<compile_context>
chip_gen: v6e
topology: v6e:2x2x1
jax: 0.10.0
libtpu: 0.0.40
codegen_flags: <defaults>
</compile_context>

<pallas_src>
import functools
import jax
import jax.numpy as jnp
from jax import lax
from jax.experimental import pallas as pl
from jax.experimental.pallas import tpu as pltpu

# ----------------------------- model dims -----------------------------------
B = 2          # batch
S_SRC = 8      # encoder sequence length
S_TGT = 8      # decoder sequence length
D = 32         # model dim
H = 4          # heads
DH = D // H    # head dim
DFF = 64       # feed-forward hidden dim
LN_EPS = 1e-5


# ----------------------------- in-kernel helpers -----------------------------
def _layernorm(h, g, b):
    mu = jnp.mean(h, axis=-1, keepdims=True)
    d = h - mu
    var = jnp.mean(d * d, axis=-1, keepdims=True)
    return d * lax.rsqrt(var + LN_EPS) * g + b


def _softmax_rows(s):
    s = s - jnp.max(s, axis=-1, keepdims=True)
    p = jnp.exp(s)
    # divide moved to the EUP slot (approx reciprocal), VPU stays free
    return p * pl.reciprocal(jnp.sum(p, axis=-1, keepdims=True), approx=True)


def _mha_into_scratch(q_all, k_all, v_all, ctx_ref, *, batch, s_q, s_kv):
    """Scaled-dot-product attention per (batch, head), fully unrolled in-kernel.

    q_all: (batch*s_q, D)   -- the 1/sqrt(DH) scale is already folded into Wq
    k_all, v_all: (batch*s_kv, D)
    Writes the merged-head context (batch*s_q, D) into ctx_ref (VMEM scratch).
    """
    for b in range(batch):
        q_rows = slice(b * s_q, (b + 1) * s_q)
        kv_rows = slice(b * s_kv, (b + 1) * s_kv)
        for h in range(H):
            cols = slice(h * DH, (h + 1) * DH)
            q = q_all[q_rows, cols]          # (s_q, DH)
            k = k_all[kv_rows, cols]         # (s_kv, DH)
            v = v_all[kv_rows, cols]         # (s_kv, DH)
            # q @ k^T without materializing a transpose
            s = lax.dot_general(q, k, (((1,), (1,)), ((), ())),
                                preferred_element_type=jnp.float32)
            p = _softmax_rows(s)
            ctx_ref[q_rows, cols] = jnp.dot(p, v,
                                            preferred_element_type=jnp.float32)


# ----------------------------- fused layer kernels ---------------------------
def _encoder_layer_kernel(x_ref, wqkv_ref, bqkv_ref, wo_ref, bo_ref,
                          ln1_g_ref, ln1_b_ref,
                          w1_ref, b1_ref, w2_ref, b2_ref,
                          ln2_g_ref, ln2_b_ref,
                          o_ref, ctx_ref, *, batch, seq):
    x = x_ref[...]                                             # (B*S, D)
    # fused QKV projection (Wq pre-scaled by 1/sqrt(DH))
    qkv = jnp.dot(x, wqkv_ref[...],
                  preferred_element_type=jnp.float32) + bqkv_ref[...]
    _mha_into_scratch(qkv[:, 0:D], qkv[:, D:2 * D], qkv[:, 2 * D:3 * D],
                      ctx_ref, batch=batch, s_q=seq, s_kv=seq)
    attn = jnp.dot(ctx_ref[...], wo_ref[...],
                   preferred_element_type=jnp.float32) + bo_ref[...]
    h1 = _layernorm(x + attn, ln1_g_ref[...], ln1_b_ref[...])
    # fused FFN
    ff = jnp.maximum(
        jnp.dot(h1, w1_ref[...], preferred_element_type=jnp.float32)
        + b1_ref[...], 0.0)
    ff = jnp.dot(ff, w2_ref[...],
                 preferred_element_type=jnp.float32) + b2_ref[...]
    o_ref[...] = _layernorm(h1 + ff, ln2_g_ref[...], ln2_b_ref[...])


def _decoder_layer_kernel(z_ref, c_ref,
                          sa_wqkv_ref, sa_bqkv_ref, sa_wo_ref, sa_bo_ref,
                          ln1_g_ref, ln1_b_ref,
                          ca_wq_ref, ca_bq_ref, ca_wkv_ref, ca_bkv_ref,
                          ca_wo_ref, ca_bo_ref,
                          ln2_g_ref, ln2_b_ref,
                          w1_ref, b1_ref, w2_ref, b2_ref,
                          ln3_g_ref, ln3_b_ref,
                          o_ref, ctx_ref, *, batch, seq_t, seq_s):
    z = z_ref[...]                                             # (B*S_TGT, D)
    c = c_ref[...]                                             # (B*S_SRC, D)

    # --- self-attention (no causal mask: PyTorch applies none unless tgt_mask
    # is passed, which the wrapper's forward() never does) ---
    qkv = jnp.dot(z, sa_wqkv_ref[...],
                  preferred_element_type=jnp.float32) + sa_bqkv_ref[...]
    _mha_into_scratch(qkv[:, 0:D], qkv[:, D:2 * D], qkv[:, 2 * D:3 * D],
                      ctx_ref, batch=batch, s_q=seq_t, s_kv=seq_t)
    sa = jnp.dot(ctx_ref[...], sa_wo_ref[...],
                 preferred_element_type=jnp.float32) + sa_bo_ref[...]
    h1 = _layernorm(z + sa, ln1_g_ref[...], ln1_b_ref[...])

    # --- cross-attention on the encoder memory ---
    q = jnp.dot(h1, ca_wq_ref[...],
                preferred_element_type=jnp.float32) + ca_bq_ref[...]
    kv = jnp.dot(c, ca_wkv_ref[...],
                 preferred_element_type=jnp.float32) + ca_bkv_ref[...]
    _mha_into_scratch(q, kv[:, 0:D], kv[:, D:2 * D],
                      ctx_ref, batch=batch, s_q=seq_t, s_kv=seq_s)
    ca = jnp.dot(ctx_ref[...], ca_wo_ref[...],
                 preferred_element_type=jnp.float32) + ca_bo_ref[...]
    h2 = _layernorm(h1 + ca, ln2_g_ref[...], ln2_b_ref[...])

    # --- fused FFN ---
    ff = jnp.maximum(
        jnp.dot(h2, w1_ref[...], preferred_element_type=jnp.float32)
        + b1_ref[...], 0.0)
    ff = jnp.dot(ff, w2_ref[...],
                 preferred_element_type=jnp.float32) + b2_ref[...]
    o_ref[...] = _layernorm(h2 + ff, ln3_g_ref[...], ln3_b_ref[...])


# ----------------------------- layer wrappers ---------------------------------
def _vmem_spec():
    return pl.BlockSpec(memory_space=pltpu.MemorySpace.VMEM)


def encoder_layer(x, p):
    # x: (B, S_SRC, D) -> (B, S_SRC, D); single fused pallas_call, no grid.
    Bx, Sx, _ = x.shape
    kern = functools.partial(_encoder_layer_kernel, batch=Bx, seq=Sx)
    args = (x.reshape(Bx * Sx, D),
            p["wqkv"], p["bqkv"], p["wo"], p["bo"],
            p["ln1_g"], p["ln1_b"],
            p["ffn_w1"], p["ffn_b1"], p["ffn_w2"], p["ffn_b2"],
            p["ln2_g"], p["ln2_b"])
    out = pl.pallas_call(
        kern,
        out_shape=jax.ShapeDtypeStruct((Bx * Sx, D), jnp.float32),
        in_specs=[_vmem_spec() for _ in args],
        out_specs=_vmem_spec(),
        scratch_shapes=[pltpu.VMEM((Bx * Sx, D), jnp.float32)],
    )(*args)
    return out.reshape(Bx, Sx, D)


def decoder_layer(z, c, p):
    # z: (B, S_TGT, D), c: (B, S_SRC, D) -> (B, S_TGT, D); single fused call.
    Bz, Sz, _ = z.shape
    _, Sc, _ = c.shape
    kern = functools.partial(_decoder_layer_kernel, batch=Bz, seq_t=Sz, seq_s=Sc)
    args = (z.reshape(Bz * Sz, D), c.reshape(Bz * Sc, D),
            p["sa_wqkv"], p["sa_bqkv"], p["sa_wo"], p["sa_bo"],
            p["ln1_g"], p["ln1_b"],
            p["ca_wq"], p["ca_bq"], p["ca_wkv"], p["ca_bkv"],
            p["ca_wo"], p["ca_bo"],
            p["ln2_g"], p["ln2_b"],
            p["ffn_w1"], p["ffn_b1"], p["ffn_w2"], p["ffn_b2"],
            p["ln3_g"], p["ln3_b"])
    out = pl.pallas_call(
        kern,
        out_shape=jax.ShapeDtypeStruct((Bz * Sz, D), jnp.float32),
        in_specs=[_vmem_spec() for _ in args],
        out_specs=_vmem_spec(),
        scratch_shapes=[pltpu.VMEM((Bz * Sz, D), jnp.float32)],
    )(*args)
    return out.reshape(Bz, Sz, D)


def transformer_forward(x, z, params):
    """Mirrors Transformer.forward: c = encode(x); y = decode(z, c)."""
    c = encoder_layer(x, params["encoder"])
    y = decoder_layer(z, c, params["decoder"])
    return y


# ----------------------------- parameter init --------------------------------
# NOTE: weights are used as x @ W (K, N); porting a PyTorch nn.Linear
# checkpoint 1:1 would require transposing its (N, K) weights.
def _fused_qkv_params(key):
    """Fused Wq|Wk|Wv with the 1/sqrt(DH) scale folded into the Q projection."""
    ks = jax.random.split(key, 3)
    scale = 1.0 / float(DH) ** 0.5
    wq = jax.random.normal(ks[0], (D, D), jnp.float32) * 0.02 * scale
    wk = jax.random.normal(ks[1], (D, D), jnp.float32) * 0.02
    wv = jax.random.normal(ks[2], (D, D), jnp.float32) * 0.02
    wqkv = jnp.concatenate([wq, wk, wv], axis=1)          # (D, 3D)
    bqkv = jnp.zeros((1, 3 * D), jnp.float32)             # bq scale-fold is a no-op (zeros)
    return wqkv, bqkv


def _cross_attn_params(key):
    ks = jax.random.split(key, 3)
    scale = 1.0 / float(DH) ** 0.5
    wq = jax.random.normal(ks[0], (D, D), jnp.float32) * 0.02 * scale
    wk = jax.random.normal(ks[1], (D, D), jnp.float32) * 0.02
    wv = jax.random.normal(ks[2], (D, D), jnp.float32) * 0.02
    return {
        "ca_wq": wq, "ca_bq": jnp.zeros((1, D), jnp.float32),
        "ca_wkv": jnp.concatenate([wk, wv], axis=1),       # (D, 2D)
        "ca_bkv": jnp.zeros((1, 2 * D), jnp.float32),
    }


def init_params(key):
    ke, kd = jax.random.split(key)
    ke_a, ke_o, ke_f1, ke_f2 = jax.random.split(ke, 4)
    kd_a, kd_ao, kd_c, kd_co, kd_f1, kd_f2 = jax.random.split(kd, 6)

    enc_wqkv, enc_bqkv = _fused_qkv_params(ke_a)
    enc = {
        "wqkv": enc_wqkv, "bqkv": enc_bqkv,
        "wo": jax.random.normal(ke_o, (D, D), jnp.float32) * 0.02,
        "bo": jnp.zeros((1, D), jnp.float32),
        "ln1_g": jnp.ones((1, D), jnp.float32), "ln1_b": jnp.zeros((1, D), jnp.float32),
        "ffn_w1": jax.random.normal(ke_f1, (D, DFF), jnp.float32) * 0.02,
        "ffn_b1": jnp.zeros((1, DFF), jnp.float32),
        "ffn_w2": jax.random.normal(ke_f2, (DFF, D), jnp.float32) * 0.02,
        "ffn_b2": jnp.zeros((1, D), jnp.float32),
        "ln2_g": jnp.ones((1, D), jnp.float32), "ln2_b": jnp.zeros((1, D), jnp.float32),
    }

    dec_wqkv, dec_bqkv = _fused_qkv_params(kd_a)
    dec = {
        "sa_wqkv": dec_wqkv, "sa_bqkv": dec_bqkv,
        "sa_wo": jax.random.normal(kd_ao, (D, D), jnp.float32) * 0.02,
        "sa_bo": jnp.zeros((1, D), jnp.float32),
        "ln1_g": jnp.ones((1, D), jnp.float32), "ln1_b": jnp.zeros((1, D), jnp.float32),
        **_cross_attn_params(kd_c),
        "ca_wo": jax.random.normal(kd_co, (D, D), jnp.float32) * 0.02,
        "ca_bo": jnp.zeros((1, D), jnp.float32),
        "ln2_g": jnp.ones((1, D), jnp.float32), "ln2_b": jnp.zeros((1, D), jnp.float32),
        "ffn_w1": jax.random.normal(kd_f1, (D, DFF), jnp.float32) * 0.02,
        "ffn_b1": jnp.zeros((1, DFF), jnp.float32),
        "ffn_w2": jax.random.normal(kd_f2, (DFF, D), jnp.float32) * 0.02,
        "ffn_b2": jnp.zeros((1, D), jnp.float32),
        "ln3_g": jnp.ones((1, D), jnp.float32), "ln3_b": jnp.zeros((1, D), jnp.float32),
    }
    return {"encoder": enc, "decoder": dec}


# TODO(synk): dropout from the PyTorch encoder/decoder layers is omitted
# (eval-mode parity only).

# ----------------------------- main ------------------------------------------
if __name__ == "__main__":
    key = jax.random.PRNGKey(0)
    kx, kz, kp = jax.random.split(key, 3)
    x = jax.random.normal(kx, (B, S_SRC, D), jnp.float32)   # encoder input
    z = jax.random.normal(kz, (B, S_TGT, D), jnp.float32)   # decoder input
    params = init_params(kp)

    y = jax.jit(transformer_forward)(x, z, params)
    y = jax.block_until_ready(y)

    assert y.shape == (B, S_TGT, D), y.shape
    assert jnp.all(jnp.isfinite(y))
    print("KERNEL_OK")
</pallas_src>

<mosaic_0001>
module attributes {stable_mosaic.version = 11 : i64} {
  func.func @_decoder_layer_kernel(%arg0: memref<16x32xf32, #tpu.memory_space<vmem>>, %arg1: memref<16x32xf32, #tpu.memory_space<vmem>>, %arg2: memref<32x96xf32, #tpu.memory_space<vmem>>, %arg3: memref<1x96xf32, #tpu.memory_space<vmem>>, %arg4: memref<32x32xf32, #tpu.memory_space<vmem>>, %arg5: memref<1x32xf32, #tpu.memory_space<vmem>>, %arg6: memref<1x32xf32, #tpu.memory_space<vmem>>, %arg7: memref<1x32xf32, #tpu.memory_space<vmem>>, %arg8: memref<32x32xf32, #tpu.memory_space<vmem>>, %arg9: memref<1x32xf32, #tpu.memory_space<vmem>>, %arg10: memref<32x64xf32, #tpu.memory_space<vmem>>, %arg11: memref<1x64xf32, #tpu.memory_space<vmem>>, %arg12: memref<32x32xf32, #tpu.memory_space<vmem>>, %arg13: memref<1x32xf32, #tpu.memory_space<vmem>>, %arg14: memref<1x32xf32, #tpu.memory_space<vmem>>, %arg15: memref<1x32xf32, #tpu.memory_space<vmem>>, %arg16: memref<32x64xf32, #tpu.memory_space<vmem>>, %arg17: memref<1x64xf32, #tpu.memory_space<vmem>>, %arg18: memref<64x32xf32, #tpu.memory_space<vmem>>, %arg19: memref<1x32xf32, #tpu.memory_space<vmem>>, %arg20: memref<1x32xf32, #tpu.memory_space<vmem>>, %arg21: memref<1x32xf32, #tpu.memory_space<vmem>>, %arg22: memref<16x32xf32, #tpu.memory_space<vmem>>, %arg23: memref<16x32xf32, #tpu.memory_space<vmem>>) attributes {dimension_semantics = [], scalar_prefetch = 0 : i64, scratch_operands = 1 : i64, tpu.core_type = #tpu.core_type<tc>} {
    %c0 = arith.constant 0 : index
    %c0_0 = arith.constant 0 : index
    %0 = vector.load %arg0[%c0, %c0_0] : memref<16x32xf32, #tpu.memory_space<vmem>>, vector<16x32xf32>
    %c0_1 = arith.constant 0 : index
    %c0_2 = arith.constant 0 : index
    %1 = vector.load %arg1[%c0_1, %c0_2] : memref<16x32xf32, #tpu.memory_space<vmem>>, vector<16x32xf32>
    %c0_3 = arith.constant 0 : index
    %c0_4 = arith.constant 0 : index
    %2 = vector.load %arg2[%c0_3, %c0_4] : memref<32x96xf32, #tpu.memory_space<vmem>>, vector<32x96xf32>
    %cst = arith.constant dense<0.000000e+00> : vector<16x96xf32>
    %3 = tpu.matmul %0, %2, %cst {dimension_numbers = #tpu.dot_dimension_numbers<[1], [0], [0], [1], [0, 0, 1, 1], [], []>} : vector<16x32xf32>, vector<32x96xf32>, vector<16x96xf32> -> vector<16x96xf32>
    %c0_5 = arith.constant 0 : index
    %c0_6 = arith.constant 0 : index
    %4 = vector.load %arg3[%c0_5, %c0_6] : memref<1x96xf32, #tpu.memory_space<vmem>>, vector<1x96xf32>
    %5 = vector.broadcast %4 : vector<1x96xf32> to vector<16x96xf32>
    %6 = arith.addf %3, %5 : vector<16x96xf32>
    %7 = vector.extract_strided_slice %6 {offsets = [0, 0], sizes = [16, 32], strides = [1, 1]} : vector<16x96xf32> to vector<16x32xf32>
    %8 = vector.extract_strided_slice %6 {offsets = [0, 32], sizes = [16, 32], strides = [1, 1]} : vector<16x96xf32> to vector<16x32xf32>
    %9 = vector.extract_strided_slice %6 {offsets = [0, 64], sizes = [16, 32], strides = [1, 1]} : vector<16x96xf32> to vector<16x32xf32>
    %10 = vector.extract_strided_slice %7 {offsets = [0, 0], sizes = [8, 8], strides = [1, 1]} : vector<16x32xf32> to vector<8x8xf32>
    %11 = vector.extract_strided_slice %8 {offsets = [0, 0], sizes = [8, 8], strides = [1, 1]} : vector<16x32xf32> to vector<8x8xf32>
    %12 = vector.extract_strided_slice %9 {offsets = [0, 0], sizes = [8, 8], strides = [1, 1]} : vector<16x32xf32> to vector<8x8xf32>
    %cst_7 = arith.constant dense<0.000000e+00> : vector<8x8xf32>
    %13 = tpu.matmul %10, %11, %cst_7 {dimension_numbers = #tpu.dot_dimension_numbers<[1], [1], [0], [0], [0, 0, 1, 0], [], []>} : vector<8x8xf32>, vector<8x8xf32>, vector<8x8xf32> -> vector<8x8xf32>
    %cst_8 = arith.constant dense<0xFF800000> : vector<8xf32>
    %14 = vector.multi_reduction <maximumf>, %13, %cst_8 [1] : vector<8x8xf32> to vector<8xf32>
    %15 = vector.shape_cast %14 : vector<8xf32> to vector<8x1xf32>
    %16 = vector.broadcast %15 : vector<8x1xf32> to vector<8x8xf32>
    %17 = arith.subf %13, %16 : vector<8x8xf32>
    %18 = math.exp %17 : vector<8x8xf32>
    %cst_9 = arith.constant dense<0.000000e+00> : vector<8xf32>
    %19 = vector.multi_reduction <add>, %18, %cst_9 [1] : vector<8x8xf32> to vector<8xf32>
    %20 = vector.shape_cast %19 : vector<8xf32> to vector<8x1xf32>
    %21 = tpu.reciprocal %20 {approx = true} : vector<8x1xf32> -> vector<8x1xf32>
    %22 = vector.broadcast %21 : vector<8x1xf32> to vector<8x8xf32>
    %23 = arith.mulf %18, %22 : vector<8x8xf32>
    %cst_10 = arith.constant dense<0.000000e+00> : vector<8x8xf32>
    %24 = tpu.matmul %23, %12, %cst_10 {dimension_numbers = #tpu.dot_dimension_numbers<[1], [0], [0], [1], [0, 0, 1, 1], [], []>} : vector<8x8xf32>, vector<8x8xf32>, vector<8x8xf32> -> vector<8x8xf32>
    %c0_11 = arith.constant 0 : index
    %c0_12 = arith.constant 0 : index
    %25 = vector.load %arg23[%c0_11, %c0_12] : memref<16x32xf32, #tpu.memory_space<vmem>>, vector<8x8xf32>
    tpu.vector_store %arg23[%c0_11, %c0_12], %24 {strides = array<i32>} : memref<16x32xf32, #tpu.memory_space<vmem>>, vector<8x8xf32>,
    %26 = vector.extract_strided_slice %7 {offsets = [0, 8], sizes = [8, 8], strides = [1, 1]} : vector<16x32xf32> to vector<8x8xf32>
    %27 = vector.extract_strided_slice %8 {offsets = [0, 8], sizes = [8, 8], strides = [1, 1]} : vector<16x32xf32> to vector<8x8xf32>
    %28 = vector.extract_strided_slice %9 {offsets = [0, 8], sizes = [8, 8], strides = [1, 1]} : vector<16x32xf32> to vector<8x8xf32>
    %cst_13 = arith.constant dense<0.000000e+00> : vector<8x8xf32>
    %29 = tpu.matmul %26, %27, %cst_13 {dimension_numbers = #tpu.dot_dimension_numbers<[1], [1], [0], [0], [0, 0, 1, 0], [], []>} : vector<8x8xf32>, vector<8x8xf32>, vector<8x8xf32> -> vector<8x8xf32>
    %cst_14 = arith.constant dense<0xFF800000> : vector<8xf32>
    %30 = vector.multi_reduction <maximumf>, %29, %cst_14 [1] : vector<8x8xf32> to vector<8xf32>
    %31 = vector.shape_cast %30 : vector<8xf32> to vector<8x1xf32>
    %32 = vector.broadcast %31 : vector<8x1xf32> to vector<8x8xf32>
    %33 = arith.subf %29, %32 : vector<8x8xf32>
    %34 = math.exp %33 : vector<8x8xf32>
    %cst_15 = arith.constant dense<0.000000e+00> : vector<8xf32>
    %35 = vector.multi_reduction <add>, %34, %cst_15 [1] : vector<8x8xf32> to vector<8xf32>
    %36 = vector.shape_cast %35 : vector<8xf32> to vector<8x1xf32>
    %37 = tpu.reciprocal %36 {approx = true} : vector<8x1xf32> -> vector<8x1xf32>
    %38 = vector.broadcast %37 : vector<8x1xf32> to vector<8x8xf32>
    %39 = arith.mulf %34, %38 : vector<8x8xf32>
    %cst_16 = arith.constant dense<0.000000e+00> : vector<8x8xf32>
    %40 = tpu.matmul %39, %28, %cst_16 {dimension_numbers = #tpu.dot_dimension_numbers<[1], [0], [0], [1], [0, 0, 1, 1], [], []>} : vector<8x8xf32>, vector<8x8xf32>, vector<8x8xf32> -> vector<8x8xf32>
    %c0_17 = arith.constant 0 : index
    %c8 = arith.constant 8 : index
    %41 = vector.load %arg23[%c0_17, %c8] : memref<16x32xf32, #tpu.memory_space<vmem>>, vector<8x8xf32>
    tpu.vector_store %arg23[%c0_17, %c8], %40 {strides = array<i32>} : memref<16x32xf32, #tpu.memory_space<vmem>>, vector<8x8xf32>,
    %42 = vector.extract_strided_slice %7 {offsets = [0, 16], sizes = [8, 8], strides = [1, 1]} : vector<16x32xf32> to vector<8x8xf32>
    %43 = vector.extract_strided_slice %8 {offsets = [0, 16], sizes = [8, 8], strides = [1, 1]} : vector<16x32xf32> to vector<8x8xf32>
    %44 = vector.extract_strided_slice %9 {offsets = [0, 16], sizes = [8, 8], strides = [1, 1]} : vector<16x32xf32> to vector<8x8xf32>
    %cst_18 = arith.constant dense<0.000000e+00> : vector<8x8xf32>
    %45 = tpu.matmul %42, %43, %cst_18 {dimension_numbers = #tpu.dot_dimension_numbers<[1], [1], [0], [0], [0, 0, 1, 0], [], []>} : vector<8x8xf32>, vector<8x8xf32>, vector<8x8xf32> -> vector<8x8xf32>
    %cst_19 = arith.constant dense<0xFF800000> : vector<8xf32>
    %46 = vector.multi_reduction <maximumf>, %45, %cst_19 [1] : vector<8x8xf32> to vector<8xf32>
    %47 = vector.shape_cast %46 : vector<8xf32> to vector<8x1xf32>
    %48 = vector.broadcast %47 : vector<8x1xf32> to vector<8x8xf32>
    %49 = arith.subf %45, %48 : vector<8x8xf32>
    %50 = math.exp %49 : vector<8x8xf32>
    %cst_20 = arith.constant dense<0.000000e+00> : vector<8xf32>
    %51 = vector.multi_reduction <add>, %50, %cst_20 [1] : vector<8x8xf32> to vector<8xf32>
    %52 = vector.shape_cast %51 : vector<8xf32> to vector<8x1xf32>
    %53 = tpu.reciprocal %52 {approx = true} : vector<8x1xf32> -> vector<8x1xf32>
    %54 = vector.broadcast %53 : vector<8x1xf32> to vector<8x8xf32>
    %55 = arith.mulf %50, %54 : vector<8x8xf32>
    %cst_21 = arith.constant dense<0.000000e+00> : vector<8x8xf32>
    %56 = tpu.matmul %55, %44, %cst_21 {dimension_numbers = #tpu.dot_dimension_numbers<[1], [0], [0], [1], [0, 0, 1, 1], [], []>} : vector<8x8xf32>, vector<8x8xf32>, vector<8x8xf32> -> vector<8x8xf32>
    %c0_22 = arith.constant 0 : index
    %c16 = arith.constant 16 : index
    %57 = vector.load %arg23[%c0_22, %c16] : memref<16x32xf32, #tpu.memory_space<vmem>>, vector<8x8xf32>
    tpu.vector_store %arg23[%c0_22, %c16], %56 {strides = array<i32>} : memref<16x32xf32, #tpu.memory_space<vmem>>, vector<8x8xf32>,
    %58 = vector.extract_strided_slice %7 {offsets = [0, 24], sizes = [8, 8], strides = [1, 1]} : vector<16x32xf32> to vector<8x8xf32>
    %59 = vector.extract_strided_slice %8 {offsets = [0, 24], sizes = [8, 8], strides = [1, 1]} : vector<16x32xf32> to vector<8x8xf32>
    %60 = vector.extract_strided_slice %9 {offsets = [0, 24], sizes = [8, 8], strides = [1, 1]} : vector<16x32xf32> to vector<8x8xf32>
    %cst_23 = arith.constant dense<0.000000e+00> : vector<8x8xf32>
    %61 = tpu.matmul %58, %59, %cst_23 {dimension_numbers = #tpu.dot_dimension_numbers<[1], [1], [0], [0], [0, 0, 1, 0], [], []>} : vector<8x8xf32>, vector<8x8xf32>, vector<8x8xf32> -> vector<8x8xf32>
    %cst_24 = arith.constant dense<0xFF800000> : vector<8xf32>
    %62 = vector.multi_reduction <maximumf>, %61, %cst_24 [1] : vector<8x8xf32> to vector<8xf32>
    %63 = vector.shape_cast %62 : vector<8xf32> to vector<8x1xf32>
    %64 = vector.broadcast %63 : vector<8x1xf32> to vector<8x8xf32>
    %65 = arith.subf %61, %64 : vector<8x8xf32>
    %66 = math.exp %65 : vector<8x8xf32>
    %cst_25 = arith.constant dense<0.000000e+00> : vector<8xf32>
    %67 = vector.multi_reduction <add>, %66, %cst_25 [1] : vector<8x8xf32> to vector<8xf32>
    %68 = vector.shape_cast %67 : vector<8xf32> to vector<8x1xf32>
    %69 = tpu.reciprocal %68 {approx = true} : vector<8x1xf32> -> vector<8x1xf32>
    %70 = vector.broadcast %69 : vector<8x1xf32> to vector<8x8xf32>
    %71 = arith.mulf %66, %70 : vector<8x8xf32>
    %cst_26 = arith.constant dense<0.000000e+00> : vector<8x8xf32>
    %72 = tpu.matmul %71, %60, %cst_26 {dimension_numbers = #tpu.dot_dimension_numbers<[1], [0], [0], [1], [0, 0, 1, 1], [], []>} : vector<8x8xf32>, vector<8x8xf32>, vector<8x8xf32> -> vector<8x8xf32>
    %c0_27 = arith.constant 0 : index
    %c24 = arith.constant 24 : index
    %73 = vector.load %arg23[%c0_27, %c24] : memref<16x32xf32, #tpu.memory_space<vmem>>, vector<8x8xf32>
    tpu.vector_store %arg23[%c0_27, %c24], %72 {strides = array<i32>} : memref<16x32xf32, #tpu.memory_space<vmem>>, vector<8x8xf32>,
    %74 = vector.extract_strided_slice %7 {offsets = [8, 0], sizes = [8, 8], strides = [1, 1]} : vector<16x32xf32> to vector<8x8xf32>
    %75 = vector.extract_strided_slice %8 {offsets = [8, 0], sizes = [8, 8], strides = [1, 1]} : vector<16x32xf32> to vector<8x8xf32>
    %76 = vector.extract_strided_slice %9 {offsets = [8, 0], sizes = [8, 8], strides = [1, 1]} : vector<16x32xf32> to vector<8x8xf32>
    %cst_28 = arith.constant dense<0.000000e+00> : vector<8x8xf32>
    %77 = tpu.matmul %74, %75, %cst_28 {dimension_numbers = #tpu.dot_dimension_numbers<[1], [1], [0], [0], [0, 0, 1, 0], [], []>} : vector<8x8xf32>, vector<8x8xf32>, vector<8x8xf32> -> vector<8x8xf32>
    %cst_29 = arith.constant dense<0xFF800000> : vector<8xf32>
    %78 = vector.multi_reduction <maximumf>, %77, %cst_29 [1] : vector<8x8xf32> to vector<8xf32>
    %79 = vector.shape_cast %78 : vector<8xf32> to vector<8x1xf32>
    %80 = vector.broadcast %79 : vector<8x1xf32> to vector<8x8xf32>
    %81 = arith.subf %77, %80 : vector<8x8xf32>
    %82 = math.exp %81 : vector<8x8xf32>
    %cst_30 = arith.constant dense<0.000000e+00> : vector<8xf32>
    %83 = vector.multi_reduction <add>, %82, %cst_30 [1] : vector<8x8xf32> to vector<8xf32>
    %84 = vector.shape_cast %83 : vector<8xf32> to vector<8x1xf32>
    %85 = tpu.reciprocal %84 {approx = true} : vector<8x1xf32> -> vector<8x1xf32>
    %86 = vector.broadcast %85 : vector<8x1xf32> to vector<8x8xf32>
    %87 = arith.mulf %82, %86 : vector<8x8xf32>
    %cst_31 = arith.constant dense<0.000000e+00> : vector<8x8xf32>
    %88 = tpu.matmul %87, %76, %cst_31 {dimension_numbers = #tpu.dot_dimension_numbers<[1], [0], [0], [1], [0, 0, 1, 1], [], []>} : vector<8x8xf32>, vector<8x8xf32>, vector<8x8xf32> -> vector<8x8xf32>
    %c8_32 = arith.constant 8 : index
    %c0_33 = arith.constant 0 : index
    %89 = vector.load %arg23[%c8_32, %c0_33] : memref<16x32xf32, #tpu.memory_space<vmem>>, vector<8x8xf32>
    tpu.vector_store %arg23[%c8_32, %c0_33], %88 {strides = array<i32>} : memref<16x32xf32, #tpu.memory_space<vmem>>, vector<8x8xf32>,
    %90 = vector.extract_strided_slice %7 {offsets = [8, 8], sizes = [8, 8], strides = [1, 1]} : vector<16x32xf32> to vector<8x8xf32>
    %91 = vector.extract_strided_slice %8 {offsets = [8, 8], sizes = [8, 8], strides = [1, 1]} : vector<16x32xf32> to vector<8x8xf32>
    %92 = vector.extract_strided_slice %9 {offsets = [8, 8], sizes = [8, 8], strides = [1, 1]} : vector<16x32xf32> to vector<8x8xf32>
    %cst_34 = arith.constant dense<0.000000e+00> : vector<8x8xf32>
    %93 = tpu.matmul %90, %91, %cst_34 {dimension_numbers = #tpu.dot_dimension_numbers<[1], [1], [0], [0], [0, 0, 1, 0], [], []>} : vector<8x8xf32>, vector<8x8xf32>, vector<8x8xf32> -> vector<8x8xf32>
    %cst_35 = arith.constant dense<0xFF800000> : vector<8xf32>
    %94 = vector.multi_reduction <maximumf>, %93, %cst_35 [1] : vector<8x8xf32> to vector<8xf32>
    %95 = vector.shape_cast %94 : vector<8xf32> to vector<8x1xf32>
    %96 = vector.broadcast %95 : vector<8x1xf32> to vector<8x8xf32>
    %97 = arith.subf %93, %96 : vector<8x8xf32>
    %98 = math.exp %97 : vector<8x8xf32>
    %cst_36 = arith.constant dense<0.000000e+00> : vector<8xf32>
    %99 = vector.multi_reduction <add>, %98, %cst_36 [1] : vector<8x8xf32> to vector<8xf32>
    %100 = vector.shape_cast %99 : vector<8xf32> to vector<8x1xf32>
    %101 = tpu.reciprocal %100 {approx = true} : vector<8x1xf32> -> vector<8x1xf32>
    %102 = vector.broadcast %101 : vector<8x1xf32> to vector<8x8xf32>
    %103 = arith.mulf %98, %102 : vector<8x8xf32>
    %cst_37 = arith.constant dense<0.000000e+00> : vector<8x8xf32>
    %104 = tpu.matmul %103, %92, %cst_37 {dimension_numbers = #tpu.dot_dimension_numbers<[1], [0], [0], [1], [0, 0, 1, 1], [], []>} : vector<8x8xf32>, vector<8x8xf32>, vector<8x8xf32> -> vector<8x8xf32>
    %c8_38 = arith.constant 8 : index
    %c8_39 = arith.constant 8 : index
    %105 = vector.load %arg23[%c8_38, %c8_39] : memref<16x32xf32, #tpu.memory_space<vmem>>, vector<8x8xf32>
    tpu.vector_store %arg23[%c8_38, %c8_39], %104 {strides = array<i32>} : memref<16x32xf32, #tpu.memory_space<vmem>>, vector<8x8xf32>,
    %106 = vector.extract_strided_slice %7 {offsets = [8, 16], sizes = [8, 8], strides = [1, 1]} : vector<16x32xf32> to vector<8x8xf32>
    %107 = vector.extract_strided_slice %8 {offsets = [8, 16], sizes = [8, 8], strides = [1, 1]} : vector<16x32xf32> to vector<8x8xf32>
    %108 = vector.extract_strided_slice %9 {offsets = [8, 16], sizes = [8, 8], strides = [1, 1]} : vector<16x32xf32> to vector<8x8xf32>
    %cst_40 = arith.constant dense<0.000000e+00> : vector<8x8xf32>
    %109 = tpu.matmul %106, %107, %cst_40 {dimension_numbers = #tpu.dot_dimension_numbers<[1], [1], [0], [0], [0, 0, 1, 0], [], []>} : vector<8x8xf32>, vector<8x8xf32>, vector<8x8xf32> -> vector<8x8xf32>
    %cst_41 = arith.constant dense<0xFF800000> : vector<8xf32>
    %110 = vector.multi_reduction <maximumf>, %109, %cst_41 [1] : vector<8x8xf32> to vector<8xf32>
    %111 = vector.shape_cast %110 : vector<8xf32> to vector<8x1xf32>
    %112 = vector.broadcast %111 : vector<8x1xf32> to vector<8x8xf32>
    %113 = arith.subf %109, %112 : vector<8x8xf32>
    %114 = math.exp %113 : vector<8x8xf32>
    %cst_42 = arith.constant dense<0.000000e+00> : vector<8xf32>
    %115 = vector.multi_reduction <add>, %114, %cst_42 [1] : vector<8x8xf32> to vector<8xf32>
    %116 = vector.shape_cast %115 : vector<8xf32> to vector<8x1xf32>
    %117 = tpu.reciprocal %116 {approx = true} : vector<8x1xf32> -> vector<8x1xf32>
    %118 = vector.broadcast %117 : vector<8x1xf32> to vector<8x8xf32>
    %119 = arith.mulf %114, %118 : vector<8x8xf32>
    %cst_43 = arith.constant dense<0.000000e+00> : vector<8x8xf32>
    %120 = tpu.matmul %119, %108, %cst_43 {dimension_numbers = #tpu.dot_dimension_numbers<[1], [0], [0], [1], [0, 0, 1, 1], [], []>} : vector<8x8xf32>, vector<8x8xf32>, vector<8x8xf32> -> vector<8x8xf32>
    %c8_44 = arith.constant 8 : index
    %c16_45 = arith.constant 16 : index
    %121 = vector.load %arg23[%c8_44, %c16_45] : memref<16x32xf32, #tpu.memory_space<vmem>>, vector<8x8xf32>
    tpu.vector_store %arg23[%c8_44, %c16_45], %120 {strides = array<i32>} : memref<16x32xf32, #tpu.memory_space<vmem>>, vector<8x8xf32>,
    %122 = vector.extract_strided_slice %7 {offsets = [8, 24], sizes = [8, 8], strides = [1, 1]} : vector<16x32xf32> to vector<8x8xf32>
    %123 = vector.extract_strided_slice %8 {offsets = [8, 24], sizes = [8, 8], strides = [1, 1]} : vector<16x32xf32> to vector<8x8xf32>
    %124 = vector.extract_strided_slice %9 {offsets = [8, 24], sizes = [8, 8], strides = [1, 1]} : vector<16x32xf32> to vector<8x8xf32>
    %cst_46 = arith.constant dense<0.000000e+00> : vector<8x8xf32>
    %125 = tpu.matmul %122, %123, %cst_46 {dimension_numbers = #tpu.dot_dimension_numbers<[1], [1], [0], [0], [0, 0, 1, 0], [], []>} : vector<8x8xf32>, vector<8x8xf32>, vector<8x8xf32> -> vector<8x8xf32>
    %cst_47 = arith.constant dense<0xFF800000> : vector<8xf32>
    %126 = vector.multi_reduction <maximumf>, %125, %cst_47 [1] : vector<8x8xf32> to vector<8xf32>
    %127 = vector.shape_cast %126 : vector<8xf32> to vector<8x1xf32>
    %128 = vector.broadcast %127 : vector<8x1xf32> to vector<8x8xf32>
    %129 = arith.subf %125, %128 : vector<8x8xf32>
    %130 = math.exp %129 : vector<8x8xf32>
    %cst_48 = arith.constant dense<0.000000e+00> : vector<8xf32>
    %131 = vector.multi_reduction <add>, %130, %cst_48 [1] : vector<8x8xf32> to vector<8xf32>
    %132 = vector.shape_cast %131 : vector<8xf32> to vector<8x1xf32>
    %133 = tpu.reciprocal %132 {approx = true} : vector<8x1xf32> -> vector<8x1xf32>
    %134 = vector.broadcast %133 : vector<8x1xf32> to vector<8x8xf32>
    %135 = arith.mulf %130, %134 : vector<8x8xf32>
    %cst_49 = arith.constant dense<0.000000e+00> : vector<8x8xf32>
    %136 = tpu.matmul %135, %124, %cst_49 {dimension_numbers = #tpu.dot_dimension_numbers<[1], [0], [0], [1], [0, 0, 1, 1], [], []>} : vector<8x8xf32>, vector<8x8xf32>, vector<8x8xf32> -> vector<8x8xf32>
    %c8_50 = arith.constant 8 : index
    %c24_51 = arith.constant 24 : index
    %137 = vector.load %arg23[%c8_50, %c24_51] : memref<16x32xf32, #tpu.memory_space<vmem>>, vector<8x8xf32>
    tpu.vector_store %arg23[%c8_50, %c24_51], %136 {strides = array<i32>} : memref<16x32xf32, #tpu.memory_space<vmem>>, vector<8x8xf32>,
    %c0_52 = arith.constant 0 : index
    %c0_53 = arith.constant 0 : index
    %138 = vector.load %arg23[%c0_52, %c0_53] : memref<16x32xf32, #tpu.memory_space<vmem>>, vector<16x32xf32>
    %c0_54 = arith.constant 0 : index
    %c0_55 = arith.constant 0 : index
    %139 = vector.load %arg4[%c0_54, %c0_55] : memref<32x32xf32, #tpu.memory_space<vmem>>, vector<32x32xf32>
    %cst_56 = arith.constant dense<0.000000e+00> : vector<16x32xf32>
    %140 = tpu.matmul %138, %139, %cst_56 {dimension_numbers = #tpu.dot_dimension_numbers<[1], [0], [0], [1], [0, 0, 1, 1], [], []>} : vector<16x32xf32>, vector<32x32xf32>, vector<16x32xf32> -> vector<16x32xf32>
    %c0_57 = arith.constant 0 : index
    %c0_58 = arith.constant 0 : index
    %141 = vector.load %arg5[%c0_57, %c0_58] : memref<1x32xf32, #tpu.memory_space<vmem>>, vector<1x32xf32>
    %142 = vector.broadcast %141 : vector<1x32xf32> to vector<16x32xf32>
    %143 = arith.addf %140, %142 : vector<16x32xf32>
    %144 = arith.addf %0, %143 : vector<16x32xf32>
    %c0_59 = arith.constant 0 : index
    %c0_60 = arith.constant 0 : index
    %145 = vector.load %arg6[%c0_59, %c0_60] : memref<1x32xf32, #tpu.memory_space<vmem>>, vector<1x32xf32>
    %c0_61 = arith.constant 0 : index
    %c0_62 = arith.constant 0 : index
    %146 = vector.load %arg7[%c0_61, %c0_62] : memref<1x32xf32, #tpu.memory_space<vmem>>, vector<1x32xf32>
    %cst_63 = arith.constant dense<0.000000e+00> : vector<16xf32>
    %147 = vector.multi_reduction <add>, %144, %cst_63 [1] : vector<16x32xf32> to vector<16xf32>
    %148 = vector.shape_cast %147 : vector<16xf32> to vector<16x1xf32>
    %cst_64 = arith.constant 3.200000e+01 : f32
    %149 = vector.broadcast %cst_64 : f32 to vector<16x1xf32>
    %150 = arith.divf %148, %149 : vector<16x1xf32>
    %151 = vector.broadcast %150 : vector<16x1xf32> to vector<16x32xf32>
    %152 = arith.subf %144, %151 : vector<16x32xf32>
    %153 = arith.mulf %152, %152 : vector<16x32xf32>
    %cst_65 = arith.constant dense<0.000000e+00> : vector<16xf32>
    %154 = vector.multi_reduction <add>, %153, %cst_65 [1] : vector<16x32xf32> to vector<16xf32>
    %155 = vector.shape_cast %154 : vector<16xf32> to vector<16x1xf32>
    %cst_66 = arith.constant 3.200000e+01 : f32
    %156 = vector.broadcast %cst_66 : f32 to vector<16x1xf32>
    %157 = arith.divf %155, %156 : vector<16x1xf32>
    %cst_67 = arith.constant 9.99999974E-6 : f32
    %158 = vector.broadcast %cst_67 : f32 to vector<16x1xf32>
    %159 = arith.addf %157, %158 : vector<16x1xf32>
    %160 = math.rsqrt %159 : vector<16x1xf32>
    %161 = vector.broadcast %160 : vector<16x1xf32> to vector<16x32xf32>
    %162 = arith.mulf %152, %161 : vector<16x32xf32>
    %163 = vector.broadcast %145 : vector<1x32xf32> to vector<16x32xf32>
    %164 = arith.mulf %162, %163 : vector<16x32xf32>
    %165 = vector.broadcast %146 : vector<1x32xf32> to vector<16x32xf32>
    %166 = arith.addf %164, %165 : vector<16x32xf32>
    %c0_68 = arith.constant 0 : index
    %c0_69 = arith.constant 0 : index
    %167 = vector.load %arg8[%c0_68, %c0_69] : memref<32x32xf32, #tpu.memory_space<vmem>>, vector<32x32xf32>
    %cst_70 = arith.constant dense<0.000000e+00> : vector<16x32xf32>
    %168 = tpu.matmul %166, %167, %cst_70 {dimension_numbers = #tpu.dot_dimension_numbers<[1], [0], [0], [1], [0, 0, 1, 1], [], []>} : vector<16x32xf32>, vector<32x32xf32>, vector<16x32xf32> -> vector<16x32xf32>
    %c0_71 = arith.constant 0 : index
    %c0_72 = arith.constant 0 : index
    %169 = vector.load %arg9[%c0_71, %c0_72] : memref<1x32xf32, #tpu.memory_space<vmem>>, vector<1x32xf32>
    %170 = vector.broadcast %169 : vector<1x32xf32> to vector<16x32xf32>
    %171 = arith.addf %168, %170 : vector<16x32xf32>
    %c0_73 = arith.constant 0 : index
    %c0_74 = arith.constant 0 : index
    %172 = vector.load %arg10[%c0_73, %c0_74] : memref<32x64xf32, #tpu.memory_space<vmem>>, vector<32x64xf32>
    %cst_75 = arith.constant dense<0.000000e+00> : vector<16x64xf32>
    %173 = tpu.matmul %1, %172, %cst_75 {dimension_numbers = #tpu.dot_dimension_numbers<[1], [0], [0], [1], [0, 0, 1, 1], [], []>} : vector<16x32xf32>, vector<32x64xf32>, vector<16x64xf32> -> vector<16x64xf32>
    %c0_76 = arith.constant 0 : index
    %c0_77 = arith.constant 0 : index
    %174 = vector.load %arg11[%c0_76, %c0_77] : memref<1x64xf32, #tpu.memory_space<vmem>>, vector<1x64xf32>
    %175 = vector.broadcast %174 : vector<1x64xf32> to vector<16x64xf32>
    %176 = arith.addf %173, %175 : vector<16x64xf32>
    %177 = vector.extract_strided_slice %176 {offsets = [0, 0], sizes = [16, 32], strides = [1, 1]} : vector<16x64xf32> to vector<16x32xf32>
    %178 = vector.extract_strided_slice %176 {offsets = [0, 32], sizes = [16, 32], strides = [1, 1]} : vector<16x64xf32> to vector<16x32xf32>
    %179 = vector.extract_strided_slice %171 {offsets = [0, 0], sizes = [8, 8], strides = [1, 1]} : vector<16x32xf32> to vector<8x8xf32>
    %180 = vector.extract_strided_slice %177 {offsets = [0, 0], sizes = [8, 8], strides = [1, 1]} : vector<16x32xf32> to vector<8x8xf32>
    %181 = vector.extract_strided_slice %178 {offsets = [0, 0], sizes = [8, 8], strides = [1, 1]} : vector<16x32xf32> to vector<8x8xf32>
    %cst_78 = arith.constant dense<0.000000e+00> : vector<8x8xf32>
    %182 = tpu.matmul %179, %180, %cst_78 {dimension_numbers = #tpu.dot_dimension_numbers<[1], [1], [0], [0], [0, 0, 1, 0], [], []>} : vector<8x8xf32>, vector<8x8xf32>, vector<8x8xf32> -> vector<8x8xf32>
    %cst_79 = arith.constant dense<0xFF800000> : vector<8xf32>
    %183 = vector.multi_reduction <maximumf>, %182, %cst_79 [1] : vector<8x8xf32> to vector<8xf32>
    %184 = vector.shape_cast %183 : vector<8xf32> to vector<8x1xf32>
    %185 = vector.broadcast %184 : vector<8x1xf32> to vector<8x8xf32>
    %186 = arith.subf %182, %185 : vector<8x8xf32>
    %187 = math.exp %186 : vector<8x8xf32>
    %cst_80 = arith.constant dense<0.000000e+00> : vector<8xf32>
    %188 = vector.multi_reduction <add>, %187, %cst_80 [1] : vector<8x8xf32> to vector<8xf32>
    %189 = vector.shape_cast %188 : vector<8xf32> to vector<8x1xf32>
    %190 = tpu.reciprocal %189 {approx = true} : vector<8x1xf32> -> vector<8x1xf32>
    %191 = vector.broadcast %190 : vector<8x1xf32> to vector<8x8xf32>
    %192 = arith.mulf %187, %191 : vector<8x8xf32>
    %cst_81 = arith.constant dense<0.000000e+00> : vector<8x8xf32>
    %193 = tpu.matmul %192, %181, %cst_81 {dimension_numbers = #tpu.dot_dimension_numbers<[1], [0], [0], [1], [0, 0, 1, 1], [], []>} : vector<8x8xf32>, vector<8x8xf32>, vector<8x8xf32> -> vector<8x8xf32>
    %c0_82 = arith.constant 0 : index
    %c0_83 = arith.constant 0 : index
    %194 = vector.load %arg23[%c0_82, %c0_83] : memref<16x32xf32, #tpu.memory_space<vmem>>, vector<8x8xf32>
    tpu.vector_store %arg23[%c0_82, %c0_83], %193 {strides = array<i32>} : memref<16x32xf32, #tpu.memory_space<vmem>>, vector<8x8xf32>,
    %195 = vector.extract_strided_slice %171 {offsets = [0, 8], sizes = [8, 8], strides = [1, 1]} : vector<16x32xf32> to vector<8x8xf32>
    %196 = vector.extract_strided_slice %177 {offsets = [0, 8], sizes = [8, 8], strides = [1, 1]} : vector<16x32xf32> to vector<8x8xf32>
    %197 = vector.extract_strided_slice %178 {offsets = [0, 8], sizes = [8, 8], strides = [1, 1]} : vector<16x32xf32> to vector<8x8xf32>
    %cst_84 = arith.constant dense<0.000000e+00> : vector<8x8xf32>
    %198 = tpu.matmul %195, %196, %cst_84 {dimension_numbers = #tpu.dot_dimension_numbers<[1], [1], [0], [0], [0, 0, 1, 0], [], []>} : vector<8x8xf32>, vector<8x8xf32>, vector<8x8xf32> -> vector<8x8xf32>
    %cst_85 = arith.constant dense<0xFF800000> : vector<8xf32>
    %199 = vector.multi_reduction <maximumf>, %198, %cst_85 [1] : vector<8x8xf32> to vector<8xf32>
    %200 = vector.shape_cast %199 : vector<8xf32> to vector<8x1xf32>
    %201 = vector.broadcast %200 : vector<8x1xf32> to vector<8x8xf32>
    %202 = arith.subf %198, %201 : vector<8x8xf32>
    %203 = math.exp %202 : vector<8x8xf32>
    %cst_86 = arith.constant dense<0.000000e+00> : vector<8xf32>
    %204 = vector.multi_reduction <add>, %203, %cst_86 [1] : vector<8x8xf32> to vector<8xf32>
    %205 = vector.shape_cast %204 : vector<8xf32> to vector<8x1xf32>
    %206 = tpu.reciprocal %205 {approx = true} : vector<8x1xf32> -> vector<8x1xf32>
    %207 = vector.broadcast %206 : vector<8x1xf32> to vector<8x8xf32>
    %208 = arith.mulf %203, %207 : vector<8x8xf32>
    %cst_87 = arith.constant dense<0.000000e+00> : vector<8x8xf32>
    %209 = tpu.matmul %208, %197, %cst_87 {dimension_numbers = #tpu.dot_dimension_numbers<[1], [0], [0], [1], [0, 0, 1, 1], [], []>} : vector<8x8xf32>, vector<8x8xf32>, vector<8x8xf32> -> vector<8x8xf32>
    %c0_88 = arith.constant 0 : index
    %c8_89 = arith.constant 8 : index
    %210 = vector.load %arg23[%c0_88, %c8_89] : memref<16x32xf32, #tpu.memory_space<vmem>>, vector<8x8xf32>
    tpu.vector_store %arg23[%c0_88, %c8_89], %209 {strides = array<i32>} : memref<16x32xf32, #tpu.memory_space<vmem>>, vector<8x8xf32>,
    %211 = vector.extract_strided_slice %171 {offsets = [0, 16], sizes = [8, 8], strides = [1, 1]} : vector<16x32xf32> to vector<8x8xf32>
    %212 = vector.extract_strided_slice %177 {offsets = [0, 16], sizes = [8, 8], strides = [1, 1]} : vector<16x32xf32> to vector<8x8xf32>
    %213 = vector.extract_strided_slice %178 {offsets = [0, 16], sizes = [8, 8], strides = [1, 1]} : vector<16x32xf32> to vector<8x8xf32>
    %cst_90 = arith.constant dense<0.000000e+00> : vector<8x8xf32>
    %214 = tpu.matmul %211, %212, %cst_90 {dimension_numbers = #tpu.dot_dimension_numbers<[1], [1], [0], [0], [0, 0, 1, 0], [], []>} : vector<8x8xf32>, vector<8x8xf32>, vector<8x8xf32> -> vector<8x8xf32>
    %cst_91 = arith.constant dense<0xFF800000> : vector<8xf32>
    %215 = vector.multi_reduction <maximumf>, %214, %cst_91 [1] : vector<8x8xf32> to vector<8xf32>
    %216 = vector.shape_cast %215 : vector<8xf32> to vector<8x1xf32>
    %217 = vector.broadcast %216 : vector<8x1xf32> to vector<8x8xf32>
    %218 = arith.subf %214, %217 : vector<8x8xf32>
    %219 = math.exp %218 : vector<8x8xf32>
    %cst_92 = arith.constant dense<0.000000e+00> : vector<8xf32>
    %220 = vector.multi_reduction <add>, %219, %cst_92 [1] : vector<8x8xf32> to vector<8xf32>
    %221 = vector.shape_cast %220 : vector<8xf32> to vector<8x1xf32>
    %222 = tpu.reciprocal %221 {approx = true} : vector<8x1xf32> -> vector<8x1xf32>
    %223 = vector.broadcast %222 : vector<8x1xf32> to vector<8x8xf32>
    %224 = arith.mulf %219, %223 : vector<8x8xf32>
    %cst_93 = arith.constant dense<0.000000e+00> : vector<8x8xf32>
    %225 = tpu.matmul %224, %213, %cst_93 {dimension_numbers = #tpu.dot_dimension_numbers<[1], [0], [0], [1], [0, 0, 1, 1], [], []>} : vector<8x8xf32>, vector<8x8xf32>, vector<8x8xf32> -> vector<8x8xf32>
    %c0_94 = arith.constant 0 : index
    %c16_95 = arith.constant 16 : index
    %226 = vector.load %arg23[%c0_94, %c16_95] : memref<16x32xf32, #tpu.memory_space<vmem>>, vector<8x8xf32>
    tpu.vector_store %arg23[%c0_94, %c16_95], %225 {strides = array<i32>} : memref<16x32xf32, #tpu.memory_space<vmem>>, vector<8x8xf32>,
    %227 = vector.extract_strided_slice %171 {offsets = [0, 24], sizes = [8, 8], strides = [1, 1]} : vector<16x32xf32> to vector<8x8xf32>
    %228 = vector.extract_strided_slice %177 {offsets = [0, 24], sizes = [8, 8], strides = [1, 1]} : vector<16x32xf32> to vector<8x8xf32>
    %229 = vector.extract_strided_slice %178 {offsets = [0, 24], sizes = [8, 8], strides = [1, 1]} : vector<16x32xf32> to vector<8x8xf32>
    %cst_96 = arith.constant dense<0.000000e+00> : vector<8x8xf32>
    %230 = tpu.matmul %227, %228, %cst_96 {dimension_numbers = #tpu.dot_dimension_numbers<[1], [1], [0], [0], [0, 0, 1, 0], [], []>} : vector<8x8xf32>, vector<8x8xf32>, vector<8x8xf32> -> vector<8x8xf32>
    %cst_97 = arith.constant dense<0xFF800000> : vector<8xf32>
    %231 = vector.multi_reduction <maximumf>, %230, %cst_97 [1] : vector<8x8xf32> to vector<8xf32>
    %232 = vector.shape_cast %231 : vector<8xf32> to vector<8x1xf32>
    %233 = vector.broadcast %232 : vector<8x1xf32> to vector<8x8xf32>
    %234 = arith.subf %230, %233 : vector<8x8xf32>
    %235 = math.exp %234 : vector<8x8xf32>
    %cst_98 = arith.constant dense<0.000000e+00> : vector<8xf32>
    %236 = vector.multi_reduction <add>, %235, %cst_98 [1] : vector<8x8xf32> to vector<8xf32>
    %237 = vector.shape_cast %236 : vector<8xf32> to vector<8x1xf32>
    %238 = tpu.reciprocal %237 {approx = true} : vector<8x1xf32> -> vector<8x1xf32>
    %239 = vector.broadcast %238 : vector<8x1xf32> to vector<8x8xf32>
    %240 = arith.mulf %235, %239 : vector<8x8xf32>
    %cst_99 = arith.constant dense<0.000000e+00> : vector<8x8xf32>
    %241 = tpu.matmul %240, %229, %cst_99 {dimension_numbers = #tpu.dot_dimension_numbers<[1], [0], [0], [1], [0, 0, 1, 1], [], []>} : vector<8x8xf32>, vector<8x8xf32>, vector<8x8xf32> -> vector<8x8xf32>
    %c0_100 = arith.constant 0 : index
    %c24_101 = arith.constant 24 : index
    %242 = vector.load %arg23[%c0_100, %c24_101] : memref<16x32xf32, #tpu.memory_space<vmem>>, vector<8x8xf32>
    tpu.vector_store %arg23[%c0_100, %c24_101], %241 {strides = array<i32>} : memref<16x32xf32, #tpu.memory_space<vmem>>, vector<8x8xf32>,
    %243 = vector.extract_strided_slice %171 {offsets = [8, 0], sizes = [8, 8], strides = [1, 1]} : vector<16x32xf32> to vector<8x8xf32>
    %244 = vector.extract_strided_slice %177 {offsets = [8, 0], sizes = [8, 8], strides = [1, 1]} : vector<16x32xf32> to vector<8x8xf32>
    %245 = vector.extract_strided_slice %178 {offsets = [8, 0], sizes = [8, 8], strides = [1, 1]} : vector<16x32xf32> to vector<8x8xf32>
    %cst_102 = arith.constant dense<0.000000e+00> : vector<8x8xf32>
    %246 = tpu.matmul %243, %244, %cst_102 {dimension_numbers = #tpu.dot_dimension_numbers<[1], [1], [0], [0], [0, 0, 1, 0], [], []>} : vector<8x8xf32>, vector<8x8xf32>, vector<8x8xf32> -> vector<8x8xf32>
    %cst_103 = arith.constant dense<0xFF800000> : vector<8xf32>
    %247 = vector.multi_reduction <maximumf>, %246, %cst_103 [1] : vector<8x8xf32> to vector<8xf32>
    %248 = vector.shape_cast %247 : vector<8xf32> to vector<8x1xf32>
    %249 = vector.broadcast %248 : vector<8x1xf32> to vector<8x8xf32>
    %250 = arith.subf %246, %249 : vector<8x8xf32>
    %251 = math.exp %250 : vector<8x8xf32>
    %cst_104 = arith.constant dense<0.000000e+00> : vector<8xf32>
    %252 = vector.multi_reduction <add>, %251, %cst_104 [1] : vector<8x8xf32> to vector<8xf32>
    %253 = vector.shape_cast %252 : vector<8xf32> to vector<8x1xf32>
    %254 = tpu.reciprocal %253 {approx = true} : vector<8x1xf32> -> vector<8x1xf32>
    %255 = vector.broadcast %254 : vector<8x1xf32> to vector<8x8xf32>
    %256 = arith.mulf %251, %255 : vector<8x8xf32>
    %cst_105 = arith.constant dense<0.000000e+00> : vector<8x8xf32>
    %257 = tpu.matmul %256, %245, %cst_105 {dimension_numbers = #tpu.dot_dimension_numbers<[1], [0], [0], [1], [0, 0, 1, 1], [], []>} : vector<8x8xf32>, vector<8x8xf32>, vector<8x8xf32> -> vector<8x8xf32>
    %c8_106 = arith.constant 8 : index
    %c0_107 = arith.constant 0 : index
    %258 = vector.load %arg23[%c8_106, %c0_107] : memref<16x32xf32, #tpu.memory_space<vmem>>, vector<8x8xf32>
    tpu.vector_store %arg23[%c8_106, %c0_107], %257 {strides = array<i32>} : memref<16x32xf32, #tpu.memory_space<vmem>>, vector<8x8xf32>,
    %259 = vector.extract_strided_slice %171 {offsets = [8, 8], sizes = [8, 8], strides = [1, 1]} : vector<16x32xf32> to vector<8x8xf32>
    %260 = vector.extract_strided_slice %177 {offsets = [8, 8], sizes = [8, 8], strides = [1, 1]} : vector<16x32xf32> to vector<8x8xf32>
    %261 = vector.extract_strided_slice %178 {offsets = [8, 8], sizes = [8, 8], strides = [1, 1]} : vector<16x32xf32> to vector<8x8xf32>
    %cst_108 = arith.constant dense<0.000000e+00> : vector<8x8xf32>
    %262 = tpu.matmul %259, %260, %cst_108 {dimension_numbers = #tpu.dot_dimension_numbers<[1], [1], [0], [0], [0, 0, 1, 0], [], []>} : vector<8x8xf32>, vector<8x8xf32>, vector<8x8xf32> -> vector<8x8xf32>
    %cst_109 = arith.constant dense<0xFF800000> : vector<8xf32>
    %263 = vector.multi_reduction <maximumf>, %262, %cst_109 [1] : vector<8x8xf32> to vector<8xf32>
    %264 = vector.shape_cast %263 : vector<8xf32> to vector<8x1xf32>
    %265 = vector.broadcast %264 : vector<8x1xf32> to vector<8x8xf32>
    %266 = arith.subf %262, %265 : vector<8x8xf32>
    %267 = math.exp %266 : vector<8x8xf32>
    %cst_110 = arith.constant dense<0.000000e+00> : vector<8xf32>
    %268 = vector.multi_reduction <add>, %267, %cst_110 [1] : vector<8x8xf32> to vector<8xf32>
    %269 = vector.shape_cast %268 : vector<8xf32> to vector<8x1xf32>
    %270 = tpu.reciprocal %269 {approx = true} : vector<8x1xf32> -> vector<8x1xf32>
    %271 = vector.broadcast %270 : vector<8x1xf32> to vector<8x8xf32>
    %272 = arith.mulf %267, %271 : vector<8x8xf32>
    %cst_111 = arith.constant dense<0.000000e+00> : vector<8x8xf32>
    %273 = tpu.matmul %272, %261, %cst_111 {dimension_numbers = #tpu.dot_dimension_numbers<[1], [0], [0], [1], [0, 0, 1, 1], [], []>} : vector<8x8xf32>, vector<8x8xf32>, vector<8x8xf32> -> vector<8x8xf32>
    %c8_112 = arith.constant 8 : index
    %c8_113 = arith.constant 8 : index
    %274 = vector.load %arg23[%c8_112, %c8_113] : memref<16x32xf32, #tpu.memory_space<vmem>>, vector<8x8xf32>
    tpu.vector_store %arg23[%c8_112, %c8_113], %273 {strides = array<i32>} : memref<16x32xf32, #tpu.memory_space<vmem>>, vector<8x8xf32>,
    %275 = vector.extract_strided_slice %171 {offsets = [8, 16], sizes = [8, 8], strides = [1, 1]} : vector<16x32xf32> to vector<8x8xf32>
    %276 = vector.extract_strided_slice %177 {offsets = [8, 16], sizes = [8, 8], strides = [1, 1]} : vector<16x32xf32> to vector<8x8xf32>
    %277 = vector.extract_strided_slice %178 {offsets = [8, 16], sizes = [8, 8], strides = [1, 1]} : vector<16x32xf32> to vector<8x8xf32>
    %cst_114 = arith.constant dense<0.000000e+00> : vector<8x8xf32>
    %278 = tpu.matmul %275, %276, %cst_114 {dimension_numbers = #tpu.dot_dimension_numbers<[1], [1], [0], [0], [0, 0, 1, 0], [], []>} : vector<8x8xf32>, vector<8x8xf32>, vector<8x8xf32> -> vector<8x8xf32>
    %cst_115 = arith.constant dense<0xFF800000> : vector<8xf32>
    %279 = vector.multi_reduction <maximumf>, %278, %cst_115 [1] : vector<8x8xf32> to vector<8xf32>
    %280 = vector.shape_cast %279 : vector<8xf32> to vector<8x1xf32>
    %281 = vector.broadcast %280 : vector<8x1xf32> to vector<8x8xf32>
    %282 = arith.subf %278, %281 : vector<8x8xf32>
    %283 = math.exp %282 : vector<8x8xf32>
    %cst_116 = arith.constant dense<0.000000e+00> : vector<8xf32>
    %284 = vector.multi_reduction <add>, %283, %cst_116 [1] : vector<8x8xf32> to vector<8xf32>
    %285 = vector.shape_cast %284 : vector<8xf32> to vector<8x1xf32>
    %286 = tpu.reciprocal %285 {approx = true} : vector<8x1xf32> -> vector<8x1xf32>
    %287 = vector.broadcast %286 : vector<8x1xf32> to vector<8x8xf32>
    %288 = arith.mulf %283, %287 : vector<8x8xf32>
    %cst_117 = arith.constant dense<0.000000e+00> : vector<8x8xf32>
    %289 = tpu.matmul %288, %277, %cst_117 {dimension_numbers = #tpu.dot_dimension_numbers<[1], [0], [0], [1], [0, 0, 1, 1], [], []>} : vector<8x8xf32>, vector<8x8xf32>, vector<8x8xf32> -> vector<8x8xf32>
    %c8_118 = arith.constant 8 : index
    %c16_119 = arith.constant 16 : index
    %290 = vector.load %arg23[%c8_118, %c16_119] : memref<16x32xf32, #tpu.memory_space<vmem>>, vector<8x8xf32>
    tpu.vector_store %arg23[%c8_118, %c16_119], %289 {strides = array<i32>} : memref<16x32xf32, #tpu.memory_space<vmem>>, vector<8x8xf32>,
    %291 = vector.extract_strided_slice %171 {offsets = [8, 24], sizes = [8, 8], strides = [1, 1]} : vector<16x32xf32> to vector<8x8xf32>
    %292 = vector.extract_strided_slice %177 {offsets = [8, 24], sizes = [8, 8], strides = [1, 1]} : vector<16x32xf32> to vector<8x8xf32>
    %293 = vector.extract_strided_slice %178 {offsets = [8, 24], sizes = [8, 8], strides = [1, 1]} : vector<16x32xf32> to vector<8x8xf32>
    %cst_120 = arith.constant dense<0.000000e+00> : vector<8x8xf32>
    %294 = tpu.matmul %291, %292, %cst_120 {dimension_numbers = #tpu.dot_dimension_numbers<[1], [1], [0], [0], [0, 0, 1, 0], [], []>} : vector<8x8xf32>, vector<8x8xf32>, vector<8x8xf32> -> vector<8x8xf32>
    %cst_121 = arith.constant dense<0xFF800000> : vector<8xf32>
    %295 = vector.multi_reduction <maximumf>, %294, %cst_121 [1] : vector<8x8xf32> to vector<8xf32>
    %296 = vector.shape_cast %295 : vector<8xf32> to vector<8x1xf32>
    %297 = vector.broadcast %296 : vector<8x1xf32> to vector<8x8xf32>
    %298 = arith.subf %294, %297 : vector<8x8xf32>
    %299 = math.exp %298 : vector<8x8xf32>
    %cst_122 = arith.constant dense<0.000000e+00> : vector<8xf32>
    %300 = vector.multi_reduction <add>, %299, %cst_122 [1] : vector<8x8xf32> to vector<8xf32>
    %301 = vector.shape_cast %300 : vector<8xf32> to vector<8x1xf32>
    %302 = tpu.reciprocal %301 {approx = true} : vector<8x1xf32> -> vector<8x1xf32>
    %303 = vector.broadcast %302 : vector<8x1xf32> to vector<8x8xf32>
    %304 = arith.mulf %299, %303 : vector<8x8xf32>
    %cst_123 = arith.constant dense<0.000000e+00> : vector<8x8xf32>
    %305 = tpu.matmul %304, %293, %cst_123 {dimension_numbers = #tpu.dot_dimension_numbers<[1], [0], [0], [1], [0, 0, 1, 1], [], []>} : vector<8x8xf32>, vector<8x8xf32>, vector<8x8xf32> -> vector<8x8xf32>
    %c8_124 = arith.constant 8 : index
    %c24_125 = arith.constant 24 : index
    %306 = vector.load %arg23[%c8_124, %c24_125] : memref<16x32xf32, #tpu.memory_space<vmem>>, vector<8x8xf32>
    tpu.vector_store %arg23[%c8_124, %c24_125], %305 {strides = array<i32>} : memref<16x32xf32, #tpu.memory_space<vmem>>, vector<8x8xf32>,
    %c0_126 = arith.constant 0 : index
    %c0_127 = arith.constant 0 : index
    %307 = vector.load %arg23[%c0_126, %c0_127] : memref<16x32xf32, #tpu.memory_space<vmem>>, vector<16x32xf32>
    %c0_128 = arith.constant 0 : index
    %c0_129 = arith.constant 0 : index
    %308 = vector.load %arg12[%c0_128, %c0_129] : memref<32x32xf32, #tpu.memory_space<vmem>>, vector<32x32xf32>
    %cst_130 = arith.constant dense<0.000000e+00> : vector<16x32xf32>
    %309 = tpu.matmul %307, %308, %cst_130 {dimension_numbers = #tpu.dot_dimension_numbers<[1], [0], [0], [1], [0, 0, 1, 1], [], []>} : vector<16x32xf32>, vector<32x32xf32>, vector<16x32xf32> -> vector<16x32xf32>
    %c0_131 = arith.constant 0 : index
    %c0_132 = arith.constant 0 : index
    %310 = vector.load %arg13[%c0_131, %c0_132] : memref<1x32xf32, #tpu.memory_space<vmem>>, vector<1x32xf32>
    %311 = vector.broadcast %310 : vector<1x32xf32> to vector<16x32xf32>
    %312 = arith.addf %309, %311 : vector<16x32xf32>
    %313 = arith.addf %166, %312 : vector<16x32xf32>
    %c0_133 = arith.constant 0 : index
    %c0_134 = arith.constant 0 : index
    %314 = vector.load %arg14[%c0_133, %c0_134] : memref<1x32xf32, #tpu.memory_space<vmem>>, vector<1x32xf32>
    %c0_135 = arith.constant 0 : index
    %c0_136 = arith.constant 0 : index
    %315 = vector.load %arg15[%c0_135, %c0_136] : memref<1x32xf32, #tpu.memory_space<vmem>>, vector<1x32xf32>
    %cst_137 = arith.constant dense<0.000000e+00> : vector<16xf32>
    %316 = vector.multi_reduction <add>, %313, %cst_137 [1] : vector<16x32xf32> to vector<16xf32>
    %317 = vector.shape_cast %316 : vector<16xf32> to vector<16x1xf32>
    %cst_138 = arith.constant 3.200000e+01 : f32
    %318 = vector.broadcast %cst_138 : f32 to vector<16x1xf32>
    %319 = arith.divf %317, %318 : vector<16x1xf32>
    %320 = vector.broadcast %319 : vector<16x1xf32> to vector<16x32xf32>
    %321 = arith.subf %313, %320 : vector<16x32xf32>
    %322 = arith.mulf %321, %321 : vector<16x32xf32>
    %cst_139 = arith.constant dense<0.000000e+00> : vector<16xf32>
    %323 = vector.multi_reduction <add>, %322, %cst_139 [1] : vector<16x32xf32> to vector<16xf32>
    %324 = vector.shape_cast %323 : vector<16xf32> to vector<16x1xf32>
    %cst_140 = arith.constant 3.200000e+01 : f32
    %325 = vector.broadcast %cst_140 : f32 to vector<16x1xf32>
    %326 = arith.divf %324, %325 : vector<16x1xf32>
    %cst_141 = arith.constant 9.99999974E-6 : f32
    %327 = vector.broadcast %cst_141 : f32 to vector<16x1xf32>
    %328 = arith.addf %326, %327 : vector<16x1xf32>
    %329 = math.rsqrt %328 : vector<16x1xf32>
    %330 = vector.broadcast %329 : vector<16x1xf32> to vector<16x32xf32>
    %331 = arith.mulf %321, %330 : vector<16x32xf32>
    %332 = vector.broadcast %314 : vector<1x32xf32> to vector<16x32xf32>
    %333 = arith.mulf %331, %332 : vector<16x32xf32>
    %334 = vector.broadcast %315 : vector<1x32xf32> to vector<16x32xf32>
    %335 = arith.addf %333, %334 : vector<16x32xf32>
    %c0_142 = arith.constant 0 : index
    %c0_143 = arith.constant 0 : index
    %336 = vector.load %arg16[%c0_142, %c0_143] : memref<32x64xf32, #tpu.memory_space<vmem>>, vector<32x64xf32>
    %cst_144 = arith.constant dense<0.000000e+00> : vector<16x64xf32>
    %337 = tpu.matmul %335, %336, %cst_144 {dimension_numbers = #tpu.dot_dimension_numbers<[1], [0], [0], [1], [0, 0, 1, 1], [], []>} : vector<16x32xf32>, vector<32x64xf32>, vector<16x64xf32> -> vector<16x64xf32>
    %c0_145 = arith.constant 0 : index
    %c0_146 = arith.constant 0 : index
    %338 = vector.load %arg17[%c0_145, %c0_146] : memref<1x64xf32, #tpu.memory_space<vmem>>, vector<1x64xf32>
    %339 = vector.broadcast %338 : vector<1x64xf32> to vector<16x64xf32>
    %340 = arith.addf %337, %339 : vector<16x64xf32>
    %cst_147 = arith.constant 0.000000e+00 : f32
    %341 = vector.broadcast %cst_147 : f32 to vector<16x64xf32>
    %342 = arith.maximumf %340, %341 : vector<16x64xf32>
    %c0_148 = arith.constant 0 : index
    %c0_149 = arith.constant 0 : index
    %343 = vector.load %arg18[%c0_148, %c0_149] : memref<64x32xf32, #tpu.memory_space<vmem>>, vector<64x32xf32>
    %cst_150 = arith.constant dense<0.000000e+00> : vector<16x32xf32>
    %344 = tpu.matmul %342, %343, %cst_150 {dimension_numbers = #tpu.dot_dimension_numbers<[1], [0], [0], [1], [0, 0, 1, 1], [], []>} : vector<16x64xf32>, vector<64x32xf32>, vector<16x32xf32> -> vector<16x32xf32>
    %c0_151 = arith.constant 0 : index
    %c0_152 = arith.constant 0 : index
    %345 = vector.load %arg19[%c0_151, %c0_152] : memref<1x32xf32, #tpu.memory_space<vmem>>, vector<1x32xf32>
    %346 = vector.broadcast %345 : vector<1x32xf32> to vector<16x32xf32>
    %347 = arith.addf %344, %346 : vector<16x32xf32>
    %348 = arith.addf %335, %347 : vector<16x32xf32>
    %c0_153 = arith.constant 0 : index
    %c0_154 = arith.constant 0 : index
    %349 = vector.load %arg20[%c0_153, %c0_154] : memref<1x32xf32, #tpu.memory_space<vmem>>, vector<1x32xf32>
    %c0_155 = arith.constant 0 : index
    %c0_156 = arith.constant 0 : index
    %350 = vector.load %arg21[%c0_155, %c0_156] : memref<1x32xf32, #tpu.memory_space<vmem>>, vector<1x32xf32>
    %cst_157 = arith.constant dense<0.000000e+00> : vector<16xf32>
    %351 = vector.multi_reduction <add>, %348, %cst_157 [1] : vector<16x32xf32> to vector<16xf32>
    %352 = vector.shape_cast %351 : vector<16xf32> to vector<16x1xf32>
    %cst_158 = arith.constant 3.200000e+01 : f32
    %353 = vector.broadcast %cst_158 : f32 to vector<16x1xf32>
    %354 = arith.divf %352, %353 : vector<16x1xf32>
    %355 = vector.broadcast %354 : vector<16x1xf32> to vector<16x32xf32>
    %356 = arith.subf %348, %355 : vector<16x32xf32>
    %357 = arith.mulf %356, %356 : vector<16x32xf32>
    %cst_159 = arith.constant dense<0.000000e+00> : vector<16xf32>
    %358 = vector.multi_reduction <add>, %357, %cst_159 [1] : vector<16x32xf32> to vector<16xf32>
    %359 = vector.shape_cast %358 : vector<16xf32> to vector<16x1xf32>
    %cst_160 = arith.constant 3.200000e+01 : f32
    %360 = vector.broadcast %cst_160 : f32 to vector<16x1xf32>
    %361 = arith.divf %359, %360 : vector<16x1xf32>
    %cst_161 = arith.constant 9.99999974E-6 : f32
    %362 = vector.broadcast %cst_161 : f32 to vector<16x1xf32>
    %363 = arith.addf %361, %362 : vector<16x1xf32>
    %364 = math.rsqrt %363 : vector<16x1xf32>
    %365 = vector.broadcast %364 : vector<16x1xf32> to vector<16x32xf32>
    %366 = arith.mulf %356, %365 : vector<16x32xf32>
    %367 = vector.broadcast %349 : vector<1x32xf32> to vector<16x32xf32>
    %368 = arith.mulf %366, %367 : vector<16x32xf32>
    %369 = vector.broadcast %350 : vector<1x32xf32> to vector<16x32xf32>
    %370 = arith.addf %368, %369 : vector<16x32xf32>
    %c0_162 = arith.constant 0 : index
    %c0_163 = arith.constant 0 : index
    %371 = vector.load %arg22[%c0_162, %c0_163] : memref<16x32xf32, #tpu.memory_space<vmem>>, vector<16x32xf32>
    tpu.vector_store %arg22[%c0_162, %c0_163], %370 {strides = array<i32>} : memref<16x32xf32, #tpu.memory_space<vmem>>, vector<16x32xf32>,
    return
  }
}

module attributes {stable_mosaic.version = 11 : i64} {
  func.func @_encoder_layer_kernel(%arg0: memref<16x32xf32, #tpu.memory_space<vmem>>, %arg1: memref<32x96xf32, #tpu.memory_space<vmem>>, %arg2: memref<1x96xf32, #tpu.memory_space<vmem>>, %arg3: memref<32x32xf32, #tpu.memory_space<vmem>>, %arg4: memref<1x32xf32, #tpu.memory_space<vmem>>, %arg5: memref<1x32xf32, #tpu.memory_space<vmem>>, %arg6: memref<1x32xf32, #tpu.memory_space<vmem>>, %arg7: memref<32x64xf32, #tpu.memory_space<vmem>>, %arg8: memref<1x64xf32, #tpu.memory_space<vmem>>, %arg9: memref<64x32xf32, #tpu.memory_space<vmem>>, %arg10: memref<1x32xf32, #tpu.memory_space<vmem>>, %arg11: memref<1x32xf32, #tpu.memory_space<vmem>>, %arg12: memref<1x32xf32, #tpu.memory_space<vmem>>, %arg13: memref<16x32xf32, #tpu.memory_space<vmem>>, %arg14: memref<16x32xf32, #tpu.memory_space<vmem>>) attributes {dimension_semantics = [], scalar_prefetch = 0 : i64, scratch_operands = 1 : i64, tpu.core_type = #tpu.core_type<tc>} {
    %c0 = arith.constant 0 : index
    %c0_0 = arith.constant 0 : index
    %0 = vector.load %arg0[%c0, %c0_0] : memref<16x32xf32, #tpu.memory_space<vmem>>, vector<16x32xf32>
    %c0_1 = arith.constant 0 : index
    %c0_2 = arith.constant 0 : index
    %1 = vector.load %arg1[%c0_1, %c0_2] : memref<32x96xf32, #tpu.memory_space<vmem>>, vector<32x96xf32>
    %cst = arith.constant dense<0.000000e+00> : vector<16x96xf32>
    %2 = tpu.matmul %0, %1, %cst {dimension_numbers = #tpu.dot_dimension_numbers<[1], [0], [0], [1], [0, 0, 1, 1], [], []>} : vector<16x32xf32>, vector<32x96xf32>, vector<16x96xf32> -> vector<16x96xf32>
    %c0_3 = arith.constant 0 : index
    %c0_4 = arith.constant 0 : index
    %3 = vector.load %arg2[%c0_3, %c0_4] : memref<1x96xf32, #tpu.memory_space<vmem>>, vector<1x96xf32>
    %4 = vector.broadcast %3 : vector<1x96xf32> to vector<16x96xf32>
    %5 = arith.addf %2, %4 : vector<16x96xf32>
    %6 = vector.extract_strided_slice %5 {offsets = [0, 0], sizes = [16, 32], strides = [1, 1]} : vector<16x96xf32> to vector<16x32xf32>
    %7 = vector.extract_strided_slice %5 {offsets = [0, 32], sizes = [16, 32], strides = [1, 1]} : vector<16x96xf32> to vector<16x32xf32>
    %8 = vector.extract_strided_slice %5 {offsets = [0, 64], sizes = [16, 32], strides = [1, 1]} : vector<16x96xf32> to vector<16x32xf32>
    %9 = vector.extract_strided_slice %6 {offsets = [0, 0], sizes = [8, 8], strides = [1, 1]} : vector<16x32xf32> to vector<8x8xf32>
    %10 = vector.extract_strided_slice %7 {offsets = [0, 0], sizes = [8, 8], strides = [1, 1]} : vector<16x32xf32> to vector<8x8xf32>
    %11 = vector.extract_strided_slice %8 {offsets = [0, 0], sizes = [8, 8], strides = [1, 1]} : vector<16x32xf32> to vector<8x8xf32>
    %cst_5 = arith.constant dense<0.000000e+00> : vector<8x8xf32>
    %12 = tpu.matmul %9, %10, %cst_5 {dimension_numbers = #tpu.dot_dimension_numbers<[1], [1], [0], [0], [0, 0, 1, 0], [], []>} : vector<8x8xf32>, vector<8x8xf32>, vector<8x8xf32> -> vector<8x8xf32>
    %cst_6 = arith.constant dense<0xFF800000> : vector<8xf32>
    %13 = vector.multi_reduction <maximumf>, %12, %cst_6 [1] : vector<8x8xf32> to vector<8xf32>
    %14 = vector.shape_cast %13 : vector<8xf32> to vector<8x1xf32>
    %15 = vector.broadcast %14 : vector<8x1xf32> to vector<8x8xf32>
    %16 = arith.subf %12, %15 : vector<8x8xf32>
    %17 = math.exp %16 : vector<8x8xf32>
    %cst_7 = arith.constant dense<0.000000e+00> : vector<8xf32>
    %18 = vector.multi_reduction <add>, %17, %cst_7 [1] : vector<8x8xf32> to vector<8xf32>
    %19 = vector.shape_cast %18 : vector<8xf32> to vector<8x1xf32>
    %20 = tpu.reciprocal %19 {approx = true} : vector<8x1xf32> -> vector<8x1xf32>
    %21 = vector.broadcast %20 : vector<8x1xf32> to vector<8x8xf32>
    %22 = arith.mulf %17, %21 : vector<8x8xf32>
    %cst_8 = arith.constant dense<0.000000e+00> : vector<8x8xf32>
    %23 = tpu.matmul %22, %11, %cst_8 {dimension_numbers = #tpu.dot_dimension_numbers<[1], [0], [0], [1], [0, 0, 1, 1], [], []>} : vector<8x8xf32>, vector<8x8xf32>, vector<8x8xf32> -> vector<8x8xf32>
    %c0_9 = arith.constant 0 : index
    %c0_10 = arith.constant 0 : index
    %24 = vector.load %arg14[%c0_9, %c0_10] : memref<16x32xf32, #tpu.memory_space<vmem>>, vector<8x8xf32>
    tpu.vector_store %arg14[%c0_9, %c0_10], %23 {strides = array<i32>} : memref<16x32xf32, #tpu.memory_space<vmem>>, vector<8x8xf32>,
    %25 = vector.extract_strided_slice %6 {offsets = [0, 8], sizes = [8, 8], strides = [1, 1]} : vector<16x32xf32> to vector<8x8xf32>
    %26 = vector.extract_strided_slice %7 {offsets = [0, 8], sizes = [8, 8], strides = [1, 1]} : vector<16x32xf32> to vector<8x8xf32>
    %27 = vector.extract_strided_slice %8 {offsets = [0, 8], sizes = [8, 8], strides = [1, 1]} : vector<16x32xf32> to vector<8x8xf32>
    %cst_11 = arith.constant dense<0.000000e+00> : vector<8x8xf32>
    %28 = tpu.matmul %25, %26, %cst_11 {dimension_numbers = #tpu.dot_dimension_numbers<[1], [1], [0], [0], [0, 0, 1, 0], [], []>} : vector<8x8xf32>, vector<8x8xf32>, vector<8x8xf32> -> vector<8x8xf32>
    %cst_12 = arith.constant dense<0xFF800000> : vector<8xf32>
    %29 = vector.multi_reduction <maximumf>, %28, %cst_12 [1] : vector<8x8xf32> to vector<8xf32>
    %30 = vector.shape_cast %29 : vector<8xf32> to vector<8x1xf32>
    %31 = vector.broadcast %30 : vector<8x1xf32> to vector<8x8xf32>
    %32 = arith.subf %28, %31 : vector<8x8xf32>
    %33 = math.exp %32 : vector<8x8xf32>
    %cst_13 = arith.constant dense<0.000000e+00> : vector<8xf32>
    %34 = vector.multi_reduction <add>, %33, %cst_13 [1] : vector<8x8xf32> to vector<8xf32>
    %35 = vector.shape_cast %34 : vector<8xf32> to vector<8x1xf32>
    %36 = tpu.reciprocal %35 {approx = true} : vector<8x1xf32> -> vector<8x1xf32>
    %37 = vector.broadcast %36 : vector<8x1xf32> to vector<8x8xf32>
    %38 = arith.mulf %33, %37 : vector<8x8xf32>
    %cst_14 = arith.constant dense<0.000000e+00> : vector<8x8xf32>
    %39 = tpu.matmul %38, %27, %cst_14 {dimension_numbers = #tpu.dot_dimension_numbers<[1], [0], [0], [1], [0, 0, 1, 1], [], []>} : vector<8x8xf32>, vector<8x8xf32>, vector<8x8xf32> -> vector<8x8xf32>
    %c0_15 = arith.constant 0 : index
    %c8 = arith.constant 8 : index
    %40 = vector.load %arg14[%c0_15, %c8] : memref<16x32xf32, #tpu.memory_space<vmem>>, vector<8x8xf32>
    tpu.vector_store %arg14[%c0_15, %c8], %39 {strides = array<i32>} : memref<16x32xf32, #tpu.memory_space<vmem>>, vector<8x8xf32>,
    %41 = vector.extract_strided_slice %6 {offsets = [0, 16], sizes = [8, 8], strides = [1, 1]} : vector<16x32xf32> to vector<8x8xf32>
    %42 = vector.extract_strided_slice %7 {offsets = [0, 16], sizes = [8, 8], strides = [1, 1]} : vector<16x32xf32> to vector<8x8xf32>
    %43 = vector.extract_strided_slice %8 {offsets = [0, 16], sizes = [8, 8], strides = [1, 1]} : vector<16x32xf32> to vector<8x8xf32>
    %cst_16 = arith.constant dense<0.000000e+00> : vector<8x8xf32>
    %44 = tpu.matmul %41, %42, %cst_16 {dimension_numbers = #tpu.dot_dimension_numbers<[1], [1], [0], [0], [0, 0, 1, 0], [], []>} : vector<8x8xf32>, vector<8x8xf32>, vector<8x8xf32> -> vector<8x8xf32>
    %cst_17 = arith.constant dense<0xFF800000> : vector<8xf32>
    %45 = vector.multi_reduction <maximumf>, %44, %cst_17 [1] : vector<8x8xf32> to vector<8xf32>
    %46 = vector.shape_cast %45 : vector<8xf32> to vector<8x1xf32>
    %47 = vector.broadcast %46 : vector<8x1xf32> to vector<8x8xf32>
    %48 = arith.subf %44, %47 : vector<8x8xf32>
    %49 = math.exp %48 : vector<8x8xf32>
    %cst_18 = arith.constant dense<0.000000e+00> : vector<8xf32>
    %50 = vector.multi_reduction <add>, %49, %cst_18 [1] : vector<8x8xf32> to vector<8xf32>
    %51 = vector.shape_cast %50 : vector<8xf32> to vector<8x1xf32>
    %52 = tpu.reciprocal %51 {approx = true} : vector<8x1xf32> -> vector<8x1xf32>
    %53 = vector.broadcast %52 : vector<8x1xf32> to vector<8x8xf32>
    %54 = arith.mulf %49, %53 : vector<8x8xf32>
    %cst_19 = arith.constant dense<0.000000e+00> : vector<8x8xf32>
    %55 = tpu.matmul %54, %43, %cst_19 {dimension_numbers = #tpu.dot_dimension_numbers<[1], [0], [0], [1], [0, 0, 1, 1], [], []>} : vector<8x8xf32>, vector<8x8xf32>, vector<8x8xf32> -> vector<8x8xf32>
    %c0_20 = arith.constant 0 : index
    %c16 = arith.constant 16 : index
    %56 = vector.load %arg14[%c0_20, %c16] : memref<16x32xf32, #tpu.memory_space<vmem>>, vector<8x8xf32>
    tpu.vector_store %arg14[%c0_20, %c16], %55 {strides = array<i32>} : memref<16x32xf32, #tpu.memory_space<vmem>>, vector<8x8xf32>,
    %57 = vector.extract_strided_slice %6 {offsets = [0, 24], sizes = [8, 8], strides = [1, 1]} : vector<16x32xf32> to vector<8x8xf32>
    %58 = vector.extract_strided_slice %7 {offsets = [0, 24], sizes = [8, 8], strides = [1, 1]} : vector<16x32xf32> to vector<8x8xf32>
    %59 = vector.extract_strided_slice %8 {offsets = [0, 24], sizes = [8, 8], strides = [1, 1]} : vector<16x32xf32> to vector<8x8xf32>
    %cst_21 = arith.constant dense<0.000000e+00> : vector<8x8xf32>
    %60 = tpu.matmul %57, %58, %cst_21 {dimension_numbers = #tpu.dot_dimension_numbers<[1], [1], [0], [0], [0, 0, 1, 0], [], []>} : vector<8x8xf32>, vector<8x8xf32>, vector<8x8xf32> -> vector<8x8xf32>
    %cst_22 = arith.constant dense<0xFF800000> : vector<8xf32>
    %61 = vector.multi_reduction <maximumf>, %60, %cst_22 [1] : vector<8x8xf32> to vector<8xf32>
    %62 = vector.shape_cast %61 : vector<8xf32> to vector<8x1xf32>
    %63 = vector.broadcast %62 : vector<8x1xf32> to vector<8x8xf32>
    %64 = arith.subf %60, %63 : vector<8x8xf32>
    %65 = math.exp %64 : vector<8x8xf32>
    %cst_23 = arith.constant dense<0.000000e+00> : vector<8xf32>
    %66 = vector.multi_reduction <add>, %65, %cst_23 [1] : vector<8x8xf32> to vector<8xf32>
    %67 = vector.shape_cast %66 : vector<8xf32> to vector<8x1xf32>
    %68 = tpu.reciprocal %67 {approx = true} : vector<8x1xf32> -> vector<8x1xf32>
    %69 = vector.broadcast %68 : vector<8x1xf32> to vector<8x8xf32>
    %70 = arith.mulf %65, %69 : vector<8x8xf32>
    %cst_24 = arith.constant dense<0.000000e+00> : vector<8x8xf32>
    %71 = tpu.matmul %70, %59, %cst_24 {dimension_numbers = #tpu.dot_dimension_numbers<[1], [0], [0], [1], [0, 0, 1, 1], [], []>} : vector<8x8xf32>, vector<8x8xf32>, vector<8x8xf32> -> vector<8x8xf32>
    %c0_25 = arith.constant 0 : index
    %c24 = arith.constant 24 : index
    %72 = vector.load %arg14[%c0_25, %c24] : memref<16x32xf32, #tpu.memory_space<vmem>>, vector<8x8xf32>
    tpu.vector_store %arg14[%c0_25, %c24], %71 {strides = array<i32>} : memref<16x32xf32, #tpu.memory_space<vmem>>, vector<8x8xf32>,
    %73 = vector.extract_strided_slice %6 {offsets = [8, 0], sizes = [8, 8], strides = [1, 1]} : vector<16x32xf32> to vector<8x8xf32>
    %74 = vector.extract_strided_slice %7 {offsets = [8, 0], sizes = [8, 8], strides = [1, 1]} : vector<16x32xf32> to vector<8x8xf32>
    %75 = vector.extract_strided_slice %8 {offsets = [8, 0], sizes = [8, 8], strides = [1, 1]} : vector<16x32xf32> to vector<8x8xf32>
    %cst_26 = arith.constant dense<0.000000e+00> : vector<8x8xf32>
    %76 = tpu.matmul %73, %74, %cst_26 {dimension_numbers = #tpu.dot_dimension_numbers<[1], [1], [0], [0], [0, 0, 1, 0], [], []>} : vector<8x8xf32>, vector<8x8xf32>, vector<8x8xf32> -> vector<8x8xf32>
    %cst_27 = arith.constant dense<0xFF800000> : vector<8xf32>
    %77 = vector.multi_reduction <maximumf>, %76, %cst_27 [1] : vector<8x8xf32> to vector<8xf32>
    %78 = vector.shape_cast %77 : vector<8xf32> to vector<8x1xf32>
    %79 = vector.broadcast %78 : vector<8x1xf32> to vector<8x8xf32>
    %80 = arith.subf %76, %79 : vector<8x8xf32>
    %81 = math.exp %80 : vector<8x8xf32>
    %cst_28 = arith.constant dense<0.000000e+00> : vector<8xf32>
    %82 = vector.multi_reduction <add>, %81, %cst_28 [1] : vector<8x8xf32> to vector<8xf32>
    %83 = vector.shape_cast %82 : vector<8xf32> to vector<8x1xf32>
    %84 = tpu.reciprocal %83 {approx = true} : vector<8x1xf32> -> vector<8x1xf32>
    %85 = vector.broadcast %84 : vector<8x1xf32> to vector<8x8xf32>
    %86 = arith.mulf %81, %85 : vector<8x8xf32>
    %cst_29 = arith.constant dense<0.000000e+00> : vector<8x8xf32>
    %87 = tpu.matmul %86, %75, %cst_29 {dimension_numbers = #tpu.dot_dimension_numbers<[1], [0], [0], [1], [0, 0, 1, 1], [], []>} : vector<8x8xf32>, vector<8x8xf32>, vector<8x8xf32> -> vector<8x8xf32>
    %c8_30 = arith.constant 8 : index
    %c0_31 = arith.constant 0 : index
    %88 = vector.load %arg14[%c8_30, %c0_31] : memref<16x32xf32, #tpu.memory_space<vmem>>, vector<8x8xf32>
    tpu.vector_store %arg14[%c8_30, %c0_31], %87 {strides = array<i32>} : memref<16x32xf32, #tpu.memory_space<vmem>>, vector<8x8xf32>,
    %89 = vector.extract_strided_slice %6 {offsets = [8, 8], sizes = [8, 8], strides = [1, 1]} : vector<16x32xf32> to vector<8x8xf32>
    %90 = vector.extract_strided_slice %7 {offsets = [8, 8], sizes = [8, 8], strides = [1, 1]} : vector<16x32xf32> to vector<8x8xf32>
    %91 = vector.extract_strided_slice %8 {offsets = [8, 8], sizes = [8, 8], strides = [1, 1]} : vector<16x32xf32> to vector<8x8xf32>
    %cst_32 = arith.constant dense<0.000000e+00> : vector<8x8xf32>
    %92 = tpu.matmul %89, %90, %cst_32 {dimension_numbers = #tpu.dot_dimension_numbers<[1], [1], [0], [0], [0, 0, 1, 0], [], []>} : vector<8x8xf32>, vector<8x8xf32>, vector<8x8xf32> -> vector<8x8xf32>
    %cst_33 = arith.constant dense<0xFF800000> : vector<8xf32>
    %93 = vector.multi_reduction <maximumf>, %92, %cst_33 [1] : vector<8x8xf32> to vector<8xf32>
    %94 = vector.shape_cast %93 : vector<8xf32> to vector<8x1xf32>
    %95 = vector.broadcast %94 : vector<8x1xf32> to vector<8x8xf32>
    %96 = arith.subf %92, %95 : vector<8x8xf32>
    %97 = math.exp %96 : vector<8x8xf32>
    %cst_34 = arith.constant dense<0.000000e+00> : vector<8xf32>
    %98 = vector.multi_reduction <add>, %97, %cst_34 [1] : vector<8x8xf32> to vector<8xf32>
    %99 = vector.shape_cast %98 : vector<8xf32> to vector<8x1xf32>
    %100 = tpu.reciprocal %99 {approx = true} : vector<8x1xf32> -> vector<8x1xf32>
    %101 = vector.broadcast %100 : vector<8x1xf32> to vector<8x8xf32>
    %102 = arith.mulf %97, %101 : vector<8x8xf32>
    %cst_35 = arith.constant dense<0.000000e+00> : vector<8x8xf32>
    %103 = tpu.matmul %102, %91, %cst_35 {dimension_numbers = #tpu.dot_dimension_numbers<[1], [0], [0], [1], [0, 0, 1, 1], [], []>} : vector<8x8xf32>, vector<8x8xf32>, vector<8x8xf32> -> vector<8x8xf32>
    %c8_36 = arith.constant 8 : index
    %c8_37 = arith.constant 8 : index
    %104 = vector.load %arg14[%c8_36, %c8_37] : memref<16x32xf32, #tpu.memory_space<vmem>>, vector<8x8xf32>
    tpu.vector_store %arg14[%c8_36, %c8_37], %103 {strides = array<i32>} : memref<16x32xf32, #tpu.memory_space<vmem>>, vector<8x8xf32>,
    %105 = vector.extract_strided_slice %6 {offsets = [8, 16], sizes = [8, 8], strides = [1, 1]} : vector<16x32xf32> to vector<8x8xf32>
    %106 = vector.extract_strided_slice %7 {offsets = [8, 16], sizes = [8, 8], strides = [1, 1]} : vector<16x32xf32> to vector<8x8xf32>
    %107 = vector.extract_strided_slice %8 {offsets = [8, 16], sizes = [8, 8], strides = [1, 1]} : vector<16x32xf32> to vector<8x8xf32>
    %cst_38 = arith.constant dense<0.000000e+00> : vector<8x8xf32>
    %108 = tpu.matmul %105, %106, %cst_38 {dimension_numbers = #tpu.dot_dimension_numbers<[1], [1], [0], [0], [0, 0, 1, 0], [], []>} : vector<8x8xf32>, vector<8x8xf32>, vector<8x8xf32> -> vector<8x8xf32>
    %cst_39 = arith.constant dense<0xFF800000> : vector<8xf32>
    %109 = vector.multi_reduction <maximumf>, %108, %cst_39 [1] : vector<8x8xf32> to vector<8xf32>
    %110 = vector.shape_cast %109 : vector<8xf32> to vector<8x1xf32>
    %111 = vector.broadcast %110 : vector<8x1xf32> to vector<8x8xf32>
    %112 = arith.subf %108, %111 : vector<8x8xf32>
    %113 = math.exp %112 : vector<8x8xf32>
    %cst_40 = arith.constant dense<0.000000e+00> : vector<8xf32>
    %114 = vector.multi_reduction <add>, %113, %cst_40 [1] : vector<8x8xf32> to vector<8xf32>
    %115 = vector.shape_cast %114 : vector<8xf32> to vector<8x1xf32>
    %116 = tpu.reciprocal %115 {approx = true} : vector<8x1xf32> -> vector<8x1xf32>
    %117 = vector.broadcast %116 : vector<8x1xf32> to vector<8x8xf32>
    %118 = arith.mulf %113, %117 : vector<8x8xf32>
    %cst_41 = arith.constant dense<0.000000e+00> : vector<8x8xf32>
    %119 = tpu.matmul %118, %107, %cst_41 {dimension_numbers = #tpu.dot_dimension_numbers<[1], [0], [0], [1], [0, 0, 1, 1], [], []>} : vector<8x8xf32>, vector<8x8xf32>, vector<8x8xf32> -> vector<8x8xf32>
    %c8_42 = arith.constant 8 : index
    %c16_43 = arith.constant 16 : index
    %120 = vector.load %arg14[%c8_42, %c16_43] : memref<16x32xf32, #tpu.memory_space<vmem>>, vector<8x8xf32>
    tpu.vector_store %arg14[%c8_42, %c16_43], %119 {strides = array<i32>} : memref<16x32xf32, #tpu.memory_space<vmem>>, vector<8x8xf32>,
    %121 = vector.extract_strided_slice %6 {offsets = [8, 24], sizes = [8, 8], strides = [1, 1]} : vector<16x32xf32> to vector<8x8xf32>
    %122 = vector.extract_strided_slice %7 {offsets = [8, 24], sizes = [8, 8], strides = [1, 1]} : vector<16x32xf32> to vector<8x8xf32>
    %123 = vector.extract_strided_slice %8 {offsets = [8, 24], sizes = [8, 8], strides = [1, 1]} : vector<16x32xf32> to vector<8x8xf32>
    %cst_44 = arith.constant dense<0.000000e+00> : vector<8x8xf32>
    %124 = tpu.matmul %121, %122, %cst_44 {dimension_numbers = #tpu.dot_dimension_numbers<[1], [1], [0], [0], [0, 0, 1, 0], [], []>} : vector<8x8xf32>, vector<8x8xf32>, vector<8x8xf32> -> vector<8x8xf32>
    %cst_45 = arith.constant dense<0xFF800000> : vector<8xf32>
    %125 = vector.multi_reduction <maximumf>, %124, %cst_45 [1] : vector<8x8xf32> to vector<8xf32>
    %126 = vector.shape_cast %125 : vector<8xf32> to vector<8x1xf32>
    %127 = vector.broadcast %126 : vector<8x1xf32> to vector<8x8xf32>
    %128 = arith.subf %124, %127 : vector<8x8xf32>
    %129 = math.exp %128 : vector<8x8xf32>
    %cst_46 = arith.constant dense<0.000000e+00> : vector<8xf32>
    %130 = vector.multi_reduction <add>, %129, %cst_46 [1] : vector<8x8xf32> to vector<8xf32>
    %131 = vector.shape_cast %130 : vector<8xf32> to vector<8x1xf32>
    %132 = tpu.reciprocal %131 {approx = true} : vector<8x1xf32> -> vector<8x1xf32>
    %133 = vector.broadcast %132 : vector<8x1xf32> to vector<8x8xf32>
    %134 = arith.mulf %129, %133 : vector<8x8xf32>
    %cst_47 = arith.constant dense<0.000000e+00> : vector<8x8xf32>
    %135 = tpu.matmul %134, %123, %cst_47 {dimension_numbers = #tpu.dot_dimension_numbers<[1], [0], [0], [1], [0, 0, 1, 1], [], []>} : vector<8x8xf32>, vector<8x8xf32>, vector<8x8xf32> -> vector<8x8xf32>
    %c8_48 = arith.constant 8 : index
    %c24_49 = arith.constant 24 : index
    %136 = vector.load %arg14[%c8_48, %c24_49] : memref<16x32xf32, #tpu.memory_space<vmem>>, vector<8x8xf32>
    tpu.vector_store %arg14[%c8_48, %c24_49], %135 {strides = array<i32>} : memref<16x32xf32, #tpu.memory_space<vmem>>, vector<8x8xf32>,
    %c0_50 = arith.constant 0 : index
    %c0_51 = arith.constant 0 : index
    %137 = vector.load %arg14[%c0_50, %c0_51] : memref<16x32xf32, #tpu.memory_space<vmem>>, vector<16x32xf32>
    %c0_52 = arith.constant 0 : index
    %c0_53 = arith.constant 0 : index
    %138 = vector.load %arg3[%c0_52, %c0_53] : memref<32x32xf32, #tpu.memory_space<vmem>>, vector<32x32xf32>
    %cst_54 = arith.constant dense<0.000000e+00> : vector<16x32xf32>
    %139 = tpu.matmul %137, %138, %cst_54 {dimension_numbers = #tpu.dot_dimension_numbers<[1], [0], [0], [1], [0, 0, 1, 1], [], []>} : vector<16x32xf32>, vector<32x32xf32>, vector<16x32xf32> -> vector<16x32xf32>
    %c0_55 = arith.constant 0 : index
    %c0_56 = arith.constant 0 : index
    %140 = vector.load %arg4[%c0_55, %c0_56] : memref<1x32xf32, #tpu.memory_space<vmem>>, vector<1x32xf32>
    %141 = vector.broadcast %140 : vector<1x32xf32> to vector<16x32xf32>
    %142 = arith.addf %139, %141 : vector<16x32xf32>
    %143 = arith.addf %0, %142 : vector<16x32xf32>
    %c0_57 = arith.constant 0 : index
    %c0_58 = arith.constant 0 : index
    %144 = vector.load %arg5[%c0_57, %c0_58] : memref<1x32xf32, #tpu.memory_space<vmem>>, vector<1x32xf32>
    %c0_59 = arith.constant 0 : index
    %c0_60 = arith.constant 0 : index
    %145 = vector.load %arg6[%c0_59, %c0_60] : memref<1x32xf32, #tpu.memory_space<vmem>>, vector<1x32xf32>
    %cst_61 = arith.constant dense<0.000000e+00> : vector<16xf32>
    %146 = vector.multi_reduction <add>, %143, %cst_61 [1] : vector<16x32xf32> to vector<16xf32>
    %147 = vector.shape_cast %146 : vector<16xf32> to vector<16x1xf32>
    %cst_62 = arith.constant 3.200000e+01 : f32
    %148 = vector.broadcast %cst_62 : f32 to vector<16x1xf32>
    %149 = arith.divf %147, %148 : vector<16x1xf32>
    %150 = vector.broadcast %149 : vector<16x1xf32> to vector<16x32xf32>
    %151 = arith.subf %143, %150 : vector<16x32xf32>
    %152 = arith.mulf %151, %151 : vector<16x32xf32>
    %cst_63 = arith.constant dense<0.000000e+00> : vector<16xf32>
    %153 = vector.multi_reduction <add>, %152, %cst_63 [1] : vector<16x32xf32> to vector<16xf32>
    %154 = vector.shape_cast %153 : vector<16xf32> to vector<16x1xf32>
    %cst_64 = arith.constant 3.200000e+01 : f32
    %155 = vector.broadcast %cst_64 : f32 to vector<16x1xf32>
    %156 = arith.divf %154, %155 : vector<16x1xf32>
    %cst_65 = arith.constant 9.99999974E-6 : f32
    %157 = vector.broadcast %cst_65 : f32 to vector<16x1xf32>
    %158 = arith.addf %156, %157 : vector<16x1xf32>
    %159 = math.rsqrt %158 : vector<16x1xf32>
    %160 = vector.broadcast %159 : vector<16x1xf32> to vector<16x32xf32>
    %161 = arith.mulf %151, %160 : vector<16x32xf32>
    %162 = vector.broadcast %144 : vector<1x32xf32> to vector<16x32xf32>
    %163 = arith.mulf %161, %162 : vector<16x32xf32>
    %164 = vector.broadcast %145 : vector<1x32xf32> to vector<16x32xf32>
    %165 = arith.addf %163, %164 : vector<16x32xf32>
    %c0_66 = arith.constant 0 : index
    %c0_67 = arith.constant 0 : index
    %166 = vector.load %arg7[%c0_66, %c0_67] : memref<32x64xf32, #tpu.memory_space<vmem>>, vector<32x64xf32>
    %cst_68 = arith.constant dense<0.000000e+00> : vector<16x64xf32>
    %167 = tpu.matmul %165, %166, %cst_68 {dimension_numbers = #tpu.dot_dimension_numbers<[1], [0], [0], [1], [0, 0, 1, 1], [], []>} : vector<16x32xf32>, vector<32x64xf32>, vector<16x64xf32> -> vector<16x64xf32>
    %c0_69 = arith.constant 0 : index
    %c0_70 = arith.constant 0 : index
    %168 = vector.load %arg8[%c0_69, %c0_70] : memref<1x64xf32, #tpu.memory_space<vmem>>, vector<1x64xf32>
    %169 = vector.broadcast %168 : vector<1x64xf32> to vector<16x64xf32>
    %170 = arith.addf %167, %169 : vector<16x64xf32>
    %cst_71 = arith.constant 0.000000e+00 : f32
    %171 = vector.broadcast %cst_71 : f32 to vector<16x64xf32>
    %172 = arith.maximumf %170, %171 : vector<16x64xf32>
    %c0_72 = arith.constant 0 : index
    %c0_73 = arith.constant 0 : index
    %173 = vector.load %arg9[%c0_72, %c0_73] : memref<64x32xf32, #tpu.memory_space<vmem>>, vector<64x32xf32>
    %cst_74 = arith.constant dense<0.000000e+00> : vector<16x32xf32>
    %174 = tpu.matmul %172, %173, %cst_74 {dimension_numbers = #tpu.dot_dimension_numbers<[1], [0], [0], [1], [0, 0, 1, 1], [], []>} : vector<16x64xf32>, vector<64x32xf32>, vector<16x32xf32> -> vector<16x32xf32>
    %c0_75 = arith.constant 0 : index
    %c0_76 = arith.constant 0 : index
    %175 = vector.load %arg10[%c0_75, %c0_76] : memref<1x32xf32, #tpu.memory_space<vmem>>, vector<1x32xf32>
    %176 = vector.broadcast %175 : vector<1x32xf32> to vector<16x32xf32>
    %177 = arith.addf %174, %176 : vector<16x32xf32>
    %178 = arith.addf %165, %177 : vector<16x32xf32>
    %c0_77 = arith.constant 0 : index
    %c0_78 = arith.constant 0 : index
    %179 = vector.load %arg11[%c0_77, %c0_78] : memref<1x32xf32, #tpu.memory_space<vmem>>, vector<1x32xf32>
    %c0_79 = arith.constant 0 : index
    %c0_80 = arith.constant 0 : index
    %180 = vector.load %arg12[%c0_79, %c0_80] : memref<1x32xf32, #tpu.memory_space<vmem>>, vector<1x32xf32>
    %cst_81 = arith.constant dense<0.000000e+00> : vector<16xf32>
    %181 = vector.multi_reduction <add>, %178, %cst_81 [1] : vector<16x32xf32> to vector<16xf32>
    %182 = vector.shape_cast %181 : vector<16xf32> to vector<16x1xf32>
    %cst_82 = arith.constant 3.200000e+01 : f32
    %183 = vector.broadcast %cst_82 : f32 to vector<16x1xf32>
    %184 = arith.divf %182, %183 : vector<16x1xf32>
    %185 = vector.broadcast %184 : vector<16x1xf32> to vector<16x32xf32>
    %186 = arith.subf %178, %185 : vector<16x32xf32>
    %187 = arith.mulf %186, %186 : vector<16x32xf32>
    %cst_83 = arith.constant dense<0.000000e+00> : vector<16xf32>
    %188 = vector.multi_reduction <add>, %187, %cst_83 [1] : vector<16x32xf32> to vector<16xf32>
    %189 = vector.shape_cast %188 : vector<16xf32> to vector<16x1xf32>
    %cst_84 = arith.constant 3.200000e+01 : f32
    %190 = vector.broadcast %cst_84 : f32 to vector<16x1xf32>
    %191 = arith.divf %189, %190 : vector<16x1xf32>
    %cst_85 = arith.constant 9.99999974E-6 : f32
    %192 = vector.broadcast %cst_85 : f32 to vector<16x1xf32>
    %193 = arith.addf %191, %192 : vector<16x1xf32>
    %194 = math.rsqrt %193 : vector<16x1xf32>
    %195 = vector.broadcast %194 : vector<16x1xf32> to vector<16x32xf32>
    %196 = arith.mulf %186, %195 : vector<16x32xf32>
    %197 = vector.broadcast %179 : vector<1x32xf32> to vector<16x32xf32>
    %198 = arith.mulf %196, %197 : vector<16x32xf32>
    %199 = vector.broadcast %180 : vector<1x32xf32> to vector<16x32xf32>
    %200 = arith.addf %198, %199 : vector<16x32xf32>
    %c0_86 = arith.constant 0 : index
    %c0_87 = arith.constant 0 : index
    %201 = vector.load %arg13[%c0_86, %c0_87] : memref<16x32xf32, #tpu.memory_space<vmem>>, vector<16x32xf32>
    tpu.vector_store %arg13[%c0_86, %c0_87], %200 {strides = array<i32>} : memref<16x32xf32, #tpu.memory_space<vmem>>, vector<16x32xf32>,
    return
  }
}

</mosaic_0001>

<llo_original>
// kernel: transformer_forward.2
$region0: #{transformer_forward.2}
  #allocation0 [shape = 'u32[]', space=smem, size = 0x4, offset = 0x4, fixed_abs, tag = 'smem constant byte address 0x4 - core index']
  #allocation1 [shape = 'u32[144,128]{1,0:T(1,128)}', space=vmem, size = 0x12000, scoped, tag = 'internal scratch']
  #allocation2 [shape = 'f32[16,32]{1,0:T(8,128)}', space=vmem, size = 0x2000, scoped, tag = 'scratch operand']
  %s0 = inlined_call_operand.vmem [shape: f32[16,32], index: 0, kind: input, shape index: {}]
  %s1 = inlined_call_operand.vmem [shape: f32[32,96], index: 1, kind: input, shape index: {}]
  %s2 = inlined_call_operand.vmem [shape: f32[1,96], index: 2, kind: input, shape index: {}]
  %s3 = inlined_call_operand.vmem [shape: f32[32,32], index: 3, kind: input, shape index: {}]
  %s4 = inlined_call_operand.vmem [shape: f32[1,32], index: 4, kind: input, shape index: {}]
  %s5 = inlined_call_operand.vmem [shape: f32[1,32], index: 5, kind: input, shape index: {}]
  %s6 = inlined_call_operand.vmem [shape: f32[1,32], index: 6, kind: input, shape index: {}]
  %s7 = inlined_call_operand.vmem [shape: f32[32,64], index: 7, kind: input, shape index: {}]
  %s8 = inlined_call_operand.vmem [shape: f32[1,64], index: 8, kind: input, shape index: {}]
  %s9 = inlined_call_operand.vmem [shape: f32[64,32], index: 9, kind: input, shape index: {}]
  %s10 = inlined_call_operand.vmem [shape: f32[1,32], index: 10, kind: input, shape index: {}]
  %s11 = inlined_call_operand.vmem [shape: f32[1,32], index: 11, kind: input, shape index: {}]
  %s12 = inlined_call_operand.vmem [shape: f32[1,32], index: 12, kind: input, shape index: {}]
  %s13 = inlined_call_operand.vmem [shape: f32[16,32], index: 13, kind: output, shape index: {}]
  %s14 = sld [smem:[#allocation0]]
  $region62: #{transformer_forward.2} parent=0
    _
  %s16 = ssub.s32 1, %s14
  %s17 = scalar_select 0, %s16, %s14
  // Predicated region
  $region2: #{transformer_forward.2} parent=0 // pred_check
    _
  $region3: #{transformer_forward.2} parent=0 // pred_check_branch
    %19 = sbr.rel (0) target = $region5
  $region4: #{transformer_forward.2} parent=0 // pred_region
    _
  $region5: #{transformer_forward.2} parent=0 // pred_fallthru
    _
  // Predicated region
  $region6: #{transformer_forward.2} parent=0 // pred_check
    _
  $region7: #{transformer_forward.2} parent=0 // pred_check_branch
    %21 = sbr.rel (0) target = $region9
  $region8: #{transformer_forward.2} parent=0 // pred_region
    _
  $region9: #{transformer_forward.2} parent=0 // pred_fallthru
    _
  // Predicated region
  $region10: #{transformer_forward.2} parent=0 // pred_check
    _
  $region11: #{transformer_forward.2} parent=0 // pred_check_branch
    %23 = sbr.rel (0) target = $region13
  $region12: #{transformer_forward.2} parent=0 // pred_region
    _
  $region13: #{transformer_forward.2} parent=0 // pred_fallthru
    _
  // Predicated region
  $region14: #{transformer_forward.2} parent=0 // pred_check
    _
  $region15: #{transformer_forward.2} parent=0 // pred_check_branch
    %25 = sbr.rel (0) target = $region17
  $region16: #{transformer_forward.2} parent=0 // pred_region
    _
  $region17: #{transformer_forward.2} parent=0 // pred_fallthru
    _
  // Predicated region
  $region18: #{transformer_forward.2} parent=0 // pred_check
    _
  $region19: #{transformer_forward.2} parent=0 // pred_check_branch
    %27 = sbr.rel (0) target = $region21
  $region20: #{transformer_forward.2} parent=0 // pred_region
    _
  $region21: #{transformer_forward.2} parent=0 // pred_fallthru
    _
  // Predicated region
  $region22: #{transformer_forward.2} parent=0 // pred_check
    _
  $region23: #{transformer_forward.2} parent=0 // pred_check_branch
    %29 = sbr.rel (0) target = $region25
  $region24: #{transformer_forward.2} parent=0 // pred_region
    _
  $region25: #{transformer_forward.2} parent=0 // pred_fallthru
    _
  // Predicated region
  $region26: #{transformer_forward.2} parent=0 // pred_check
    _
  $region27: #{transformer_forward.2} parent=0 // pred_check_branch
    %31 = sbr.rel (0) target = $region29
  $region28: #{transformer_forward.2} parent=0 // pred_region
    _
  $region29: #{transformer_forward.2} parent=0 // pred_fallthru
    _
  // Predicated region
  $region30: #{transformer_forward.2} parent=0 // pred_check
    _
  $region31: #{transformer_forward.2} parent=0 // pred_check_branch
    %33 = sbr.rel (0) target = $region33
  $region32: #{transformer_forward.2} parent=0 // pred_region
    _
  $region33: #{transformer_forward.2} parent=0 // pred_fallthru
    _
  // Predicated region
  $region34: #{transformer_forward.2} parent=0 // pred_check
    _
  $region35: #{transformer_forward.2} parent=0 // pred_check_branch
    %35 = sbr.rel (0) target = $region37
  $region36: #{transformer_forward.2} parent=0 // pred_region
    _
  $region37: #{transformer_forward.2} parent=0 // pred_fallthru
    _
  // Predicated region
  $region38: #{transformer_forward.2} parent=0 // pred_check
    _
  $region39: #{transformer_forward.2} parent=0 // pred_check_branch
    %37 = sbr.rel (0) target = $region41
  $region40: #{transformer_forward.2} parent=0 // pred_region
    _
  $region41: #{transformer_forward.2} parent=0 // pred_fallthru
    _
  // Predicated region
  $region42: #{transformer_forward.2} parent=0 // pred_check
    _
  $region43: #{transformer_forward.2} parent=0 // pred_check_branch
    %39 = sbr.rel (0) target = $region45
  $region44: #{transformer_forward.2} parent=0 // pred_region
    _
  $region45: #{transformer_forward.2} parent=0 // pred_fallthru
    _
  // Predicated region
  $region46: #{transformer_forward.2} parent=0 // pred_check
    _
  $region47: #{transformer_forward.2} parent=0 // pred_check_branch
    %41 = sbr.rel (0) target = $region49
  $region48: #{transformer_forward.2} parent=0 // pred_region
    _
  $region49: #{transformer_forward.2} parent=0 // pred_fallthru
    _
  // Predicated region
  $region50: #{transformer_forward.2} parent=0 // pred_check
    _
  $region51: #{transformer_forward.2} parent=0 // pred_check_branch
    %43 = sbr.rel (0) target = $region53
  $region52: #{transformer_forward.2} parent=0 // pred_region
    _
  $region53: #{transformer_forward.2} parent=0 // pred_fallthru
    _
  %v44 = vld [vmem:[%s0] sm:$0xff]
  %v45 = vld [vmem:[%s0 + $0x8] sm:$0xff]
  %v46 = vld [vmem:[%s1] sm:$0xff]
  %v47 = vld [vmem:[%s1 + $0x8] sm:$0xff]
  %v48 = vld [vmem:[%s1 + $0x10] sm:$0xff]
  %v49 = vld [vmem:[%s1 + $0x18] sm:$0xff]
  %v50 = vld [vmem:[%s2] sm:$0x1]
  %v52 = vlaneseq
  %v53 = vshrl.u32 %v52, 7
  %v54 = vsub.s32 0, %v53
  %v55 = vrot.slane %v50, %v54
  %vm57 = vcmask 261120
  %v59 = vsel %vm57, %v44, 0
  %v62 = vsel %vm57, %v45, 0
  %64 = vmatprep.subr.mxu0 0.0
  %65 = vmatpush1.msra.mxu0 0.0
  %66 = vmatprep.subr.mxu0 0.0
  %67 = vmatpush1.msra.mxu0 0.0
  %68 = vmatprep.subr.mxu0 0.0
  %69 = vmatpush1.msra.mxu0 0.0
  %70 = vmatprep.subr.mxu0 0.0
  %71 = vmatpush1.msra.mxu0 0.0
  %72 = vmatprep.subr.mxu0 0.0
  %73 = vmatpush1.msra.mxu0 0.0
  %74 = vmatprep.subr.mxu0 0.0
  %75 = vmatpush1.msra.mxu0 0.0
  %76 = vmatprep.subr.mxu0 0.0
  %77 = vmatpush1.msra.mxu0 0.0
  %78 = vmatprep.subr.mxu0 0.0
  %79 = vmatpush1.msra.mxu0 0.0
  %80 = vmatprep.subr.mxu0 0.0
  %81 = vmatpush1.msra.mxu0 0.0
  %82 = vmatprep.subr.mxu0 0.0
  %83 = vmatpush1.msra.mxu0 0.0
  %84 = vmatprep.subr.mxu0 0.0
  %85 = vmatpush1.msra.mxu0 0.0
  %86 = vmatprep.subr.mxu0 0.0
  %87 = vmatpush1.msra.mxu0 0.0
  %88 = vmatprep.subr.mxu0 0.0
  %89 = vmatpush1.msra.mxu0 %v49
  %90 = vmatprep.subr.mxu0 0.0
  %91 = vmatpush1.msra.mxu0 %v48
  %92 = vmatprep.subr.mxu0 0.0
  %93 = vmatpush1.msra.mxu0 %v47
  %94 = vmatprep.subr.mxu0 0.0
  %95 = vmatpush1.msra.mxu0 %v46
  %96 = vmatprep.subr.mxu0 0.0
  %97 = vmatpush2.msra.mxu0 0.0
  %98 = vmatprep.subr.mxu0 0.0
  %99 = vmatpush2.msra.mxu0 0.0
  %100 = vmatprep.subr.mxu0 0.0
  %101 = vmatpush2.msra.mxu0 0.0
  %102 = vmatprep.subr.mxu0 0.0
  %103 = vmatpush2.msra.mxu0 0.0
  %104 = vmatprep.subr.mxu0 0.0
  %105 = vmatpush2.msra.mxu0 0.0
  %106 = vmatprep.subr.mxu0 0.0
  %107 = vmatpush2.msra.mxu0 0.0
  %108 = vmatprep.subr.mxu0 0.0
  %109 = vmatpush2.msra.mxu0 0.0
  %110 = vmatprep.subr.mxu0 0.0
  %111 = vmatpush2.msra.mxu0 0.0
  %112 = vmatprep.subr.mxu0 0.0
  %113 = vmatpush2.msra.mxu0 0.0
  %114 = vmatprep.subr.mxu0 0.0
  %115 = vmatpush2.msra.mxu0 0.0
  %116 = vmatprep.subr.mxu0 0.0
  %117 = vmatpush2.msra.mxu0 0.0
  %118 = vmatprep.subr.mxu0 0.0
  %119 = vmatpush2.msra.mxu0 0.0
  %120 = vmatprep.subr.mxu0 0.0
  %121 = vmatpush2.msra.mxu0 0.0
  %122 = vmatprep.subr.mxu0 0.0
  %123 = vmatpush2.msra.mxu0 0.0
  %124 = vmatprep.subr.mxu0 0.0
  %125 = vmatpush2.msra.mxu0 0.0
  %126 = vmatprep.subr.mxu0 0.0
  %127 = vmatpush2.msra.mxu0 0.0
  %128 = vmatprep.mubr.f32.mxu0 0.0
  %129 = vmatmul.mubr.f32.gmra.mxu0 %v59
  %v130 = vpop.f32.mrf.mxu0
  %v131 = vadd.f32 %v55, %v130
  %v132 = vpop.f32.mrf.mxu0
  %133 = vmatprep.mubr.f32.mxu0 0.0
  %134 = vmatmul.mubr.f32.gmra.mxu0 %v62
  %v135 = vpop.f32.mrf.mxu0
  %v136 = vadd.f32 %v55, %v135
  %v137 = vpop.f32.mrf.mxu0
  %138 = vdwg.mxu0
  %140 = vrot.lane.b32.xlu0 %v131, 96
  %v141 = vpop.permute.xlu0 %140
  %vm142 = vcmask 64512
  %v143 = vsel %vm142, %v131, 0
  %v145 = vsel %vm142, %v141, 0
  %147 = vmatprep.subr.mxu0 0.0
  %148 = vmatpush1.xpose.msra.mxu0 0.0
  %149 = vmatprep.subr.mxu0 0.0
  %150 = vmatpush1.xpose.msra.mxu0 0.0
  %151 = vmatprep.subr.mxu0 0.0
  %152 = vmatpush1.xpose.msra.mxu0 0.0
  %153 = vmatprep.subr.mxu0 0.0
  %154 = vmatpush1.xpose.msra.mxu0 0.0
  %155 = vmatprep.subr.mxu0 0.0
  %156 = vmatpush1.xpose.msra.mxu0 0.0
  %157 = vmatprep.subr.mxu0 0.0
  %158 = vmatpush1.xpose.msra.mxu0 0.0
  %159 = vmatprep.subr.mxu0 0.0
  %160 = vmatpush1.xpose.msra.mxu0 0.0
  %161 = vmatprep.subr.mxu0 0.0
  %162 = vmatpush1.xpose.msra.mxu0 0.0
  %163 = vmatprep.subr.mxu0 0.0
  %164 = vmatpush1.xpose.msra.mxu0 0.0
  %165 = vmatprep.subr.mxu0 0.0
  %166 = vmatpush1.xpose.msra.mxu0 0.0
  %167 = vmatprep.subr.mxu0 0.0
  %168 = vmatpush1.xpose.msra.mxu0 0.0
  %169 = vmatprep.subr.mxu0 0.0
  %170 = vmatpush1.xpose.msra.mxu0 0.0
  %171 = vmatprep.subr.mxu0 0.0
  %172 = vmatpush1.xpose.msra.mxu0 0.0
  %173 = vmatprep.subr.mxu0 0.0
  %174 = vmatpush1.xpose.msra.mxu0 0.0
  %175 = vmatprep.subr.mxu0 0.0
  %176 = vmatpush1.xpose.msra.mxu0 0.0
  %177 = vmatprep.subr.mxu0 0.0
  %178 = vmatpush1.xpose.msra.mxu0 %v145
  %179 = vmatprep.subr.mxu0 0.0
  %180 = vmatpush2.xpose.msra.mxu0 0.0
  %181 = vmatprep.subr.mxu0 0.0
  %182 = vmatpush2.xpose.msra.mxu0 0.0
  %183 = vmatprep.subr.mxu0 0.0
  %184 = vmatpush2.xpose.msra.mxu0 0.0
  %185 = vmatprep.subr.mxu0 0.0
  %186 = vmatpush2.xpose.msra.mxu0 0.0
  %187 = vmatprep.subr.mxu0 0.0
  %188 = vmatpush2.xpose.msra.mxu0 0.0
  %189 = vmatprep.subr.mxu0 0.0
  %190 = vmatpush2.xpose.msra.mxu0 0.0
  %191 = vmatprep.subr.mxu0 0.0
  %192 = vmatpush2.xpose.msra.mxu0 0.0
  %193 = vmatprep.subr.mxu0 0.0
  %194 = vmatpush2.xpose.msra.mxu0 0.0
  %195 = vmatprep.subr.mxu0 0.0
  %196 = vmatpush2.xpose.msra.mxu0 0.0
  %197 = vmatprep.subr.mxu0 0.0
  %198 = vmatpush2.xpose.msra.mxu0 0.0
  %199 = vmatprep.subr.mxu0 0.0
  %200 = vmatpush2.xpose.msra.mxu0 0.0
  %201 = vmatprep.subr.mxu0 0.0
  %202 = vmatpush2.xpose.msra.mxu0 0.0
  %203 = vmatprep.subr.mxu0 0.0
  %204 = vmatpush2.xpose.msra.mxu0 0.0
  %205 = vmatprep.subr.mxu0 0.0
  %206 = vmatpush2.xpose.msra.mxu0 0.0
  %207 = vmatprep.subr.mxu0 0.0
  %208 = vmatpush2.xpose.msra.mxu0 0.0
  %209 = vmatprep.subr.mxu0 0.0
  %210 = vmatpush2.xpose.msra.mxu0 0.0
  %211 = vmatprep.mubr.f32.mxu0 0.0
  %212 = vmatmul.mubr.f32.gmra.mxu0 %v143
  %v213 = vpop.f32.mrf.mxu0
  %v214 = vadd.f32 0.0, %v213
  %v215 = vpop.f32.mrf.mxu0
  %216 = vdwg.mxu0
  %v217 = vsel %vm142, %v214, -inf
  %218 = vmax.xlane.f32.xlu0 %v217
  %v219 = vpop.xlane.xlu0 %218
  %v220 = vsub.f32 %v214, %v219
  %v221 = vmul.f32 %v220, 1.442695
  %v222 = vpow.pop %v221
  %v223 = vsel %vm142, %v222, 0.0
  %224 = vadd.xlane.f32.xlu0 %v223
  %v225 = vpop.xlane.xlu0 %224
  %v226 = vrcp.pop %v225
  %v227 = vmul.f32 %v222, %v226
  %228 = vrot.lane.b32.xlu0 %v131, 64
  %v229 = vpop.permute.xlu0 %228
  %v232 = vsel %vm142, %v227, 0
  %234 = vmatprep.subr.mxu0 0.0
  %235 = vmatpush1.msra.mxu0 0.0
  %236 = vmatprep.subr.mxu0 0.0
  %237 = vmatpush1.msra.mxu0 0.0
  %238 = vmatprep.subr.mxu0 0.0
  %239 = vmatpush1.msra.mxu0 0.0
  %240 = vmatprep.subr.mxu0 0.0
  %241 = vmatpush1.msra.mxu0 0.0
  %242 = vmatprep.subr.mxu0 0.0
  %243 = vmatpush1.msra.mxu0 0.0
  %244 = vmatprep.subr.mxu0 0.0
  %245 = vmatpush1.msra.mxu0 0.0
  %246 = vmatprep.subr.mxu0 0.0
  %247 = vmatpush1.msra.mxu0 0.0
  %248 = vmatprep.subr.mxu0 0.0
  %249 = vmatpush1.msra.mxu0 0.0
  %250 = vmatprep.subr.mxu0 0.0
  %251 = vmatpush1.msra.mxu0 0.0
  %252 = vmatprep.subr.mxu0 0.0
  %253 = vmatpush1.msra.mxu0 0.0
  %254 = vmatprep.subr.mxu0 0.0
  %255 = vmatpush1.msra.mxu0 0.0
  %256 = vmatprep.subr.mxu0 0.0
  %257 = vmatpush1.msra.mxu0 0.0
  %258 = vmatprep.subr.mxu0 0.0
  %259 = vmatpush1.msra.mxu0 0.0
  %260 = vmatprep.subr.mxu0 0.0
  %261 = vmatpush1.msra.mxu0 0.0
  %262 = vmatprep.subr.mxu0 0.0
  %263 = vmatpush1.msra.mxu0 0.0
  %264 = vmatprep.subr.mxu0 0.0
  %265 = vmatpush1.msra.mxu0 %v229
  %266 = vmatprep.subr.mxu0 0.0
  %267 = vmatpush2.msra.mxu0 0.0
  %268 = vmatprep.subr.mxu0 0.0
  %269 = vmatpush2.msra.mxu0 0.0
  %270 = vmatprep.subr.mxu0 0.0
  %271 = vmatpush2.msra.mxu0 0.0
  %272 = vmatprep.subr.mxu0 0.0
  %273 = vmatpush2.msra.mxu0 0.0
  %274 = vmatprep.subr.mxu0 0.0
  %275 = vmatpush2.msra.mxu0 0.0
  %276 = vmatprep.subr.mxu0 0.0
  %277 = vmatpush2.msra.mxu0 0.0
  %278 = vmatprep.subr.mxu0 0.0
  %279 = vmatpush2.msra.mxu0 0.0
  %280 = vmatprep.subr.mxu0 0.0
  %281 = vmatpush2.msra.mxu0 0.0
  %282 = vmatprep.subr.mxu0 0.0
  %283 = vmatpush2.msra.mxu0 0.0
  %284 = vmatprep.subr.mxu0 0.0
  %285 = vmatpush2.msra.mxu0 0.0
  %286 = vmatprep.subr.mxu0 0.0
  %287 = vmatpush2.msra.mxu0 0.0
  %288 = vmatprep.subr.mxu0 0.0
  %289 = vmatpush2.msra.mxu0 0.0
  %290 = vmatprep.subr.mxu0 0.0
  %291 = vmatpush2.msra.mxu0 0.0
  %292 = vmatprep.subr.mxu0 0.0
  %293 = vmatpush2.msra.mxu0 0.0
  %294 = vmatprep.subr.mxu0 0.0
  %295 = vmatpush2.msra.mxu0 0.0
  %296 = vmatprep.subr.mxu0 0.0
  %297 = vmatpush2.msra.mxu0 0.0
  %298 = vmatprep.mubr.f32.mxu0 0.0
  %299 = vmatmul.mubr.f32.gmra.mxu0 %v232
  %v300 = vpop.f32.mrf.mxu0
  %v301 = vadd.f32 0.0, %v300
  %v302 = vpop.f32.mrf.mxu0
  %303 = vdwg.mxu0
  %304 = vst.msk [vmem:[#allocation2] sm:$0xff] %vm142, %v301
  %305 = vrot.lane.b32.xlu0 %v131, 120
  %v306 = vpop.permute.xlu0 %305
  %307 = vrot.lane.b32.xlu0 %v131, 88
  %v308 = vpop.permute.xlu0 %307
  %v309 = vsel %vm142, %v306, 0
  %v311 = vsel %vm142, %v308, 0
  %313 = vmatprep.subr.mxu0 0.0
  %314 = vmatpush1.xpose.msra.mxu0 0.0
  %315 = vmatprep.subr.mxu0 0.0
  %316 = vmatpush1.xpose.msra.mxu0 0.0
  %317 = vmatprep.subr.mxu0 0.0
  %318 = vmatpush1.xpose.msra.mxu0 0.0
  %319 = vmatprep.subr.mxu0 0.0
  %320 = vmatpush1.xpose.msra.mxu0 0.0
  %321 = vmatprep.subr.mxu0 0.0
  %322 = vmatpush1.xpose.msra.mxu0 0.0
  %323 = vmatprep.subr.mxu0 0.0
  %324 = vmatpush1.xpose.msra.mxu0 0.0
  %325 = vmatprep.subr.mxu0 0.0
  %326 = vmatpush1.xpose.msra.mxu0 0.0
  %327 = vmatprep.subr.mxu0 0.0
  %328 = vmatpush1.xpose.msra.mxu0 0.0
  %329 = vmatprep.subr.mxu0 0.0
  %330 = vmatpush1.xpose.msra.mxu0 0.0
  %331 = vmatprep.subr.mxu0 0.0
  %332 = vmatpush1.xpose.msra.mxu0 0.0
  %333 = vmatprep.subr.mxu0 0.0
  %334 = vmatpush1.xpose.msra.mxu0 0.0
  %335 = vmatprep.subr.mxu0 0.0
  %336 = vmatpush1.xpose.msra.mxu0 0.0
  %337 = vmatprep.subr.mxu0 0.0
  %338 = vmatpush1.xpose.msra.mxu0 0.0
  %339 = vmatprep.subr.mxu0 0.0
  %340 = vmatpush1.xpose.msra.mxu0 0.0
  %341 = vmatprep.subr.mxu0 0.0
  %342 = vmatpush1.xpose.msra.mxu0 0.0
  %343 = vmatprep.subr.mxu0 0.0
  %344 = vmatpush1.xpose.msra.mxu0 %v311
  %345 = vmatprep.subr.mxu0 0.0
  %346 = vmatpush2.xpose.msra.mxu0 0.0
  %347 = vmatprep.subr.mxu0 0.0
  %348 = vmatpush2.xpose.msra.mxu0 0.0
  %349 = vmatprep.subr.mxu0 0.0
  %350 = vmatpush2.xpose.msra.mxu0 0.0
  %351 = vmatprep.subr.mxu0 0.0
  %352 = vmatpush2.xpose.msra.mxu0 0.0
  %353 = vmatprep.subr.mxu0 0.0
  %354 = vmatpush2.xpose.msra.mxu0 0.0
  %355 = vmatprep.subr.mxu0 0.0
  %356 = vmatpush2.xpose.msra.mxu0 0.0
  %357 = vmatprep.subr.mxu0 0.0
  %358 = vmatpush2.xpose.msra.mxu0 0.0
  %359 = vmatprep.subr.mxu0 0.0
  %360 = vmatpush2.xpose.msra.mxu0 0.0
  %361 = vmatprep.subr.mxu0 0.0
  %362 = vmatpush2.xpose.msra.mxu0 0.0
  %363 = vmatprep.subr.mxu0 0.0
  %364 = vmatpush2.xpose.msra.mxu0 0.0
  %365 = vmatprep.subr.mxu0 0.0
  %366 = vmatpush2.xpose.msra.mxu0 0.0
  %367 = vmatprep.subr.mxu0 0.0
  %368 = vmatpush2.xpose.msra.mxu0 0.0
  %369 = vmatprep.subr.mxu0 0.0
  %370 = vmatpush2.xpose.msra.mxu0 0.0
  %371 = vmatprep.subr.mxu0 0.0
  %372 = vmatpush2.xpose.msra.mxu0 0.0
  %373 = vmatprep.subr.mxu0 0.0
  %374 = vmatpush2.xpose.msra.mxu0 0.0
  %375 = vmatprep.subr.mxu0 0.0
  %376 = vmatpush2.xpose.msra.mxu0 0.0
  %377 = vmatprep.mubr.f32.mxu0 0.0
  %378 = vmatmul.mubr.f32.gmra.mxu0 %v309
  %v379 = vpop.f32.mrf.mxu0
  %v380 = vadd.f32 0.0, %v379
  %v381 = vpop.f32.mrf.mxu0
  %382 = vdwg.mxu0
  %v383 = vsel %vm142, %v380, -inf
  %384 = vmax.xlane.f32.xlu0 %v383
  %v385 = vpop.xlane.xlu0 %384
  %v386 = vsub.f32 %v380, %v385
  %v387 = vmul.f32 %v386, 1.442695
  %v388 = vpow.pop %v387
  %v389 = vsel %vm142, %v388, 0.0
  %390 = vadd.xlane.f32.xlu0 %v389
  %v391 = vpop.xlane.xlu0 %390
  %v392 = vrcp.pop %v391
  %v393 = vmul.f32 %v388, %v392
  %394 = vrot.lane.b32.xlu0 %v131, 56
  %v395 = vpop.permute.xlu0 %394
  %v398 = vsel %vm142, %v393, 0
  %400 = vmatprep.subr.mxu0 0.0
  %401 = vmatpush1.msra.mxu0 0.0
  %402 = vmatprep.subr.mxu0 0.0
  %403 = vmatpush1.msra.mxu0 0.0
  %404 = vmatprep.subr.mxu0 0.0
  %405 = vmatpush1.msra.mxu0 0.0
  %406 = vmatprep.subr.mxu0 0.0
  %407 = vmatpush1.msra.mxu0 0.0
  %408 = vmatprep.subr.mxu0 0.0
  %409 = vmatpush1.msra.mxu0 0.0
  %410 = vmatprep.subr.mxu0 0.0
  %411 = vmatpush1.msra.mxu0 0.0
  %412 = vmatprep.subr.mxu0 0.0
  %413 = vmatpush1.msra.mxu0 0.0
  %414 = vmatprep.subr.mxu0 0.0
  %415 = vmatpush1.msra.mxu0 0.0
  %416 = vmatprep.subr.mxu0 0.0
  %417 = vmatpush1.msra.mxu0 0.0
  %418 = vmatprep.subr.mxu0 0.0
  %419 = vmatpush1.msra.mxu0 0.0
  %420 = vmatprep.subr.mxu0 0.0
  %421 = vmatpush1.msra.mxu0 0.0
  %422 = vmatprep.subr.mxu0 0.0
  %423 = vmatpush1.msra.mxu0 0.0
  %424 = vmatprep.subr.mxu0 0.0
  %425 = vmatpush1.msra.mxu0 0.0
  %426 = vmatprep.subr.mxu0 0.0
  %427 = vmatpush1.msra.mxu0 0.0
  %428 = vmatprep.subr.mxu0 0.0
  %429 = vmatpush1.msra.mxu0 0.0
  %430 = vmatprep.subr.mxu0 0.0
  %431 = vmatpush1.msra.mxu0 %v395
  %432 = vmatprep.subr.mxu0 0.0
  %433 = vmatpush2.msra.mxu0 0.0
  %434 = vmatprep.subr.mxu0 0.0
  %435 = vmatpush2.msra.mxu0 0.0
  %436 = vmatprep.subr.mxu0 0.0
  %437 = vmatpush2.msra.mxu0 0.0
  %438 = vmatprep.subr.mxu0 0.0
  %439 = vmatpush2.msra.mxu0 0.0
  %440 = vmatprep.subr.mxu0 0.0
  %441 = vmatpush2.msra.mxu0 0.0
  %442 = vmatprep.subr.mxu0 0.0
  %443 = vmatpush2.msra.mxu0 0.0
  %444 = vmatprep.subr.mxu0 0.0
  %445 = vmatpush2.msra.mxu0 0.0
  %446 = vmatprep.subr.mxu0 0.0
  %447 = vmatpush2.msra.mxu0 0.0
  %448 = vmatprep.subr.mxu0 0.0
  %449 = vmatpush2.msra.mxu0 0.0
  %450 = vmatprep.subr.mxu0 0.0
  %451 = vmatpush2.msra.mxu0 0.0
  %452 = vmatprep.subr.mxu0 0.0
  %453 = vmatpush2.msra.mxu0 0.0
  %454 = vmatprep.subr.mxu0 0.0
  %455 = vmatpush2.msra.mxu0 0.0
  %456 = vmatprep.subr.mxu0 0.0
  %457 = vmatpush2.msra.mxu0 0.0
  %458 = vmatprep.subr.mxu0 0.0
  %459 = vmatpush2.msra.mxu0 0.0
  %460 = vmatprep.subr.mxu0 0.0
  %461 = vmatpush2.msra.mxu0 0.0
  %462 = vmatprep.subr.mxu0 0.0
  %463 = vmatpush2.msra.mxu0 0.0
  %464 = vmatprep.mubr.f32.mxu0 0.0
  %465 = vmatmul.mubr.f32.gmra.mxu0 %v398
  %v466 = vpop.f32.mrf.mxu0
  %v467 = vadd.f32 0.0, %v466
  %v468 = vpop.f32.mrf.mxu0
  %469 = vdwg.mxu0
  %471 = vrot.lane.b32.xlu0 %v467, 8
  %v472 = vpop.permute.xlu0 %471
  %vm474 = vcmask 130112
  %475 = vst.msk [vmem:[#allocation2] sm:$0xff] %vm474, %v472
  %476 = vrot.lane.b32.xlu0 %v131, 112
  %v477 = vpop.permute.xlu0 %476
  %478 = vrot.lane.b32.xlu0 %v131, 80
  %v479 = vpop.permute.xlu0 %478
  %v480 = vsel %vm142, %v477, 0
  %v482 = vsel %vm142, %v479, 0
  %484 = vmatprep.subr.mxu0 0.0
  %485 = vmatpush1.xpose.msra.mxu0 0.0
  %486 = vmatprep.subr.mxu0 0.0
  %487 = vmatpush1.xpose.msra.mxu0 0.0
  %488 = vmatprep.subr.mxu0 0.0
  %489 = vmatpush1.xpose.msra.mxu0 0.0
  %490 = vmatprep.subr.mxu0 0.0
  %491 = vmatpush1.xpose.msra.mxu0 0.0
  %492 = vmatprep.subr.mxu0 0.0
  %493 = vmatpush1.xpose.msra.mxu0 0.0
  %494 = vmatprep.subr.mxu0 0.0
  %495 = vmatpush1.xpose.msra.mxu0 0.0
  %496 = vmatprep.subr.mxu0 0.0
  %497 = vmatpush1.xpose.msra.mxu0 0.0
  %498 = vmatprep.subr.mxu0 0.0
  %499 = vmatpush1.xpose.msra.mxu0 0.0
  %500 = vmatprep.subr.mxu0 0.0
  %501 = vmatpush1.xpose.msra.mxu0 0.0
  %502 = vmatprep.subr.mxu0 0.0
  %503 = vmatpush1.xpose.msra.mxu0 0.0
  %504 = vmatprep.subr.mxu0 0.0
  %505 = vmatpush1.xpose.msra.mxu0 0.0
  %506 = vmatprep.subr.mxu0 0.0
  %507 = vmatpush1.xpose.msra.mxu0 0.0
  %508 = vmatprep.subr.mxu0 0.0
  %509 = vmatpush1.xpose.msra.mxu0 0.0
  %510 = vmatprep.subr.mxu0 0.0
  %511 = vmatpush1.xpose.msra.mxu0 0.0
  %512 = vmatprep.subr.mxu0 0.0
  %513 = vmatpush1.xpose.msra.mxu0 0.0
  %514 = vmatprep.subr.mxu0 0.0
  %515 = vmatpush1.xpose.msra.mxu0 %v482
  %516 = vmatprep.subr.mxu0 0.0
  %517 = vmatpush2.xpose.msra.mxu0 0.0
  %518 = vmatprep.subr.mxu0 0.0
  %519 = vmatpush2.xpose.msra.mxu0 0.0
  %520 = vmatprep.subr.mxu0 0.0
  %521 = vmatpush2.xpose.msra.mxu0 0.0
  %522 = vmatprep.subr.mxu0 0.0
  %523 = vmatpush2.xpose.msra.mxu0 0.0
  %524 = vmatprep.subr.mxu0 0.0
  %525 = vmatpush2.xpose.msra.mxu0 0.0
  %526 = vmatprep.subr.mxu0 0.0
  %527 = vmatpush2.xpose.msra.mxu0 0.0
  %528 = vmatprep.subr.mxu0 0.0
  %529 = vmatpush2.xpose.msra.mxu0 0.0
  %530 = vmatprep.subr.mxu0 0.0
  %531 = vmatpush2.xpose.msra.mxu0 0.0
  %532 = vmatprep.subr.mxu0 0.0
  %533 = vmatpush2.xpose.msra.mxu0 0.0
  %534 = vmatprep.subr.mxu0 0.0
  %535 = vmatpush2.xpose.msra.mxu0 0.0
  %536 = vmatprep.subr.mxu0 0.0
  %537 = vmatpush2.xpose.msra.mxu0 0.0
  %538 = vmatprep.subr.mxu0 0.0
  %539 = vmatpush2.xpose.msra.mxu0 0.0
  %540 = vmatprep.subr.mxu0 0.0
  %541 = vmatpush2.xpose.msra.mxu0 0.0
  %542 = vmatprep.subr.mxu0 0.0
  %543 = vmatpush2.xpose.msra.mxu0 0.0
  %544 = vmatprep.subr.mxu0 0.0
  %545 = vmatpush2.xpose.msra.mxu0 0.0
  %546 = vmatprep.subr.mxu0 0.0
  %547 = vmatpush2.xpose.msra.mxu0 0.0
  %548 = vmatprep.mubr.f32.mxu0 0.0
  %549 = vmatmul.mubr.f32.gmra.mxu0 %v480
  %v550 = vpop.f32.mrf.mxu0
  %v551 = vadd.f32 0.0, %v550
  %v552 = vpop.f32.mrf.mxu0
  %553 = vdwg.mxu0
  %v554 = vsel %vm142, %v551, -inf
  %555 = vmax.xlane.f32.xlu0 %v554
  %v556 = vpop.xlane.xlu0 %555
  %v557 = vsub.f32 %v551, %v556
  %v558 = vmul.f32 %v557, 1.442695
  %v559 = vpow.pop %v558
  %v560 = vsel %vm142, %v559, 0.0
  %561 = vadd.xlane.f32.xlu0 %v560
  %v562 = vpop.xlane.xlu0 %561
  %v563 = vrcp.pop %v562
  %v564 = vmul.f32 %v559, %v563
  %565 = vrot.lane.b32.xlu0 %v131, 48
  %v566 = vpop.permute.xlu0 %565
  %v569 = vsel %vm142, %v564, 0
  %571 = vmatprep.subr.mxu0 0.0
  %572 = vmatpush1.msra.mxu0 0.0
  %573 = vmatprep.subr.mxu0 0.0
  %574 = vmatpush1.msra.mxu0 0.0
  %575 = vmatprep.subr.mxu0 0.0
  %576 = vmatpush1.msra.mxu0 0.0
  %577 = vmatprep.subr.mxu0 0.0
  %578 = vmatpush1.msra.mxu0 0.0
  %579 = vmatprep.subr.mxu0 0.0
  %580 = vmatpush1.msra.mxu0 0.0
  %581 = vmatprep.subr.mxu0 0.0
  %582 = vmatpush1.msra.mxu0 0.0
  %583 = vmatprep.subr.mxu0 0.0
  %584 = vmatpush1.msra.mxu0 0.0
  %585 = vmatprep.subr.mxu0 0.0
  %586 = vmatpush1.msra.mxu0 0.0
  %587 = vmatprep.subr.mxu0 0.0
  %588 = vmatpush1.msra.mxu0 0.0
  %589 = vmatprep.subr.mxu0 0.0
  %590 = vmatpush1.msra.mxu0 0.0
  %591 = vmatprep.subr.mxu0 0.0
  %592 = vmatpush1.msra.mxu0 0.0
  %593 = vmatprep.subr.mxu0 0.0
  %594 = vmatpush1.msra.mxu0 0.0
  %595 = vmatprep.subr.mxu0 0.0
  %596 = vmatpush1.msra.mxu0 0.0
  %597 = vmatprep.subr.mxu0 0.0
  %598 = vmatpush1.msra.mxu0 0.0
  %599 = vmatprep.subr.mxu0 0.0
  %600 = vmatpush1.msra.mxu0 0.0
  %601 = vmatprep.subr.mxu0 0.0
  %602 = vmatpush1.msra.mxu0 %v566
  %603 = vmatprep.subr.mxu0 0.0
  %604 = vmatpush2.msra.mxu0 0.0
  %605 = vmatprep.subr.mxu0 0.0
  %606 = vmatpush2.msra.mxu0 0.0
  %607 = vmatprep.subr.mxu0 0.0
  %608 = vmatpush2.msra.mxu0 0.0
  %609 = vmatprep.subr.mxu0 0.0
  %610 = vmatpush2.msra.mxu0 0.0
  %611 = vmatprep.subr.mxu0 0.0
  %612 = vmatpush2.msra.mxu0 0.0
  %613 = vmatprep.subr.mxu0 0.0
  %614 = vmatpush2.msra.mxu0 0.0
  %615 = vmatprep.subr.mxu0 0.0
  %616 = vmatpush2.msra.mxu0 0.0
  %617 = vmatprep.subr.mxu0 0.0
  %618 = vmatpush2.msra.mxu0 0.0
  %619 = vmatprep.subr.mxu0 0.0
  %620 = vmatpush2.msra.mxu0 0.0
  %621 = vmatprep.subr.mxu0 0.0
  %622 = vmatpush2.msra.mxu0 0.0
  %623 = vmatprep.subr.mxu0 0.0
  %624 = vmatpush2.msra.mxu0 0.0
  %625 = vmatprep.subr.mxu0 0.0
  %626 = vmatpush2.msra.mxu0 0.0
  %627 = vmatprep.subr.mxu0 0.0
  %628 = vmatpush2.msra.mxu0 0.0
  %629 = vmatprep.subr.mxu0 0.0
  %630 = vmatpush2.msra.mxu0 0.0
  %631 = vmatprep.subr.mxu0 0.0
  %632 = vmatpush2.msra.mxu0 0.0
  %633 = vmatprep.subr.mxu0 0.0
  %634 = vmatpush2.msra.mxu0 0.0
  %635 = vmatprep.mubr.f32.mxu0 0.0
  %636 = vmatmul.mubr.f32.gmra.mxu0 %v569
  %v637 = vpop.f32.mrf.mxu0
  %v638 = vadd.f32 0.0, %v637
  %v639 = vpop.f32.mrf.mxu0
  %640 = vdwg.mxu0
  %642 = vrot.lane.b32.xlu0 %v638, 16
  %v643 = vpop.permute.xlu0 %642
  %vm645 = vcmask 195712
  %646 = vst.msk [vmem:[#allocation2] sm:$0xff] %vm645, %v643
  %647 = vrot.lane.b32.xlu0 %v131, 104
  %v648 = vpop.permute.xlu0 %647
  %649 = vrot.lane.b32.xlu0 %v131, 72
  %v650 = vpop.permute.xlu0 %649
  %v651 = vsel %vm142, %v648, 0
  %v653 = vsel %vm142, %v650, 0
  %655 = vmatprep.subr.mxu0 0.0
  %656 = vmatpush1.xpose.msra.mxu0 0.0
  %657 = vmatprep.subr.mxu0 0.0
  %658 = vmatpush1.xpose.msra.mxu0 0.0
  %659 = vmatprep.subr.mxu0 0.0
  %660 = vmatpush1.xpose.msra.mxu0 0.0
  %661 = vmatprep.subr.mxu0 0.0
  %662 = vmatpush1.xpose.msra.mxu0 0.0
  %663 = vmatprep.subr.mxu0 0.0
  %664 = vmatpush1.xpose.msra.mxu0 0.0
  %665 = vmatprep.subr.mxu0 0.0
  %666 = vmatpush1.xpose.msra.mxu0 0.0
  %667 = vmatprep.subr.mxu0 0.0
  %668 = vmatpush1.xpose.msra.mxu0 0.0
  %669 = vmatprep.subr.mxu0 0.0
  %670 = vmatpush1.xpose.msra.mxu0 0.0
  %671 = vmatprep.subr.mxu0 0.0
  %672 = vmatpush1.xpose.msra.mxu0 0.0
  %673 = vmatprep.subr.mxu0 0.0
  %674 = vmatpush1.xpose.msra.mxu0 0.0
  %675 = vmatprep.subr.mxu0 0.0
  %676 = vmatpush1.xpose.msra.mxu0 0.0
  %677 = vmatprep.subr.mxu0 0.0
  %678 = vmatpush1.xpose.msra.mxu0 0.0
  %679 = vmatprep.subr.mxu0 0.0
  %680 = vmatpush1.xpose.msra.mxu0 0.0
  %681 = vmatprep.subr.mxu0 0.0
  %682 = vmatpush1.xpose.msra.mxu0 0.0
  %683 = vmatprep.subr.mxu0 0.0
  %684 = vmatpush1.xpose.msra.mxu0 0.0
  %685 = vmatprep.subr.mxu0 0.0
  %686 = vmatpush1.xpose.msra.mxu0 %v653
  %687 = vmatprep.subr.mxu0 0.0
  %688 = vmatpush2.xpose.msra.mxu0 0.0
  %689 = vmatprep.subr.mxu0 0.0
  %690 = vmatpush2.xpose.msra.mxu0 0.0
  %691 = vmatprep.subr.mxu0 0.0
  %692 = vmatpush2.xpose.msra.mxu0 0.0
  %693 = vmatprep.subr.mxu0 0.0
  %694 = vmatpush2.xpose.msra.mxu0 0.0
  %695 = vmatprep.subr.mxu0 0.0
  %696 = vmatpush2.xpose.msra.mxu0 0.0
  %697 = vmatprep.subr.mxu0 0.0
  %698 = vmatpush2.xpose.msra.mxu0 0.0
  %699 = vmatprep.subr.mxu0 0.0
  %700 = vmatpush2.xpose.msra.mxu0 0.0
  %701 = vmatprep.subr.mxu0 0.0
  %702 = vmatpush2.xpose.msra.mxu0 0.0
  %703 = vmatprep.subr.mxu0 0.0
  %704 = vmatpush2.xpose.msra.mxu0 0.0
  %705 = vmatprep.subr.mxu0 0.0
  %706 = vmatpush2.xpose.msra.mxu0 0.0
  %707 = vmatprep.subr.mxu0 0.0
  %708 = vmatpush2.xpose.msra.mxu0 0.0
  %709 = vmatprep.subr.mxu0 0.0
  %710 = vmatpush2.xpose.msra.mxu0 0.0
  %711 = vmatprep.subr.mxu0 0.0
  %712 = vmatpush2.xpose.msra.mxu0 0.0
  %713 = vmatprep.subr.mxu0 0.0
  %714 = vmatpush2.xpose.msra.mxu0 0.0
  %715 = vmatprep.subr.mxu0 0.0
  %716 = vmatpush2.xpose.msra.mxu0 0.0
  %717 = vmatprep.subr.mxu0 0.0
  %718 = vmatpush2.xpose.msra.mxu0 0.0
  %719 = vmatprep.mubr.f32.mxu0 0.0
  %720 = vmatmul.mubr.f32.gmra.mxu0 %v651
  %v721 = vpop.f32.mrf.mxu0
  %v722 = vadd.f32 0.0, %v721
  %v723 = vpop.f32.mrf.mxu0
  %724 = vdwg.mxu0
  %v725 = vsel %vm142, %v722, -inf
  %726 = vmax.xlane.f32.xlu0 %v725
  %v727 = vpop.xlane.xlu0 %726
  %v728 = vsub.f32 %v722, %v727
  %v729 = vmul.f32 %v728, 1.442695
  %v730 = vpow.pop %v729
  %v731 = vsel %vm142, %v730, 0.0
  %732 = vadd.xlane.f32.xlu0 %v731
  %v733 = vpop.xlane.xlu0 %732
  %v734 = vrcp.pop %v733
  %v735 = vmul.f32 %v730, %v734
  %736 = vrot.lane.b32.xlu0 %v131, 40
  %v737 = vpop.permute.xlu0 %736
  %v740 = vsel %vm142, %v735, 0
  %742 = vmatprep.subr.mxu0 0.0
  %743 = vmatpush1.msra.mxu0 0.0
  %744 = vmatprep.subr.mxu0 0.0
  %745 = vmatpush1.msra.mxu0 0.0
  %746 = vmatprep.subr.mxu0 0.0
  %747 = vmatpush1.msra.mxu0 0.0
  %748 = vmatprep.subr.mxu0 0.0
  %749 = vmatpush1.msra.mxu0 0.0
  %750 = vmatprep.subr.mxu0 0.0
  %751 = vmatpush1.msra.mxu0 0.0
  %752 = vmatprep.subr.mxu0 0.0
  %753 = vmatpush1.msra.mxu0 0.0
  %754 = vmatprep.subr.mxu0 0.0
  %755 = vmatpush1.msra.mxu0 0.0
  %756 = vmatprep.subr.mxu0 0.0
  %757 = vmatpush1.msra.mxu0 0.0
  %758 = vmatprep.subr.mxu0 0.0
  %759 = vmatpush1.msra.mxu0 0.0
  %760 = vmatprep.subr.mxu0 0.0
  %761 = vmatpush1.msra.mxu0 0.0
  %762 = vmatprep.subr.mxu0 0.0
  %763 = vmatpush1.msra.mxu0 0.0
  %764 = vmatprep.subr.mxu0 0.0
  %765 = vmatpush1.msra.mxu0 0.0
  %766 = vmatprep.subr.mxu0 0.0
  %767 = vmatpush1.msra.mxu0 0.0
  %768 = vmatprep.subr.mxu0 0.0
  %769 = vmatpush1.msra.mxu0 0.0
  %770 = vmatprep.subr.mxu0 0.0
  %771 = vmatpush1.msra.mxu0 0.0
  %772 = vmatprep.subr.mxu0 0.0
  %773 = vmatpush1.msra.mxu0 %v737
  %774 = vmatprep.subr.mxu0 0.0
  %775 = vmatpush2.msra.mxu0 0.0
  %776 = vmatprep.subr.mxu0 0.0
  %777 = vmatpush2.msra.mxu0 0.0
  %778 = vmatprep.subr.mxu0 0.0
  %779 = vmatpush2.msra.mxu0 0.0
  %780 = vmatprep.subr.mxu0 0.0
  %781 = vmatpush2.msra.mxu0 0.0
  %782 = vmatprep.subr.mxu0 0.0
  %783 = vmatpush2.msra.mxu0 0.0
  %784 = vmatprep.subr.mxu0 0.0
  %785 = vmatpush2.msra.mxu0 0.0
  %786 = vmatprep.subr.mxu0 0.0
  %787 = vmatpush2.msra.mxu0 0.0
  %788 = vmatprep.subr.mxu0 0.0
  %789 = vmatpush2.msra.mxu0 0.0
  %790 = vmatprep.subr.mxu0 0.0
  %791 = vmatpush2.msra.mxu0 0.0
  %792 = vmatprep.subr.mxu0 0.0
  %793 = vmatpush2.msra.mxu0 0.0
  %794 = vmatprep.subr.mxu0 0.0
  %795 = vmatpush2.msra.mxu0 0.0
  %796 = vmatprep.subr.mxu0 0.0
  %797 = vmatpush2.msra.mxu0 0.0
  %798 = vmatprep.subr.mxu0 0.0
  %799 = vmatpush2.msra.mxu0 0.0
  %800 = vmatprep.subr.mxu0 0.0
  %801 = vmatpush2.msra.mxu0 0.0
  %802 = vmatprep.subr.mxu0 0.0
  %803 = vmatpush2.msra.mxu0 0.0
  %804 = vmatprep.subr.mxu0 0.0
  %805 = vmatpush2.msra.mxu0 0.0
  %806 = vmatprep.mubr.f32.mxu0 0.0
  %807 = vmatmul.mubr.f32.gmra.mxu0 %v740
  %v808 = vpop.f32.mrf.mxu0
  %v809 = vadd.f32 0.0, %v808
  %v810 = vpop.f32.mrf.mxu0
  %811 = vdwg.mxu0
  %813 = vrot.lane.b32.xlu0 %v809, 24
  %v814 = vpop.permute.xlu0 %813
  %vm816 = vcmask 261312
  %817 = vst.msk [vmem:[#allocation2] sm:$0xff] %vm816, %v814
  %819 = vrot.lane.b32.xlu0 %v136, 96
  %v820 = vpop.permute.xlu0 %819
  %v821 = vsel %vm142, %v136, 0
  %v823 = vsel %vm142, %v820, 0
  %825 = vmatprep.subr.mxu0 0.0
  %826 = vmatpush1.xpose.msra.mxu0 0.0
  %827 = vmatprep.subr.mxu0 0.0
  %828 = vmatpush1.xpose.msra.mxu0 0.0
  %829 = vmatprep.subr.mxu0 0.0
  %830 = vmatpush1.xpose.msra.mxu0 0.0
  %831 = vmatprep.subr.mxu0 0.0
  %832 = vmatpush1.xpose.msra.mxu0 0.0
  %833 = vmatprep.subr.mxu0 0.0
  %834 = vmatpush1.xpose.msra.mxu0 0.0
  %835 = vmatprep.subr.mxu0 0.0
  %836 = vmatpush1.xpose.msra.mxu0 0.0
  %837 = vmatprep.subr.mxu0 0.0
  %838 = vmatpush1.xpose.msra.mxu0 0.0
  %839 = vmatprep.subr.mxu0 0.0
  %840 = vmatpush1.xpose.msra.mxu0 0.0
  %841 = vmatprep.subr.mxu0 0.0
  %842 = vmatpush1.xpose.msra.mxu0 0.0
  %843 = vmatprep.subr.mxu0 0.0
  %844 = vmatpush1.xpose.msra.mxu0 0.0
  %845 = vmatprep.subr.mxu0 0.0
  %846 = vmatpush1.xpose.msra.mxu0 0.0
  %847 = vmatprep.subr.mxu0 0.0
  %848 = vmatpush1.xpose.msra.mxu0 0.0
  %849 = vmatprep.subr.mxu0 0.0
  %850 = vmatpush1.xpose.msra.mxu0 0.0
  %851 = vmatprep.subr.mxu0 0.0
  %852 = vmatpush1.xpose.msra.mxu0 0.0
  %853 = vmatprep.subr.mxu0 0.0
  %854 = vmatpush1.xpose.msra.mxu0 0.0
  %855 = vmatprep.subr.mxu0 0.0
  %856 = vmatpush1.xpose.msra.mxu0 %v823
  %857 = vmatprep.subr.mxu0 0.0
  %858 = vmatpush2.xpose.msra.mxu0 0.0
  %859 = vmatprep.subr.mxu0 0.0
  %860 = vmatpush2.xpose.msra.mxu0 0.0
  %861 = vmatprep.subr.mxu0 0.0
  %862 = vmatpush2.xpose.msra.mxu0 0.0
  %863 = vmatprep.subr.mxu0 0.0
  %864 = vmatpush2.xpose.msra.mxu0 0.0
  %865 = vmatprep.subr.mxu0 0.0
  %866 = vmatpush2.xpose.msra.mxu0 0.0
  %867 = vmatprep.subr.mxu0 0.0
  %868 = vmatpush2.xpose.msra.mxu0 0.0
  %869 = vmatprep.subr.mxu0 0.0
  %870 = vmatpush2.xpose.msra.mxu0 0.0
  %871 = vmatprep.subr.mxu0 0.0
  %872 = vmatpush2.xpose.msra.mxu0 0.0
  %873 = vmatprep.subr.mxu0 0.0
  %874 = vmatpush2.xpose.msra.mxu0 0.0
  %875 = vmatprep.subr.mxu0 0.0
  %876 = vmatpush2.xpose.msra.mxu0 0.0
  %877 = vmatprep.subr.mxu0 0.0
  %878 = vmatpush2.xpose.msra.mxu0 0.0
  %879 = vmatprep.subr.mxu0 0.0
  %880 = vmatpush2.xpose.msra.mxu0 0.0
  %881 = vmatprep.subr.mxu0 0.0
  %882 = vmatpush2.xpose.msra.mxu0 0.0
  %883 = vmatprep.subr.mxu0 0.0
  %884 = vmatpush2.xpose.msra.mxu0 0.0
  %885 = vmatprep.subr.mxu0 0.0
  %886 = vmatpush2.xpose.msra.mxu0 0.0
  %887 = vmatprep.subr.mxu0 0.0
  %888 = vmatpush2.xpose.msra.mxu0 0.0
  %889 = vmatprep.mubr.f32.mxu0 0.0
  %890 = vmatmul.mubr.f32.gmra.mxu0 %v821
  %v891 = vpop.f32.mrf.mxu0
  %v892 = vadd.f32 0.0, %v891
  %v893 = vpop.f32.mrf.mxu0
  %894 = vdwg.mxu0
  %v895 = vsel %vm142, %v892, -inf
  %896 = vmax.xlane.f32.xlu0 %v895
  %v897 = vpop.xlane.xlu0 %896
  %v898 = vsub.f32 %v892, %v897
  %v899 = vmul.f32 %v898, 1.442695
  %v900 = vpow.pop %v899
  %v901 = vsel %vm142, %v900, 0.0
  %902 = vadd.xlane.f32.xlu0 %v901
  %v903 = vpop.xlane.xlu0 %902
  %v904 = vrcp.pop %v903
  %v905 = vmul.f32 %v900, %v904
  %906 = vrot.lane.b32.xlu0 %v136, 64
  %v907 = vpop.permute.xlu0 %906
  %v910 = vsel %vm142, %v905, 0
  %912 = vmatprep.subr.mxu0 0.0
  %913 = vmatpush1.msra.mxu0 0.0
  %914 = vmatprep.subr.mxu0 0.0
  %915 = vmatpush1.msra.mxu0 0.0
  %916 = vmatprep.subr.mxu0 0.0
  %917 = vmatpush1.msra.mxu0 0.0
  %918 = vmatprep.subr.mxu0 0.0
  %919 = vmatpush1.msra.mxu0 0.0
  %920 = vmatprep.subr.mxu0 0.0
  %921 = vmatpush1.msra.mxu0 0.0
  %922 = vmatprep.subr.mxu0 0.0
  %923 = vmatpush1.msra.mxu0 0.0
  %924 = vmatprep.subr.mxu0 0.0
  %925 = vmatpush1.msra.mxu0 0.0
  %926 = vmatprep.subr.mxu0 0.0
  %927 = vmatpush1.msra.mxu0 0.0
  %928 = vmatprep.subr.mxu0 0.0
  %929 = vmatpush1.msra.mxu0 0.0
  %930 = vmatprep.subr.mxu0 0.0
  %931 = vmatpush1.msra.mxu0 0.0
  %932 = vmatprep.subr.mxu0 0.0
  %933 = vmatpush1.msra.mxu0 0.0
  %934 = vmatprep.subr.mxu0 0.0
  %935 = vmatpush1.msra.mxu0 0.0
  %936 = vmatprep.subr.mxu0 0.0
  %937 = vmatpush1.msra.mxu0 0.0
  %938 = vmatprep.subr.mxu0 0.0
  %939 = vmatpush1.msra.mxu0 0.0
  %940 = vmatprep.subr.mxu0 0.0
  %941 = vmatpush1.msra.mxu0 0.0
  %942 = vmatprep.subr.mxu0 0.0
  %943 = vmatpush1.msra.mxu0 %v907
  %944 = vmatprep.subr.mxu0 0.0
  %945 = vmatpush2.msra.mxu0 0.0
  %946 = vmatprep.subr.mxu0 0.0
  %947 = vmatpush2.msra.mxu0 0.0
  %948 = vmatprep.subr.mxu0 0.0
  %949 = vmatpush2.msra.mxu0 0.0
  %950 = vmatprep.subr.mxu0 0.0
  %951 = vmatpush2.msra.mxu0 0.0
  %952 = vmatprep.subr.mxu0 0.0
  %953 = vmatpush2.msra.mxu0 0.0
  %954 = vmatprep.subr.mxu0 0.0
  %955 = vmatpush2.msra.mxu0 0.0
  %956 = vmatprep.subr.mxu0 0.0
  %957 = vmatpush2.msra.mxu0 0.0
  %958 = vmatprep.subr.mxu0 0.0
  %959 = vmatpush2.msra.mxu0 0.0
  %960 = vmatprep.subr.mxu0 0.0
  %961 = vmatpush2.msra.mxu0 0.0
  %962 = vmatprep.subr.mxu0 0.0
  %963 = vmatpush2.msra.mxu0 0.0
  %964 = vmatprep.subr.mxu0 0.0
  %965 = vmatpush2.msra.mxu0 0.0
  %966 = vmatprep.subr.mxu0 0.0
  %967 = vmatpush2.msra.mxu0 0.0
  %968 = vmatprep.subr.mxu0 0.0
  %969 = vmatpush2.msra.mxu0 0.0
  %970 = vmatprep.subr.mxu0 0.0
  %971 = vmatpush2.msra.mxu0 0.0
  %972 = vmatprep.subr.mxu0 0.0
  %973 = vmatpush2.msra.mxu0 0.0
  %974 = vmatprep.subr.mxu0 0.0
  %975 = vmatpush2.msra.mxu0 0.0
  %976 = vmatprep.mubr.f32.mxu0 0.0
  %977 = vmatmul.mubr.f32.gmra.mxu0 %v910
  %v978 = vpop.f32.mrf.mxu0
  %v979 = vadd.f32 0.0, %v978
  %v980 = vpop.f32.mrf.mxu0
  %981 = vdwg.mxu0
  %982 = vst.msk [vmem:[#allocation2 + $0x8] sm:$0xff] %vm142, %v979
  %983 = vrot.lane.b32.xlu0 %v136, 120
  %v984 = vpop.permute.xlu0 %983
  %985 = vrot.lane.b32.xlu0 %v136, 88
  %v986 = vpop.permute.xlu0 %985
  %v987 = vsel %vm142, %v984, 0
  %v989 = vsel %vm142, %v986, 0
  %991 = vmatprep.subr.mxu0 0.0
  %992 = vmatpush1.xpose.msra.mxu0 0.0
  %993 = vmatprep.subr.mxu0 0.0
  %994 = vmatpush1.xpose.msra.mxu0 0.0
  %995 = vmatprep.subr.mxu0 0.0
  %996 = vmatpush1.xpose.msra.mxu0 0.0
  %997 = vmatprep.subr.mxu0 0.0
  %998 = vmatpush1.xpose.msra.mxu0 0.0
  %999 = vmatprep.subr.mxu0 0.0
  %1000 = vmatpush1.xpose.msra.mxu0 0.0
  %1001 = vmatprep.subr.mxu0 0.0
  %1002 = vmatpush1.xpose.msra.mxu0 0.0
  %1003 = vmatprep.subr.mxu0 0.0
  %1004 = vmatpush1.xpose.msra.mxu0 0.0
  %1005 = vmatprep.subr.mxu0 0.0
  %1006 = vmatpush1.xpose.msra.mxu0 0.0
  %1007 = vmatprep.subr.mxu0 0.0
  %1008 = vmatpush1.xpose.msra.mxu0 0.0
  %1009 = vmatprep.subr.mxu0 0.0
  %1010 = vmatpush1.xpose.msra.mxu0 0.0
  %1011 = vmatprep.subr.mxu0 0.0
  %1012 = vmatpush1.xpose.msra.mxu0 0.0
  %1013 = vmatprep.subr.mxu0 0.0
  %1014 = vmatpush1.xpose.msra.mxu0 0.0
  %1015 = vmatprep.subr.mxu0 0.0
  %1016 = vmatpush1.xpose.msra.mxu0 0.0
  %1017 = vmatprep.subr.mxu0 0.0
  %1018 = vmatpush1.xpose.msra.mxu0 0.0
  %1019 = vmatprep.subr.mxu0 0.0
  %1020 = vmatpush1.xpose.msra.mxu0 0.0
  %1021 = vmatprep.subr.mxu0 0.0
  %1022 = vmatpush1.xpose.msra.mxu0 %v989
  %1023 = vmatprep.subr.mxu0 0.0
  %1024 = vmatpush2.xpose.msra.mxu0 0.0
  %1025 = vmatprep.subr.mxu0 0.0
  %1026 = vmatpush2.xpose.msra.mxu0 0.0
  %1027 = vmatprep.subr.mxu0 0.0
  %1028 = vmatpush2.xpose.msra.mxu0 0.0
  %1029 = vmatprep.subr.mxu0 0.0
  %1030 = vmatpush2.xpose.msra.mxu0 0.0
  %1031 = vmatprep.subr.mxu0 0.0
  %1032 = vmatpush2.xpose.msra.mxu0 0.0
  %1033 = vmatprep.subr.mxu0 0.0
  %1034 = vmatpush2.xpose.msra.mxu0 0.0
  %1035 = vmatprep.subr.mxu0 0.0
  %1036 = vmatpush2.xpose.msra.mxu0 0.0
  %1037 = vmatprep.subr.mxu0 0.0
  %1038 = vmatpush2.xpose.msra.mxu0 0.0
  %1039 = vmatprep.subr.mxu0 0.0
  %1040 = vmatpush2.xpose.msra.mxu0 0.0
  %1041 = vmatprep.subr.mxu0 0.0
  %1042 = vmatpush2.xpose.msra.mxu0 0.0
  %1043 = vmatprep.subr.mxu0 0.0
  %1044 = vmatpush2.xpose.msra.mxu0 0.0
  %1045 = vmatprep.subr.mxu0 0.0
  %1046 = vmatpush2.xpose.msra.mxu0 0.0
  %1047 = vmatprep.subr.mxu0 0.0
  %1048 = vmatpush2.xpose.msra.mxu0 0.0
  %1049 = vmatprep.subr.mxu0 0.0
  %1050 = vmatpush2.xpose.msra.mxu0 0.0
  %1051 = vmatprep.subr.mxu0 0.0
  %1052 = vmatpush2.xpose.msra.mxu0 0.0
  %1053 = vmatprep.subr.mxu0 0.0
  %1054 = vmatpush2.xpose.msra.mxu0 0.0
  %1055 = vmatprep.mubr.f32.mxu0 0.0
  %1056 = vmatmul.mubr.f32.gmra.mxu0 %v987
  %v1057 = vpop.f32.mrf.mxu0
  %v1058 = vadd.f32 0.0, %v1057
  %v1059 = vpop.f32.mrf.mxu0
  %1060 = vdwg.mxu0
  %v1061 = vsel %vm142, %v1058, -inf
  %1062 = vmax.xlane.f32.xlu0 %v1061
  %v1063 = vpop.xlane.xlu0 %1062
  %v1064 = vsub.f32 %v1058, %v1063
  %v1065 = vmul.f32 %v1064, 1.442695
  %v1066 = vpow.pop %v1065
  %v1067 = vsel %vm142, %v1066, 0.0
  %1068 = vadd.xlane.f32.xlu0 %v1067
  %v1069 = vpop.xlane.xlu0 %1068
  %v1070 = vrcp.pop %v1069
  %v1071 = vmul.f32 %v1066, %v1070
  %1072 = vrot.lane.b32.xlu0 %v136, 56
  %v1073 = vpop.permute.xlu0 %1072
  %v1076 = vsel %vm142, %v1071, 0
  %1078 = vmatprep.subr.mxu0 0.0
  %1079 = vmatpush1.msra.mxu0 0.0
  %1080 = vmatprep.subr.mxu0 0.0
  %1081 = vmatpush1.msra.mxu0 0.0
  %1082 = vmatprep.subr.mxu0 0.0
  %1083 = vmatpush1.msra.mxu0 0.0
  %1084 = vmatprep.subr.mxu0 0.0
  %1085 = vmatpush1.msra.mxu0 0.0
  %1086 = vmatprep.subr.mxu0 0.0
  %1087 = vmatpush1.msra.mxu0 0.0
  %1088 = vmatprep.subr.mxu0 0.0
  %1089 = vmatpush1.msra.mxu0 0.0
  %1090 = vmatprep.subr.mxu0 0.0
  %1091 = vmatpush1.msra.mxu0 0.0
  %1092 = vmatprep.subr.mxu0 0.0
  %1093 = vmatpush1.msra.mxu0 0.0
  %1094 = vmatprep.subr.mxu0 0.0
  %1095 = vmatpush1.msra.mxu0 0.0
  %1096 = vmatprep.subr.mxu0 0.0
  %1097 = vmatpush1.msra.mxu0 0.0
  %1098 = vmatprep.subr.mxu0 0.0
  %1099 = vmatpush1.msra.mxu0 0.0
  %1100 = vmatprep.subr.mxu0 0.0
  %1101 = vmatpush1.msra.mxu0 0.0
  %1102 = vmatprep.subr.mxu0 0.0
  %1103 = vmatpush1.msra.mxu0 0.0
  %1104 = vmatprep.subr.mxu0 0.0
  %1105 = vmatpush1.msra.mxu0 0.0
  %1106 = vmatprep.subr.mxu0 0.0
  %1107 = vmatpush1.msra.mxu0 0.0
  %1108 = vmatprep.subr.mxu0 0.0
  %1109 = vmatpush1.msra.mxu0 %v1073
  %1110 = vmatprep.subr.mxu0 0.0
  %1111 = vmatpush2.msra.mxu0 0.0
  %1112 = vmatprep.subr.mxu0 0.0
  %1113 = vmatpush2.msra.mxu0 0.0
  %1114 = vmatprep.subr.mxu0 0.0
  %1115 = vmatpush2.msra.mxu0 0.0
  %1116 = vmatprep.subr.mxu0 0.0
  %1117 = vmatpush2.msra.mxu0 0.0
  %1118 = vmatprep.subr.mxu0 0.0
  %1119 = vmatpush2.msra.mxu0 0.0
  %1120 = vmatprep.subr.mxu0 0.0
  %1121 = vmatpush2.msra.mxu0 0.0
  %1122 = vmatprep.subr.mxu0 0.0
  %1123 = vmatpush2.msra.mxu0 0.0
  %1124 = vmatprep.subr.mxu0 0.0
  %1125 = vmatpush2.msra.mxu0 0.0
  %1126 = vmatprep.subr.mxu0 0.0
  %1127 = vmatpush2.msra.mxu0 0.0
  %1128 = vmatprep.subr.mxu0 0.0
  %1129 = vmatpush2.msra.mxu0 0.0
  %1130 = vmatprep.subr.mxu0 0.0
  %1131 = vmatpush2.msra.mxu0 0.0
  %1132 = vmatprep.subr.mxu0 0.0
  %1133 = vmatpush2.msra.mxu0 0.0
  %1134 = vmatprep.subr.mxu0 0.0
  %1135 = vmatpush2.msra.mxu0 0.0
  %1136 = vmatprep.subr.mxu0 0.0
  %1137 = vmatpush2.msra.mxu0 0.0
  %1138 = vmatprep.subr.mxu0 0.0
  %1139 = vmatpush2.msra.mxu0 0.0
  %1140 = vmatprep.subr.mxu0 0.0
  %1141 = vmatpush2.msra.mxu0 0.0
  %1142 = vmatprep.mubr.f32.mxu0 0.0
  %1143 = vmatmul.mubr.f32.gmra.mxu0 %v1076
  %v1144 = vpop.f32.mrf.mxu0
  %v1145 = vadd.f32 0.0, %v1144
  %v1146 = vpop.f32.mrf.mxu0
  %1147 = vdwg.mxu0
  %1149 = vrot.lane.b32.xlu0 %v1145, 8
  %v1150 = vpop.permute.xlu0 %1149
  %1152 = vst.msk [vmem:[#allocation2 + $0x8] sm:$0xff] %vm474, %v1150
  %1153 = vrot.lane.b32.xlu0 %v136, 112
  %v1154 = vpop.permute.xlu0 %1153
  %1155 = vrot.lane.b32.xlu0 %v136, 80
  %v1156 = vpop.permute.xlu0 %1155
  %v1157 = vsel %vm142, %v1154, 0
  %v1159 = vsel %vm142, %v1156, 0
  %1161 = vmatprep.subr.mxu0 0.0
  %1162 = vmatpush1.xpose.msra.mxu0 0.0
  %1163 = vmatprep.subr.mxu0 0.0
  %1164 = vmatpush1.xpose.msra.mxu0 0.0
  %1165 = vmatprep.subr.mxu0 0.0
  %1166 = vmatpush1.xpose.msra.mxu0 0.0
  %1167 = vmatprep.subr.mxu0 0.0
  %1168 = vmatpush1.xpose.msra.mxu0 0.0
  %1169 = vmatprep.subr.mxu0 0.0
  %1170 = vmatpush1.xpose.msra.mxu0 0.0
  %1171 = vmatprep.subr.mxu0 0.0
  %1172 = vmatpush1.xpose.msra.mxu0 0.0
  %1173 = vmatprep.subr.mxu0 0.0
  %1174 = vmatpush1.xpose.msra.mxu0 0.0
  %1175 = vmatprep.subr.mxu0 0.0
  %1176 = vmatpush1.xpose.msra.mxu0 0.0
  %1177 = vmatprep.subr.mxu0 0.0
  %1178 = vmatpush1.xpose.msra.mxu0 0.0
  %1179 = vmatprep.subr.mxu0 0.0
  %1180 = vmatpush1.xpose.msra.mxu0 0.0
  %1181 = vmatprep.subr.mxu0 0.0
  %1182 = vmatpush1.xpose.msra.mxu0 0.0
  %1183 = vmatprep.subr.mxu0 0.0
  %1184 = vmatpush1.xpose.msra.mxu0 0.0
  %1185 = vmatprep.subr.mxu0 0.0
  %1186 = vmatpush1.xpose.msra.mxu0 0.0
  %1187 = vmatprep.subr.mxu0 0.0
  %1188 = vmatpush1.xpose.msra.mxu0 0.0
  %1189 = vmatprep.subr.mxu0 0.0
  %1190 = vmatpush1.xpose.msra.mxu0 0.0
  %1191 = vmatprep.subr.mxu0 0.0
  %1192 = vmatpush1.xpose.msra.mxu0 %v1159
  %1193 = vmatprep.subr.mxu0 0.0
  %1194 = vmatpush2.xpose.msra.mxu0 0.0
  %1195 = vmatprep.subr.mxu0 0.0
  %1196 = vmatpush2.xpose.msra.mxu0 0.0
  %1197 = vmatprep.subr.mxu0 0.0
  %1198 = vmatpush2.xpose.msra.mxu0 0.0
  %1199 = vmatprep.subr.mxu0 0.0
  %1200 = vmatpush2.xpose.msra.mxu0 0.0
  %1201 = vmatprep.subr.mxu0 0.0
  %1202 = vmatpush2.xpose.msra.mxu0 0.0
  %1203 = vmatprep.subr.mxu0 0.0
  %1204 = vmatpush2.xpose.msra.mxu0 0.0
  %1205 = vmatprep.subr.mxu0 0.0
  %1206 = vmatpush2.xpose.msra.mxu0 0.0
  %1207 = vmatprep.subr.mxu0 0.0
  %1208 = vmatpush2.xpose.msra.mxu0 0.0
  %1209 = vmatprep.subr.mxu0 0.0
  %1210 = vmatpush2.xpose.msra.mxu0 0.0
  %1211 = vmatprep.subr.mxu0 0.0
  %1212 = vmatpush2.xpose.msra.mxu0 0.0
  %1213 = vmatprep.subr.mxu0 0.0
  %1214 = vmatpush2.xpose.msra.mxu0 0.0
  %1215 = vmatprep.subr.mxu0 0.0
  %1216 = vmatpush2.xpose.msra.mxu0 0.0
  %1217 = vmatprep.subr.mxu0 0.0
  %1218 = vmatpush2.xpose.msra.mxu0 0.0
  %1219 = vmatprep.subr.mxu0 0.0
  %1220 = vmatpush2.xpose.msra.mxu0 0.0
  %1221 = vmatprep.subr.mxu0 0.0
  %1222 = vmatpush2.xpose.msra.mxu0 0.0
  %1223 = vmatprep.subr.mxu0 0.0
  %1224 = vmatpush2.xpose.msra.mxu0 0.0
  %1225 = vmatprep.mubr.f32.mxu0 0.0
  %1226 = vmatmul.mubr.f32.gmra.mxu0 %v1157
  %v1227 = vpop.f32.mrf.mxu0
  %v1228 = vadd.f32 0.0, %v1227
  %v1229 = vpop.f32.mrf.mxu0
  %1230 = vdwg.mxu0
  %v1231 = vsel %vm142, %v1228, -inf
  %1232 = vmax.xlane.f32.xlu0 %v1231
  %v1233 = vpop.xlane.xlu0 %1232
  %v1234 = vsub.f32 %v1228, %v1233
  %v1235 = vmul.f32 %v1234, 1.442695
  %v1236 = vpow.pop %v1235
  %v1237 = vsel %vm142, %v1236, 0.0
  %1238 = vadd.xlane.f32.xlu0 %v1237
  %v1239 = vpop.xlane.xlu0 %1238
  %v1240 = vrcp.pop %v1239
  %v1241 = vmul.f32 %v1236, %v1240
  %1242 = vrot.lane.b32.xlu0 %v136, 48
  %v1243 = vpop.permute.xlu0 %1242
  %v1246 = vsel %vm142, %v1241, 0
  %1248 = vmatprep.subr.mxu0 0.0
  %1249 = vmatpush1.msra.mxu0 0.0
  %1250 = vmatprep.subr.mxu0 0.0
  %1251 = vmatpush1.msra.mxu0 0.0
  %1252 = vmatprep.subr.mxu0 0.0
  %1253 = vmatpush1.msra.mxu0 0.0
  %1254 = vmatprep.subr.mxu0 0.0
  %1255 = vmatpush1.msra.mxu0 0.0
  %1256 = vmatprep.subr.mxu0 0.0
  %1257 = vmatpush1.msra.mxu0 0.0
  %1258 = vmatprep.subr.mxu0 0.0
  %1259 = vmatpush1.msra.mxu0 0.0
  %1260 = vmatprep.subr.mxu0 0.0
  %1261 = vmatpush1.msra.mxu0 0.0
  %1262 = vmatprep.subr.mxu0 0.0
  %1263 = vmatpush1.msra.mxu0 0.0
  %1264 = vmatprep.subr.mxu0 0.0
  %1265 = vmatpush1.msra.mxu0 0.0
  %1266 = vmatprep.subr.mxu0 0.0
  %1267 = vmatpush1.msra.mxu0 0.0
  %1268 = vmatprep.subr.mxu0 0.0
  %1269 = vmatpush1.msra.mxu0 0.0
  %1270 = vmatprep.subr.mxu0 0.0
  %1271 = vmatpush1.msra.mxu0 0.0
  %1272 = vmatprep.subr.mxu0 0.0
  %1273 = vmatpush1.msra.mxu0 0.0
  %1274 = vmatprep.subr.mxu0 0.0
  %1275 = vmatpush1.msra.mxu0 0.0
  %1276 = vmatprep.subr.mxu0 0.0
  %1277 = vmatpush1.msra.mxu0 0.0
  %1278 = vmatprep.subr.mxu0 0.0
  %1279 = vmatpush1.msra.mxu0 %v1243
  %1280 = vmatprep.subr.mxu0 0.0
  %1281 = vmatpush2.msra.mxu0 0.0
  %1282 = vmatprep.subr.mxu0 0.0
  %1283 = vmatpush2.msra.mxu0 0.0
  %1284 = vmatprep.subr.mxu0 0.0
  %1285 = vmatpush2.msra.mxu0 0.0
  %1286 = vmatprep.subr.mxu0 0.0
  %1287 = vmatpush2.msra.mxu0 0.0
  %1288 = vmatprep.subr.mxu0 0.0
  %1289 = vmatpush2.msra.mxu0 0.0
  %1290 = vmatprep.subr.mxu0 0.0
  %1291 = vmatpush2.msra.mxu0 0.0
  %1292 = vmatprep.subr.mxu0 0.0
  %1293 = vmatpush2.msra.mxu0 0.0
  %1294 = vmatprep.subr.mxu0 0.0
  %1295 = vmatpush2.msra.mxu0 0.0
  %1296 = vmatprep.subr.mxu0 0.0
  %1297 = vmatpush2.msra.mxu0 0.0
  %1298 = vmatprep.subr.mxu0 0.0
  %1299 = vmatpush2.msra.mxu0 0.0
  %1300 = vmatprep.subr.mxu0 0.0
  %1301 = vmatpush2.msra.mxu0 0.0
  %1302 = vmatprep.subr.mxu0 0.0
  %1303 = vmatpush2.msra.mxu0 0.0
  %1304 = vmatprep.subr.mxu0 0.0
  %1305 = vmatpush2.msra.mxu0 0.0
  %1306 = vmatprep.subr.mxu0 0.0
  %1307 = vmatpush2.msra.mxu0 0.0
  %1308 = vmatprep.subr.mxu0 0.0
  %1309 = vmatpush2.msra.mxu0 0.0
  %1310 = vmatprep.subr.mxu0 0.0
  %1311 = vmatpush2.msra.mxu0 0.0
  %1312 = vmatprep.mubr.f32.mxu0 0.0
  %1313 = vmatmul.mubr.f32.gmra.mxu0 %v1246
  %v1314 = vpop.f32.mrf.mxu0
  %v1315 = vadd.f32 0.0, %v1314
  %v1316 = vpop.f32.mrf.mxu0
  %1317 = vdwg.mxu0
  %1319 = vrot.lane.b32.xlu0 %v1315, 16
  %v1320 = vpop.permute.xlu0 %1319
  %1322 = vst.msk [vmem:[#allocation2 + $0x8] sm:$0xff] %vm645, %v1320
  %1323 = vrot.lane.b32.xlu0 %v136, 104
  %v1324 = vpop.permute.xlu0 %1323
  %1325 = vrot.lane.b32.xlu0 %v136, 72
  %v1326 = vpop.permute.xlu0 %1325
  %v1327 = vsel %vm142, %v1324, 0
  %v1329 = vsel %vm142, %v1326, 0
  %1331 = vmatprep.subr.mxu0 0.0
  %1332 = vmatpush1.xpose.msra.mxu0 0.0
  %1333 = vmatprep.subr.mxu0 0.0
  %1334 = vmatpush1.xpose.msra.mxu0 0.0
  %1335 = vmatprep.subr.mxu0 0.0
  %1336 = vmatpush1.xpose.msra.mxu0 0.0
  %1337 = vmatprep.subr.mxu0 0.0
  %1338 = vmatpush1.xpose.msra.mxu0 0.0
  %1339 = vmatprep.subr.mxu0 0.0
  %1340 = vmatpush1.xpose.msra.mxu0 0.0
  %1341 = vmatprep.subr.mxu0 0.0
  %1342 = vmatpush1.xpose.msra.mxu0 0.0
  %1343 = vmatprep.subr.mxu0 0.0
  %1344 = vmatpush1.xpose.msra.mxu0 0.0
  %1345 = vmatprep.subr.mxu0 0.0
  %1346 = vmatpush1.xpose.msra.mxu0 0.0
  %1347 = vmatprep.subr.mxu0 0.0
  %1348 = vmatpush1.xpose.msra.mxu0 0.0
  %1349 = vmatprep.subr.mxu0 0.0
  %1350 = vmatpush1.xpose.msra.mxu0 0.0
  %1351 = vmatprep.subr.mxu0 0.0
  %1352 = vmatpush1.xpose.msra.mxu0 0.0
  %1353 = vmatprep.subr.mxu0 0.0
  %1354 = vmatpush1.xpose.msra.mxu0 0.0
  %1355 = vmatprep.subr.mxu0 0.0
  %1356 = vmatpush1.xpose.msra.mxu0 0.0
  %1357 = vmatprep.subr.mxu0 0.0
  %1358 = vmatpush1.xpose.msra.mxu0 0.0
  %1359 = vmatprep.subr.mxu0 0.0
  %1360 = vmatpush1.xpose.msra.mxu0 0.0
  %1361 = vmatprep.subr.mxu0 0.0
  %1362 = vmatpush1.xpose.msra.mxu0 %v1329
  %1363 = vmatprep.subr.mxu0 0.0
  %1364 = vmatpush2.xpose.msra.mxu0 0.0
  %1365 = vmatprep.subr.mxu0 0.0
  %1366 = vmatpush2.xpose.msra.mxu0 0.0
  %1367 = vmatprep.subr.mxu0 0.0
  %1368 = vmatpush2.xpose.msra.mxu0 0.0
  %1369 = vmatprep.subr.mxu0 0.0
  %1370 = vmatpush2.xpose.msra.mxu0 0.0
  %1371 = vmatprep.subr.mxu0 0.0
  %1372 = vmatpush2.xpose.msra.mxu0 0.0
  %1373 = vmatprep.subr.mxu0 0.0
  %1374 = vmatpush2.xpose.msra.mxu0 0.0
  %1375 = vmatprep.subr.mxu0 0.0
  %1376 = vmatpush2.xpose.msra.mxu0 0.0
  %1377 = vmatprep.subr.mxu0 0.0
  %1378 = vmatpush2.xpose.msra.mxu0 0.0
  %1379 = vmatprep.subr.mxu0 0.0
  %1380 = vmatpush2.xpose.msra.mxu0 0.0
  %1381 = vmatprep.subr.mxu0 0.0
  %1382 = vmatpush2.xpose.msra.mxu0 0.0
  %1383 = vmatprep.subr.mxu0 0.0
  %1384 = vmatpush2.xpose.msra.mxu0 0.0
  %1385 = vmatprep.subr.mxu0 0.0
  %1386 = vmatpush2.xpose.msra.mxu0 0.0
  %1387 = vmatprep.subr.mxu0 0.0
  %1388 = vmatpush2.xpose.msra.mxu0 0.0
  %1389 = vmatprep.subr.mxu0 0.0
  %1390 = vmatpush2.xpose.msra.mxu0 0.0
  %1391 = vmatprep.subr.mxu0 0.0
  %1392 = vmatpush2.xpose.msra.mxu0 0.0
  %1393 = vmatprep.subr.mxu0 0.0
  %1394 = vmatpush2.xpose.msra.mxu0 0.0
  %1395 = vmatprep.mubr.f32.mxu0 0.0
  %1396 = vmatmul.mubr.f32.gmra.mxu0 %v1327
  %v1397 = vpop.f32.mrf.mxu0
  %v1398 = vadd.f32 0.0, %v1397
  %v1399 = vpop.f32.mrf.mxu0
  %1400 = vdwg.mxu0
  %v1401 = vsel %vm142, %v1398, -inf
  %1402 = vmax.xlane.f32.xlu0 %v1401
  %v1403 = vpop.xlane.xlu0 %1402
  %v1404 = vsub.f32 %v1398, %v1403
  %v1405 = vmul.f32 %v1404, 1.442695
  %v1406 = vpow.pop %v1405
  %v1407 = vsel %vm142, %v1406, 0.0
  %1408 = vadd.xlane.f32.xlu0 %v1407
  %v1409 = vpop.xlane.xlu0 %1408
  %v1410 = vrcp.pop %v1409
  %v1411 = vmul.f32 %v1406, %v1410
  %1412 = vrot.lane.b32.xlu0 %v136, 40
  %v1413 = vpop.permute.xlu0 %1412
  %v1416 = vsel %vm142, %v1411, 0
  %1418 = vmatprep.subr.mxu0 0.0
  %1419 = vmatpush1.msra.mxu0 0.0
  %1420 = vmatprep.subr.mxu0 0.0
  %1421 = vmatpush1.msra.mxu0 0.0
  %1422 = vmatprep.subr.mxu0 0.0
  %1423 = vmatpush1.msra.mxu0 0.0
  %1424 = vmatprep.subr.mxu0 0.0
  %1425 = vmatpush1.msra.mxu0 0.0
  %1426 = vmatprep.subr.mxu0 0.0
  %1427 = vmatpush1.msra.mxu0 0.0
  %1428 = vmatprep.subr.mxu0 0.0
  %1429 = vmatpush1.msra.mxu0 0.0
  %1430 = vmatprep.subr.mxu0 0.0
  %1431 = vmatpush1.msra.mxu0 0.0
  %1432 = vmatprep.subr.mxu0 0.0
  %1433 = vmatpush1.msra.mxu0 0.0
  %1434 = vmatprep.subr.mxu0 0.0
  %1435 = vmatpush1.msra.mxu0 0.0
  %1436 = vmatprep.subr.mxu0 0.0
  %1437 = vmatpush1.msra.mxu0 0.0
  %1438 = vmatprep.subr.mxu0 0.0
  %1439 = vmatpush1.msra.mxu0 0.0
  %1440 = vmatprep.subr.mxu0 0.0
  %1441 = vmatpush1.msra.mxu0 0.0
  %1442 = vmatprep.subr.mxu0 0.0
  %1443 = vmatpush1.msra.mxu0 0.0
  %1444 = vmatprep.subr.mxu0 0.0
  %1445 = vmatpush1.msra.mxu0 0.0
  %1446 = vmatprep.subr.mxu0 0.0
  %1447 = vmatpush1.msra.mxu0 0.0
  %1448 = vmatprep.subr.mxu0 0.0
  %1449 = vmatpush1.msra.mxu0 %v1413
  %1450 = vmatprep.subr.mxu0 0.0
  %1451 = vmatpush2.msra.mxu0 0.0
  %1452 = vmatprep.subr.mxu0 0.0
  %1453 = vmatpush2.msra.mxu0 0.0
  %1454 = vmatprep.subr.mxu0 0.0
  %1455 = vmatpush2.msra.mxu0 0.0
  %1456 = vmatprep.subr.mxu0 0.0
  %1457 = vmatpush2.msra.mxu0 0.0
  %1458 = vmatprep.subr.mxu0 0.0
  %1459 = vmatpush2.msra.mxu0 0.0
  %1460 = vmatprep.subr.mxu0 0.0
  %1461 = vmatpush2.msra.mxu0 0.0
  %1462 = vmatprep.subr.mxu0 0.0
  %1463 = vmatpush2.msra.mxu0 0.0
  %1464 = vmatprep.subr.mxu0 0.0
  %1465 = vmatpush2.msra.mxu0 0.0
  %1466 = vmatprep.subr.mxu0 0.0
  %1467 = vmatpush2.msra.mxu0 0.0
  %1468 = vmatprep.subr.mxu0 0.0
  %1469 = vmatpush2.msra.mxu0 0.0
  %1470 = vmatprep.subr.mxu0 0.0
  %1471 = vmatpush2.msra.mxu0 0.0
  %1472 = vmatprep.subr.mxu0 0.0
  %1473 = vmatpush2.msra.mxu0 0.0
  %1474 = vmatprep.subr.mxu0 0.0
  %1475 = vmatpush2.msra.mxu0 0.0
  %1476 = vmatprep.subr.mxu0 0.0
  %1477 = vmatpush2.msra.mxu0 0.0
  %1478 = vmatprep.subr.mxu0 0.0
  %1479 = vmatpush2.msra.mxu0 0.0
  %1480 = vmatprep.subr.mxu0 0.0
  %1481 = vmatpush2.msra.mxu0 0.0
  %1482 = vmatprep.mubr.f32.mxu0 0.0
  %1483 = vmatmul.mubr.f32.gmra.mxu0 %v1416
  %v1484 = vpop.f32.mrf.mxu0
  %v1485 = vadd.f32 0.0, %v1484
  %v1486 = vpop.f32.mrf.mxu0
  %1487 = vdwg.mxu0
  %1489 = vrot.lane.b32.xlu0 %v1485, 24
  %v1490 = vpop.permute.xlu0 %1489
  %1492 = vst.msk [vmem:[#allocation2 + $0x8] sm:$0xff] %vm816, %v1490
  %v1493 = vld [vmem:[#allocation2] sm:$0xff]
  %v1494 = vld [vmem:[#allocation2 + $0x8] sm:$0xff]
  %v1495 = vld [vmem:[%s3] sm:$0xff]
  %v1496 = vld [vmem:[%s3 + $0x8] sm:$0xff]
  %v1497 = vld [vmem:[%s3 + $0x10] sm:$0xff]
  %v1498 = vld [vmem:[%s3 + $0x18] sm:$0xff]
  %v1499 = vld [vmem:[%s4] sm:$0x1]
  %v1501 = vlaneseq
  %v1502 = vshrl.u32 %v1501, 7
  %v1503 = vsub.s32 0, %v1502
  %v1504 = vrot.slane %v1499, %v1503
  %v1507 = vsel %vm57, %v1493, 0
  %v1510 = vsel %vm57, %v1494, 0
  %1512 = vmatprep.subr.mxu0 0.0
  %1513 = vmatpush1.msra.mxu0 0.0
  %1514 = vmatprep.subr.mxu0 0.0
  %1515 = vmatpush1.msra.mxu0 0.0
  %1516 = vmatprep.subr.mxu0 0.0
  %1517 = vmatpush1.msra.mxu0 0.0
  %1518 = vmatprep.subr.mxu0 0.0
  %1519 = vmatpush1.msra.mxu0 0.0
  %1520 = vmatprep.subr.mxu0 0.0
  %1521 = vmatpush1.msra.mxu0 0.0
  %1522 = vmatprep.subr.mxu0 0.0
  %1523 = vmatpush1.msra.mxu0 0.0
  %1524 = vmatprep.subr.mxu0 0.0
  %1525 = vmatpush1.msra.mxu0 0.0
  %1526 = vmatprep.subr.mxu0 0.0
  %1527 = vmatpush1.msra.mxu0 0.0
  %1528 = vmatprep.subr.mxu0 0.0
  %1529 = vmatpush1.msra.mxu0 0.0
  %1530 = vmatprep.subr.mxu0 0.0
  %1531 = vmatpush1.msra.mxu0 0.0
  %1532 = vmatprep.subr.mxu0 0.0
  %1533 = vmatpush1.msra.mxu0 0.0
  %1534 = vmatprep.subr.mxu0 0.0
  %1535 = vmatpush1.msra.mxu0 0.0
  %1536 = vmatprep.subr.mxu0 0.0
  %1537 = vmatpush1.msra.mxu0 %v1498
  %1538 = vmatprep.subr.mxu0 0.0
  %1539 = vmatpush1.msra.mxu0 %v1497
  %1540 = vmatprep.subr.mxu0 0.0
  %1541 = vmatpush1.msra.mxu0 %v1496
  %1542 = vmatprep.subr.mxu0 0.0
  %1543 = vmatpush1.msra.mxu0 %v1495
  %1544 = vmatprep.subr.mxu0 0.0
  %1545 = vmatpush2.msra.mxu0 0.0
  %1546 = vmatprep.subr.mxu0 0.0
  %1547 = vmatpush2.msra.mxu0 0.0
  %1548 = vmatprep.subr.mxu0 0.0
  %1549 = vmatpush2.msra.mxu0 0.0
  %1550 = vmatprep.subr.mxu0 0.0
  %1551 = vmatpush2.msra.mxu0 0.0
  %1552 = vmatprep.subr.mxu0 0.0
  %1553 = vmatpush2.msra.mxu0 0.0
  %1554 = vmatprep.subr.mxu0 0.0
  %1555 = vmatpush2.msra.mxu0 0.0
  %1556 = vmatprep.subr.mxu0 0.0
  %1557 = vmatpush2.msra.mxu0 0.0
  %1558 = vmatprep.subr.mxu0 0.0
  %1559 = vmatpush2.msra.mxu0 0.0
  %1560 = vmatprep.subr.mxu0 0.0
  %1561 = vmatpush2.msra.mxu0 0.0
  %1562 = vmatprep.subr.mxu0 0.0
  %1563 = vmatpush2.msra.mxu0 0.0
  %1564 = vmatprep.subr.mxu0 0.0
  %1565 = vmatpush2.msra.mxu0 0.0
  %1566 = vmatprep.subr.mxu0 0.0
  %1567 = vmatpush2.msra.mxu0 0.0
  %1568 = vmatprep.subr.mxu0 0.0
  %1569 = vmatpush2.msra.mxu0 0.0
  %1570 = vmatprep.subr.mxu0 0.0
  %1571 = vmatpush2.msra.mxu0 0.0
  %1572 = vmatprep.subr.mxu0 0.0
  %1573 = vmatpush2.msra.mxu0 0.0
  %1574 = vmatprep.subr.mxu0 0.0
  %1575 = vmatpush2.msra.mxu0 0.0
  %1576 = vmatprep.mubr.f32.mxu0 0.0
  %1577 = vmatmul.mubr.f32.gmra.mxu0 %v1507
  %v1578 = vpop.f32.mrf.mxu0
  %v1579 = vadd.f32 %v1504, %v1578
  %v1580 = vpop.f32.mrf.mxu0
  %1581 = vmatprep.mubr.f32.mxu0 0.0
  %1582 = vmatmul.mubr.f32.gmra.mxu0 %v1510
  %v1583 = vpop.f32.mrf.mxu0
  %v1584 = vadd.f32 %v1504, %v1583
  %v1585 = vpop.f32.mrf.mxu0
  %1586 = vdwg.mxu0
  %v1587 = vadd.f32 %v44, %v1579
  %v1588 = vadd.f32 %v45, %v1584
  %v1589 = vld [vmem:[%s5] sm:$0x1]
  %v1590 = vld [vmem:[%s6] sm:$0x1]
  %v1591 = vsel %vm57, %v1587, 0.0
  %1592 = vadd.xlane.f32.xlu0 %v1591
  %v1593 = vpop.xlane.xlu0 %1592
  %v1594 = vsel %vm57, %v1588, 0.0
  %1595 = vadd.xlane.f32.xlu0 %v1594
  %v1596 = vpop.xlane.xlu0 %1595
  %v1597 = vrcp.pop 32.0
  %v1598 = vmul.f32 %v1593, %v1597
  %v1599 = vmul.f32 %v1596, %v1597
  %v1600 = vsub.f32 %v1587, %v1598
  %v1601 = vsub.f32 %v1588, %v1599
  %v1602 = vmul.f32 %v1600, %v1600
  %v1603 = vmul.f32 %v1601, %v1601
  %v1604 = vsel %vm57, %v1602, 0.0
  %1605 = vadd.xlane.f32.xlu0 %v1604
  %v1606 = vpop.xlane.xlu0 %1605
  %v1607 = vsel %vm57, %v1603, 0.0
  %1608 = vadd.xlane.f32.xlu0 %v1607
  %v1609 = vpop.xlane.xlu0 %1608
  %v1610 = vmul.f32 %v1606, %v1597
  %v1611 = vmul.f32 %v1609, %v1597
  %v1612 = vadd.f32 %v1610, 1e-05
  %v1613 = vadd.f32 %v1611, 1e-05
  %v1614 = vrsqrt.pop %v1612
  %v1615 = vrsqrt.pop %v1613
  %v1616 = vmul.f32 %v1600, %v1614
  %v1617 = vmul.f32 %v1601, %v1615
  %v1619 = vlaneseq
  %v1620 = vshrl.u32 %v1619, 7
  %v1621 = vsub.s32 0, %v1620
  %v1622 = vrot.slane %v1589, %v1621
  %v1624 = vmul.f32 %v1616, %v1622
  %v1625 = vmul.f32 %v1617, %v1622
  %v1627 = vlaneseq
  %v1628 = vshrl.u32 %v1627, 7
  %v1629 = vsub.s32 0, %v1628
  %v1630 = vrot.slane %v1590, %v1629
  %v1632 = vadd.f32 %v1624, %v1630
  %v1633 = vadd.f32 %v1625, %v1630
  %v1634 = vld [vmem:[%s7] sm:$0xff]
  %v1635 = vld [vmem:[%s7 + $0x8] sm:$0xff]
  %v1636 = vld [vmem:[%s7 + $0x10] sm:$0xff]
  %v1637 = vld [vmem:[%s7 + $0x18] sm:$0xff]
  %v1638 = vld [vmem:[%s8] sm:$0x1]
  %v1640 = vlaneseq
  %v1641 = vshrl.u32 %v1640, 7
  %v1642 = vsub.s32 0, %v1641
  %v1643 = vrot.slane %v1638, %v1642
  %v1646 = vsel %vm57, %v1632, 0
  %v1649 = vsel %vm57, %v1633, 0
  %1651 = vmatprep.subr.mxu0 0.0
  %1652 = vmatpush1.msra.mxu0 0.0
  %1653 = vmatprep.subr.mxu0 0.0
  %1654 = vmatpush1.msra.mxu0 0.0
  %1655 = vmatprep.subr.mxu0 0.0
  %1656 = vmatpush1.msra.mxu0 0.0
  %1657 = vmatprep.subr.mxu0 0.0
  %1658 = vmatpush1.msra.mxu0 0.0
  %1659 = vmatprep.subr.mxu0 0.0
  %1660 = vmatpush1.msra.mxu0 0.0
  %1661 = vmatprep.subr.mxu0 0.0
  %1662 = vmatpush1.msra.mxu0 0.0
  %1663 = vmatprep.subr.mxu0 0.0
  %1664 = vmatpush1.msra.mxu0 0.0
  %1665 = vmatprep.subr.mxu0 0.0
  %1666 = vmatpush1.msra.mxu0 0.0
  %1667 = vmatprep.subr.mxu0 0.0
  %1668 = vmatpush1.msra.mxu0 0.0
  %1669 = vmatprep.subr.mxu0 0.0
  %1670 = vmatpush1.msra.mxu0 0.0
  %1671 = vmatprep.subr.mxu0 0.0
  %1672 = vmatpush1.msra.mxu0 0.0
  %1673 = vmatprep.subr.mxu0 0.0
  %1674 = vmatpush1.msra.mxu0 0.0
  %1675 = vmatprep.subr.mxu0 0.0
  %1676 = vmatpush1.msra.mxu0 %v1637
  %1677 = vmatprep.subr.mxu0 0.0
  %1678 = vmatpush1.msra.mxu0 %v1636
  %1679 = vmatprep.subr.mxu0 0.0
  %1680 = vmatpush1.msra.mxu0 %v1635
  %1681 = vmatprep.subr.mxu0 0.0
  %1682 = vmatpush1.msra.mxu0 %v1634
  %1683 = vmatprep.subr.mxu0 0.0
  %1684 = vmatpush2.msra.mxu0 0.0
  %1685 = vmatprep.subr.mxu0 0.0
  %1686 = vmatpush2.msra.mxu0 0.0
  %1687 = vmatprep.subr.mxu0 0.0
  %1688 = vmatpush2.msra.mxu0 0.0
  %1689 = vmatprep.subr.mxu0 0.0
  %1690 = vmatpush2.msra.mxu0 0.0
  %1691 = vmatprep.subr.mxu0 0.0
  %1692 = vmatpush2.msra.mxu0 0.0
  %1693 = vmatprep.subr.mxu0 0.0
  %1694 = vmatpush2.msra.mxu0 0.0
  %1695 = vmatprep.subr.mxu0 0.0
  %1696 = vmatpush2.msra.mxu0 0.0
  %1697 = vmatprep.subr.mxu0 0.0
  %1698 = vmatpush2.msra.mxu0 0.0
  %1699 = vmatprep.subr.mxu0 0.0
  %1700 = vmatpush2.msra.mxu0 0.0
  %1701 = vmatprep.subr.mxu0 0.0
  %1702 = vmatpush2.msra.mxu0 0.0
  %1703 = vmatprep.subr.mxu0 0.0
  %1704 = vmatpush2.msra.mxu0 0.0
  %1705 = vmatprep.subr.mxu0 0.0
  %1706 = vmatpush2.msra.mxu0 0.0
  %1707 = vmatprep.subr.mxu0 0.0
  %1708 = vmatpush2.msra.mxu0 0.0
  %1709 = vmatprep.subr.mxu0 0.0
  %1710 = vmatpush2.msra.mxu0 0.0
  %1711 = vmatprep.subr.mxu0 0.0
  %1712 = vmatpush2.msra.mxu0 0.0
  %1713 = vmatprep.subr.mxu0 0.0
  %1714 = vmatpush2.msra.mxu0 0.0
  %1715 = vmatprep.mubr.f32.mxu0 0.0
  %1716 = vmatmul.mubr.f32.gmra.mxu0 %v1646
  %v1717 = vpop.f32.mrf.mxu0
  %v1718 = vadd.f32 %v1643, %v1717
  %v1719 = vpop.f32.mrf.mxu0
  %1720 = vmatprep.mubr.f32.mxu0 0.0
  %1721 = vmatmul.mubr.f32.gmra.mxu0 %v1649
  %v1722 = vpop.f32.mrf.mxu0
  %v1723 = vadd.f32 %v1643, %v1722
  %v1724 = vpop.f32.mrf.mxu0
  %1725 = vdwg.mxu0
  %v1726 = vmax.f32 %v1718, 0.0
  %v1727 = vmax.f32 %v1723, 0.0
  %v1728 = vld [vmem:[%s9] sm:$0xff]
  %v1729 = vld [vmem:[%s9 + $0x8] sm:$0xff]
  %v1730 = vld [vmem:[%s9 + $0x10] sm:$0xff]
  %v1731 = vld [vmem:[%s9 + $0x18] sm:$0xff]
  %v1732 = vld [vmem:[%s9 + $0x20] sm:$0xff]
  %v1733 = vld [vmem:[%s9 + $0x28] sm:$0xff]
  %v1734 = vld [vmem:[%s9 + $0x30] sm:$0xff]
  %v1735 = vld [vmem:[%s9 + $0x38] sm:$0xff]
  %v1736 = vld [vmem:[%s10] sm:$0x1]
  %v1738 = vlaneseq
  %v1739 = vshrl.u32 %v1738, 7
  %v1740 = vsub.s32 0, %v1739
  %v1741 = vrot.slane %v1736, %v1740
  %vm1743 = vcmask 523264
  %v1745 = vsel %vm1743, %v1726, 0
  %v1748 = vsel %vm1743, %v1727, 0
  %1750 = vmatprep.subr.mxu0 0.0
  %1751 = vmatpush1.msra.mxu0 0.0
  %1752 = vmatprep.subr.mxu0 0.0
  %1753 = vmatpush1.msra.mxu0 0.0
  %1754 = vmatprep.subr.mxu0 0.0
  %1755 = vmatpush1.msra.mxu0 0.0
  %1756 = vmatprep.subr.mxu0 0.0
  %1757 = vmatpush1.msra.mxu0 0.0
  %1758 = vmatprep.subr.mxu0 0.0
  %1759 = vmatpush1.msra.mxu0 0.0
  %1760 = vmatprep.subr.mxu0 0.0
  %1761 = vmatpush1.msra.mxu0 0.0
  %1762 = vmatprep.subr.mxu0 0.0
  %1763 = vmatpush1.msra.mxu0 0.0
  %1764 = vmatprep.subr.mxu0 0.0
  %1765 = vmatpush1.msra.mxu0 0.0
  %1766 = vmatprep.subr.mxu0 0.0
  %1767 = vmatpush1.msra.mxu0 %v1735
  %1768 = vmatprep.subr.mxu0 0.0
  %1769 = vmatpush1.msra.mxu0 %v1734
  %1770 = vmatprep.subr.mxu0 0.0
  %1771 = vmatpush1.msra.mxu0 %v1733
  %1772 = vmatprep.subr.mxu0 0.0
  %1773 = vmatpush1.msra.mxu0 %v1732
  %1774 = vmatprep.subr.mxu0 0.0
  %1775 = vmatpush1.msra.mxu0 %v1731
  %1776 = vmatprep.subr.mxu0 0.0
  %1777 = vmatpush1.msra.mxu0 %v1730
  %1778 = vmatprep.subr.mxu0 0.0
  %1779 = vmatpush1.msra.mxu0 %v1729
  %1780 = vmatprep.subr.mxu0 0.0
  %1781 = vmatpush1.msra.mxu0 %v1728
  %1782 = vmatprep.subr.mxu0 0.0
  %1783 = vmatpush2.msra.mxu0 0.0
  %1784 = vmatprep.subr.mxu0 0.0
  %1785 = vmatpush2.msra.mxu0 0.0
  %1786 = vmatprep.subr.mxu0 0.0
  %1787 = vmatpush2.msra.mxu0 0.0
  %1788 = vmatprep.subr.mxu0 0.0
  %1789 = vmatpush2.msra.mxu0 0.0
  %1790 = vmatprep.subr.mxu0 0.0
  %1791 = vmatpush2.msra.mxu0 0.0
  %1792 = vmatprep.subr.mxu0 0.0
  %1793 = vmatpush2.msra.mxu0 0.0
  %1794 = vmatprep.subr.mxu0 0.0
  %1795 = vmatpush2.msra.mxu0 0.0
  %1796 = vmatprep.subr.mxu0 0.0
  %1797 = vmatpush2.msra.mxu0 0.0
  %1798 = vmatprep.subr.mxu0 0.0
  %1799 = vmatpush2.msra.mxu0 0.0
  %1800 = vmatprep.subr.mxu0 0.0
  %1801 = vmatpush2.msra.mxu0 0.0
  %1802 = vmatprep.subr.mxu0 0.0
  %1803 = vmatpush2.msra.mxu0 0.0
  %1804 = vmatprep.subr.mxu0 0.0
  %1805 = vmatpush2.msra.mxu0 0.0
  %1806 = vmatprep.subr.mxu0 0.0
  %1807 = vmatpush2.msra.mxu0 0.0
  %1808 = vmatprep.subr.mxu0 0.0
  %1809 = vmatpush2.msra.mxu0 0.0
  %1810 = vmatprep.subr.mxu0 0.0
  %1811 = vmatpush2.msra.mxu0 0.0
  %1812 = vmatprep.subr.mxu0 0.0
  %1813 = vmatpush2.msra.mxu0 0.0
  %1814 = vmatprep.mubr.f32.mxu0 0.0
  %1815 = vmatmul.mubr.f32.gmra.mxu0 %v1745
  %v1816 = vpop.f32.mrf.mxu0
  %v1817 = vadd.f32 %v1741, %v1816
  %v1818 = vpop.f32.mrf.mxu0
  %1819 = vmatprep.mubr.f32.mxu0 0.0
  %1820 = vmatmul.mubr.f32.gmra.mxu0 %v1748
  %v1821 = vpop.f32.mrf.mxu0
  %v1822 = vadd.f32 %v1741, %v1821
  %v1823 = vpop.f32.mrf.mxu0
  %1824 = vdwg.mxu0
  %v1825 = vadd.f32 %v1632, %v1817
  %v1826 = vadd.f32 %v1633, %v1822
  %v1827 = vld [vmem:[%s11] sm:$0x1]
  %v1828 = vld [vmem:[%s12] sm:$0x1]
  %v1829 = vsel %vm57, %v1825, 0.0
  %1830 = vadd.xlane.f32.xlu0 %v1829
  %v1831 = vpop.xlane.xlu0 %1830
  %v1832 = vsel %vm57, %v1826, 0.0
  %1833 = vadd.xlane.f32.xlu0 %v1832
  %v1834 = vpop.xlane.xlu0 %1833
  %v1835 = vmul.f32 %v1831, %v1597
  %v1836 = vmul.f32 %v1834, %v1597
  %v1837 = vsub.f32 %v1825, %v1835
  %v1838 = vsub.f32 %v1826, %v1836
  %v1839 = vmul.f32 %v1837, %v1837
  %v1840 = vmul.f32 %v1838, %v1838
  %v1841 = vsel %vm57, %v1839, 0.0
  %1842 = vadd.xlane.f32.xlu0 %v1841
  %v1843 = vpop.xlane.xlu0 %1842
  %v1844 = vsel %vm57, %v1840, 0.0
  %1845 = vadd.xlane.f32.xlu0 %v1844
  %v1846 = vpop.xlane.xlu0 %1845
  %v1847 = vmul.f32 %v1843, %v1597
  %v1848 = vmul.f32 %v1846, %v1597
  %v1849 = vadd.f32 %v1847, 1e-05
  %v1850 = vadd.f32 %v1848, 1e-05
  %v1851 = vrsqrt.pop %v1849
  %v1852 = vrsqrt.pop %v1850
  %v1853 = vmul.f32 %v1837, %v1851
  %v1854 = vmul.f32 %v1838, %v1852
  %v1856 = vlaneseq
  %v1857 = vshrl.u32 %v1856, 7
  %v1858 = vsub.s32 0, %v1857
  %v1859 = vrot.slane %v1827, %v1858
  %v1861 = vmul.f32 %v1853, %v1859
  %v1862 = vmul.f32 %v1854, %v1859
  %v1864 = vlaneseq
  %v1865 = vshrl.u32 %v1864, 7
  %v1866 = vsub.s32 0, %v1865
  %v1867 = vrot.slane %v1828, %v1866
  %v1869 = vadd.f32 %v1861, %v1867
  %v1870 = vadd.f32 %v1862, %v1867
  %1871 = vst.msk [vmem:[%s13] sm:$0xff] %vm57, %v1869
  %1872 = vst.msk [vmem:[%s13 + $0x8] sm:$0xff] %vm57, %v1870
  // Predicated region
  $region54: #{transformer_forward.2} parent=0 // pred_check
    _
  $region55: #{transformer_forward.2} parent=0 // pred_check_branch
    %1874 = sbr.rel (0) target = $region57
  $region56: #{transformer_forward.2} parent=0 // pred_region
    _
  $region57: #{transformer_forward.2} parent=0 // pred_fallthru
    _
  // Predicated region
  $region58: #{transformer_forward.2} parent=0 // pred_check
    _
  $region59: #{transformer_forward.2} parent=0 // pred_check_branch
    %1876 = sbr.rel (0) target = $region61
  $region60: #{transformer_forward.2} parent=0 // pred_region
    _
  $region61: #{transformer_forward.2} parent=0 // pred_fallthru
    _

// kernel: transformer_forward.3
$region0: #{transformer_forward.3}
  #allocation0 [shape = 'u32[]', space=smem, size = 0x4, offset = 0x4, fixed_abs, tag = 'smem constant byte address 0x4 - core index']
  #allocation1 [shape = 'u32[144,128]{1,0:T(1,128)}', space=vmem, size = 0x12000, scoped, tag = 'internal scratch']
  #allocation2 [shape = 'f32[16,32]{1,0:T(8,128)}', space=vmem, size = 0x2000, scoped, tag = 'scratch operand']
  %s0 = inlined_call_operand.vmem [shape: f32[16,32], index: 0, kind: input, shape index: {}]
  %s1 = inlined_call_operand.vmem [shape: f32[16,32], index: 1, kind: input, shape index: {}]
  %s2 = inlined_call_operand.vmem [shape: f32[32,96], index: 2, kind: input, shape index: {}]
  %s3 = inlined_call_operand.vmem [shape: f32[1,96], index: 3, kind: input, shape index: {}]
  %s4 = inlined_call_operand.vmem [shape: f32[32,32], index: 4, kind: input, shape index: {}]
  %s5 = inlined_call_operand.vmem [shape: f32[1,32], index: 5, kind: input, shape index: {}]
  %s6 = inlined_call_operand.vmem [shape: f32[1,32], index: 6, kind: input, shape index: {}]
  %s7 = inlined_call_operand.vmem [shape: f32[1,32], index: 7, kind: input, shape index: {}]
  %s8 = inlined_call_operand.vmem [shape: f32[32,32], index: 8, kind: input, shape index: {}]
  %s9 = inlined_call_operand.vmem [shape: f32[1,32], index: 9, kind: input, shape index: {}]
  %s10 = inlined_call_operand.vmem [shape: f32[32,64], index: 10, kind: input, shape index: {}]
  %s11 = inlined_call_operand.vmem [shape: f32[1,64], index: 11, kind: input, shape index: {}]
  %s12 = inlined_call_operand.vmem [shape: f32[32,32], index: 12, kind: input, shape index: {}]
  %s13 = inlined_call_operand.vmem [shape: f32[1,32], index: 13, kind: input, shape index: {}]
  %s14 = inlined_call_operand.vmem [shape: f32[1,32], index: 14, kind: input, shape index: {}]
  %s15 = inlined_call_operand.vmem [shape: f32[1,32], index: 15, kind: input, shape index: {}]
  %s16 = inlined_call_operand.vmem [shape: f32[32,64], index: 16, kind: input, shape index: {}]
  %s17 = inlined_call_operand.vmem [shape: f32[1,64], index: 17, kind: input, shape index: {}]
  %s18 = inlined_call_operand.vmem [shape: f32[64,32], index: 18, kind: input, shape index: {}]
  %s19 = inlined_call_operand.vmem [shape: f32[1,32], index: 19, kind: input, shape index: {}]
  %s20 = inlined_call_operand.vmem [shape: f32[1,32], index: 20, kind: input, shape index: {}]
  %s21 = inlined_call_operand.vmem [shape: f32[1,32], index: 21, kind: input, shape index: {}]
  %s22 = inlined_call_operand.hbm [shape: f32[16,32], index: 22, kind: output, shape index: {}]
  %s23 = sld [smem:[#allocation0]]
  $region98: #{transformer_forward.3} parent=0
    _
  %s25 = ssub.s32 1, %s23
  %s26 = scalar_select 0, %s25, %s23
  $region1: #{transformer_forward.3} parent=0
    #allocation3 [shape = 'u8[8192]{0}', space=vmem, size = 0x2000, scoped, tag = 'output window, operand 0, single buffered']
    #allocation4 [shape = 's32[1]{0}', space=sflag, size = 0x4, scoped, tag = 'scoped memory for transformer_forward.3']
    %27 = vsyncpa [#allocation4], 0
    // Predicated region
    $region2: #{transformer_forward.3} parent=1 // pred_check
      _
    $region3: #{transformer_forward.3} parent=1 // pred_check_branch
      %29 = sbr.rel (0) target = $region5
    $region4: #{transformer_forward.3} parent=1 // pred_region
      _
    $region5: #{transformer_forward.3} parent=1 // pred_fallthru
      _
    // Predicated region
    $region6: #{transformer_forward.3} parent=1 // pred_check
      _
    $region7: #{transformer_forward.3} parent=1 // pred_check_branch
      %31 = sbr.rel (0) target = $region9
    $region8: #{transformer_forward.3} parent=1 // pred_region
      _
    $region9: #{transformer_forward.3} parent=1 // pred_fallthru
      _
    // Predicated region
    $region10: #{transformer_forward.3} parent=1 // pred_check
      _
    $region11: #{transformer_forward.3} parent=1 // pred_check_branch
      %33 = sbr.rel (0) target = $region13
    $region12: #{transformer_forward.3} parent=1 // pred_region
      _
    $region13: #{transformer_forward.3} parent=1 // pred_fallthru
      _
    // Predicated region
    $region14: #{transformer_forward.3} parent=1 // pred_check
      _
    $region15: #{transformer_forward.3} parent=1 // pred_check_branch
      %35 = sbr.rel (0) target = $region17
    $region16: #{transformer_forward.3} parent=1 // pred_region
      _
    $region17: #{transformer_forward.3} parent=1 // pred_fallthru
      _
    // Predicated region
    $region18: #{transformer_forward.3} parent=1 // pred_check
      _
    $region19: #{transformer_forward.3} parent=1 // pred_check_branch
      %37 = sbr.rel (0) target = $region21
    $region20: #{transformer_forward.3} parent=1 // pred_region
      _
    $region21: #{transformer_forward.3} parent=1 // pred_fallthru
      _
    // Predicated region
    $region22: #{transformer_forward.3} parent=1 // pred_check
      _
    $region23: #{transformer_forward.3} parent=1 // pred_check_branch
      %39 = sbr.rel (0) target = $region25
    $region24: #{transformer_forward.3} parent=1 // pred_region
      _
    $region25: #{transformer_forward.3} parent=1 // pred_fallthru
      _
    // Predicated region
    $region26: #{transformer_forward.3} parent=1 // pred_check
      _
    $region27: #{transformer_forward.3} parent=1 // pred_check_branch
      %41 = sbr.rel (0) target = $region29
    $region28: #{transformer_forward.3} parent=1 // pred_region
      _
    $region29: #{transformer_forward.3} parent=1 // pred_fallthru
      _
    // Predicated region
    $region30: #{transformer_forward.3} parent=1 // pred_check
      _
    $region31: #{transformer_forward.3} parent=1 // pred_check_branch
      %43 = sbr.rel (0) target = $region33
    $region32: #{transformer_forward.3} parent=1 // pred_region
      _
    $region33: #{transformer_forward.3} parent=1 // pred_fallthru
      _
    // Predicated region
    $region34: #{transformer_forward.3} parent=1 // pred_check
      _
    $region35: #{transformer_forward.3} parent=1 // pred_check_branch
      %45 = sbr.rel (0) target = $region37
    $region36: #{transformer_forward.3} parent=1 // pred_region
      _
    $region37: #{transformer_forward.3} parent=1 // pred_fallthru
      _
    // Predicated region
    $region38: #{transformer_forward.3} parent=1 // pred_check
      _
    $region39: #{transformer_forward.3} parent=1 // pred_check_branch
      %47 = sbr.rel (0) target = $region41
    $region40: #{transformer_forward.3} parent=1 // pred_region
      _
    $region41: #{transformer_forward.3} parent=1 // pred_fallthru
      _
    // Predicated region
    $region42: #{transformer_forward.3} parent=1 // pred_check
      _
    $region43: #{transformer_forward.3} parent=1 // pred_check_branch
      %49 = sbr.rel (0) target = $region45
    $region44: #{transformer_forward.3} parent=1 // pred_region
      _
    $region45: #{transformer_forward.3} parent=1 // pred_fallthru
      _
    // Predicated region
    $region46: #{transformer_forward.3} parent=1 // pred_check
      _
    $region47: #{transformer_forward.3} parent=1 // pred_check_branch
      %51 = sbr.rel (0) target = $region49
    $region48: #{transformer_forward.3} parent=1 // pred_region
      _
    $region49: #{transformer_forward.3} parent=1 // pred_fallthru
      _
    // Predicated region
    $region50: #{transformer_forward.3} parent=1 // pred_check
      _
    $region51: #{transformer_forward.3} parent=1 // pred_check_branch
      %53 = sbr.rel (0) target = $region53
    $region52: #{transformer_forward.3} parent=1 // pred_region
      _
    $region53: #{transformer_forward.3} parent=1 // pred_fallthru
      _
    // Predicated region
    $region54: #{transformer_forward.3} parent=1 // pred_check
      _
    $region55: #{transformer_forward.3} parent=1 // pred_check_branch
      %55 = sbr.rel (0) target = $region57
    $region56: #{transformer_forward.3} parent=1 // pred_region
      _
    $region57: #{transformer_forward.3} parent=1 // pred_fallthru
      _
    // Predicated region
    $region58: #{transformer_forward.3} parent=1 // pred_check
      _
    $region59: #{transformer_forward.3} parent=1 // pred_check_branch
      %57 = sbr.rel (0) target = $region61
    $region60: #{transformer_forward.3} parent=1 // pred_region
      _
    $region61: #{transformer_forward.3} parent=1 // pred_fallthru
      _
    // Predicated region
    $region62: #{transformer_forward.3} parent=1 // pred_check
      _
    $region63: #{transformer_forward.3} parent=1 // pred_check_branch
      %59 = sbr.rel (0) target = $region65
    $region64: #{transformer_forward.3} parent=1 // pred_region
      _
    $region65: #{transformer_forward.3} parent=1 // pred_fallthru
      _
    // Predicated region
    $region66: #{transformer_forward.3} parent=1 // pred_check
      _
    $region67: #{transformer_forward.3} parent=1 // pred_check_branch
      %61 = sbr.rel (0) target = $region69
    $region68: #{transformer_forward.3} parent=1 // pred_region
      _
    $region69: #{transformer_forward.3} parent=1 // pred_fallthru
      _
    // Predicated region
    $region70: #{transformer_forward.3} parent=1 // pred_check
      _
    $region71: #{transformer_forward.3} parent=1 // pred_check_branch
      %63 = sbr.rel (0) target = $region73
    $region72: #{transformer_forward.3} parent=1 // pred_region
      _
    $region73: #{transformer_forward.3} parent=1 // pred_fallthru
      _
    // Predicated region
    $region74: #{transformer_forward.3} parent=1 // pred_check
      _
    $region75: #{transformer_forward.3} parent=1 // pred_check_branch
      %65 = sbr.rel (0) target = $region77
    $region76: #{transformer_forward.3} parent=1 // pred_region
      _
    $region77: #{transformer_forward.3} parent=1 // pred_fallthru
      _
    // Predicated region
    $region78: #{transformer_forward.3} parent=1 // pred_check
      _
    $region79: #{transformer_forward.3} parent=1 // pred_check_branch
      %67 = sbr.rel (0) target = $region81
    $region80: #{transformer_forward.3} parent=1 // pred_region
      _
    $region81: #{transformer_forward.3} parent=1 // pred_fallthru
      _
    // Predicated region
    $region82: #{transformer_forward.3} parent=1 // pred_check
      _
    $region83: #{transformer_forward.3} parent=1 // pred_check_branch
      %69 = sbr.rel (0) target = $region85
    $region84: #{transformer_forward.3} parent=1 // pred_region
      _
    $region85: #{transformer_forward.3} parent=1 // pred_fallthru
      _
    // Predicated region
    $region86: #{transformer_forward.3} parent=1 // pred_check
      _
    $region87: #{transformer_forward.3} parent=1 // pred_check_branch
      %71 = sbr.rel (0) target = $region89
    $region88: #{transformer_forward.3} parent=1 // pred_region
      _
    $region89: #{transformer_forward.3} parent=1 // pred_fallthru
      _
    %v72 = vld [vmem:[%s0] sm:$0xff]
    %v73 = vld [vmem:[%s0 + $0x8] sm:$0xff]
    %v74 = vld [vmem:[%s1] sm:$0xff]
    %v75 = vld [vmem:[%s1 + $0x8] sm:$0xff]
    %v76 = vld [vmem:[%s2] sm:$0xff]
    %v77 = vld [vmem:[%s2 + $0x8] sm:$0xff]
    %v78 = vld [vmem:[%s2 + $0x10] sm:$0xff]
    %v79 = vld [vmem:[%s2 + $0x18] sm:$0xff]
    %v80 = vld [vmem:[%s3] sm:$0x1]
    %v82 = vlaneseq
    %v83 = vshrl.u32 %v82, 7
    %v84 = vsub.s32 0, %v83
    %v85 = vrot.slane %v80, %v84
    %vm87 = vcmask 261120
    %v89 = vsel %vm87, %v72, 0
    %v92 = vsel %vm87, %v73, 0
    %94 = vmatprep.subr.mxu0 0.0
    %95 = vmatpush1.msra.mxu0 0.0
    %96 = vmatprep.subr.mxu0 0.0
    %97 = vmatpush1.msra.mxu0 0.0
    %98 = vmatprep.subr.mxu0 0.0
    %99 = vmatpush1.msra.mxu0 0.0
    %100 = vmatprep.subr.mxu0 0.0
    %101 = vmatpush1.msra.mxu0 0.0
    %102 = vmatprep.subr.mxu0 0.0
    %103 = vmatpush1.msra.mxu0 0.0
    %104 = vmatprep.subr.mxu0 0.0
    %105 = vmatpush1.msra.mxu0 0.0
    %106 = vmatprep.subr.mxu0 0.0
    %107 = vmatpush1.msra.mxu0 0.0
    %108 = vmatprep.subr.mxu0 0.0
    %109 = vmatpush1.msra.mxu0 0.0
    %110 = vmatprep.subr.mxu0 0.0
    %111 = vmatpush1.msra.mxu0 0.0
    %112 = vmatprep.subr.mxu0 0.0
    %113 = vmatpush1.msra.mxu0 0.0
    %114 = vmatprep.subr.mxu0 0.0
    %115 = vmatpush1.msra.mxu0 0.0
    %116 = vmatprep.subr.mxu0 0.0
    %117 = vmatpush1.msra.mxu0 0.0
    %118 = vmatprep.subr.mxu0 0.0
    %119 = vmatpush1.msra.mxu0 %v79
    %120 = vmatprep.subr.mxu0 0.0
    %121 = vmatpush1.msra.mxu0 %v78
    %122 = vmatprep.subr.mxu0 0.0
    %123 = vmatpush1.msra.mxu0 %v77
    %124 = vmatprep.subr.mxu0 0.0
    %125 = vmatpush1.msra.mxu0 %v76
    %126 = vmatprep.subr.mxu0 0.0
    %127 = vmatpush2.msra.mxu0 0.0
    %128 = vmatprep.subr.mxu0 0.0
    %129 = vmatpush2.msra.mxu0 0.0
    %130 = vmatprep.subr.mxu0 0.0
    %131 = vmatpush2.msra.mxu0 0.0
    %132 = vmatprep.subr.mxu0 0.0
    %133 = vmatpush2.msra.mxu0 0.0
    %134 = vmatprep.subr.mxu0 0.0
    %135 = vmatpush2.msra.mxu0 0.0
    %136 = vmatprep.subr.mxu0 0.0
    %137 = vmatpush2.msra.mxu0 0.0
    %138 = vmatprep.subr.mxu0 0.0
    %139 = vmatpush2.msra.mxu0 0.0
    %140 = vmatprep.subr.mxu0 0.0
    %141 = vmatpush2.msra.mxu0 0.0
    %142 = vmatprep.subr.mxu0 0.0
    %143 = vmatpush2.msra.mxu0 0.0
    %144 = vmatprep.subr.mxu0 0.0
    %145 = vmatpush2.msra.mxu0 0.0
    %146 = vmatprep.subr.mxu0 0.0
    %147 = vmatpush2.msra.mxu0 0.0
    %148 = vmatprep.subr.mxu0 0.0
    %149 = vmatpush2.msra.mxu0 0.0
    %150 = vmatprep.subr.mxu0 0.0
    %151 = vmatpush2.msra.mxu0 0.0
    %152 = vmatprep.subr.mxu0 0.0
    %153 = vmatpush2.msra.mxu0 0.0
    %154 = vmatprep.subr.mxu0 0.0
    %155 = vmatpush2.msra.mxu0 0.0
    %156 = vmatprep.subr.mxu0 0.0
    %157 = vmatpush2.msra.mxu0 0.0
    %158 = vmatprep.mubr.f32.mxu0 0.0
    %159 = vmatmul.mubr.f32.gmra.mxu0 %v89
    %v160 = vpop.f32.mrf.mxu0
    %v161 = vadd.f32 %v85, %v160
    %v162 = vpop.f32.mrf.mxu0
    %163 = vmatprep.mubr.f32.mxu0 0.0
    %164 = vmatmul.mubr.f32.gmra.mxu0 %v92
    %v165 = vpop.f32.mrf.mxu0
    %v166 = vadd.f32 %v85, %v165
    %v167 = vpop.f32.mrf.mxu0
    %168 = vdwg.mxu0
    %170 = vrot.lane.b32.xlu0 %v161, 96
    %v171 = vpop.permute.xlu0 %170
    %vm172 = vcmask 64512
    %v173 = vsel %vm172, %v161, 0
    %v175 = vsel %vm172, %v171, 0
    %177 = vmatprep.subr.mxu0 0.0
    %178 = vmatpush1.xpose.msra.mxu0 0.0
    %179 = vmatprep.subr.mxu0 0.0
    %180 = vmatpush1.xpose.msra.mxu0 0.0
    %181 = vmatprep.subr.mxu0 0.0
    %182 = vmatpush1.xpose.msra.mxu0 0.0
    %183 = vmatprep.subr.mxu0 0.0
    %184 = vmatpush1.xpose.msra.mxu0 0.0
    %185 = vmatprep.subr.mxu0 0.0
    %186 = vmatpush1.xpose.msra.mxu0 0.0
    %187 = vmatprep.subr.mxu0 0.0
    %188 = vmatpush1.xpose.msra.mxu0 0.0
    %189 = vmatprep.subr.mxu0 0.0
    %190 = vmatpush1.xpose.msra.mxu0 0.0
    %191 = vmatprep.subr.mxu0 0.0
    %192 = vmatpush1.xpose.msra.mxu0 0.0
    %193 = vmatprep.subr.mxu0 0.0
    %194 = vmatpush1.xpose.msra.mxu0 0.0
    %195 = vmatprep.subr.mxu0 0.0
    %196 = vmatpush1.xpose.msra.mxu0 0.0
    %197 = vmatprep.subr.mxu0 0.0
    %198 = vmatpush1.xpose.msra.mxu0 0.0
    %199 = vmatprep.subr.mxu0 0.0
    %200 = vmatpush1.xpose.msra.mxu0 0.0
    %201 = vmatprep.subr.mxu0 0.0
    %202 = vmatpush1.xpose.msra.mxu0 0.0
    %203 = vmatprep.subr.mxu0 0.0
    %204 = vmatpush1.xpose.msra.mxu0 0.0
    %205 = vmatprep.subr.mxu0 0.0
    %206 = vmatpush1.xpose.msra.mxu0 0.0
    %207 = vmatprep.subr.mxu0 0.0
    %208 = vmatpush1.xpose.msra.mxu0 %v175
    %209 = vmatprep.subr.mxu0 0.0
    %210 = vmatpush2.xpose.msra.mxu0 0.0
    %211 = vmatprep.subr.mxu0 0.0
    %212 = vmatpush2.xpose.msra.mxu0 0.0
    %213 = vmatprep.subr.mxu0 0.0
    %214 = vmatpush2.xpose.msra.mxu0 0.0
    %215 = vmatprep.subr.mxu0 0.0
    %216 = vmatpush2.xpose.msra.mxu0 0.0
    %217 = vmatprep.subr.mxu0 0.0
    %218 = vmatpush2.xpose.msra.mxu0 0.0
    %219 = vmatprep.subr.mxu0 0.0
    %220 = vmatpush2.xpose.msra.mxu0 0.0
    %221 = vmatprep.subr.mxu0 0.0
    %222 = vmatpush2.xpose.msra.mxu0 0.0
    %223 = vmatprep.subr.mxu0 0.0
    %224 = vmatpush2.xpose.msra.mxu0 0.0
    %225 = vmatprep.subr.mxu0 0.0
    %226 = vmatpush2.xpose.msra.mxu0 0.0
    %227 = vmatprep.subr.mxu0 0.0
    %228 = vmatpush2.xpose.msra.mxu0 0.0
    %229 = vmatprep.subr.mxu0 0.0
    %230 = vmatpush2.xpose.msra.mxu0 0.0
    %231 = vmatprep.subr.mxu0 0.0
    %232 = vmatpush2.xpose.msra.mxu0 0.0
    %233 = vmatprep.subr.mxu0 0.0
    %234 = vmatpush2.xpose.msra.mxu0 0.0
    %235 = vmatprep.subr.mxu0 0.0
    %236 = vmatpush2.xpose.msra.mxu0 0.0
    %237 = vmatprep.subr.mxu0 0.0
    %238 = vmatpush2.xpose.msra.mxu0 0.0
    %239 = vmatprep.subr.mxu0 0.0
    %240 = vmatpush2.xpose.msra.mxu0 0.0
    %241 = vmatprep.mubr.f32.mxu0 0.0
    %242 = vmatmul.mubr.f32.gmra.mxu0 %v173
    %v243 = vpop.f32.mrf.mxu0
    %v244 = vadd.f32 0.0, %v243
    %v245 = vpop.f32.mrf.mxu0
    %246 = vdwg.mxu0
    %v247 = vsel %vm172, %v244, -inf
    %248 = vmax.xlane.f32.xlu0 %v247
    %v249 = vpop.xlane.xlu0 %248
    %v250 = vsub.f32 %v244, %v249
    %v251 = vmul.f32 %v250, 1.442695
    %v252 = vpow.pop %v251
    %v253 = vsel %vm172, %v252, 0.0
    %254 = vadd.xlane.f32.xlu0 %v253
    %v255 = vpop.xlane.xlu0 %254
    %v256 = vrcp.pop %v255
    %v257 = vmul.f32 %v252, %v256
    %258 = vrot.lane.b32.xlu0 %v161, 64
    %v259 = vpop.permute.xlu0 %258
    %v262 = vsel %vm172, %v257, 0
    %264 = vmatprep.subr.mxu0 0.0
    %265 = vmatpush1.msra.mxu0 0.0
    %266 = vmatprep.subr.mxu0 0.0
    %267 = vmatpush1.msra.mxu0 0.0
    %268 = vmatprep.subr.mxu0 0.0
    %269 = vmatpush1.msra.mxu0 0.0
    %270 = vmatprep.subr.mxu0 0.0
    %271 = vmatpush1.msra.mxu0 0.0
    %272 = vmatprep.subr.mxu0 0.0
    %273 = vmatpush1.msra.mxu0 0.0
    %274 = vmatprep.subr.mxu0 0.0
    %275 = vmatpush1.msra.mxu0 0.0
    %276 = vmatprep.subr.mxu0 0.0
    %277 = vmatpush1.msra.mxu0 0.0
    %278 = vmatprep.subr.mxu0 0.0
    %279 = vmatpush1.msra.mxu0 0.0
    %280 = vmatprep.subr.mxu0 0.0
    %281 = vmatpush1.msra.mxu0 0.0
    %282 = vmatprep.subr.mxu0 0.0
    %283 = vmatpush1.msra.mxu0 0.0
    %284 = vmatprep.subr.mxu0 0.0
    %285 = vmatpush1.msra.mxu0 0.0
    %286 = vmatprep.subr.mxu0 0.0
    %287 = vmatpush1.msra.mxu0 0.0
    %288 = vmatprep.subr.mxu0 0.0
    %289 = vmatpush1.msra.mxu0 0.0
    %290 = vmatprep.subr.mxu0 0.0
    %291 = vmatpush1.msra.mxu0 0.0
    %292 = vmatprep.subr.mxu0 0.0
    %293 = vmatpush1.msra.mxu0 0.0
    %294 = vmatprep.subr.mxu0 0.0
    %295 = vmatpush1.msra.mxu0 %v259
    %296 = vmatprep.subr.mxu0 0.0
    %297 = vmatpush2.msra.mxu0 0.0
    %298 = vmatprep.subr.mxu0 0.0
    %299 = vmatpush2.msra.mxu0 0.0
    %300 = vmatprep.subr.mxu0 0.0
    %301 = vmatpush2.msra.mxu0 0.0
    %302 = vmatprep.subr.mxu0 0.0
    %303 = vmatpush2.msra.mxu0 0.0
    %304 = vmatprep.subr.mxu0 0.0
    %305 = vmatpush2.msra.mxu0 0.0
    %306 = vmatprep.subr.mxu0 0.0
    %307 = vmatpush2.msra.mxu0 0.0
    %308 = vmatprep.subr.mxu0 0.0
    %309 = vmatpush2.msra.mxu0 0.0
    %310 = vmatprep.subr.mxu0 0.0
    %311 = vmatpush2.msra.mxu0 0.0
    %312 = vmatprep.subr.mxu0 0.0
    %313 = vmatpush2.msra.mxu0 0.0
    %314 = vmatprep.subr.mxu0 0.0
    %315 = vmatpush2.msra.mxu0 0.0
    %316 = vmatprep.subr.mxu0 0.0
    %317 = vmatpush2.msra.mxu0 0.0
    %318 = vmatprep.subr.mxu0 0.0
    %319 = vmatpush2.msra.mxu0 0.0
    %320 = vmatprep.subr.mxu0 0.0
    %321 = vmatpush2.msra.mxu0 0.0
    %322 = vmatprep.subr.mxu0 0.0
    %323 = vmatpush2.msra.mxu0 0.0
    %324 = vmatprep.subr.mxu0 0.0
    %325 = vmatpush2.msra.mxu0 0.0
    %326 = vmatprep.subr.mxu0 0.0
    %327 = vmatpush2.msra.mxu0 0.0
    %328 = vmatprep.mubr.f32.mxu0 0.0
    %329 = vmatmul.mubr.f32.gmra.mxu0 %v262
    %v330 = vpop.f32.mrf.mxu0
    %v331 = vadd.f32 0.0, %v330
    %v332 = vpop.f32.mrf.mxu0
    %333 = vdwg.mxu0
    %334 = vst.msk [vmem:[#allocation2] sm:$0xff] %vm172, %v331
    %335 = vrot.lane.b32.xlu0 %v161, 120
    %v336 = vpop.permute.xlu0 %335
    %337 = vrot.lane.b32.xlu0 %v161, 88
    %v338 = vpop.permute.xlu0 %337
    %v339 = vsel %vm172, %v336, 0
    %v341 = vsel %vm172, %v338, 0
    %343 = vmatprep.subr.mxu0 0.0
    %344 = vmatpush1.xpose.msra.mxu0 0.0
    %345 = vmatprep.subr.mxu0 0.0
    %346 = vmatpush1.xpose.msra.mxu0 0.0
    %347 = vmatprep.subr.mxu0 0.0
    %348 = vmatpush1.xpose.msra.mxu0 0.0
    %349 = vmatprep.subr.mxu0 0.0
    %350 = vmatpush1.xpose.msra.mxu0 0.0
    %351 = vmatprep.subr.mxu0 0.0
    %352 = vmatpush1.xpose.msra.mxu0 0.0
    %353 = vmatprep.subr.mxu0 0.0
    %354 = vmatpush1.xpose.msra.mxu0 0.0
    %355 = vmatprep.subr.mxu0 0.0
    %356 = vmatpush1.xpose.msra.mxu0 0.0
    %357 = vmatprep.subr.mxu0 0.0
    %358 = vmatpush1.xpose.msra.mxu0 0.0
    %359 = vmatprep.subr.mxu0 0.0
    %360 = vmatpush1.xpose.msra.mxu0 0.0
    %361 = vmatprep.subr.mxu0 0.0
    %362 = vmatpush1.xpose.msra.mxu0 0.0
    %363 = vmatprep.subr.mxu0 0.0
    %364 = vmatpush1.xpose.msra.mxu0 0.0
    %365 = vmatprep.subr.mxu0 0.0
    %366 = vmatpush1.xpose.msra.mxu0 0.0
    %367 = vmatprep.subr.mxu0 0.0
    %368 = vmatpush1.xpose.msra.mxu0 0.0
    %369 = vmatprep.subr.mxu0 0.0
    %370 = vmatpush1.xpose.msra.mxu0 0.0
    %371 = vmatprep.subr.mxu0 0.0
    %372 = vmatpush1.xpose.msra.mxu0 0.0
    %373 = vmatprep.subr.mxu0 0.0
    %374 = vmatpush1.xpose.msra.mxu0 %v341
    %375 = vmatprep.subr.mxu0 0.0
    %376 = vmatpush2.xpose.msra.mxu0 0.0
    %377 = vmatprep.subr.mxu0 0.0
    %378 = vmatpush2.xpose.msra.mxu0 0.0
    %379 = vmatprep.subr.mxu0 0.0
    %380 = vmatpush2.xpose.msra.mxu0 0.0
    %381 = vmatprep.subr.mxu0 0.0
    %382 = vmatpush2.xpose.msra.mxu0 0.0
    %383 = vmatprep.subr.mxu0 0.0
    %384 = vmatpush2.xpose.msra.mxu0 0.0
    %385 = vmatprep.subr.mxu0 0.0
    %386 = vmatpush2.xpose.msra.mxu0 0.0
    %387 = vmatprep.subr.mxu0 0.0
    %388 = vmatpush2.xpose.msra.mxu0 0.0
    %389 = vmatprep.subr.mxu0 0.0
    %390 = vmatpush2.xpose.msra.mxu0 0.0
    %391 = vmatprep.subr.mxu0 0.0
    %392 = vmatpush2.xpose.msra.mxu0 0.0
    %393 = vmatprep.subr.mxu0 0.0
    %394 = vmatpush2.xpose.msra.mxu0 0.0
    %395 = vmatprep.subr.mxu0 0.0
    %396 = vmatpush2.xpose.msra.mxu0 0.0
    %397 = vmatprep.subr.mxu0 0.0
    %398 = vmatpush2.xpose.msra.mxu0 0.0
    %399 = vmatprep.subr.mxu0 0.0
    %400 = vmatpush2.xpose.msra.mxu0 0.0
    %401 = vmatprep.subr.mxu0 0.0
    %402 = vmatpush2.xpose.msra.mxu0 0.0
    %403 = vmatprep.subr.mxu0 0.0
    %404 = vmatpush2.xpose.msra.mxu0 0.0
    %405 = vmatprep.subr.mxu0 0.0
    %406 = vmatpush2.xpose.msra.mxu0 0.0
    %407 = vmatprep.mubr.f32.mxu0 0.0
    %408 = vmatmul.mubr.f32.gmra.mxu0 %v339
    %v409 = vpop.f32.mrf.mxu0
    %v410 = vadd.f32 0.0, %v409
    %v411 = vpop.f32.mrf.mxu0
    %412 = vdwg.mxu0
    %v413 = vsel %vm172, %v410, -inf
    %414 = vmax.xlane.f32.xlu0 %v413
    %v415 = vpop.xlane.xlu0 %414
    %v416 = vsub.f32 %v410, %v415
    %v417 = vmul.f32 %v416, 1.442695
    %v418 = vpow.pop %v417
    %v419 = vsel %vm172, %v418, 0.0
    %420 = vadd.xlane.f32.xlu0 %v419
    %v421 = vpop.xlane.xlu0 %420
    %v422 = vrcp.pop %v421
    %v423 = vmul.f32 %v418, %v422
    %424 = vrot.lane.b32.xlu0 %v161, 56
    %v425 = vpop.permute.xlu0 %424
    %v428 = vsel %vm172, %v423, 0
    %430 = vmatprep.subr.mxu0 0.0
    %431 = vmatpush1.msra.mxu0 0.0
    %432 = vmatprep.subr.mxu0 0.0
    %433 = vmatpush1.msra.mxu0 0.0
    %434 = vmatprep.subr.mxu0 0.0
    %435 = vmatpush1.msra.mxu0 0.0
    %436 = vmatprep.subr.mxu0 0.0
    %437 = vmatpush1.msra.mxu0 0.0
    %438 = vmatprep.subr.mxu0 0.0
    %439 = vmatpush1.msra.mxu0 0.0
    %440 = vmatprep.subr.mxu0 0.0
    %441 = vmatpush1.msra.mxu0 0.0
    %442 = vmatprep.subr.mxu0 0.0
    %443 = vmatpush1.msra.mxu0 0.0
    %444 = vmatprep.subr.mxu0 0.0
    %445 = vmatpush1.msra.mxu0 0.0
    %446 = vmatprep.subr.mxu0 0.0
    %447 = vmatpush1.msra.mxu0 0.0
    %448 = vmatprep.subr.mxu0 0.0
    %449 = vmatpush1.msra.mxu0 0.0
    %450 = vmatprep.subr.mxu0 0.0
    %451 = vmatpush1.msra.mxu0 0.0
    %452 = vmatprep.subr.mxu0 0.0
    %453 = vmatpush1.msra.mxu0 0.0
    %454 = vmatprep.subr.mxu0 0.0
    %455 = vmatpush1.msra.mxu0 0.0
    %456 = vmatprep.subr.mxu0 0.0
    %457 = vmatpush1.msra.mxu0 0.0
    %458 = vmatprep.subr.mxu0 0.0
    %459 = vmatpush1.msra.mxu0 0.0
    %460 = vmatprep.subr.mxu0 0.0
    %461 = vmatpush1.msra.mxu0 %v425
    %462 = vmatprep.subr.mxu0 0.0
    %463 = vmatpush2.msra.mxu0 0.0
    %464 = vmatprep.subr.mxu0 0.0
    %465 = vmatpush2.msra.mxu0 0.0
    %466 = vmatprep.subr.mxu0 0.0
    %467 = vmatpush2.msra.mxu0 0.0
    %468 = vmatprep.subr.mxu0 0.0
    %469 = vmatpush2.msra.mxu0 0.0
    %470 = vmatprep.subr.mxu0 0.0
    %471 = vmatpush2.msra.mxu0 0.0
    %472 = vmatprep.subr.mxu0 0.0
    %473 = vmatpush2.msra.mxu0 0.0
    %474 = vmatprep.subr.mxu0 0.0
    %475 = vmatpush2.msra.mxu0 0.0
    %476 = vmatprep.subr.mxu0 0.0
    %477 = vmatpush2.msra.mxu0 0.0
    %478 = vmatprep.subr.mxu0 0.0
    %479 = vmatpush2.msra.mxu0 0.0
    %480 = vmatprep.subr.mxu0 0.0
    %481 = vmatpush2.msra.mxu0 0.0
    %482 = vmatprep.subr.mxu0 0.0
    %483 = vmatpush2.msra.mxu0 0.0
    %484 = vmatprep.subr.mxu0 0.0
    %485 = vmatpush2.msra.mxu0 0.0
    %486 = vmatprep.subr.mxu0 0.0
    %487 = vmatpush2.msra.mxu0 0.0
    %488 = vmatprep.subr.mxu0 0.0
    %489 = vmatpush2.msra.mxu0 0.0
    %490 = vmatprep.subr.mxu0 0.0
    %491 = vmatpush2.msra.mxu0 0.0
    %492 = vmatprep.subr.mxu0 0.0
    %493 = vmatpush2.msra.mxu0 0.0
    %494 = vmatprep.mubr.f32.mxu0 0.0
    %495 = vmatmul.mubr.f32.gmra.mxu0 %v428
    %v496 = vpop.f32.mrf.mxu0
    %v497 = vadd.f32 0.0, %v496
    %v498 = vpop.f32.mrf.mxu0
    %499 = vdwg.mxu0
    %501 = vrot.lane.b32.xlu0 %v497, 8
    %v502 = vpop.permute.xlu0 %501
    %vm504 = vcmask 130112
    %505 = vst.msk [vmem:[#allocation2] sm:$0xff] %vm504, %v502
    %506 = vrot.lane.b32.xlu0 %v161, 112
    %v507 = vpop.permute.xlu0 %506
    %508 = vrot.lane.b32.xlu0 %v161, 80
    %v509 = vpop.permute.xlu0 %508
    %v510 = vsel %vm172, %v507, 0
    %v512 = vsel %vm172, %v509, 0
    %514 = vmatprep.subr.mxu0 0.0
    %515 = vmatpush1.xpose.msra.mxu0 0.0
    %516 = vmatprep.subr.mxu0 0.0
    %517 = vmatpush1.xpose.msra.mxu0 0.0
    %518 = vmatprep.subr.mxu0 0.0
    %519 = vmatpush1.xpose.msra.mxu0 0.0
    %520 = vmatprep.subr.mxu0 0.0
    %521 = vmatpush1.xpose.msra.mxu0 0.0
    %522 = vmatprep.subr.mxu0 0.0
    %523 = vmatpush1.xpose.msra.mxu0 0.0
    %524 = vmatprep.subr.mxu0 0.0
    %525 = vmatpush1.xpose.msra.mxu0 0.0
    %526 = vmatprep.subr.mxu0 0.0
    %527 = vmatpush1.xpose.msra.mxu0 0.0
    %528 = vmatprep.subr.mxu0 0.0
    %529 = vmatpush1.xpose.msra.mxu0 0.0
    %530 = vmatprep.subr.mxu0 0.0
    %531 = vmatpush1.xpose.msra.mxu0 0.0
    %532 = vmatprep.subr.mxu0 0.0
    %533 = vmatpush1.xpose.msra.mxu0 0.0
    %534 = vmatprep.subr.mxu0 0.0
    %535 = vmatpush1.xpose.msra.mxu0 0.0
    %536 = vmatprep.subr.mxu0 0.0
    %537 = vmatpush1.xpose.msra.mxu0 0.0
    %538 = vmatprep.subr.mxu0 0.0
    %539 = vmatpush1.xpose.msra.mxu0 0.0
    %540 = vmatprep.subr.mxu0 0.0
    %541 = vmatpush1.xpose.msra.mxu0 0.0
    %542 = vmatprep.subr.mxu0 0.0
    %543 = vmatpush1.xpose.msra.mxu0 0.0
    %544 = vmatprep.subr.mxu0 0.0
    %545 = vmatpush1.xpose.msra.mxu0 %v512
    %546 = vmatprep.subr.mxu0 0.0
    %547 = vmatpush2.xpose.msra.mxu0 0.0
    %548 = vmatprep.subr.mxu0 0.0
    %549 = vmatpush2.xpose.msra.mxu0 0.0
    %550 = vmatprep.subr.mxu0 0.0
    %551 = vmatpush2.xpose.msra.mxu0 0.0
    %552 = vmatprep.subr.mxu0 0.0
    %553 = vmatpush2.xpose.msra.mxu0 0.0
    %554 = vmatprep.subr.mxu0 0.0
    %555 = vmatpush2.xpose.msra.mxu0 0.0
    %556 = vmatprep.subr.mxu0 0.0
    %557 = vmatpush2.xpose.msra.mxu0 0.0
    %558 = vmatprep.subr.mxu0 0.0
    %559 = vmatpush2.xpose.msra.mxu0 0.0
    %560 = vmatprep.subr.mxu0 0.0
    %561 = vmatpush2.xpose.msra.mxu0 0.0
    %562 = vmatprep.subr.mxu0 0.0
    %563 = vmatpush2.xpose.msra.mxu0 0.0
    %564 = vmatprep.subr.mxu0 0.0
    %565 = vmatpush2.xpose.msra.mxu0 0.0
    %566 = vmatprep.subr.mxu0 0.0
    %567 = vmatpush2.xpose.msra.mxu0 0.0
    %568 = vmatprep.subr.mxu0 0.0
    %569 = vmatpush2.xpose.msra.mxu0 0.0
    %570 = vmatprep.subr.mxu0 0.0
    %571 = vmatpush2.xpose.msra.mxu0 0.0
    %572 = vmatprep.subr.mxu0 0.0
    %573 = vmatpush2.xpose.msra.mxu0 0.0
    %574 = vmatprep.subr.mxu0 0.0
    %575 = vmatpush2.xpose.msra.mxu0 0.0
    %576 = vmatprep.subr.mxu0 0.0
    %577 = vmatpush2.xpose.msra.mxu0 0.0
    %578 = vmatprep.mubr.f32.mxu0 0.0
    %579 = vmatmul.mubr.f32.gmra.mxu0 %v510
    %v580 = vpop.f32.mrf.mxu0
    %v581 = vadd.f32 0.0, %v580
    %v582 = vpop.f32.mrf.mxu0
    %583 = vdwg.mxu0
    %v584 = vsel %vm172, %v581, -inf
    %585 = vmax.xlane.f32.xlu0 %v584
    %v586 = vpop.xlane.xlu0 %585
    %v587 = vsub.f32 %v581, %v586
    %v588 = vmul.f32 %v587, 1.442695
    %v589 = vpow.pop %v588
    %v590 = vsel %vm172, %v589, 0.0
    %591 = vadd.xlane.f32.xlu0 %v590
    %v592 = vpop.xlane.xlu0 %591
    %v593 = vrcp.pop %v592
    %v594 = vmul.f32 %v589, %v593
    %595 = vrot.lane.b32.xlu0 %v161, 48
    %v596 = vpop.permute.xlu0 %595
    %v599 = vsel %vm172, %v594, 0
    %601 = vmatprep.subr.mxu0 0.0
    %602 = vmatpush1.msra.mxu0 0.0
    %603 = vmatprep.subr.mxu0 0.0
    %604 = vmatpush1.msra.mxu0 0.0
    %605 = vmatprep.subr.mxu0 0.0
    %606 = vmatpush1.msra.mxu0 0.0
    %607 = vmatprep.subr.mxu0 0.0
    %608 = vmatpush1.msra.mxu0 0.0
    %609 = vmatprep.subr.mxu0 0.0
    %610 = vmatpush1.msra.mxu0 0.0
    %611 = vmatprep.subr.mxu0 0.0
    %612 = vmatpush1.msra.mxu0 0.0
    %613 = vmatprep.subr.mxu0 0.0
    %614 = vmatpush1.msra.mxu0 0.0
    %615 = vmatprep.subr.mxu0 0.0
    %616 = vmatpush1.msra.mxu0 0.0
    %617 = vmatprep.subr.mxu0 0.0
    %618 = vmatpush1.msra.mxu0 0.0
    %619 = vmatprep.subr.mxu0 0.0
    %620 = vmatpush1.msra.mxu0 0.0
    %621 = vmatprep.subr.mxu0 0.0
    %622 = vmatpush1.msra.mxu0 0.0
    %623 = vmatprep.subr.mxu0 0.0
    %624 = vmatpush1.msra.mxu0 0.0
    %625 = vmatprep.subr.mxu0 0.0
    %626 = vmatpush1.msra.mxu0 0.0
    %627 = vmatprep.subr.mxu0 0.0
    %628 = vmatpush1.msra.mxu0 0.0
    %629 = vmatprep.subr.mxu0 0.0
    %630 = vmatpush1.msra.mxu0 0.0
    %631 = vmatprep.subr.mxu0 0.0
    %632 = vmatpush1.msra.mxu0 %v596
    %633 = vmatprep.subr.mxu0 0.0
    %634 = vmatpush2.msra.mxu0 0.0
    %635 = vmatprep.subr.mxu0 0.0
    %636 = vmatpush2.msra.mxu0 0.0
    %637 = vmatprep.subr.mxu0 0.0
    %638 = vmatpush2.msra.mxu0 0.0
    %639 = vmatprep.subr.mxu0 0.0
    %640 = vmatpush2.msra.mxu0 0.0
    %641 = vmatprep.subr.mxu0 0.0
    %642 = vmatpush2.msra.mxu0 0.0
    %643 = vmatprep.subr.mxu0 0.0
    %644 = vmatpush2.msra.mxu0 0.0
    %645 = vmatprep.subr.mxu0 0.0
    %646 = vmatpush2.msra.mxu0 0.0
    %647 = vmatprep.subr.mxu0 0.0
    %648 = vmatpush2.msra.mxu0 0.0
    %649 = vmatprep.subr.mxu0 0.0
    %650 = vmatpush2.msra.mxu0 0.0
    %651 = vmatprep.subr.mxu0 0.0
    %652 = vmatpush2.msra.mxu0 0.0
    %653 = vmatprep.subr.mxu0 0.0
    %654 = vmatpush2.msra.mxu0 0.0
    %655 = vmatprep.subr.mxu0 0.0
    %656 = vmatpush2.msra.mxu0 0.0
    %657 = vmatprep.subr.mxu0 0.0
    %658 = vmatpush2.msra.mxu0 0.0
    %659 = vmatprep.subr.mxu0 0.0
    %660 = vmatpush2.msra.mxu0 0.0
    %661 = vmatprep.subr.mxu0 0.0
    %662 = vmatpush2.msra.mxu0 0.0
    %663 = vmatprep.subr.mxu0 0.0
    %664 = vmatpush2.msra.mxu0 0.0
    %665 = vmatprep.mubr.f32.mxu0 0.0
    %666 = vmatmul.mubr.f32.gmra.mxu0 %v599
    %v667 = vpop.f32.mrf.mxu0
    %v668 = vadd.f32 0.0, %v667
    %v669 = vpop.f32.mrf.mxu0
    %670 = vdwg.mxu0
    %672 = vrot.lane.b32.xlu0 %v668, 16
    %v673 = vpop.permute.xlu0 %672
    %vm675 = vcmask 195712
    %676 = vst.msk [vmem:[#allocation2] sm:$0xff] %vm675, %v673
    %677 = vrot.lane.b32.xlu0 %v161, 104
    %v678 = vpop.permute.xlu0 %677
    %679 = vrot.lane.b32.xlu0 %v161, 72
    %v680 = vpop.permute.xlu0 %679
    %v681 = vsel %vm172, %v678, 0
    %v683 = vsel %vm172, %v680, 0
    %685 = vmatprep.subr.mxu0 0.0
    %686 = vmatpush1.xpose.msra.mxu0 0.0
    %687 = vmatprep.subr.mxu0 0.0
    %688 = vmatpush1.xpose.msra.mxu0 0.0
    %689 = vmatprep.subr.mxu0 0.0
    %690 = vmatpush1.xpose.msra.mxu0 0.0
    %691 = vmatprep.subr.mxu0 0.0
    %692 = vmatpush1.xpose.msra.mxu0 0.0
    %693 = vmatprep.subr.mxu0 0.0
    %694 = vmatpush1.xpose.msra.mxu0 0.0
    %695 = vmatprep.subr.mxu0 0.0
    %696 = vmatpush1.xpose.msra.mxu0 0.0
    %697 = vmatprep.subr.mxu0 0.0
    %698 = vmatpush1.xpose.msra.mxu0 0.0
    %699 = vmatprep.subr.mxu0 0.0
    %700 = vmatpush1.xpose.msra.mxu0 0.0
    %701 = vmatprep.subr.mxu0 0.0
    %702 = vmatpush1.xpose.msra.mxu0 0.0
    %703 = vmatprep.subr.mxu0 0.0
    %704 = vmatpush1.xpose.msra.mxu0 0.0
    %705 = vmatprep.subr.mxu0 0.0
    %706 = vmatpush1.xpose.msra.mxu0 0.0
    %707 = vmatprep.subr.mxu0 0.0
    %708 = vmatpush1.xpose.msra.mxu0 0.0
    %709 = vmatprep.subr.mxu0 0.0
    %710 = vmatpush1.xpose.msra.mxu0 0.0
    %711 = vmatprep.subr.mxu0 0.0
    %712 = vmatpush1.xpose.msra.mxu0 0.0
    %713 = vmatprep.subr.mxu0 0.0
    %714 = vmatpush1.xpose.msra.mxu0 0.0
    %715 = vmatprep.subr.mxu0 0.0
    %716 = vmatpush1.xpose.msra.mxu0 %v683
    %717 = vmatprep.subr.mxu0 0.0
    %718 = vmatpush2.xpose.msra.mxu0 0.0
    %719 = vmatprep.subr.mxu0 0.0
    %720 = vmatpush2.xpose.msra.mxu0 0.0
    %721 = vmatprep.subr.mxu0 0.0
    %722 = vmatpush2.xpose.msra.mxu0 0.0
    %723 = vmatprep.subr.mxu0 0.0
    %724 = vmatpush2.xpose.msra.mxu0 0.0
    %725 = vmatprep.subr.mxu0 0.0
    %726 = vmatpush2.xpose.msra.mxu0 0.0
    %727 = vmatprep.subr.mxu0 0.0
    %728 = vmatpush2.xpose.msra.mxu0 0.0
    %729 = vmatprep.subr.mxu0 0.0
    %730 = vmatpush2.xpose.msra.mxu0 0.0
    %731 = vmatprep.subr.mxu0 0.0
    %732 = vmatpush2.xpose.msra.mxu0 0.0
    %733 = vmatprep.subr.mxu0 0.0
    %734 = vmatpush2.xpose.msra.mxu0 0.0
    %735 = vmatprep.subr.mxu0 0.0
    %736 = vmatpush2.xpose.msra.mxu0 0.0
    %737 = vmatprep.subr.mxu0 0.0
    %738 = vmatpush2.xpose.msra.mxu0 0.0
    %739 = vmatprep.subr.mxu0 0.0
    %740 = vmatpush2.xpose.msra.mxu0 0.0
    %741 = vmatprep.subr.mxu0 0.0
    %742 = vmatpush2.xpose.msra.mxu0 0.0
    %743 = vmatprep.subr.mxu0 0.0
    %744 = vmatpush2.xpose.msra.mxu0 0.0
    %745 = vmatprep.subr.mxu0 0.0
    %746 = vmatpush2.xpose.msra.mxu0 0.0
    %747 = vmatprep.subr.mxu0 0.0
    %748 = vmatpush2.xpose.msra.mxu0 0.0
    %749 = vmatprep.mubr.f32.mxu0 0.0
    %750 = vmatmul.mubr.f32.gmra.mxu0 %v681
    %v751 = vpop.f32.mrf.mxu0
    %v752 = vadd.f32 0.0, %v751
    %v753 = vpop.f32.mrf.mxu0
    %754 = vdwg.mxu0
    %v755 = vsel %vm172, %v752, -inf
    %756 = vmax.xlane.f32.xlu0 %v755
    %v757 = vpop.xlane.xlu0 %756
    %v758 = vsub.f32 %v752, %v757
    %v759 = vmul.f32 %v758, 1.442695
    %v760 = vpow.pop %v759
    %v761 = vsel %vm172, %v760, 0.0
    %762 = vadd.xlane.f32.xlu0 %v761
    %v763 = vpop.xlane.xlu0 %762
    %v764 = vrcp.pop %v763
    %v765 = vmul.f32 %v760, %v764
    %766 = vrot.lane.b32.xlu0 %v161, 40
    %v767 = vpop.permute.xlu0 %766
    %v770 = vsel %vm172, %v765, 0
    %772 = vmatprep.subr.mxu0 0.0
    %773 = vmatpush1.msra.mxu0 0.0
    %774 = vmatprep.subr.mxu0 0.0
    %775 = vmatpush1.msra.mxu0 0.0
    %776 = vmatprep.subr.mxu0 0.0
    %777 = vmatpush1.msra.mxu0 0.0
    %778 = vmatprep.subr.mxu0 0.0
    %779 = vmatpush1.msra.mxu0 0.0
    %780 = vmatprep.subr.mxu0 0.0
    %781 = vmatpush1.msra.mxu0 0.0
    %782 = vmatprep.subr.mxu0 0.0
    %783 = vmatpush1.msra.mxu0 0.0
    %784 = vmatprep.subr.mxu0 0.0
    %785 = vmatpush1.msra.mxu0 0.0
    %786 = vmatprep.subr.mxu0 0.0
    %787 = vmatpush1.msra.mxu0 0.0
    %788 = vmatprep.subr.mxu0 0.0
    %789 = vmatpush1.msra.mxu0 0.0
    %790 = vmatprep.subr.mxu0 0.0
    %791 = vmatpush1.msra.mxu0 0.0
    %792 = vmatprep.subr.mxu0 0.0
    %793 = vmatpush1.msra.mxu0 0.0
    %794 = vmatprep.subr.mxu0 0.0
    %795 = vmatpush1.msra.mxu0 0.0
    %796 = vmatprep.subr.mxu0 0.0
    %797 = vmatpush1.msra.mxu0 0.0
    %798 = vmatprep.subr.mxu0 0.0
    %799 = vmatpush1.msra.mxu0 0.0
    %800 = vmatprep.subr.mxu0 0.0
    %801 = vmatpush1.msra.mxu0 0.0
    %802 = vmatprep.subr.mxu0 0.0
    %803 = vmatpush1.msra.mxu0 %v767
    %804 = vmatprep.subr.mxu0 0.0
    %805 = vmatpush2.msra.mxu0 0.0
    %806 = vmatprep.subr.mxu0 0.0
    %807 = vmatpush2.msra.mxu0 0.0
    %808 = vmatprep.subr.mxu0 0.0
    %809 = vmatpush2.msra.mxu0 0.0
    %810 = vmatprep.subr.mxu0 0.0
    %811 = vmatpush2.msra.mxu0 0.0
    %812 = vmatprep.subr.mxu0 0.0
    %813 = vmatpush2.msra.mxu0 0.0
    %814 = vmatprep.subr.mxu0 0.0
    %815 = vmatpush2.msra.mxu0 0.0
    %816 = vmatprep.subr.mxu0 0.0
    %817 = vmatpush2.msra.mxu0 0.0
    %818 = vmatprep.subr.mxu0 0.0
    %819 = vmatpush2.msra.mxu0 0.0
    %820 = vmatprep.subr.mxu0 0.0
    %821 = vmatpush2.msra.mxu0 0.0
    %822 = vmatprep.subr.mxu0 0.0
    %823 = vmatpush2.msra.mxu0 0.0
    %824 = vmatprep.subr.mxu0 0.0
    %825 = vmatpush2.msra.mxu0 0.0
    %826 = vmatprep.subr.mxu0 0.0
    %827 = vmatpush2.msra.mxu0 0.0
    %828 = vmatprep.subr.mxu0 0.0
    %829 = vmatpush2.msra.mxu0 0.0
    %830 = vmatprep.subr.mxu0 0.0
    %831 = vmatpush2.msra.mxu0 0.0
    %832 = vmatprep.subr.mxu0 0.0
    %833 = vmatpush2.msra.mxu0 0.0
    %834 = vmatprep.subr.mxu0 0.0
    %835 = vmatpush2.msra.mxu0 0.0
    %836 = vmatprep.mubr.f32.mxu0 0.0
    %837 = vmatmul.mubr.f32.gmra.mxu0 %v770
    %v838 = vpop.f32.mrf.mxu0
    %v839 = vadd.f32 0.0, %v838
    %v840 = vpop.f32.mrf.mxu0
    %841 = vdwg.mxu0
    %843 = vrot.lane.b32.xlu0 %v839, 24
    %v844 = vpop.permute.xlu0 %843
    %vm846 = vcmask 261312
    %847 = vst.msk [vmem:[#allocation2] sm:$0xff] %vm846, %v844
    %849 = vrot.lane.b32.xlu0 %v166, 96
    %v850 = vpop.permute.xlu0 %849
    %v851 = vsel %vm172, %v166, 0
    %v853 = vsel %vm172, %v850, 0
    %855 = vmatprep.subr.mxu0 0.0
    %856 = vmatpush1.xpose.msra.mxu0 0.0
    %857 = vmatprep.subr.mxu0 0.0
    %858 = vmatpush1.xpose.msra.mxu0 0.0
    %859 = vmatprep.subr.mxu0 0.0
    %860 = vmatpush1.xpose.msra.mxu0 0.0
    %861 = vmatprep.subr.mxu0 0.0
    %862 = vmatpush1.xpose.msra.mxu0 0.0
    %863 = vmatprep.subr.mxu0 0.0
    %864 = vmatpush1.xpose.msra.mxu0 0.0
    %865 = vmatprep.subr.mxu0 0.0
    %866 = vmatpush1.xpose.msra.mxu0 0.0
    %867 = vmatprep.subr.mxu0 0.0
    %868 = vmatpush1.xpose.msra.mxu0 0.0
    %869 = vmatprep.subr.mxu0 0.0
    %870 = vmatpush1.xpose.msra.mxu0 0.0
    %871 = vmatprep.subr.mxu0 0.0
    %872 = vmatpush1.xpose.msra.mxu0 0.0
    %873 = vmatprep.subr.mxu0 0.0
    %874 = vmatpush1.xpose.msra.mxu0 0.0
    %875 = vmatprep.subr.mxu0 0.0
    %876 = vmatpush1.xpose.msra.mxu0 0.0
    %877 = vmatprep.subr.mxu0 0.0
    %878 = vmatpush1.xpose.msra.mxu0 0.0
    %879 = vmatprep.subr.mxu0 0.0
    %880 = vmatpush1.xpose.msra.mxu0 0.0
    %881 = vmatprep.subr.mxu0 0.0
    %882 = vmatpush1.xpose.msra.mxu0 0.0
    %883 = vmatprep.subr.mxu0 0.0
    %884 = vmatpush1.xpose.msra.mxu0 0.0
    %885 = vmatprep.subr.mxu0 0.0
    %886 = vmatpush1.xpose.msra.mxu0 %v853
    %887 = vmatprep.subr.mxu0 0.0
    %888 = vmatpush2.xpose.msra.mxu0 0.0
    %889 = vmatprep.subr.mxu0 0.0
    %890 = vmatpush2.xpose.msra.mxu0 0.0
    %891 = vmatprep.subr.mxu0 0.0
    %892 = vmatpush2.xpose.msra.mxu0 0.0
    %893 = vmatprep.subr.mxu0 0.0
    %894 = vmatpush2.xpose.msra.mxu0 0.0
    %895 = vmatprep.subr.mxu0 0.0
    %896 = vmatpush2.xpose.msra.mxu0 0.0
    %897 = vmatprep.subr.mxu0 0.0
    %898 = vmatpush2.xpose.msra.mxu0 0.0
    %899 = vmatprep.subr.mxu0 0.0
    %900 = vmatpush2.xpose.msra.mxu0 0.0
    %901 = vmatprep.subr.mxu0 0.0
    %902 = vmatpush2.xpose.msra.mxu0 0.0
    %903 = vmatprep.subr.mxu0 0.0
    %904 = vmatpush2.xpose.msra.mxu0 0.0
    %905 = vmatprep.subr.mxu0 0.0
    %906 = vmatpush2.xpose.msra.mxu0 0.0
    %907 = vmatprep.subr.mxu0 0.0
    %908 = vmatpush2.xpose.msra.mxu0 0.0
    %909 = vmatprep.subr.mxu0 0.0
    %910 = vmatpush2.xpose.msra.mxu0 0.0
    %911 = vmatprep.subr.mxu0 0.0
    %912 = vmatpush2.xpose.msra.mxu0 0.0
    %913 = vmatprep.subr.mxu0 0.0
    %914 = vmatpush2.xpose.msra.mxu0 0.0
    %915 = vmatprep.subr.mxu0 0.0
    %916 = vmatpush2.xpose.msra.mxu0 0.0
    %917 = vmatprep.subr.mxu0 0.0
    %918 = vmatpush2.xpose.msra.mxu0 0.0
    %919 = vmatprep.mubr.f32.mxu0 0.0
    %920 = vmatmul.mubr.f32.gmra.mxu0 %v851
    %v921 = vpop.f32.mrf.mxu0
    %v922 = vadd.f32 0.0, %v921
    %v923 = vpop.f32.mrf.mxu0
    %924 = vdwg.mxu0
    %v925 = vsel %vm172, %v922, -inf
    %926 = vmax.xlane.f32.xlu0 %v925
    %v927 = vpop.xlane.xlu0 %926
    %v928 = vsub.f32 %v922, %v927
    %v929 = vmul.f32 %v928, 1.442695
    %v930 = vpow.pop %v929
    %v931 = vsel %vm172, %v930, 0.0
    %932 = vadd.xlane.f32.xlu0 %v931
    %v933 = vpop.xlane.xlu0 %932
    %v934 = vrcp.pop %v933
    %v935 = vmul.f32 %v930, %v934
    %936 = vrot.lane.b32.xlu0 %v166, 64
    %v937 = vpop.permute.xlu0 %936
    %v940 = vsel %vm172, %v935, 0
    %942 = vmatprep.subr.mxu0 0.0
    %943 = vmatpush1.msra.mxu0 0.0
    %944 = vmatprep.subr.mxu0 0.0
    %945 = vmatpush1.msra.mxu0 0.0
    %946 = vmatprep.subr.mxu0 0.0
    %947 = vmatpush1.msra.mxu0 0.0
    %948 = vmatprep.subr.mxu0 0.0
    %949 = vmatpush1.msra.mxu0 0.0
    %950 = vmatprep.subr.mxu0 0.0
    %951 = vmatpush1.msra.mxu0 0.0
    %952 = vmatprep.subr.mxu0 0.0
    %953 = vmatpush1.msra.mxu0 0.0
    %954 = vmatprep.subr.mxu0 0.0
    %955 = vmatpush1.msra.mxu0 0.0
    %956 = vmatprep.subr.mxu0 0.0
    %957 = vmatpush1.msra.mxu0 0.0
    %958 = vmatprep.subr.mxu0 0.0
    %959 = vmatpush1.msra.mxu0 0.0
    %960 = vmatprep.subr.mxu0 0.0
    %961 = vmatpush1.msra.mxu0 0.0
    %962 = vmatprep.subr.mxu0 0.0
    %963 = vmatpush1.msra.mxu0 0.0
    %964 = vmatprep.subr.mxu0 0.0
    %965 = vmatpush1.msra.mxu0 0.0
    %966 = vmatprep.subr.mxu0 0.0
    %967 = vmatpush1.msra.mxu0 0.0
    %968 = vmatprep.subr.mxu0 0.0
    %969 = vmatpush1.msra.mxu0 0.0
    %970 = vmatprep.subr.mxu0 0.0
    %971 = vmatpush1.msra.mxu0 0.0
    %972 = vmatprep.subr.mxu0 0.0
    %973 = vmatpush1.msra.mxu0 %v937
    %974 = vmatprep.subr.mxu0 0.0
    %975 = vmatpush2.msra.mxu0 0.0
    %976 = vmatprep.subr.mxu0 0.0
    %977 = vmatpush2.msra.mxu0 0.0
    %978 = vmatprep.subr.mxu0 0.0
    %979 = vmatpush2.msra.mxu0 0.0
    %980 = vmatprep.subr.mxu0 0.0
    %981 = vmatpush2.msra.mxu0 0.0
    %982 = vmatprep.subr.mxu0 0.0
    %983 = vmatpush2.msra.mxu0 0.0
    %984 = vmatprep.subr.mxu0 0.0
    %985 = vmatpush2.msra.mxu0 0.0
    %986 = vmatprep.subr.mxu0 0.0
    %987 = vmatpush2.msra.mxu0 0.0
    %988 = vmatprep.subr.mxu0 0.0
    %989 = vmatpush2.msra.mxu0 0.0
    %990 = vmatprep.subr.mxu0 0.0
    %991 = vmatpush2.msra.mxu0 0.0
    %992 = vmatprep.subr.mxu0 0.0
    %993 = vmatpush2.msra.mxu0 0.0
    %994 = vmatprep.subr.mxu0 0.0
    %995 = vmatpush2.msra.mxu0 0.0
    %996 = vmatprep.subr.mxu0 0.0
    %997 = vmatpush2.msra.mxu0 0.0
    %998 = vmatprep.subr.mxu0 0.0
    %999 = vmatpush2.msra.mxu0 0.0
    %1000 = vmatprep.subr.mxu0 0.0
    %1001 = vmatpush2.msra.mxu0 0.0
    %1002 = vmatprep.subr.mxu0 0.0
    %1003 = vmatpush2.msra.mxu0 0.0
    %1004 = vmatprep.subr.mxu0 0.0
    %1005 = vmatpush2.msra.mxu0 0.0
    %1006 = vmatprep.mubr.f32.mxu0 0.0
    %1007 = vmatmul.mubr.f32.gmra.mxu0 %v940
    %v1008 = vpop.f32.mrf.mxu0
    %v1009 = vadd.f32 0.0, %v1008
    %v1010 = vpop.f32.mrf.mxu0
    %1011 = vdwg.mxu0
    %1012 = vst.msk [vmem:[#allocation2 + $0x8] sm:$0xff] %vm172, %v1009
    %1013 = vrot.lane.b32.xlu0 %v166, 120
    %v1014 = vpop.permute.xlu0 %1013
    %1015 = vrot.lane.b32.xlu0 %v166, 88
    %v1016 = vpop.permute.xlu0 %1015
    %v1017 = vsel %vm172, %v1014, 0
    %v1019 = vsel %vm172, %v1016, 0
    %1021 = vmatprep.subr.mxu0 0.0
    %1022 = vmatpush1.xpose.msra.mxu0 0.0
    %1023 = vmatprep.subr.mxu0 0.0
    %1024 = vmatpush1.xpose.msra.mxu0 0.0
    %1025 = vmatprep.subr.mxu0 0.0
    %1026 = vmatpush1.xpose.msra.mxu0 0.0
    %1027 = vmatprep.subr.mxu0 0.0
    %1028 = vmatpush1.xpose.msra.mxu0 0.0
    %1029 = vmatprep.subr.mxu0 0.0
    %1030 = vmatpush1.xpose.msra.mxu0 0.0
    %1031 = vmatprep.subr.mxu0 0.0
    %1032 = vmatpush1.xpose.msra.mxu0 0.0
    %1033 = vmatprep.subr.mxu0 0.0
    %1034 = vmatpush1.xpose.msra.mxu0 0.0
    %1035 = vmatprep.subr.mxu0 0.0
    %1036 = vmatpush1.xpose.msra.mxu0 0.0
    %1037 = vmatprep.subr.mxu0 0.0
    %1038 = vmatpush1.xpose.msra.mxu0 0.0
    %1039 = vmatprep.subr.mxu0 0.0
    %1040 = vmatpush1.xpose.msra.mxu0 0.0
    %1041 = vmatprep.subr.mxu0 0.0
    %1042 = vmatpush1.xpose.msra.mxu0 0.0
    %1043 = vmatprep.subr.mxu0 0.0
    %1044 = vmatpush1.xpose.msra.mxu0 0.0
    %1045 = vmatprep.subr.mxu0 0.0
    %1046 = vmatpush1.xpose.msra.mxu0 0.0
    %1047 = vmatprep.subr.mxu0 0.0
    %1048 = vmatpush1.xpose.msra.mxu0 0.0
    %1049 = vmatprep.subr.mxu0 0.0
    %1050 = vmatpush1.xpose.msra.mxu0 0.0
    %1051 = vmatprep.subr.mxu0 0.0
    %1052 = vmatpush1.xpose.msra.mxu0 %v1019
    %1053 = vmatprep.subr.mxu0 0.0
    %1054 = vmatpush2.xpose.msra.mxu0 0.0
    %1055 = vmatprep.subr.mxu0 0.0
    %1056 = vmatpush2.xpose.msra.mxu0 0.0
    %1057 = vmatprep.subr.mxu0 0.0
    %1058 = vmatpush2.xpose.msra.mxu0 0.0
    %1059 = vmatprep.subr.mxu0 0.0
    %1060 = vmatpush2.xpose.msra.mxu0 0.0
    %1061 = vmatprep.subr.mxu0 0.0
    %1062 = vmatpush2.xpose.msra.mxu0 0.0
    %1063 = vmatprep.subr.mxu0 0.0
    %1064 = vmatpush2.xpose.msra.mxu0 0.0
    %1065 = vmatprep.subr.mxu0 0.0
    %1066 = vmatpush2.xpose.msra.mxu0 0.0
    %1067 = vmatprep.subr.mxu0 0.0
    %1068 = vmatpush2.xpose.msra.mxu0 0.0
    %1069 = vmatprep.subr.mxu0 0.0
    %1070 = vmatpush2.xpose.msra.mxu0 0.0
    %1071 = vmatprep.subr.mxu0 0.0
    %1072 = vmatpush2.xpose.msra.mxu0 0.0
    %1073 = vmatprep.subr.mxu0 0.0
    %1074 = vmatpush2.xpose.msra.mxu0 0.0
    %1075 = vmatprep.subr.mxu0 0.0
    %1076 = vmatpush2.xpose.msra.mxu0 0.0
    %1077 = vmatprep.subr.mxu0 0.0
    %1078 = vmatpush2.xpose.msra.mxu0 0.0
    %1079 = vmatprep.subr.mxu0 0.0
    %1080 = vmatpush2.xpose.msra.mxu0 0.0
    %1081 = vmatprep.subr.mxu0 0.0
    %1082 = vmatpush2.xpose.msra.mxu0 0.0
    %1083 = vmatprep.subr.mxu0 0.0
    %1084 = vmatpush2.xpose.msra.mxu0 0.0
    %1085 = vmatprep.mubr.f32.mxu0 0.0
    %1086 = vmatmul.mubr.f32.gmra.mxu0 %v1017
    %v1087 = vpop.f32.mrf.mxu0
    %v1088 = vadd.f32 0.0, %v1087
    %v1089 = vpop.f32.mrf.mxu0
    %1090 = vdwg.mxu0
    %v1091 = vsel %vm172, %v1088, -inf
    %1092 = vmax.xlane.f32.xlu0 %v1091
    %v1093 = vpop.xlane.xlu0 %1092
    %v1094 = vsub.f32 %v1088, %v1093
    %v1095 = vmul.f32 %v1094, 1.442695
    %v1096 = vpow.pop %v1095
    %v1097 = vsel %vm172, %v1096, 0.0
    %1098 = vadd.xlane.f32.xlu0 %v1097
    %v1099 = vpop.xlane.xlu0 %1098
    %v1100 = vrcp.pop %v1099
    %v1101 = vmul.f32 %v1096, %v1100
    %1102 = vrot.lane.b32.xlu0 %v166, 56
    %v1103 = vpop.permute.xlu0 %1102
    %v1106 = vsel %vm172, %v1101, 0
    %1108 = vmatprep.subr.mxu0 0.0
    %1109 = vmatpush1.msra.mxu0 0.0
    %1110 = vmatprep.subr.mxu0 0.0
    %1111 = vmatpush1.msra.mxu0 0.0
    %1112 = vmatprep.subr.mxu0 0.0
    %1113 = vmatpush1.msra.mxu0 0.0
    %1114 = vmatprep.subr.mxu0 0.0
    %1115 = vmatpush1.msra.mxu0 0.0
    %1116 = vmatprep.subr.mxu0 0.0
    %1117 = vmatpush1.msra.mxu0 0.0
    %1118 = vmatprep.subr.mxu0 0.0
    %1119 = vmatpush1.msra.mxu0 0.0
    %1120 = vmatprep.subr.mxu0 0.0
    %1121 = vmatpush1.msra.mxu0 0.0
    %1122 = vmatprep.subr.mxu0 0.0
    %1123 = vmatpush1.msra.mxu0 0.0
    %1124 = vmatprep.subr.mxu0 0.0
    %1125 = vmatpush1.msra.mxu0 0.0
    %1126 = vmatprep.subr.mxu0 0.0
    %1127 = vmatpush1.msra.mxu0 0.0
    %1128 = vmatprep.subr.mxu0 0.0
    %1129 = vmatpush1.msra.mxu0 0.0
    %1130 = vmatprep.subr.mxu0 0.0
    %1131 = vmatpush1.msra.mxu0 0.0
    %1132 = vmatprep.subr.mxu0 0.0
    %1133 = vmatpush1.msra.mxu0 0.0
    %1134 = vmatprep.subr.mxu0 0.0
    %1135 = vmatpush1.msra.mxu0 0.0
    %1136 = vmatprep.subr.mxu0 0.0
    %1137 = vmatpush1.msra.mxu0 0.0
    %1138 = vmatprep.subr.mxu0 0.0
    %1139 = vmatpush1.msra.mxu0 %v1103
    %1140 = vmatprep.subr.mxu0 0.0
    %1141 = vmatpush2.msra.mxu0 0.0
    %1142 = vmatprep.subr.mxu0 0.0
    %1143 = vmatpush2.msra.mxu0 0.0
    %1144 = vmatprep.subr.mxu0 0.0
    %1145 = vmatpush2.msra.mxu0 0.0
    %1146 = vmatprep.subr.mxu0 0.0
    %1147 = vmatpush2.msra.mxu0 0.0
    %1148 = vmatprep.subr.mxu0 0.0
    %1149 = vmatpush2.msra.mxu0 0.0
    %1150 = vmatprep.subr.mxu0 0.0
    %1151 = vmatpush2.msra.mxu0 0.0
    %1152 = vmatprep.subr.mxu0 0.0
    %1153 = vmatpush2.msra.mxu0 0.0
    %1154 = vmatprep.subr.mxu0 0.0
    %1155 = vmatpush2.msra.mxu0 0.0
    %1156 = vmatprep.subr.mxu0 0.0
    %1157 = vmatpush2.msra.mxu0 0.0
    %1158 = vmatprep.subr.mxu0 0.0
    %1159 = vmatpush2.msra.mxu0 0.0
    %1160 = vmatprep.subr.mxu0 0.0
    %1161 = vmatpush2.msra.mxu0 0.0
    %1162 = vmatprep.subr.mxu0 0.0
    %1163 = vmatpush2.msra.mxu0 0.0
    %1164 = vmatprep.subr.mxu0 0.0
    %1165 = vmatpush2.msra.mxu0 0.0
    %1166 = vmatprep.subr.mxu0 0.0
    %1167 = vmatpush2.msra.mxu0 0.0
    %1168 = vmatprep.subr.mxu0 0.0
    %1169 = vmatpush2.msra.mxu0 0.0
    %1170 = vmatprep.subr.mxu0 0.0
    %1171 = vmatpush2.msra.mxu0 0.0
    %1172 = vmatprep.mubr.f32.mxu0 0.0
    %1173 = vmatmul.mubr.f32.gmra.mxu0 %v1106
    %v1174 = vpop.f32.mrf.mxu0
    %v1175 = vadd.f32 0.0, %v1174
    %v1176 = vpop.f32.mrf.mxu0
    %1177 = vdwg.mxu0
    %1179 = vrot.lane.b32.xlu0 %v1175, 8
    %v1180 = vpop.permute.xlu0 %1179
    %1182 = vst.msk [vmem:[#allocation2 + $0x8] sm:$0xff] %vm504, %v1180
    %1183 = vrot.lane.b32.xlu0 %v166, 112
    %v1184 = vpop.permute.xlu0 %1183
    %1185 = vrot.lane.b32.xlu0 %v166, 80
    %v1186 = vpop.permute.xlu0 %1185
    %v1187 = vsel %vm172, %v1184, 0
    %v1189 = vsel %vm172, %v1186, 0
    %1191 = vmatprep.subr.mxu0 0.0
    %1192 = vmatpush1.xpose.msra.mxu0 0.0
    %1193 = vmatprep.subr.mxu0 0.0
    %1194 = vmatpush1.xpose.msra.mxu0 0.0
    %1195 = vmatprep.subr.mxu0 0.0
    %1196 = vmatpush1.xpose.msra.mxu0 0.0
    %1197 = vmatprep.subr.mxu0 0.0
    %1198 = vmatpush1.xpose.msra.mxu0 0.0
    %1199 = vmatprep.subr.mxu0 0.0
    %1200 = vmatpush1.xpose.msra.mxu0 0.0
    %1201 = vmatprep.subr.mxu0 0.0
    %1202 = vmatpush1.xpose.msra.mxu0 0.0
    %1203 = vmatprep.subr.mxu0 0.0
    %1204 = vmatpush1.xpose.msra.mxu0 0.0
    %1205 = vmatprep.subr.mxu0 0.0
    %1206 = vmatpush1.xpose.msra.mxu0 0.0
    %1207 = vmatprep.subr.mxu0 0.0
    %1208 = vmatpush1.xpose.msra.mxu0 0.0
    %1209 = vmatprep.subr.mxu0 0.0
    %1210 = vmatpush1.xpose.msra.mxu0 0.0
    %1211 = vmatprep.subr.mxu0 0.0
    %1212 = vmatpush1.xpose.msra.mxu0 0.0
    %1213 = vmatprep.subr.mxu0 0.0
    %1214 = vmatpush1.xpose.msra.mxu0 0.0
    %1215 = vmatprep.subr.mxu0 0.0
    %1216 = vmatpush1.xpose.msra.mxu0 0.0
    %1217 = vmatprep.subr.mxu0 0.0
    %1218 = vmatpush1.xpose.msra.mxu0 0.0
    %1219 = vmatprep.subr.mxu0 0.0
    %1220 = vmatpush1.xpose.msra.mxu0 0.0
    %1221 = vmatprep.subr.mxu0 0.0
    %1222 = vmatpush1.xpose.msra.mxu0 %v1189
    %1223 = vmatprep.subr.mxu0 0.0
    %1224 = vmatpush2.xpose.msra.mxu0 0.0
    %1225 = vmatprep.subr.mxu0 0.0
    %1226 = vmatpush2.xpose.msra.mxu0 0.0
    %1227 = vmatprep.subr.mxu0 0.0
    %1228 = vmatpush2.xpose.msra.mxu0 0.0
    %1229 = vmatprep.subr.mxu0 0.0
    %1230 = vmatpush2.xpose.msra.mxu0 0.0
    %1231 = vmatprep.subr.mxu0 0.0
    %1232 = vmatpush2.xpose.msra.mxu0 0.0
    %1233 = vmatprep.subr.mxu0 0.0
    %1234 = vmatpush2.xpose.msra.mxu0 0.0
    %1235 = vmatprep.subr.mxu0 0.0
    %1236 = vmatpush2.xpose.msra.mxu0 0.0
    %1237 = vmatprep.subr.mxu0 0.0
    %1238 = vmatpush2.xpose.msra.mxu0 0.0
    %1239 = vmatprep.subr.mxu0 0.0
    %1240 = vmatpush2.xpose.msra.mxu0 0.0
    %1241 = vmatprep.subr.mxu0 0.0
    %1242 = vmatpush2.xpose.msra.mxu0 0.0
    %1243 = vmatprep.subr.mxu0 0.0
    %1244 = vmatpush2.xpose.msra.mxu0 0.0
    %1245 = vmatprep.subr.mxu0 0.0
    %1246 = vmatpush2.xpose.msra.mxu0 0.0
    %1247 = vmatprep.subr.mxu0 0.0
    %1248 = vmatpush2.xpose.msra.mxu0 0.0
    %1249 = vmatprep.subr.mxu0 0.0
    %1250 = vmatpush2.xpose.msra.mxu0 0.0
    %1251 = vmatprep.subr.mxu0 0.0
    %1252 = vmatpush2.xpose.msra.mxu0 0.0
    %1253 = vmatprep.subr.mxu0 0.0
    %1254 = vmatpush2.xpose.msra.mxu0 0.0
    %1255 = vmatprep.mubr.f32.mxu0 0.0
    %1256 = vmatmul.mubr.f32.gmra.mxu0 %v1187
    %v1257 = vpop.f32.mrf.mxu0
    %v1258 = vadd.f32 0.0, %v1257
    %v1259 = vpop.f32.mrf.mxu0
    %1260 = vdwg.mxu0
    %v1261 = vsel %vm172, %v1258, -inf
    %1262 = vmax.xlane.f32.xlu0 %v1261
    %v1263 = vpop.xlane.xlu0 %1262
    %v1264 = vsub.f32 %v1258, %v1263
    %v1265 = vmul.f32 %v1264, 1.442695
    %v1266 = vpow.pop %v1265
    %v1267 = vsel %vm172, %v1266, 0.0
    %1268 = vadd.xlane.f32.xlu0 %v1267
    %v1269 = vpop.xlane.xlu0 %1268
    %v1270 = vrcp.pop %v1269
    %v1271 = vmul.f32 %v1266, %v1270
    %1272 = vrot.lane.b32.xlu0 %v166, 48
    %v1273 = vpop.permute.xlu0 %1272
    %v1276 = vsel %vm172, %v1271, 0
    %1278 = vmatprep.subr.mxu0 0.0
    %1279 = vmatpush1.msra.mxu0 0.0
    %1280 = vmatprep.subr.mxu0 0.0
    %1281 = vmatpush1.msra.mxu0 0.0
    %1282 = vmatprep.subr.mxu0 0.0
    %1283 = vmatpush1.msra.mxu0 0.0
    %1284 = vmatprep.subr.mxu0 0.0
    %1285 = vmatpush1.msra.mxu0 0.0
    %1286 = vmatprep.subr.mxu0 0.0
    %1287 = vmatpush1.msra.mxu0 0.0
    %1288 = vmatprep.subr.mxu0 0.0
    %1289 = vmatpush1.msra.mxu0 0.0
    %1290 = vmatprep.subr.mxu0 0.0
    %1291 = vmatpush1.msra.mxu0 0.0
    %1292 = vmatprep.subr.mxu0 0.0
    %1293 = vmatpush1.msra.mxu0 0.0
    %1294 = vmatprep.subr.mxu0 0.0
    %1295 = vmatpush1.msra.mxu0 0.0
    %1296 = vmatprep.subr.mxu0 0.0
    %1297 = vmatpush1.msra.mxu0 0.0
    %1298 = vmatprep.subr.mxu0 0.0
    %1299 = vmatpush1.msra.mxu0 0.0
    %1300 = vmatprep.subr.mxu0 0.0
    %1301 = vmatpush1.msra.mxu0 0.0
    %1302 = vmatprep.subr.mxu0 0.0
    %1303 = vmatpush1.msra.mxu0 0.0
    %1304 = vmatprep.subr.mxu0 0.0
    %1305 = vmatpush1.msra.mxu0 0.0
    %1306 = vmatprep.subr.mxu0 0.0
    %1307 = vmatpush1.msra.mxu0 0.0
    %1308 = vmatprep.subr.mxu0 0.0
    %1309 = vmatpush1.msra.mxu0 %v1273
    %1310 = vmatprep.subr.mxu0 0.0
    %1311 = vmatpush2.msra.mxu0 0.0
    %1312 = vmatprep.subr.mxu0 0.0
    %1313 = vmatpush2.msra.mxu0 0.0
    %1314 = vmatprep.subr.mxu0 0.0
    %1315 = vmatpush2.msra.mxu0 0.0
    %1316 = vmatprep.subr.mxu0 0.0
    %1317 = vmatpush2.msra.mxu0 0.0
    %1318 = vmatprep.subr.mxu0 0.0
    %1319 = vmatpush2.msra.mxu0 0.0
    %1320 = vmatprep.subr.mxu0 0.0
    %1321 = vmatpush2.msra.mxu0 0.0
    %1322 = vmatprep.subr.mxu0 0.0
    %1323 = vmatpush2.msra.mxu0 0.0
    %1324 = vmatprep.subr.mxu0 0.0
    %1325 = vmatpush2.msra.mxu0 0.0
    %1326 = vmatprep.subr.mxu0 0.0
    %1327 = vmatpush2.msra.mxu0 0.0
    %1328 = vmatprep.subr.mxu0 0.0
    %1329 = vmatpush2.msra.mxu0 0.0
    %1330 = vmatprep.subr.mxu0 0.0
    %1331 = vmatpush2.msra.mxu0 0.0
    %1332 = vmatprep.subr.mxu0 0.0
    %1333 = vmatpush2.msra.mxu0 0.0
    %1334 = vmatprep.subr.mxu0 0.0
    %1335 = vmatpush2.msra.mxu0 0.0
    %1336 = vmatprep.subr.mxu0 0.0
    %1337 = vmatpush2.msra.mxu0 0.0
    %1338 = vmatprep.subr.mxu0 0.0
    %1339 = vmatpush2.msra.mxu0 0.0
    %1340 = vmatprep.subr.mxu0 0.0
    %1341 = vmatpush2.msra.mxu0 0.0
    %1342 = vmatprep.mubr.f32.mxu0 0.0
    %1343 = vmatmul.mubr.f32.gmra.mxu0 %v1276
    %v1344 = vpop.f32.mrf.mxu0
    %v1345 = vadd.f32 0.0, %v1344
    %v1346 = vpop.f32.mrf.mxu0
    %1347 = vdwg.mxu0
    %1349 = vrot.lane.b32.xlu0 %v1345, 16
    %v1350 = vpop.permute.xlu0 %1349
    %1352 = vst.msk [vmem:[#allocation2 + $0x8] sm:$0xff] %vm675, %v1350
    %1353 = vrot.lane.b32.xlu0 %v166, 104
    %v1354 = vpop.permute.xlu0 %1353
    %1355 = vrot.lane.b32.xlu0 %v166, 72
    %v1356 = vpop.permute.xlu0 %1355
    %v1357 = vsel %vm172, %v1354, 0
    %v1359 = vsel %vm172, %v1356, 0
    %1361 = vmatprep.subr.mxu0 0.0
    %1362 = vmatpush1.xpose.msra.mxu0 0.0
    %1363 = vmatprep.subr.mxu0 0.0
    %1364 = vmatpush1.xpose.msra.mxu0 0.0
    %1365 = vmatprep.subr.mxu0 0.0
    %1366 = vmatpush1.xpose.msra.mxu0 0.0
    %1367 = vmatprep.subr.mxu0 0.0
    %1368 = vmatpush1.xpose.msra.mxu0 0.0
    %1369 = vmatprep.subr.mxu0 0.0
    %1370 = vmatpush1.xpose.msra.mxu0 0.0
    %1371 = vmatprep.subr.mxu0 0.0
    %1372 = vmatpush1.xpose.msra.mxu0 0.0
    %1373 = vmatprep.subr.mxu0 0.0
    %1374 = vmatpush1.xpose.msra.mxu0 0.0
    %1375 = vmatprep.subr.mxu0 0.0
    %1376 = vmatpush1.xpose.msra.mxu0 0.0
    %1377 = vmatprep.subr.mxu0 0.0
    %1378 = vmatpush1.xpose.msra.mxu0 0.0
    %1379 = vmatprep.subr.mxu0 0.0
    %1380 = vmatpush1.xpose.msra.mxu0 0.0
    %1381 = vmatprep.subr.mxu0 0.0
    %1382 = vmatpush1.xpose.msra.mxu0 0.0
    %1383 = vmatprep.subr.mxu0 0.0
    %1384 = vmatpush1.xpose.msra.mxu0 0.0
    %1385 = vmatprep.subr.mxu0 0.0
    %1386 = vmatpush1.xpose.msra.mxu0 0.0
    %1387 = vmatprep.subr.mxu0 0.0
    %1388 = vmatpush1.xpose.msra.mxu0 0.0
    %1389 = vmatprep.subr.mxu0 0.0
    %1390 = vmatpush1.xpose.msra.mxu0 0.0
    %1391 = vmatprep.subr.mxu0 0.0
    %1392 = vmatpush1.xpose.msra.mxu0 %v1359
    %1393 = vmatprep.subr.mxu0 0.0
    %1394 = vmatpush2.xpose.msra.mxu0 0.0
    %1395 = vmatprep.subr.mxu0 0.0
    %1396 = vmatpush2.xpose.msra.mxu0 0.0
    %1397 = vmatprep.subr.mxu0 0.0
    %1398 = vmatpush2.xpose.msra.mxu0 0.0
    %1399 = vmatprep.subr.mxu0 0.0
    %1400 = vmatpush2.xpose.msra.mxu0 0.0
    %1401 = vmatprep.subr.mxu0 0.0
    %1402 = vmatpush2.xpose.msra.mxu0 0.0
    %1403 = vmatprep.subr.mxu0 0.0
    %1404 = vmatpush2.xpose.msra.mxu0 0.0
    %1405 = vmatprep.subr.mxu0 0.0
    %1406 = vmatpush2.xpose.msra.mxu0 0.0
    %1407 = vmatprep.subr.mxu0 0.0
    %1408 = vmatpush2.xpose.msra.mxu0 0.0
    %1409 = vmatprep.subr.mxu0 0.0
    %1410 = vmatpush2.xpose.msra.mxu0 0.0
    %1411 = vmatprep.subr.mxu0 0.0
    %1412 = vmatpush2.xpose.msra.mxu0 0.0
    %1413 = vmatprep.subr.mxu0 0.0
    %1414 = vmatpush2.xpose.msra.mxu0 0.0
    %1415 = vmatprep.subr.mxu0 0.0
    %1416 = vmatpush2.xpose.msra.mxu0 0.0
    %1417 = vmatprep.subr.mxu0 0.0
    %1418 = vmatpush2.xpose.msra.mxu0 0.0
    %1419 = vmatprep.subr.mxu0 0.0
    %1420 = vmatpush2.xpose.msra.mxu0 0.0
    %1421 = vmatprep.subr.mxu0 0.0
    %1422 = vmatpush2.xpose.msra.mxu0 0.0
    %1423 = vmatprep.subr.mxu0 0.0
    %1424 = vmatpush2.xpose.msra.mxu0 0.0
    %1425 = vmatprep.mubr.f32.mxu0 0.0
    %1426 = vmatmul.mubr.f32.gmra.mxu0 %v1357
    %v1427 = vpop.f32.mrf.mxu0
    %v1428 = vadd.f32 0.0, %v1427
    %v1429 = vpop.f32.mrf.mxu0
    %1430 = vdwg.mxu0
    %v1431 = vsel %vm172, %v1428, -inf
    %1432 = vmax.xlane.f32.xlu0 %v1431
    %v1433 = vpop.xlane.xlu0 %1432
    %v1434 = vsub.f32 %v1428, %v1433
    %v1435 = vmul.f32 %v1434, 1.442695
    %v1436 = vpow.pop %v1435
    %v1437 = vsel %vm172, %v1436, 0.0
    %1438 = vadd.xlane.f32.xlu0 %v1437
    %v1439 = vpop.xlane.xlu0 %1438
    %v1440 = vrcp.pop %v1439
    %v1441 = vmul.f32 %v1436, %v1440
    %1442 = vrot.lane.b32.xlu0 %v166, 40
    %v1443 = vpop.permute.xlu0 %1442
    %v1446 = vsel %vm172, %v1441, 0
    %1448 = vmatprep.subr.mxu0 0.0
    %1449 = vmatpush1.msra.mxu0 0.0
    %1450 = vmatprep.subr.mxu0 0.0
    %1451 = vmatpush1.msra.mxu0 0.0
    %1452 = vmatprep.subr.mxu0 0.0
    %1453 = vmatpush1.msra.mxu0 0.0
    %1454 = vmatprep.subr.mxu0 0.0
    %1455 = vmatpush1.msra.mxu0 0.0
    %1456 = vmatprep.subr.mxu0 0.0
    %1457 = vmatpush1.msra.mxu0 0.0
    %1458 = vmatprep.subr.mxu0 0.0
    %1459 = vmatpush1.msra.mxu0 0.0
    %1460 = vmatprep.subr.mxu0 0.0
    %1461 = vmatpush1.msra.mxu0 0.0
    %1462 = vmatprep.subr.mxu0 0.0
    %1463 = vmatpush1.msra.mxu0 0.0
    %1464 = vmatprep.subr.mxu0 0.0
    %1465 = vmatpush1.msra.mxu0 0.0
    %1466 = vmatprep.subr.mxu0 0.0
    %1467 = vmatpush1.msra.mxu0 0.0
    %1468 = vmatprep.subr.mxu0 0.0
    %1469 = vmatpush1.msra.mxu0 0.0
    %1470 = vmatprep.subr.mxu0 0.0
    %1471 = vmatpush1.msra.mxu0 0.0
    %1472 = vmatprep.subr.mxu0 0.0
    %1473 = vmatpush1.msra.mxu0 0.0
    %1474 = vmatprep.subr.mxu0 0.0
    %1475 = vmatpush1.msra.mxu0 0.0
    %1476 = vmatprep.subr.mxu0 0.0
    %1477 = vmatpush1.msra.mxu0 0.0
    %1478 = vmatprep.subr.mxu0 0.0
    %1479 = vmatpush1.msra.mxu0 %v1443
    %1480 = vmatprep.subr.mxu0 0.0
    %1481 = vmatpush2.msra.mxu0 0.0
    %1482 = vmatprep.subr.mxu0 0.0
    %1483 = vmatpush2.msra.mxu0 0.0
    %1484 = vmatprep.subr.mxu0 0.0
    %1485 = vmatpush2.msra.mxu0 0.0
    %1486 = vmatprep.subr.mxu0 0.0
    %1487 = vmatpush2.msra.mxu0 0.0
    %1488 = vmatprep.subr.mxu0 0.0
    %1489 = vmatpush2.msra.mxu0 0.0
    %1490 = vmatprep.subr.mxu0 0.0
    %1491 = vmatpush2.msra.mxu0 0.0
    %1492 = vmatprep.subr.mxu0 0.0
    %1493 = vmatpush2.msra.mxu0 0.0
    %1494 = vmatprep.subr.mxu0 0.0
    %1495 = vmatpush2.msra.mxu0 0.0
    %1496 = vmatprep.subr.mxu0 0.0
    %1497 = vmatpush2.msra.mxu0 0.0
    %1498 = vmatprep.subr.mxu0 0.0
    %1499 = vmatpush2.msra.mxu0 0.0
    %1500 = vmatprep.subr.mxu0 0.0
    %1501 = vmatpush2.msra.mxu0 0.0
    %1502 = vmatprep.subr.mxu0 0.0
    %1503 = vmatpush2.msra.mxu0 0.0
    %1504 = vmatprep.subr.mxu0 0.0
    %1505 = vmatpush2.msra.mxu0 0.0
    %1506 = vmatprep.subr.mxu0 0.0
    %1507 = vmatpush2.msra.mxu0 0.0
    %1508 = vmatprep.subr.mxu0 0.0
    %1509 = vmatpush2.msra.mxu0 0.0
    %1510 = vmatprep.subr.mxu0 0.0
    %1511 = vmatpush2.msra.mxu0 0.0
    %1512 = vmatprep.mubr.f32.mxu0 0.0
    %1513 = vmatmul.mubr.f32.gmra.mxu0 %v1446
    %v1514 = vpop.f32.mrf.mxu0
    %v1515 = vadd.f32 0.0, %v1514
    %v1516 = vpop.f32.mrf.mxu0
    %1517 = vdwg.mxu0
    %1519 = vrot.lane.b32.xlu0 %v1515, 24
    %v1520 = vpop.permute.xlu0 %1519
    %1522 = vst.msk [vmem:[#allocation2 + $0x8] sm:$0xff] %vm846, %v1520
    %v1523 = vld [vmem:[#allocation2] sm:$0xff]
    %v1524 = vld [vmem:[#allocation2 + $0x8] sm:$0xff]
    %v1525 = vld [vmem:[%s4] sm:$0xff]
    %v1526 = vld [vmem:[%s4 + $0x8] sm:$0xff]
    %v1527 = vld [vmem:[%s4 + $0x10] sm:$0xff]
    %v1528 = vld [vmem:[%s4 + $0x18] sm:$0xff]
    %v1529 = vld [vmem:[%s5] sm:$0x1]
    %v1531 = vlaneseq
    %v1532 = vshrl.u32 %v1531, 7
    %v1533 = vsub.s32 0, %v1532
    %v1534 = vrot.slane %v1529, %v1533
    %v1537 = vsel %vm87, %v1523, 0
    %v1540 = vsel %vm87, %v1524, 0
    %1542 = vmatprep.subr.mxu0 0.0
    %1543 = vmatpush1.msra.mxu0 0.0
    %1544 = vmatprep.subr.mxu0 0.0
    %1545 = vmatpush1.msra.mxu0 0.0
    %1546 = vmatprep.subr.mxu0 0.0
    %1547 = vmatpush1.msra.mxu0 0.0
    %1548 = vmatprep.subr.mxu0 0.0
    %1549 = vmatpush1.msra.mxu0 0.0
    %1550 = vmatprep.subr.mxu0 0.0
    %1551 = vmatpush1.msra.mxu0 0.0
    %1552 = vmatprep.subr.mxu0 0.0
    %1553 = vmatpush1.msra.mxu0 0.0
    %1554 = vmatprep.subr.mxu0 0.0
    %1555 = vmatpush1.msra.mxu0 0.0
    %1556 = vmatprep.subr.mxu0 0.0
    %1557 = vmatpush1.msra.mxu0 0.0
    %1558 = vmatprep.subr.mxu0 0.0
    %1559 = vmatpush1.msra.mxu0 0.0
    %1560 = vmatprep.subr.mxu0 0.0
    %1561 = vmatpush1.msra.mxu0 0.0
    %1562 = vmatprep.subr.mxu0 0.0
    %1563 = vmatpush1.msra.mxu0 0.0
    %1564 = vmatprep.subr.mxu0 0.0
    %1565 = vmatpush1.msra.mxu0 0.0
    %1566 = vmatprep.subr.mxu0 0.0
    %1567 = vmatpush1.msra.mxu0 %v1528
    %1568 = vmatprep.subr.mxu0 0.0
    %1569 = vmatpush1.msra.mxu0 %v1527
    %1570 = vmatprep.subr.mxu0 0.0
    %1571 = vmatpush1.msra.mxu0 %v1526
    %1572 = vmatprep.subr.mxu0 0.0
    %1573 = vmatpush1.msra.mxu0 %v1525
    %1574 = vmatprep.subr.mxu0 0.0
    %1575 = vmatpush2.msra.mxu0 0.0
    %1576 = vmatprep.subr.mxu0 0.0
    %1577 = vmatpush2.msra.mxu0 0.0
    %1578 = vmatprep.subr.mxu0 0.0
    %1579 = vmatpush2.msra.mxu0 0.0
    %1580 = vmatprep.subr.mxu0 0.0
    %1581 = vmatpush2.msra.mxu0 0.0
    %1582 = vmatprep.subr.mxu0 0.0
    %1583 = vmatpush2.msra.mxu0 0.0
    %1584 = vmatprep.subr.mxu0 0.0
    %1585 = vmatpush2.msra.mxu0 0.0
    %1586 = vmatprep.subr.mxu0 0.0
    %1587 = vmatpush2.msra.mxu0 0.0
    %1588 = vmatprep.subr.mxu0 0.0
    %1589 = vmatpush2.msra.mxu0 0.0
    %1590 = vmatprep.subr.mxu0 0.0
    %1591 = vmatpush2.msra.mxu0 0.0
    %1592 = vmatprep.subr.mxu0 0.0
    %1593 = vmatpush2.msra.mxu0 0.0
    %1594 = vmatprep.subr.mxu0 0.0
    %1595 = vmatpush2.msra.mxu0 0.0
    %1596 = vmatprep.subr.mxu0 0.0
    %1597 = vmatpush2.msra.mxu0 0.0
    %1598 = vmatprep.subr.mxu0 0.0
    %1599 = vmatpush2.msra.mxu0 0.0
    %1600 = vmatprep.subr.mxu0 0.0
    %1601 = vmatpush2.msra.mxu0 0.0
    %1602 = vmatprep.subr.mxu0 0.0
    %1603 = vmatpush2.msra.mxu0 0.0
    %1604 = vmatprep.subr.mxu0 0.0
    %1605 = vmatpush2.msra.mxu0 0.0
    %1606 = vmatprep.mubr.f32.mxu0 0.0
    %1607 = vmatmul.mubr.f32.gmra.mxu0 %v1537
    %v1608 = vpop.f32.mrf.mxu0
    %v1609 = vadd.f32 %v1534, %v1608
    %v1610 = vpop.f32.mrf.mxu0
    %1611 = vmatprep.mubr.f32.mxu0 0.0
    %1612 = vmatmul.mubr.f32.gmra.mxu0 %v1540
    %v1613 = vpop.f32.mrf.mxu0
    %v1614 = vadd.f32 %v1534, %v1613
    %v1615 = vpop.f32.mrf.mxu0
    %1616 = vdwg.mxu0
    %v1617 = vadd.f32 %v72, %v1609
    %v1618 = vadd.f32 %v73, %v1614
    %v1619 = vld [vmem:[%s6] sm:$0x1]
    %v1620 = vld [vmem:[%s7] sm:$0x1]
    %v1621 = vsel %vm87, %v1617, 0.0
    %1622 = vadd.xlane.f32.xlu0 %v1621
    %v1623 = vpop.xlane.xlu0 %1622
    %v1624 = vsel %vm87, %v1618, 0.0
    %1625 = vadd.xlane.f32.xlu0 %v1624
    %v1626 = vpop.xlane.xlu0 %1625
    %v1627 = vrcp.pop 32.0
    %v1628 = vmul.f32 %v1623, %v1627
    %v1629 = vmul.f32 %v1626, %v1627
    %v1630 = vsub.f32 %v1617, %v1628
    %v1631 = vsub.f32 %v1618, %v1629
    %v1632 = vmul.f32 %v1630, %v1630
    %v1633 = vmul.f32 %v1631, %v1631
    %v1634 = vsel %vm87, %v1632, 0.0
    %1635 = vadd.xlane.f32.xlu0 %v1634
    %v1636 = vpop.xlane.xlu0 %1635
    %v1637 = vsel %vm87, %v1633, 0.0
    %1638 = vadd.xlane.f32.xlu0 %v1637
    %v1639 = vpop.xlane.xlu0 %1638
    %v1640 = vmul.f32 %v1636, %v1627
    %v1641 = vmul.f32 %v1639, %v1627
    %v1642 = vadd.f32 %v1640, 1e-05
    %v1643 = vadd.f32 %v1641, 1e-05
    %v1644 = vrsqrt.pop %v1642
    %v1645 = vrsqrt.pop %v1643
    %v1646 = vmul.f32 %v1630, %v1644
    %v1647 = vmul.f32 %v1631, %v1645
    %v1649 = vlaneseq
    %v1650 = vshrl.u32 %v1649, 7
    %v1651 = vsub.s32 0, %v1650
    %v1652 = vrot.slane %v1619, %v1651
    %v1654 = vmul.f32 %v1646, %v1652
    %v1655 = vmul.f32 %v1647, %v1652
    %v1657 = vlaneseq
    %v1658 = vshrl.u32 %v1657, 7
    %v1659 = vsub.s32 0, %v1658
    %v1660 = vrot.slane %v1620, %v1659
    %v1662 = vadd.f32 %v1654, %v1660
    %v1663 = vadd.f32 %v1655, %v1660
    %v1664 = vld [vmem:[%s8] sm:$0xff]
    %v1665 = vld [vmem:[%s8 + $0x8] sm:$0xff]
    %v1666 = vld [vmem:[%s8 + $0x10] sm:$0xff]
    %v1667 = vld [vmem:[%s8 + $0x18] sm:$0xff]
    %v1668 = vld [vmem:[%s9] sm:$0x1]
    %v1670 = vlaneseq
    %v1671 = vshrl.u32 %v1670, 7
    %v1672 = vsub.s32 0, %v1671
    %v1673 = vrot.slane %v1668, %v1672
    %v1676 = vsel %vm87, %v1662, 0
    %v1679 = vsel %vm87, %v1663, 0
    %1681 = vmatprep.subr.mxu0 0.0
    %1682 = vmatpush1.msra.mxu0 0.0
    %1683 = vmatprep.subr.mxu0 0.0
    %1684 = vmatpush1.msra.mxu0 0.0
    %1685 = vmatprep.subr.mxu0 0.0
    %1686 = vmatpush1.msra.mxu0 0.0
    %1687 = vmatprep.subr.mxu0 0.0
    %1688 = vmatpush1.msra.mxu0 0.0
    %1689 = vmatprep.subr.mxu0 0.0
    %1690 = vmatpush1.msra.mxu0 0.0
    %1691 = vmatprep.subr.mxu0 0.0
    %1692 = vmatpush1.msra.mxu0 0.0
    %1693 = vmatprep.subr.mxu0 0.0
    %1694 = vmatpush1.msra.mxu0 0.0
    %1695 = vmatprep.subr.mxu0 0.0
    %1696 = vmatpush1.msra.mxu0 0.0
    %1697 = vmatprep.subr.mxu0 0.0
    %1698 = vmatpush1.msra.mxu0 0.0
    %1699 = vmatprep.subr.mxu0 0.0
    %1700 = vmatpush1.msra.mxu0 0.0
    %1701 = vmatprep.subr.mxu0 0.0
    %1702 = vmatpush1.msra.mxu0 0.0
    %1703 = vmatprep.subr.mxu0 0.0
    %1704 = vmatpush1.msra.mxu0 0.0
    %1705 = vmatprep.subr.mxu0 0.0
    %1706 = vmatpush1.msra.mxu0 %v1667
    %1707 = vmatprep.subr.mxu0 0.0
    %1708 = vmatpush1.msra.mxu0 %v1666
    %1709 = vmatprep.subr.mxu0 0.0
    %1710 = vmatpush1.msra.mxu0 %v1665
    %1711 = vmatprep.subr.mxu0 0.0
    %1712 = vmatpush1.msra.mxu0 %v1664
    %1713 = vmatprep.subr.mxu0 0.0
    %1714 = vmatpush2.msra.mxu0 0.0
    %1715 = vmatprep.subr.mxu0 0.0
    %1716 = vmatpush2.msra.mxu0 0.0
    %1717 = vmatprep.subr.mxu0 0.0
    %1718 = vmatpush2.msra.mxu0 0.0
    %1719 = vmatprep.subr.mxu0 0.0
    %1720 = vmatpush2.msra.mxu0 0.0
    %1721 = vmatprep.subr.mxu0 0.0
    %1722 = vmatpush2.msra.mxu0 0.0
    %1723 = vmatprep.subr.mxu0 0.0
    %1724 = vmatpush2.msra.mxu0 0.0
    %1725 = vmatprep.subr.mxu0 0.0
    %1726 = vmatpush2.msra.mxu0 0.0
    %1727 = vmatprep.subr.mxu0 0.0
    %1728 = vmatpush2.msra.mxu0 0.0
    %1729 = vmatprep.subr.mxu0 0.0
    %1730 = vmatpush2.msra.mxu0 0.0
    %1731 = vmatprep.subr.mxu0 0.0
    %1732 = vmatpush2.msra.mxu0 0.0
    %1733 = vmatprep.subr.mxu0 0.0
    %1734 = vmatpush2.msra.mxu0 0.0
    %1735 = vmatprep.subr.mxu0 0.0
    %1736 = vmatpush2.msra.mxu0 0.0
    %1737 = vmatprep.subr.mxu0 0.0
    %1738 = vmatpush2.msra.mxu0 0.0
    %1739 = vmatprep.subr.mxu0 0.0
    %1740 = vmatpush2.msra.mxu0 0.0
    %1741 = vmatprep.subr.mxu0 0.0
    %1742 = vmatpush2.msra.mxu0 0.0
    %1743 = vmatprep.subr.mxu0 0.0
    %1744 = vmatpush2.msra.mxu0 0.0
    %1745 = vmatprep.mubr.f32.mxu0 0.0
    %1746 = vmatmul.mubr.f32.gmra.mxu0 %v1676
    %v1747 = vpop.f32.mrf.mxu0
    %v1748 = vadd.f32 %v1673, %v1747
    %v1749 = vpop.f32.mrf.mxu0
    %1750 = vmatprep.mubr.f32.mxu0 0.0
    %1751 = vmatmul.mubr.f32.gmra.mxu0 %v1679
    %v1752 = vpop.f32.mrf.mxu0
    %v1753 = vadd.f32 %v1673, %v1752
    %v1754 = vpop.f32.mrf.mxu0
    %1755 = vdwg.mxu0
    %v1756 = vld [vmem:[%s10] sm:$0xff]
    %v1757 = vld [vmem:[%s10 + $0x8] sm:$0xff]
    %v1758 = vld [vmem:[%s10 + $0x10] sm:$0xff]
    %v1759 = vld [vmem:[%s10 + $0x18] sm:$0xff]
    %v1760 = vld [vmem:[%s11] sm:$0x1]
    %v1762 = vlaneseq
    %v1763 = vshrl.u32 %v1762, 7
    %v1764 = vsub.s32 0, %v1763
    %v1765 = vrot.slane %v1760, %v1764
    %v1768 = vsel %vm87, %v74, 0
    %v1771 = vsel %vm87, %v75, 0
    %1773 = vmatprep.subr.mxu0 0.0
    %1774 = vmatpush1.msra.mxu0 0.0
    %1775 = vmatprep.subr.mxu0 0.0
    %1776 = vmatpush1.msra.mxu0 0.0
    %1777 = vmatprep.subr.mxu0 0.0
    %1778 = vmatpush1.msra.mxu0 0.0
    %1779 = vmatprep.subr.mxu0 0.0
    %1780 = vmatpush1.msra.mxu0 0.0
    %1781 = vmatprep.subr.mxu0 0.0
    %1782 = vmatpush1.msra.mxu0 0.0
    %1783 = vmatprep.subr.mxu0 0.0
    %1784 = vmatpush1.msra.mxu0 0.0
    %1785 = vmatprep.subr.mxu0 0.0
    %1786 = vmatpush1.msra.mxu0 0.0
    %1787 = vmatprep.subr.mxu0 0.0
    %1788 = vmatpush1.msra.mxu0 0.0
    %1789 = vmatprep.subr.mxu0 0.0
    %1790 = vmatpush1.msra.mxu0 0.0
    %1791 = vmatprep.subr.mxu0 0.0
    %1792 = vmatpush1.msra.mxu0 0.0
    %1793 = vmatprep.subr.mxu0 0.0
    %1794 = vmatpush1.msra.mxu0 0.0
    %1795 = vmatprep.subr.mxu0 0.0
    %1796 = vmatpush1.msra.mxu0 0.0
    %1797 = vmatprep.subr.mxu0 0.0
    %1798 = vmatpush1.msra.mxu0 %v1759
    %1799 = vmatprep.subr.mxu0 0.0
    %1800 = vmatpush1.msra.mxu0 %v1758
    %1801 = vmatprep.subr.mxu0 0.0
    %1802 = vmatpush1.msra.mxu0 %v1757
    %1803 = vmatprep.subr.mxu0 0.0
    %1804 = vmatpush1.msra.mxu0 %v1756
    %1805 = vmatprep.subr.mxu0 0.0
    %1806 = vmatpush2.msra.mxu0 0.0
    %1807 = vmatprep.subr.mxu0 0.0
    %1808 = vmatpush2.msra.mxu0 0.0
    %1809 = vmatprep.subr.mxu0 0.0
    %1810 = vmatpush2.msra.mxu0 0.0
    %1811 = vmatprep.subr.mxu0 0.0
    %1812 = vmatpush2.msra.mxu0 0.0
    %1813 = vmatprep.subr.mxu0 0.0
    %1814 = vmatpush2.msra.mxu0 0.0
    %1815 = vmatprep.subr.mxu0 0.0
    %1816 = vmatpush2.msra.mxu0 0.0
    %1817 = vmatprep.subr.mxu0 0.0
    %1818 = vmatpush2.msra.mxu0 0.0
    %1819 = vmatprep.subr.mxu0 0.0
    %1820 = vmatpush2.msra.mxu0 0.0
    %1821 = vmatprep.subr.mxu0 0.0
    %1822 = vmatpush2.msra.mxu0 0.0
    %1823 = vmatprep.subr.mxu0 0.0
    %1824 = vmatpush2.msra.mxu0 0.0
    %1825 = vmatprep.subr.mxu0 0.0
    %1826 = vmatpush2.msra.mxu0 0.0
    %1827 = vmatprep.subr.mxu0 0.0
    %1828 = vmatpush2.msra.mxu0 0.0
    %1829 = vmatprep.subr.mxu0 0.0
    %1830 = vmatpush2.msra.mxu0 0.0
    %1831 = vmatprep.subr.mxu0 0.0
    %1832 = vmatpush2.msra.mxu0 0.0
    %1833 = vmatprep.subr.mxu0 0.0
    %1834 = vmatpush2.msra.mxu0 0.0
    %1835 = vmatprep.subr.mxu0 0.0
    %1836 = vmatpush2.msra.mxu0 0.0
    %1837 = vmatprep.mubr.f32.mxu0 0.0
    %1838 = vmatmul.mubr.f32.gmra.mxu0 %v1768
    %v1839 = vpop.f32.mrf.mxu0
    %v1840 = vadd.f32 %v1765, %v1839
    %v1841 = vpop.f32.mrf.mxu0
    %1842 = vmatprep.mubr.f32.mxu0 0.0
    %1843 = vmatmul.mubr.f32.gmra.mxu0 %v1771
    %v1844 = vpop.f32.mrf.mxu0
    %v1845 = vadd.f32 %v1765, %v1844
    %v1846 = vpop.f32.mrf.mxu0
    %1847 = vdwg.mxu0
    %v1849 = vsel %vm172, %v1748, 0
    %v1852 = vsel %vm172, %v1840, 0
    %1854 = vmatprep.subr.mxu0 0.0
    %1855 = vmatpush1.xpose.msra.mxu0 0.0
    %1856 = vmatprep.subr.mxu0 0.0
    %1857 = vmatpush1.xpose.msra.mxu0 0.0
    %1858 = vmatprep.subr.mxu0 0.0
    %1859 = vmatpush1.xpose.msra.mxu0 0.0
    %1860 = vmatprep.subr.mxu0 0.0
    %1861 = vmatpush1.xpose.msra.mxu0 0.0
    %1862 = vmatprep.subr.mxu0 0.0
    %1863 = vmatpush1.xpose.msra.mxu0 0.0
    %1864 = vmatprep.subr.mxu0 0.0
    %1865 = vmatpush1.xpose.msra.mxu0 0.0
    %1866 = vmatprep.subr.mxu0 0.0
    %1867 = vmatpush1.xpose.msra.mxu0 0.0
    %1868 = vmatprep.subr.mxu0 0.0
    %1869 = vmatpush1.xpose.msra.mxu0 0.0
    %1870 = vmatprep.subr.mxu0 0.0
    %1871 = vmatpush1.xpose.msra.mxu0 0.0
    %1872 = vmatprep.subr.mxu0 0.0
    %1873 = vmatpush1.xpose.msra.mxu0 0.0
    %1874 = vmatprep.subr.mxu0 0.0
    %1875 = vmatpush1.xpose.msra.mxu0 0.0
    %1876 = vmatprep.subr.mxu0 0.0
    %1877 = vmatpush1.xpose.msra.mxu0 0.0
    %1878 = vmatprep.subr.mxu0 0.0
    %1879 = vmatpush1.xpose.msra.mxu0 0.0
    %1880 = vmatprep.subr.mxu0 0.0
    %1881 = vmatpush1.xpose.msra.mxu0 0.0
    %1882 = vmatprep.subr.mxu0 0.0
    %1883 = vmatpush1.xpose.msra.mxu0 0.0
    %1884 = vmatprep.subr.mxu0 0.0
    %1885 = vmatpush1.xpose.msra.mxu0 %v1852
    %1886 = vmatprep.subr.mxu0 0.0
    %1887 = vmatpush2.xpose.msra.mxu0 0.0
    %1888 = vmatprep.subr.mxu0 0.0
    %1889 = vmatpush2.xpose.msra.mxu0 0.0
    %1890 = vmatprep.subr.mxu0 0.0
    %1891 = vmatpush2.xpose.msra.mxu0 0.0
    %1892 = vmatprep.subr.mxu0 0.0
    %1893 = vmatpush2.xpose.msra.mxu0 0.0
    %1894 = vmatprep.subr.mxu0 0.0
    %1895 = vmatpush2.xpose.msra.mxu0 0.0
    %1896 = vmatprep.subr.mxu0 0.0
    %1897 = vmatpush2.xpose.msra.mxu0 0.0
    %1898 = vmatprep.subr.mxu0 0.0
    %1899 = vmatpush2.xpose.msra.mxu0 0.0
    %1900 = vmatprep.subr.mxu0 0.0
    %1901 = vmatpush2.xpose.msra.mxu0 0.0
    %1902 = vmatprep.subr.mxu0 0.0
    %1903 = vmatpush2.xpose.msra.mxu0 0.0
    %1904 = vmatprep.subr.mxu0 0.0
    %1905 = vmatpush2.xpose.msra.mxu0 0.0
    %1906 = vmatprep.subr.mxu0 0.0
    %1907 = vmatpush2.xpose.msra.mxu0 0.0
    %1908 = vmatprep.subr.mxu0 0.0
    %1909 = vmatpush2.xpose.msra.mxu0 0.0
    %1910 = vmatprep.subr.mxu0 0.0
    %1911 = vmatpush2.xpose.msra.mxu0 0.0
    %1912 = vmatprep.subr.mxu0 0.0
    %1913 = vmatpush2.xpose.msra.mxu0 0.0
    %1914 = vmatprep.subr.mxu0 0.0
    %1915 = vmatpush2.xpose.msra.mxu0 0.0
    %1916 = vmatprep.subr.mxu0 0.0
    %1917 = vmatpush2.xpose.msra.mxu0 0.0
    %1918 = vmatprep.mubr.f32.mxu0 0.0
    %1919 = vmatmul.mubr.f32.gmra.mxu0 %v1849
    %v1920 = vpop.f32.mrf.mxu0
    %v1921 = vadd.f32 0.0, %v1920
    %v1922 = vpop.f32.mrf.mxu0
    %1923 = vdwg.mxu0
    %v1924 = vsel %vm172, %v1921, -inf
    %1925 = vmax.xlane.f32.xlu0 %v1924
    %v1926 = vpop.xlane.xlu0 %1925
    %v1927 = vsub.f32 %v1921, %v1926
    %v1928 = vmul.f32 %v1927, 1.442695
    %v1929 = vpow.pop %v1928
    %v1930 = vsel %vm172, %v1929, 0.0
    %1931 = vadd.xlane.f32.xlu0 %v1930
    %v1932 = vpop.xlane.xlu0 %1931
    %v1933 = vrcp.pop %v1932
    %v1934 = vmul.f32 %v1929, %v1933
    %1935 = vrot.lane.b32.xlu0 %v1840, 96
    %v1936 = vpop.permute.xlu0 %1935
    %v1939 = vsel %vm172, %v1934, 0
    %1941 = vmatprep.subr.mxu0 0.0
    %1942 = vmatpush1.msra.mxu0 0.0
    %1943 = vmatprep.subr.mxu0 0.0
    %1944 = vmatpush1.msra.mxu0 0.0
    %1945 = vmatprep.subr.mxu0 0.0
    %1946 = vmatpush1.msra.mxu0 0.0
    %1947 = vmatprep.subr.mxu0 0.0
    %1948 = vmatpush1.msra.mxu0 0.0
    %1949 = vmatprep.subr.mxu0 0.0
    %1950 = vmatpush1.msra.mxu0 0.0
    %1951 = vmatprep.subr.mxu0 0.0
    %1952 = vmatpush1.msra.mxu0 0.0
    %1953 = vmatprep.subr.mxu0 0.0
    %1954 = vmatpush1.msra.mxu0 0.0
    %1955 = vmatprep.subr.mxu0 0.0
    %1956 = vmatpush1.msra.mxu0 0.0
    %1957 = vmatprep.subr.mxu0 0.0
    %1958 = vmatpush1.msra.mxu0 0.0
    %1959 = vmatprep.subr.mxu0 0.0
    %1960 = vmatpush1.msra.mxu0 0.0
    %1961 = vmatprep.subr.mxu0 0.0
    %1962 = vmatpush1.msra.mxu0 0.0
    %1963 = vmatprep.subr.mxu0 0.0
    %1964 = vmatpush1.msra.mxu0 0.0
    %1965 = vmatprep.subr.mxu0 0.0
    %1966 = vmatpush1.msra.mxu0 0.0
    %1967 = vmatprep.subr.mxu0 0.0
    %1968 = vmatpush1.msra.mxu0 0.0
    %1969 = vmatprep.subr.mxu0 0.0
    %1970 = vmatpush1.msra.mxu0 0.0
    %1971 = vmatprep.subr.mxu0 0.0
    %1972 = vmatpush1.msra.mxu0 %v1936
    %1973 = vmatprep.subr.mxu0 0.0
    %1974 = vmatpush2.msra.mxu0 0.0
    %1975 = vmatprep.subr.mxu0 0.0
    %1976 = vmatpush2.msra.mxu0 0.0
    %1977 = vmatprep.subr.mxu0 0.0
    %1978 = vmatpush2.msra.mxu0 0.0
    %1979 = vmatprep.subr.mxu0 0.0
    %1980 = vmatpush2.msra.mxu0 0.0
    %1981 = vmatprep.subr.mxu0 0.0
    %1982 = vmatpush2.msra.mxu0 0.0
    %1983 = vmatprep.subr.mxu0 0.0
    %1984 = vmatpush2.msra.mxu0 0.0
    %1985 = vmatprep.subr.mxu0 0.0
    %1986 = vmatpush2.msra.mxu0 0.0
    %1987 = vmatprep.subr.mxu0 0.0
    %1988 = vmatpush2.msra.mxu0 0.0
    %1989 = vmatprep.subr.mxu0 0.0
    %1990 = vmatpush2.msra.mxu0 0.0
    %1991 = vmatprep.subr.mxu0 0.0
    %1992 = vmatpush2.msra.mxu0 0.0
    %1993 = vmatprep.subr.mxu0 0.0
    %1994 = vmatpush2.msra.mxu0 0.0
    %1995 = vmatprep.subr.mxu0 0.0
    %1996 = vmatpush2.msra.mxu0 0.0
    %1997 = vmatprep.subr.mxu0 0.0
    %1998 = vmatpush2.msra.mxu0 0.0
    %1999 = vmatprep.subr.mxu0 0.0
    %2000 = vmatpush2.msra.mxu0 0.0
    %2001 = vmatprep.subr.mxu0 0.0
    %2002 = vmatpush2.msra.mxu0 0.0
    %2003 = vmatprep.subr.mxu0 0.0
    %2004 = vmatpush2.msra.mxu0 0.0
    %2005 = vmatprep.mubr.f32.mxu0 0.0
    %2006 = vmatmul.mubr.f32.gmra.mxu0 %v1939
    %v2007 = vpop.f32.mrf.mxu0
    %v2008 = vadd.f32 0.0, %v2007
    %v2009 = vpop.f32.mrf.mxu0
    %2010 = vdwg.mxu0
    %2011 = vst.msk [vmem:[#allocation2] sm:$0xff] %vm172, %v2008
    %2012 = vrot.lane.b32.xlu0 %v1748, 120
    %v2013 = vpop.permute.xlu0 %2012
    %2014 = vrot.lane.b32.xlu0 %v1840, 120
    %v2015 = vpop.permute.xlu0 %2014
    %v2016 = vsel %vm172, %v2013, 0
    %v2018 = vsel %vm172, %v2015, 0
    %2020 = vmatprep.subr.mxu0 0.0
    %2021 = vmatpush1.xpose.msra.mxu0 0.0
    %2022 = vmatprep.subr.mxu0 0.0
    %2023 = vmatpush1.xpose.msra.mxu0 0.0
    %2024 = vmatprep.subr.mxu0 0.0
    %2025 = vmatpush1.xpose.msra.mxu0 0.0
    %2026 = vmatprep.subr.mxu0 0.0
    %2027 = vmatpush1.xpose.msra.mxu0 0.0
    %2028 = vmatprep.subr.mxu0 0.0
    %2029 = vmatpush1.xpose.msra.mxu0 0.0
    %2030 = vmatprep.subr.mxu0 0.0
    %2031 = vmatpush1.xpose.msra.mxu0 0.0
    %2032 = vmatprep.subr.mxu0 0.0
    %2033 = vmatpush1.xpose.msra.mxu0 0.0
    %2034 = vmatprep.subr.mxu0 0.0
    %2035 = vmatpush1.xpose.msra.mxu0 0.0
    %2036 = vmatprep.subr.mxu0 0.0
    %2037 = vmatpush1.xpose.msra.mxu0 0.0
    %2038 = vmatprep.subr.mxu0 0.0
    %2039 = vmatpush1.xpose.msra.mxu0 0.0
    %2040 = vmatprep.subr.mxu0 0.0
    %2041 = vmatpush1.xpose.msra.mxu0 0.0
    %2042 = vmatprep.subr.mxu0 0.0
    %2043 = vmatpush1.xpose.msra.mxu0 0.0
    %2044 = vmatprep.subr.mxu0 0.0
    %2045 = vmatpush1.xpose.msra.mxu0 0.0
    %2046 = vmatprep.subr.mxu0 0.0
    %2047 = vmatpush1.xpose.msra.mxu0 0.0
    %2048 = vmatprep.subr.mxu0 0.0
    %2049 = vmatpush1.xpose.msra.mxu0 0.0
    %2050 = vmatprep.subr.mxu0 0.0
    %2051 = vmatpush1.xpose.msra.mxu0 %v2018
    %2052 = vmatprep.subr.mxu0 0.0
    %2053 = vmatpush2.xpose.msra.mxu0 0.0
    %2054 = vmatprep.subr.mxu0 0.0
    %2055 = vmatpush2.xpose.msra.mxu0 0.0
    %2056 = vmatprep.subr.mxu0 0.0
    %2057 = vmatpush2.xpose.msra.mxu0 0.0
    %2058 = vmatprep.subr.mxu0 0.0
    %2059 = vmatpush2.xpose.msra.mxu0 0.0
    %2060 = vmatprep.subr.mxu0 0.0
    %2061 = vmatpush2.xpose.msra.mxu0 0.0
    %2062 = vmatprep.subr.mxu0 0.0
    %2063 = vmatpush2.xpose.msra.mxu0 0.0
    %2064 = vmatprep.subr.mxu0 0.0
    %2065 = vmatpush2.xpose.msra.mxu0 0.0
    %2066 = vmatprep.subr.mxu0 0.0
    %2067 = vmatpush2.xpose.msra.mxu0 0.0
    %2068 = vmatprep.subr.mxu0 0.0
    %2069 = vmatpush2.xpose.msra.mxu0 0.0
    %2070 = vmatprep.subr.mxu0 0.0
    %2071 = vmatpush2.xpose.msra.mxu0 0.0
    %2072 = vmatprep.subr.mxu0 0.0
    %2073 = vmatpush2.xpose.msra.mxu0 0.0
    %2074 = vmatprep.subr.mxu0 0.0
    %2075 = vmatpush2.xpose.msra.mxu0 0.0
    %2076 = vmatprep.subr.mxu0 0.0
    %2077 = vmatpush2.xpose.msra.mxu0 0.0
    %2078 = vmatprep.subr.mxu0 0.0
    %2079 = vmatpush2.xpose.msra.mxu0 0.0
    %2080 = vmatprep.subr.mxu0 0.0
    %2081 = vmatpush2.xpose.msra.mxu0 0.0
    %2082 = vmatprep.subr.mxu0 0.0
    %2083 = vmatpush2.xpose.msra.mxu0 0.0
    %2084 = vmatprep.mubr.f32.mxu0 0.0
    %2085 = vmatmul.mubr.f32.gmra.mxu0 %v2016
    %v2086 = vpop.f32.mrf.mxu0
    %v2087 = vadd.f32 0.0, %v2086
    %v2088 = vpop.f32.mrf.mxu0
    %2089 = vdwg.mxu0
    %v2090 = vsel %vm172, %v2087, -inf
    %2091 = vmax.xlane.f32.xlu0 %v2090
    %v2092 = vpop.xlane.xlu0 %2091
    %v2093 = vsub.f32 %v2087, %v2092
    %v2094 = vmul.f32 %v2093, 1.442695
    %v2095 = vpow.pop %v2094
    %v2096 = vsel %vm172, %v2095, 0.0
    %2097 = vadd.xlane.f32.xlu0 %v2096
    %v2098 = vpop.xlane.xlu0 %2097
    %v2099 = vrcp.pop %v2098
    %v2100 = vmul.f32 %v2095, %v2099
    %2101 = vrot.lane.b32.xlu0 %v1840, 88
    %v2102 = vpop.permute.xlu0 %2101
    %v2105 = vsel %vm172, %v2100, 0
    %2107 = vmatprep.subr.mxu0 0.0
    %2108 = vmatpush1.msra.mxu0 0.0
    %2109 = vmatprep.subr.mxu0 0.0
    %2110 = vmatpush1.msra.mxu0 0.0
    %2111 = vmatprep.subr.mxu0 0.0
    %2112 = vmatpush1.msra.mxu0 0.0
    %2113 = vmatprep.subr.mxu0 0.0
    %2114 = vmatpush1.msra.mxu0 0.0
    %2115 = vmatprep.subr.mxu0 0.0
    %2116 = vmatpush1.msra.mxu0 0.0
    %2117 = vmatprep.subr.mxu0 0.0
    %2118 = vmatpush1.msra.mxu0 0.0
    %2119 = vmatprep.subr.mxu0 0.0
    %2120 = vmatpush1.msra.mxu0 0.0
    %2121 = vmatprep.subr.mxu0 0.0
    %2122 = vmatpush1.msra.mxu0 0.0
    %2123 = vmatprep.subr.mxu0 0.0
    %2124 = vmatpush1.msra.mxu0 0.0
    %2125 = vmatprep.subr.mxu0 0.0
    %2126 = vmatpush1.msra.mxu0 0.0
    %2127 = vmatprep.subr.mxu0 0.0
    %2128 = vmatpush1.msra.mxu0 0.0
    %2129 = vmatprep.subr.mxu0 0.0
    %2130 = vmatpush1.msra.mxu0 0.0
    %2131 = vmatprep.subr.mxu0 0.0
    %2132 = vmatpush1.msra.mxu0 0.0
    %2133 = vmatprep.subr.mxu0 0.0
    %2134 = vmatpush1.msra.mxu0 0.0
    %2135 = vmatprep.subr.mxu0 0.0
    %2136 = vmatpush1.msra.mxu0 0.0
    %2137 = vmatprep.subr.mxu0 0.0
    %2138 = vmatpush1.msra.mxu0 %v2102
    %2139 = vmatprep.subr.mxu0 0.0
    %2140 = vmatpush2.msra.mxu0 0.0
    %2141 = vmatprep.subr.mxu0 0.0
    %2142 = vmatpush2.msra.mxu0 0.0
    %2143 = vmatprep.subr.mxu0 0.0
    %2144 = vmatpush2.msra.mxu0 0.0
    %2145 = vmatprep.subr.mxu0 0.0
    %2146 = vmatpush2.msra.mxu0 0.0
    %2147 = vmatprep.subr.mxu0 0.0
    %2148 = vmatpush2.msra.mxu0 0.0
    %2149 = vmatprep.subr.mxu0 0.0
    %2150 = vmatpush2.msra.mxu0 0.0
    %2151 = vmatprep.subr.mxu0 0.0
    %2152 = vmatpush2.msra.mxu0 0.0
    %2153 = vmatprep.subr.mxu0 0.0
    %2154 = vmatpush2.msra.mxu0 0.0
    %2155 = vmatprep.subr.mxu0 0.0
    %2156 = vmatpush2.msra.mxu0 0.0
    %2157 = vmatprep.subr.mxu0 0.0
    %2158 = vmatpush2.msra.mxu0 0.0
    %2159 = vmatprep.subr.mxu0 0.0
    %2160 = vmatpush2.msra.mxu0 0.0
    %2161 = vmatprep.subr.mxu0 0.0
    %2162 = vmatpush2.msra.mxu0 0.0
    %2163 = vmatprep.subr.mxu0 0.0
    %2164 = vmatpush2.msra.mxu0 0.0
    %2165 = vmatprep.subr.mxu0 0.0
    %2166 = vmatpush2.msra.mxu0 0.0
    %2167 = vmatprep.subr.mxu0 0.0
    %2168 = vmatpush2.msra.mxu0 0.0
    %2169 = vmatprep.subr.mxu0 0.0
    %2170 = vmatpush2.msra.mxu0 0.0
    %2171 = vmatprep.mubr.f32.mxu0 0.0
    %2172 = vmatmul.mubr.f32.gmra.mxu0 %v2105
    %v2173 = vpop.f32.mrf.mxu0
    %v2174 = vadd.f32 0.0, %v2173
    %v2175 = vpop.f32.mrf.mxu0
    %2176 = vdwg.mxu0
    %2178 = vrot.lane.b32.xlu0 %v2174, 8
    %v2179 = vpop.permute.xlu0 %2178
    %2181 = vst.msk [vmem:[#allocation2] sm:$0xff] %vm504, %v2179
    %2182 = vrot.lane.b32.xlu0 %v1748, 112
    %v2183 = vpop.permute.xlu0 %2182
    %2184 = vrot.lane.b32.xlu0 %v1840, 112
    %v2185 = vpop.permute.xlu0 %2184
    %v2186 = vsel %vm172, %v2183, 0
    %v2188 = vsel %vm172, %v2185, 0
    %2190 = vmatprep.subr.mxu0 0.0
    %2191 = vmatpush1.xpose.msra.mxu0 0.0
    %2192 = vmatprep.subr.mxu0 0.0
    %2193 = vmatpush1.xpose.msra.mxu0 0.0
    %2194 = vmatprep.subr.mxu0 0.0
    %2195 = vmatpush1.xpose.msra.mxu0 0.0
    %2196 = vmatprep.subr.mxu0 0.0
    %2197 = vmatpush1.xpose.msra.mxu0 0.0
    %2198 = vmatprep.subr.mxu0 0.0
    %2199 = vmatpush1.xpose.msra.mxu0 0.0
    %2200 = vmatprep.subr.mxu0 0.0
    %2201 = vmatpush1.xpose.msra.mxu0 0.0
    %2202 = vmatprep.subr.mxu0 0.0
    %2203 = vmatpush1.xpose.msra.mxu0 0.0
    %2204 = vmatprep.subr.mxu0 0.0
    %2205 = vmatpush1.xpose.msra.mxu0 0.0
    %2206 = vmatprep.subr.mxu0 0.0
    %2207 = vmatpush1.xpose.msra.mxu0 0.0
    %2208 = vmatprep.subr.mxu0 0.0
    %2209 = vmatpush1.xpose.msra.mxu0 0.0
    %2210 = vmatprep.subr.mxu0 0.0
    %2211 = vmatpush1.xpose.msra.mxu0 0.0
    %2212 = vmatprep.subr.mxu0 0.0
    %2213 = vmatpush1.xpose.msra.mxu0 0.0
    %2214 = vmatprep.subr.mxu0 0.0
    %2215 = vmatpush1.xpose.msra.mxu0 0.0
    %2216 = vmatprep.subr.mxu0 0.0
    %2217 = vmatpush1.xpose.msra.mxu0 0.0
    %2218 = vmatprep.subr.mxu0 0.0
    %2219 = vmatpush1.xpose.msra.mxu0 0.0
    %2220 = vmatprep.subr.mxu0 0.0
    %2221 = vmatpush1.xpose.msra.mxu0 %v2188
    %2222 = vmatprep.subr.mxu0 0.0
    %2223 = vmatpush2.xpose.msra.mxu0 0.0
    %2224 = vmatprep.subr.mxu0 0.0
    %2225 = vmatpush2.xpose.msra.mxu0 0.0
    %2226 = vmatprep.subr.mxu0 0.0
    %2227 = vmatpush2.xpose.msra.mxu0 0.0
    %2228 = vmatprep.subr.mxu0 0.0
    %2229 = vmatpush2.xpose.msra.mxu0 0.0
    %2230 = vmatprep.subr.mxu0 0.0
    %2231 = vmatpush2.xpose.msra.mxu0 0.0
    %2232 = vmatprep.subr.mxu0 0.0
    %2233 = vmatpush2.xpose.msra.mxu0 0.0
    %2234 = vmatprep.subr.mxu0 0.0
    %2235 = vmatpush2.xpose.msra.mxu0 0.0
    %2236 = vmatprep.subr.mxu0 0.0
    %2237 = vmatpush2.xpose.msra.mxu0 0.0
    %2238 = vmatprep.subr.mxu0 0.0
    %2239 = vmatpush2.xpose.msra.mxu0 0.0
    %2240 = vmatprep.subr.mxu0 0.0
    %2241 = vmatpush2.xpose.msra.mxu0 0.0
    %2242 = vmatprep.subr.mxu0 0.0
    %2243 = vmatpush2.xpose.msra.mxu0 0.0
    %2244 = vmatprep.subr.mxu0 0.0
    %2245 = vmatpush2.xpose.msra.mxu0 0.0
    %2246 = vmatprep.subr.mxu0 0.0
    %2247 = vmatpush2.xpose.msra.mxu0 0.0
    %2248 = vmatprep.subr.mxu0 0.0
    %2249 = vmatpush2.xpose.msra.mxu0 0.0
    %2250 = vmatprep.subr.mxu0 0.0
    %2251 = vmatpush2.xpose.msra.mxu0 0.0
    %2252 = vmatprep.subr.mxu0 0.0
    %2253 = vmatpush2.xpose.msra.mxu0 0.0
    %2254 = vmatprep.mubr.f32.mxu0 0.0
    %2255 = vmatmul.mubr.f32.gmra.mxu0 %v2186
    %v2256 = vpop.f32.mrf.mxu0
    %v2257 = vadd.f32 0.0, %v2256
    %v2258 = vpop.f32.mrf.mxu0
    %2259 = vdwg.mxu0
    %v2260 = vsel %vm172, %v2257, -inf
    %2261 = vmax.xlane.f32.xlu0 %v2260
    %v2262 = vpop.xlane.xlu0 %2261
    %v2263 = vsub.f32 %v2257, %v2262
    %v2264 = vmul.f32 %v2263, 1.442695
    %v2265 = vpow.pop %v2264
    %v2266 = vsel %vm172, %v2265, 0.0
    %2267 = vadd.xlane.f32.xlu0 %v2266
    %v2268 = vpop.xlane.xlu0 %2267
    %v2269 = vrcp.pop %v2268
    %v2270 = vmul.f32 %v2265, %v2269
    %2271 = vrot.lane.b32.xlu0 %v1840, 80
    %v2272 = vpop.permute.xlu0 %2271
    %v2275 = vsel %vm172, %v2270, 0
    %2277 = vmatprep.subr.mxu0 0.0
    %2278 = vmatpush1.msra.mxu0 0.0
    %2279 = vmatprep.subr.mxu0 0.0
    %2280 = vmatpush1.msra.mxu0 0.0
    %2281 = vmatprep.subr.mxu0 0.0
    %2282 = vmatpush1.msra.mxu0 0.0
    %2283 = vmatprep.subr.mxu0 0.0
    %2284 = vmatpush1.msra.mxu0 0.0
    %2285 = vmatprep.subr.mxu0 0.0
    %2286 = vmatpush1.msra.mxu0 0.0
    %2287 = vmatprep.subr.mxu0 0.0
    %2288 = vmatpush1.msra.mxu0 0.0
    %2289 = vmatprep.subr.mxu0 0.0
    %2290 = vmatpush1.msra.mxu0 0.0
    %2291 = vmatprep.subr.mxu0 0.0
    %2292 = vmatpush1.msra.mxu0 0.0
    %2293 = vmatprep.subr.mxu0 0.0
    %2294 = vmatpush1.msra.mxu0 0.0
    %2295 = vmatprep.subr.mxu0 0.0
    %2296 = vmatpush1.msra.mxu0 0.0
    %2297 = vmatprep.subr.mxu0 0.0
    %2298 = vmatpush1.msra.mxu0 0.0
    %2299 = vmatprep.subr.mxu0 0.0
    %2300 = vmatpush1.msra.mxu0 0.0
    %2301 = vmatprep.subr.mxu0 0.0
    %2302 = vmatpush1.msra.mxu0 0.0
    %2303 = vmatprep.subr.mxu0 0.0
    %2304 = vmatpush1.msra.mxu0 0.0
    %2305 = vmatprep.subr.mxu0 0.0
    %2306 = vmatpush1.msra.mxu0 0.0
    %2307 = vmatprep.subr.mxu0 0.0
    %2308 = vmatpush1.msra.mxu0 %v2272
    %2309 = vmatprep.subr.mxu0 0.0
    %2310 = vmatpush2.msra.mxu0 0.0
    %2311 = vmatprep.subr.mxu0 0.0
    %2312 = vmatpush2.msra.mxu0 0.0
    %2313 = vmatprep.subr.mxu0 0.0
    %2314 = vmatpush2.msra.mxu0 0.0
    %2315 = vmatprep.subr.mxu0 0.0
    %2316 = vmatpush2.msra.mxu0 0.0
    %2317 = vmatprep.subr.mxu0 0.0
    %2318 = vmatpush2.msra.mxu0 0.0
    %2319 = vmatprep.subr.mxu0 0.0
    %2320 = vmatpush2.msra.mxu0 0.0
    %2321 = vmatprep.subr.mxu0 0.0
    %2322 = vmatpush2.msra.mxu0 0.0
    %2323 = vmatprep.subr.mxu0 0.0
    %2324 = vmatpush2.msra.mxu0 0.0
    %2325 = vmatprep.subr.mxu0 0.0
    %2326 = vmatpush2.msra.mxu0 0.0
    %2327 = vmatprep.subr.mxu0 0.0
    %2328 = vmatpush2.msra.mxu0 0.0
    %2329 = vmatprep.subr.mxu0 0.0
    %2330 = vmatpush2.msra.mxu0 0.0
    %2331 = vmatprep.subr.mxu0 0.0
    %2332 = vmatpush2.msra.mxu0 0.0
    %2333 = vmatprep.subr.mxu0 0.0
    %2334 = vmatpush2.msra.mxu0 0.0
    %2335 = vmatprep.subr.mxu0 0.0
    %2336 = vmatpush2.msra.mxu0 0.0
    %2337 = vmatprep.subr.mxu0 0.0
    %2338 = vmatpush2.msra.mxu0 0.0
    %2339 = vmatprep.subr.mxu0 0.0
    %2340 = vmatpush2.msra.mxu0 0.0
    %2341 = vmatprep.mubr.f32.mxu0 0.0
    %2342 = vmatmul.mubr.f32.gmra.mxu0 %v2275
    %v2343 = vpop.f32.mrf.mxu0
    %v2344 = vadd.f32 0.0, %v2343
    %v2345 = vpop.f32.mrf.mxu0
    %2346 = vdwg.mxu0
    %2348 = vrot.lane.b32.xlu0 %v2344, 16
    %v2349 = vpop.permute.xlu0 %2348
    %2351 = vst.msk [vmem:[#allocation2] sm:$0xff] %vm675, %v2349
    %2352 = vrot.lane.b32.xlu0 %v1748, 104
    %v2353 = vpop.permute.xlu0 %2352
    %2354 = vrot.lane.b32.xlu0 %v1840, 104
    %v2355 = vpop.permute.xlu0 %2354
    %v2356 = vsel %vm172, %v2353, 0
    %v2358 = vsel %vm172, %v2355, 0
    %2360 = vmatprep.subr.mxu0 0.0
    %2361 = vmatpush1.xpose.msra.mxu0 0.0
    %2362 = vmatprep.subr.mxu0 0.0
    %2363 = vmatpush1.xpose.msra.mxu0 0.0
    %2364 = vmatprep.subr.mxu0 0.0
    %2365 = vmatpush1.xpose.msra.mxu0 0.0
    %2366 = vmatprep.subr.mxu0 0.0
    %2367 = vmatpush1.xpose.msra.mxu0 0.0
    %2368 = vmatprep.subr.mxu0 0.0
    %2369 = vmatpush1.xpose.msra.mxu0 0.0
    %2370 = vmatprep.subr.mxu0 0.0
    %2371 = vmatpush1.xpose.msra.mxu0 0.0
    %2372 = vmatprep.subr.mxu0 0.0
    %2373 = vmatpush1.xpose.msra.mxu0 0.0
    %2374 = vmatprep.subr.mxu0 0.0
    %2375 = vmatpush1.xpose.msra.mxu0 0.0
    %2376 = vmatprep.subr.mxu0 0.0
    %2377 = vmatpush1.xpose.msra.mxu0 0.0
    %2378 = vmatprep.subr.mxu0 0.0
    %2379 = vmatpush1.xpose.msra.mxu0 0.0
    %2380 = vmatprep.subr.mxu0 0.0
    %2381 = vmatpush1.xpose.msra.mxu0 0.0
    %2382 = vmatprep.subr.mxu0 0.0
    %2383 = vmatpush1.xpose.msra.mxu0 0.0
    %2384 = vmatprep.subr.mxu0 0.0
    %2385 = vmatpush1.xpose.msra.mxu0 0.0
    %2386 = vmatprep.subr.mxu0 0.0
    %2387 = vmatpush1.xpose.msra.mxu0 0.0
    %2388 = vmatprep.subr.mxu0 0.0
    %2389 = vmatpush1.xpose.msra.mxu0 0.0
    %2390 = vmatprep.subr.mxu0 0.0
    %2391 = vmatpush1.xpose.msra.mxu0 %v2358
    %2392 = vmatprep.subr.mxu0 0.0
    %2393 = vmatpush2.xpose.msra.mxu0 0.0
    %2394 = vmatprep.subr.mxu0 0.0
    %2395 = vmatpush2.xpose.msra.mxu0 0.0
    %2396 = vmatprep.subr.mxu0 0.0
    %2397 = vmatpush2.xpose.msra.mxu0 0.0
    %2398 = vmatprep.subr.mxu0 0.0
    %2399 = vmatpush2.xpose.msra.mxu0 0.0
    %2400 = vmatprep.subr.mxu0 0.0
    %2401 = vmatpush2.xpose.msra.mxu0 0.0
    %2402 = vmatprep.subr.mxu0 0.0
    %2403 = vmatpush2.xpose.msra.mxu0 0.0
    %2404 = vmatprep.subr.mxu0 0.0
    %2405 = vmatpush2.xpose.msra.mxu0 0.0
    %2406 = vmatprep.subr.mxu0 0.0
    %2407 = vmatpush2.xpose.msra.mxu0 0.0
    %2408 = vmatprep.subr.mxu0 0.0
    %2409 = vmatpush2.xpose.msra.mxu0 0.0
    %2410 = vmatprep.subr.mxu0 0.0
    %2411 = vmatpush2.xpose.msra.mxu0 0.0
    %2412 = vmatprep.subr.mxu0 0.0
    %2413 = vmatpush2.xpose.msra.mxu0 0.0
    %2414 = vmatprep.subr.mxu0 0.0
    %2415 = vmatpush2.xpose.msra.mxu0 0.0
    %2416 = vmatprep.subr.mxu0 0.0
    %2417 = vmatpush2.xpose.msra.mxu0 0.0
    %2418 = vmatprep.subr.mxu0 0.0
    %2419 = vmatpush2.xpose.msra.mxu0 0.0
    %2420 = vmatprep.subr.mxu0 0.0
    %2421 = vmatpush2.xpose.msra.mxu0 0.0
    %2422 = vmatprep.subr.mxu0 0.0
    %2423 = vmatpush2.xpose.msra.mxu0 0.0
    %2424 = vmatprep.mubr.f32.mxu0 0.0
    %2425 = vmatmul.mubr.f32.gmra.mxu0 %v2356
    %v2426 = vpop.f32.mrf.mxu0
    %v2427 = vadd.f32 0.0, %v2426
    %v2428 = vpop.f32.mrf.mxu0
    %2429 = vdwg.mxu0
    %v2430 = vsel %vm172, %v2427, -inf
    %2431 = vmax.xlane.f32.xlu0 %v2430
    %v2432 = vpop.xlane.xlu0 %2431
    %v2433 = vsub.f32 %v2427, %v2432
    %v2434 = vmul.f32 %v2433, 1.442695
    %v2435 = vpow.pop %v2434
    %v2436 = vsel %vm172, %v2435, 0.0
    %2437 = vadd.xlane.f32.xlu0 %v2436
    %v2438 = vpop.xlane.xlu0 %2437
    %v2439 = vrcp.pop %v2438
    %v2440 = vmul.f32 %v2435, %v2439
    %2441 = vrot.lane.b32.xlu0 %v1840, 72
    %v2442 = vpop.permute.xlu0 %2441
    %v2445 = vsel %vm172, %v2440, 0
    %2447 = vmatprep.subr.mxu0 0.0
    %2448 = vmatpush1.msra.mxu0 0.0
    %2449 = vmatprep.subr.mxu0 0.0
    %2450 = vmatpush1.msra.mxu0 0.0
    %2451 = vmatprep.subr.mxu0 0.0
    %2452 = vmatpush1.msra.mxu0 0.0
    %2453 = vmatprep.subr.mxu0 0.0
    %2454 = vmatpush1.msra.mxu0 0.0
    %2455 = vmatprep.subr.mxu0 0.0
    %2456 = vmatpush1.msra.mxu0 0.0
    %2457 = vmatprep.subr.mxu0 0.0
    %2458 = vmatpush1.msra.mxu0 0.0
    %2459 = vmatprep.subr.mxu0 0.0
    %2460 = vmatpush1.msra.mxu0 0.0
    %2461 = vmatprep.subr.mxu0 0.0
    %2462 = vmatpush1.msra.mxu0 0.0
    %2463 = vmatprep.subr.mxu0 0.0
    %2464 = vmatpush1.msra.mxu0 0.0
    %2465 = vmatprep.subr.mxu0 0.0
    %2466 = vmatpush1.msra.mxu0 0.0
    %2467 = vmatprep.subr.mxu0 0.0
    %2468 = vmatpush1.msra.mxu0 0.0
    %2469 = vmatprep.subr.mxu0 0.0
    %2470 = vmatpush1.msra.mxu0 0.0
    %2471 = vmatprep.subr.mxu0 0.0
    %2472 = vmatpush1.msra.mxu0 0.0
    %2473 = vmatprep.subr.mxu0 0.0
    %2474 = vmatpush1.msra.mxu0 0.0
    %2475 = vmatprep.subr.mxu0 0.0
    %2476 = vmatpush1.msra.mxu0 0.0
    %2477 = vmatprep.subr.mxu0 0.0
    %2478 = vmatpush1.msra.mxu0 %v2442
    %2479 = vmatprep.subr.mxu0 0.0
    %2480 = vmatpush2.msra.mxu0 0.0
    %2481 = vmatprep.subr.mxu0 0.0
    %2482 = vmatpush2.msra.mxu0 0.0
    %2483 = vmatprep.subr.mxu0 0.0
    %2484 = vmatpush2.msra.mxu0 0.0
    %2485 = vmatprep.subr.mxu0 0.0
    %2486 = vmatpush2.msra.mxu0 0.0
    %2487 = vmatprep.subr.mxu0 0.0
    %2488 = vmatpush2.msra.mxu0 0.0
    %2489 = vmatprep.subr.mxu0 0.0
    %2490 = vmatpush2.msra.mxu0 0.0
    %2491 = vmatprep.subr.mxu0 0.0
    %2492 = vmatpush2.msra.mxu0 0.0
    %2493 = vmatprep.subr.mxu0 0.0
    %2494 = vmatpush2.msra.mxu0 0.0
    %2495 = vmatprep.subr.mxu0 0.0
    %2496 = vmatpush2.msra.mxu0 0.0
    %2497 = vmatprep.subr.mxu0 0.0
    %2498 = vmatpush2.msra.mxu0 0.0
    %2499 = vmatprep.subr.mxu0 0.0
    %2500 = vmatpush2.msra.mxu0 0.0
    %2501 = vmatprep.subr.mxu0 0.0
    %2502 = vmatpush2.msra.mxu0 0.0
    %2503 = vmatprep.subr.mxu0 0.0
    %2504 = vmatpush2.msra.mxu0 0.0
    %2505 = vmatprep.subr.mxu0 0.0
    %2506 = vmatpush2.msra.mxu0 0.0
    %2507 = vmatprep.subr.mxu0 0.0
    %2508 = vmatpush2.msra.mxu0 0.0
    %2509 = vmatprep.subr.mxu0 0.0
    %2510 = vmatpush2.msra.mxu0 0.0
    %2511 = vmatprep.mubr.f32.mxu0 0.0
    %2512 = vmatmul.mubr.f32.gmra.mxu0 %v2445
    %v2513 = vpop.f32.mrf.mxu0
    %v2514 = vadd.f32 0.0, %v2513
    %v2515 = vpop.f32.mrf.mxu0
    %2516 = vdwg.mxu0
    %2518 = vrot.lane.b32.xlu0 %v2514, 24
    %v2519 = vpop.permute.xlu0 %2518
    %2521 = vst.msk [vmem:[#allocation2] sm:$0xff] %vm846, %v2519
    %v2523 = vsel %vm172, %v1753, 0
    %v2526 = vsel %vm172, %v1845, 0
    %2528 = vmatprep.subr.mxu0 0.0
    %2529 = vmatpush1.xpose.msra.mxu0 0.0
    %2530 = vmatprep.subr.mxu0 0.0
    %2531 = vmatpush1.xpose.msra.mxu0 0.0
    %2532 = vmatprep.subr.mxu0 0.0
    %2533 = vmatpush1.xpose.msra.mxu0 0.0
    %2534 = vmatprep.subr.mxu0 0.0
    %2535 = vmatpush1.xpose.msra.mxu0 0.0
    %2536 = vmatprep.subr.mxu0 0.0
    %2537 = vmatpush1.xpose.msra.mxu0 0.0
    %2538 = vmatprep.subr.mxu0 0.0
    %2539 = vmatpush1.xpose.msra.mxu0 0.0
    %2540 = vmatprep.subr.mxu0 0.0
    %2541 = vmatpush1.xpose.msra.mxu0 0.0
    %2542 = vmatprep.subr.mxu0 0.0
    %2543 = vmatpush1.xpose.msra.mxu0 0.0
    %2544 = vmatprep.subr.mxu0 0.0
    %2545 = vmatpush1.xpose.msra.mxu0 0.0
    %2546 = vmatprep.subr.mxu0 0.0
    %2547 = vmatpush1.xpose.msra.mxu0 0.0
    %2548 = vmatprep.subr.mxu0 0.0
    %2549 = vmatpush1.xpose.msra.mxu0 0.0
    %2550 = vmatprep.subr.mxu0 0.0
    %2551 = vmatpush1.xpose.msra.mxu0 0.0
    %2552 = vmatprep.subr.mxu0 0.0
    %2553 = vmatpush1.xpose.msra.mxu0 0.0
    %2554 = vmatprep.subr.mxu0 0.0
    %2555 = vmatpush1.xpose.msra.mxu0 0.0
    %2556 = vmatprep.subr.mxu0 0.0
    %2557 = vmatpush1.xpose.msra.mxu0 0.0
    %2558 = vmatprep.subr.mxu0 0.0
    %2559 = vmatpush1.xpose.msra.mxu0 %v2526
    %2560 = vmatprep.subr.mxu0 0.0
    %2561 = vmatpush2.xpose.msra.mxu0 0.0
    %2562 = vmatprep.subr.mxu0 0.0
    %2563 = vmatpush2.xpose.msra.mxu0 0.0
    %2564 = vmatprep.subr.mxu0 0.0
    %2565 = vmatpush2.xpose.msra.mxu0 0.0
    %2566 = vmatprep.subr.mxu0 0.0
    %2567 = vmatpush2.xpose.msra.mxu0 0.0
    %2568 = vmatprep.subr.mxu0 0.0
    %2569 = vmatpush2.xpose.msra.mxu0 0.0
    %2570 = vmatprep.subr.mxu0 0.0
    %2571 = vmatpush2.xpose.msra.mxu0 0.0
    %2572 = vmatprep.subr.mxu0 0.0
    %2573 = vmatpush2.xpose.msra.mxu0 0.0
    %2574 = vmatprep.subr.mxu0 0.0
    %2575 = vmatpush2.xpose.msra.mxu0 0.0
    %2576 = vmatprep.subr.mxu0 0.0
    %2577 = vmatpush2.xpose.msra.mxu0 0.0
    %2578 = vmatprep.subr.mxu0 0.0
    %2579 = vmatpush2.xpose.msra.mxu0 0.0
    %2580 = vmatprep.subr.mxu0 0.0
    %2581 = vmatpush2.xpose.msra.mxu0 0.0
    %2582 = vmatprep.subr.mxu0 0.0
    %2583 = vmatpush2.xpose.msra.mxu0 0.0
    %2584 = vmatprep.subr.mxu0 0.0
    %2585 = vmatpush2.xpose.msra.mxu0 0.0
    %2586 = vmatprep.subr.mxu0 0.0
    %2587 = vmatpush2.xpose.msra.mxu0 0.0
    %2588 = vmatprep.subr.mxu0 0.0
    %2589 = vmatpush2.xpose.msra.mxu0 0.0
    %2590 = vmatprep.subr.mxu0 0.0
    %2591 = vmatpush2.xpose.msra.mxu0 0.0
    %2592 = vmatprep.mubr.f32.mxu0 0.0
    %2593 = vmatmul.mubr.f32.gmra.mxu0 %v2523
    %v2594 = vpop.f32.mrf.mxu0
    %v2595 = vadd.f32 0.0, %v2594
    %v2596 = vpop.f32.mrf.mxu0
    %2597 = vdwg.mxu0
    %v2598 = vsel %vm172, %v2595, -inf
    %2599 = vmax.xlane.f32.xlu0 %v2598
    %v2600 = vpop.xlane.xlu0 %2599
    %v2601 = vsub.f32 %v2595, %v2600
    %v2602 = vmul.f32 %v2601, 1.442695
    %v2603 = vpow.pop %v2602
    %v2604 = vsel %vm172, %v2603, 0.0
    %2605 = vadd.xlane.f32.xlu0 %v2604
    %v2606 = vpop.xlane.xlu0 %2605
    %v2607 = vrcp.pop %v2606
    %v2608 = vmul.f32 %v2603, %v2607
    %2609 = vrot.lane.b32.xlu0 %v1845, 96
    %v2610 = vpop.permute.xlu0 %2609
    %v2613 = vsel %vm172, %v2608, 0
    %2615 = vmatprep.subr.mxu0 0.0
    %2616 = vmatpush1.msra.mxu0 0.0
    %2617 = vmatprep.subr.mxu0 0.0
    %2618 = vmatpush1.msra.mxu0 0.0
    %2619 = vmatprep.subr.mxu0 0.0
    %2620 = vmatpush1.msra.mxu0 0.0
    %2621 = vmatprep.subr.mxu0 0.0
    %2622 = vmatpush1.msra.mxu0 0.0
    %2623 = vmatprep.subr.mxu0 0.0
    %2624 = vmatpush1.msra.mxu0 0.0
    %2625 = vmatprep.subr.mxu0 0.0
    %2626 = vmatpush1.msra.mxu0 0.0
    %2627 = vmatprep.subr.mxu0 0.0
    %2628 = vmatpush1.msra.mxu0 0.0
    %2629 = vmatprep.subr.mxu0 0.0
    %2630 = vmatpush1.msra.mxu0 0.0
    %2631 = vmatprep.subr.mxu0 0.0
    %2632 = vmatpush1.msra.mxu0 0.0
    %2633 = vmatprep.subr.mxu0 0.0
    %2634 = vmatpush1.msra.mxu0 0.0
    %2635 = vmatprep.subr.mxu0 0.0
    %2636 = vmatpush1.msra.mxu0 0.0
    %2637 = vmatprep.subr.mxu0 0.0
    %2638 = vmatpush1.msra.mxu0 0.0
    %2639 = vmatprep.subr.mxu0 0.0
    %2640 = vmatpush1.msra.mxu0 0.0
    %2641 = vmatprep.subr.mxu0 0.0
    %2642 = vmatpush1.msra.mxu0 0.0
    %2643 = vmatprep.subr.mxu0 0.0
    %2644 = vmatpush1.msra.mxu0 0.0
    %2645 = vmatprep.subr.mxu0 0.0
    %2646 = vmatpush1.msra.mxu0 %v2610
    %2647 = vmatprep.subr.mxu0 0.0
    %2648 = vmatpush2.msra.mxu0 0.0
    %2649 = vmatprep.subr.mxu0 0.0
    %2650 = vmatpush2.msra.mxu0 0.0
    %2651 = vmatprep.subr.mxu0 0.0
    %2652 = vmatpush2.msra.mxu0 0.0
    %2653 = vmatprep.subr.mxu0 0.0
    %2654 = vmatpush2.msra.mxu0 0.0
    %2655 = vmatprep.subr.mxu0 0.0
    %2656 = vmatpush2.msra.mxu0 0.0
    %2657 = vmatprep.subr.mxu0 0.0
    %2658 = vmatpush2.msra.mxu0 0.0
    %2659 = vmatprep.subr.mxu0 0.0
    %2660 = vmatpush2.msra.mxu0 0.0
    %2661 = vmatprep.subr.mxu0 0.0
    %2662 = vmatpush2.msra.mxu0 0.0
    %2663 = vmatprep.subr.mxu0 0.0
    %2664 = vmatpush2.msra.mxu0 0.0
    %2665 = vmatprep.subr.mxu0 0.0
    %2666 = vmatpush2.msra.mxu0 0.0
    %2667 = vmatprep.subr.mxu0 0.0
    %2668 = vmatpush2.msra.mxu0 0.0
    %2669 = vmatprep.subr.mxu0 0.0
    %2670 = vmatpush2.msra.mxu0 0.0
    %2671 = vmatprep.subr.mxu0 0.0
    %2672 = vmatpush2.msra.mxu0 0.0
    %2673 = vmatprep.subr.mxu0 0.0
    %2674 = vmatpush2.msra.mxu0 0.0
    %2675 = vmatprep.subr.mxu0 0.0
    %2676 = vmatpush2.msra.mxu0 0.0
    %2677 = vmatprep.subr.mxu0 0.0
    %2678 = vmatpush2.msra.mxu0 0.0
    %2679 = vmatprep.mubr.f32.mxu0 0.0
    %2680 = vmatmul.mubr.f32.gmra.mxu0 %v2613
    %v2681 = vpop.f32.mrf.mxu0
    %v2682 = vadd.f32 0.0, %v2681
    %v2683 = vpop.f32.mrf.mxu0
    %2684 = vdwg.mxu0
    %2685 = vst.msk [vmem:[#allocation2 + $0x8] sm:$0xff] %vm172, %v2682
    %2686 = vrot.lane.b32.xlu0 %v1753, 120
    %v2687 = vpop.permute.xlu0 %2686
    %2688 = vrot.lane.b32.xlu0 %v1845, 120
    %v2689 = vpop.permute.xlu0 %2688
    %v2690 = vsel %vm172, %v2687, 0
    %v2692 = vsel %vm172, %v2689, 0
    %2694 = vmatprep.subr.mxu0 0.0
    %2695 = vmatpush1.xpose.msra.mxu0 0.0
    %2696 = vmatprep.subr.mxu0 0.0
    %2697 = vmatpush1.xpose.msra.mxu0 0.0
    %2698 = vmatprep.subr.mxu0 0.0
    %2699 = vmatpush1.xpose.msra.mxu0 0.0
    %2700 = vmatprep.subr.mxu0 0.0
    %2701 = vmatpush1.xpose.msra.mxu0 0.0
    %2702 = vmatprep.subr.mxu0 0.0
    %2703 = vmatpush1.xpose.msra.mxu0 0.0
    %2704 = vmatprep.subr.mxu0 0.0
    %2705 = vmatpush1.xpose.msra.mxu0 0.0
    %2706 = vmatprep.subr.mxu0 0.0
    %2707 = vmatpush1.xpose.msra.mxu0 0.0
    %2708 = vmatprep.subr.mxu0 0.0
    %2709 = vmatpush1.xpose.msra.mxu0 0.0
    %2710 = vmatprep.subr.mxu0 0.0
    %2711 = vmatpush1.xpose.msra.mxu0 0.0
    %2712 = vmatprep.subr.mxu0 0.0
    %2713 = vmatpush1.xpose.msra.mxu0 0.0
    %2714 = vmatprep.subr.mxu0 0.0
    %2715 = vmatpush1.xpose.msra.mxu0 0.0
    %2716 = vmatprep.subr.mxu0 0.0
    %2717 = vmatpush1.xpose.msra.mxu0 0.0
    %2718 = vmatprep.subr.mxu0 0.0
    %2719 = vmatpush1.xpose.msra.mxu0 0.0
    %2720 = vmatprep.subr.mxu0 0.0
    %2721 = vmatpush1.xpose.msra.mxu0 0.0
    %2722 = vmatprep.subr.mxu0 0.0
    %2723 = vmatpush1.xpose.msra.mxu0 0.0
    %2724 = vmatprep.subr.mxu0 0.0
    %2725 = vmatpush1.xpose.msra.mxu0 %v2692
    %2726 = vmatprep.subr.mxu0 0.0
    %2727 = vmatpush2.xpose.msra.mxu0 0.0
    %2728 = vmatprep.subr.mxu0 0.0
    %2729 = vmatpush2.xpose.msra.mxu0 0.0
    %2730 = vmatprep.subr.mxu0 0.0
    %2731 = vmatpush2.xpose.msra.mxu0 0.0
    %2732 = vmatprep.subr.mxu0 0.0
    %2733 = vmatpush2.xpose.msra.mxu0 0.0
    %2734 = vmatprep.subr.mxu0 0.0
    %2735 = vmatpush2.xpose.msra.mxu0 0.0
    %2736 = vmatprep.subr.mxu0 0.0
    %2737 = vmatpush2.xpose.msra.mxu0 0.0
    %2738 = vmatprep.subr.mxu0 0.0
    %2739 = vmatpush2.xpose.msra.mxu0 0.0
    %2740 = vmatprep.subr.mxu0 0.0
    %2741 = vmatpush2.xpose.msra.mxu0 0.0
    %2742 = vmatprep.subr.mxu0 0.0
    %2743 = vmatpush2.xpose.msra.mxu0 0.0
    %2744 = vmatprep.subr.mxu0 0.0
    %2745 = vmatpush2.xpose.msra.mxu0 0.0
    %2746 = vmatprep.subr.mxu0 0.0
    %2747 = vmatpush2.xpose.msra.mxu0 0.0
    %2748 = vmatprep.subr.mxu0 0.0
    %2749 = vmatpush2.xpose.msra.mxu0 0.0
    %2750 = vmatprep.subr.mxu0 0.0
    %2751 = vmatpush2.xpose.msra.mxu0 0.0
    %2752 = vmatprep.subr.mxu0 0.0
    %2753 = vmatpush2.xpose.msra.mxu0 0.0
    %2754 = vmatprep.subr.mxu0 0.0
    %2755 = vmatpush2.xpose.msra.mxu0 0.0
    %2756 = vmatprep.subr.mxu0 0.0
    %2757 = vmatpush2.xpose.msra.mxu0 0.0
    %2758 = vmatprep.mubr.f32.mxu0 0.0
    %2759 = vmatmul.mubr.f32.gmra.mxu0 %v2690
    %v2760 = vpop.f32.mrf.mxu0
    %v2761 = vadd.f32 0.0, %v2760
    %v2762 = vpop.f32.mrf.mxu0
    %2763 = vdwg.mxu0
    %v2764 = vsel %vm172, %v2761, -inf
    %2765 = vmax.xlane.f32.xlu0 %v2764
    %v2766 = vpop.xlane.xlu0 %2765
    %v2767 = vsub.f32 %v2761, %v2766
    %v2768 = vmul.f32 %v2767, 1.442695
    %v2769 = vpow.pop %v2768
    %v2770 = vsel %vm172, %v2769, 0.0
    %2771 = vadd.xlane.f32.xlu0 %v2770
    %v2772 = vpop.xlane.xlu0 %2771
    %v2773 = vrcp.pop %v2772
    %v2774 = vmul.f32 %v2769, %v2773
    %2775 = vrot.lane.b32.xlu0 %v1845, 88
    %v2776 = vpop.permute.xlu0 %2775
    %v2779 = vsel %vm172, %v2774, 0
    %2781 = vmatprep.subr.mxu0 0.0
    %2782 = vmatpush1.msra.mxu0 0.0
    %2783 = vmatprep.subr.mxu0 0.0
    %2784 = vmatpush1.msra.mxu0 0.0
    %2785 = vmatprep.subr.mxu0 0.0
    %2786 = vmatpush1.msra.mxu0 0.0
    %2787 = vmatprep.subr.mxu0 0.0
    %2788 = vmatpush1.msra.mxu0 0.0
    %2789 = vmatprep.subr.mxu0 0.0
    %2790 = vmatpush1.msra.mxu0 0.0
    %2791 = vmatprep.subr.mxu0 0.0
    %2792 = vmatpush1.msra.mxu0 0.0
    %2793 = vmatprep.subr.mxu0 0.0
    %2794 = vmatpush1.msra.mxu0 0.0
    %2795 = vmatprep.subr.mxu0 0.0
    %2796 = vmatpush1.msra.mxu0 0.0
    %2797 = vmatprep.subr.mxu0 0.0
    %2798 = vmatpush1.msra.mxu0 0.0
    %2799 = vmatprep.subr.mxu0 0.0
    %2800 = vmatpush1.msra.mxu0 0.0
    %2801 = vmatprep.subr.mxu0 0.0
    %2802 = vmatpush1.msra.mxu0 0.0
    %2803 = vmatprep.subr.mxu0 0.0
    %2804 = vmatpush1.msra.mxu0 0.0
    %2805 = vmatprep.subr.mxu0 0.0
    %2806 = vmatpush1.msra.mxu0 0.0
    %2807 = vmatprep.subr.mxu0 0.0
    %2808 = vmatpush1.msra.mxu0 0.0
    %2809 = vmatprep.subr.mxu0 0.0
    %2810 = vmatpush1.msra.mxu0 0.0
    %2811 = vmatprep.subr.mxu0 0.0
    %2812 = vmatpush1.msra.mxu0 %v2776
    %2813 = vmatprep.subr.mxu0 0.0
    %2814 = vmatpush2.msra.mxu0 0.0
    %2815 = vmatprep.subr.mxu0 0.0
    %2816 = vmatpush2.msra.mxu0 0.0
    %2817 = vmatprep.subr.mxu0 0.0
    %2818 = vmatpush2.msra.mxu0 0.0
    %2819 = vmatprep.subr.mxu0 0.0
    %2820 = vmatpush2.msra.mxu0 0.0
    %2821 = vmatprep.subr.mxu0 0.0
    %2822 = vmatpush2.msra.mxu0 0.0
    %2823 = vmatprep.subr.mxu0 0.0
    %2824 = vmatpush2.msra.mxu0 0.0
    %2825 = vmatprep.subr.mxu0 0.0
    %2826 = vmatpush2.msra.mxu0 0.0
    %2827 = vmatprep.subr.mxu0 0.0
    %2828 = vmatpush2.msra.mxu0 0.0
    %2829 = vmatprep.subr.mxu0 0.0
    %2830 = vmatpush2.msra.mxu0 0.0
    %2831 = vmatprep.subr.mxu0 0.0
    %2832 = vmatpush2.msra.mxu0 0.0
    %2833 = vmatprep.subr.mxu0 0.0
    %2834 = vmatpush2.msra.mxu0 0.0
    %2835 = vmatprep.subr.mxu0 0.0
    %2836 = vmatpush2.msra.mxu0 0.0
    %2837 = vmatprep.subr.mxu0 0.0
    %2838 = vmatpush2.msra.mxu0 0.0
    %2839 = vmatprep.subr.mxu0 0.0
    %2840 = vmatpush2.msra.mxu0 0.0
    %2841 = vmatprep.subr.mxu0 0.0
    %2842 = vmatpush2.msra.mxu0 0.0
    %2843 = vmatprep.subr.mxu0 0.0
    %2844 = vmatpush2.msra.mxu0 0.0
    %2845 = vmatprep.mubr.f32.mxu0 0.0
    %2846 = vmatmul.mubr.f32.gmra.mxu0 %v2779
    %v2847 = vpop.f32.mrf.mxu0
    %v2848 = vadd.f32 0.0, %v2847
    %v2849 = vpop.f32.mrf.mxu0
    %2850 = vdwg.mxu0
    %2852 = vrot.lane.b32.xlu0 %v2848, 8
    %v2853 = vpop.permute.xlu0 %2852
    %2855 = vst.msk [vmem:[#allocation2 + $0x8] sm:$0xff] %vm504, %v2853
    %2856 = vrot.lane.b32.xlu0 %v1753, 112
    %v2857 = vpop.permute.xlu0 %2856
    %2858 = vrot.lane.b32.xlu0 %v1845, 112
    %v2859 = vpop.permute.xlu0 %2858
    %v2860 = vsel %vm172, %v2857, 0
    %v2862 = vsel %vm172, %v2859, 0
    %2864 = vmatprep.subr.mxu0 0.0
    %2865 = vmatpush1.xpose.msra.mxu0 0.0
    %2866 = vmatprep.subr.mxu0 0.0
    %2867 = vmatpush1.xpose.msra.mxu0 0.0
    %2868 = vmatprep.subr.mxu0 0.0
    %2869 = vmatpush1.xpose.msra.mxu0 0.0
    %2870 = vmatprep.subr.mxu0 0.0
    %2871 = vmatpush1.xpose.msra.mxu0 0.0
    %2872 = vmatprep.subr.mxu0 0.0
    %2873 = vmatpush1.xpose.msra.mxu0 0.0
    %2874 = vmatprep.subr.mxu0 0.0
    %2875 = vmatpush1.xpose.msra.mxu0 0.0
    %2876 = vmatprep.subr.mxu0 0.0
    %2877 = vmatpush1.xpose.msra.mxu0 0.0
    %2878 = vmatprep.subr.mxu0 0.0
    %2879 = vmatpush1.xpose.msra.mxu0 0.0
    %2880 = vmatprep.subr.mxu0 0.0
    %2881 = vmatpush1.xpose.msra.mxu0 0.0
    %2882 = vmatprep.subr.mxu0 0.0
    %2883 = vmatpush1.xpose.msra.mxu0 0.0
    %2884 = vmatprep.subr.mxu0 0.0
    %2885 = vmatpush1.xpose.msra.mxu0 0.0
    %2886 = vmatprep.subr.mxu0 0.0
    %2887 = vmatpush1.xpose.msra.mxu0 0.0
    %2888 = vmatprep.subr.mxu0 0.0
    %2889 = vmatpush1.xpose.msra.mxu0 0.0
    %2890 = vmatprep.subr.mxu0 0.0
    %2891 = vmatpush1.xpose.msra.mxu0 0.0
    %2892 = vmatprep.subr.mxu0 0.0
    %2893 = vmatpush1.xpose.msra.mxu0 0.0
    %2894 = vmatprep.subr.mxu0 0.0
    %2895 = vmatpush1.xpose.msra.mxu0 %v2862
    %2896 = vmatprep.subr.mxu0 0.0
    %2897 = vmatpush2.xpose.msra.mxu0 0.0
    %2898 = vmatprep.subr.mxu0 0.0
    %2899 = vmatpush2.xpose.msra.mxu0 0.0
    %2900 = vmatprep.subr.mxu0 0.0
    %2901 = vmatpush2.xpose.msra.mxu0 0.0
    %2902 = vmatprep.subr.mxu0 0.0
    %2903 = vmatpush2.xpose.msra.mxu0 0.0
    %2904 = vmatprep.subr.mxu0 0.0
    %2905 = vmatpush2.xpose.msra.mxu0 0.0
    %2906 = vmatprep.subr.mxu0 0.0
    %2907 = vmatpush2.xpose.msra.mxu0 0.0
    %2908 = vmatprep.subr.mxu0 0.0
    %2909 = vmatpush2.xpose.msra.mxu0 0.0
    %2910 = vmatprep.subr.mxu0 0.0
    %2911 = vmatpush2.xpose.msra.mxu0 0.0
    %2912 = vmatprep.subr.mxu0 0.0
    %2913 = vmatpush2.xpose.msra.mxu0 0.0
    %2914 = vmatprep.subr.mxu0 0.0
    %2915 = vmatpush2.xpose.msra.mxu0 0.0
    %2916 = vmatprep.subr.mxu0 0.0
    %2917 = vmatpush2.xpose.msra.mxu0 0.0
    %2918 = vmatprep.subr.mxu0 0.0
    %2919 = vmatpush2.xpose.msra.mxu0 0.0
    %2920 = vmatprep.subr.mxu0 0.0
    %2921 = vmatpush2.xpose.msra.mxu0 0.0
    %2922 = vmatprep.subr.mxu0 0.0
    %2923 = vmatpush2.xpose.msra.mxu0 0.0
    %2924 = vmatprep.subr.mxu0 0.0
    %2925 = vmatpush2.xpose.msra.mxu0 0.0
    %2926 = vmatprep.subr.mxu0 0.0
    %2927 = vmatpush2.xpose.msra.mxu0 0.0
    %2928 = vmatprep.mubr.f32.mxu0 0.0
    %2929 = vmatmul.mubr.f32.gmra.mxu0 %v2860
    %v2930 = vpop.f32.mrf.mxu0
    %v2931 = vadd.f32 0.0, %v2930
    %v2932 = vpop.f32.mrf.mxu0
    %2933 = vdwg.mxu0
    %v2934 = vsel %vm172, %v2931, -inf
    %2935 = vmax.xlane.f32.xlu0 %v2934
    %v2936 = vpop.xlane.xlu0 %2935
    %v2937 = vsub.f32 %v2931, %v2936
    %v2938 = vmul.f32 %v2937, 1.442695
    %v2939 = vpow.pop %v2938
    %v2940 = vsel %vm172, %v2939, 0.0
    %2941 = vadd.xlane.f32.xlu0 %v2940
    %v2942 = vpop.xlane.xlu0 %2941
    %v2943 = vrcp.pop %v2942
    %v2944 = vmul.f32 %v2939, %v2943
    %2945 = vrot.lane.b32.xlu0 %v1845, 80
    %v2946 = vpop.permute.xlu0 %2945
    %v2949 = vsel %vm172, %v2944, 0
    %2951 = vmatprep.subr.mxu0 0.0
    %2952 = vmatpush1.msra.mxu0 0.0
    %2953 = vmatprep.subr.mxu0 0.0
    %2954 = vmatpush1.msra.mxu0 0.0
    %2955 = vmatprep.subr.mxu0 0.0
    %2956 = vmatpush1.msra.mxu0 0.0
    %2957 = vmatprep.subr.mxu0 0.0
    %2958 = vmatpush1.msra.mxu0 0.0
    %2959 = vmatprep.subr.mxu0 0.0
    %2960 = vmatpush1.msra.mxu0 0.0
    %2961 = vmatprep.subr.mxu0 0.0
    %2962 = vmatpush1.msra.mxu0 0.0
    %2963 = vmatprep.subr.mxu0 0.0
    %2964 = vmatpush1.msra.mxu0 0.0
    %2965 = vmatprep.subr.mxu0 0.0
    %2966 = vmatpush1.msra.mxu0 0.0
    %2967 = vmatprep.subr.mxu0 0.0
    %2968 = vmatpush1.msra.mxu0 0.0
    %2969 = vmatprep.subr.mxu0 0.0
    %2970 = vmatpush1.msra.mxu0 0.0
    %2971 = vmatprep.subr.mxu0 0.0
    %2972 = vmatpush1.msra.mxu0 0.0
    %2973 = vmatprep.subr.mxu0 0.0
    %2974 = vmatpush1.msra.mxu0 0.0
    %2975 = vmatprep.subr.mxu0 0.0
    %2976 = vmatpush1.msra.mxu0 0.0
    %2977 = vmatprep.subr.mxu0 0.0
    %2978 = vmatpush1.msra.mxu0 0.0
    %2979 = vmatprep.subr.mxu0 0.0
    %2980 = vmatpush1.msra.mxu0 0.0
    %2981 = vmatprep.subr.mxu0 0.0
    %2982 = vmatpush1.msra.mxu0 %v2946
    %2983 = vmatprep.subr.mxu0 0.0
    %2984 = vmatpush2.msra.mxu0 0.0
    %2985 = vmatprep.subr.mxu0 0.0
    %2986 = vmatpush2.msra.mxu0 0.0
    %2987 = vmatprep.subr.mxu0 0.0
    %2988 = vmatpush2.msra.mxu0 0.0
    %2989 = vmatprep.subr.mxu0 0.0
    %2990 = vmatpush2.msra.mxu0 0.0
    %2991 = vmatprep.subr.mxu0 0.0
    %2992 = vmatpush2.msra.mxu0 0.0
    %2993 = vmatprep.subr.mxu0 0.0
    %2994 = vmatpush2.msra.mxu0 0.0
    %2995 = vmatprep.subr.mxu0 0.0
    %2996 = vmatpush2.msra.mxu0 0.0
    %2997 = vmatprep.subr.mxu0 0.0
    %2998 = vmatpush2.msra.mxu0 0.0
    %2999 = vmatprep.subr.mxu0 0.0
    %3000 = vmatpush2.msra.mxu0 0.0
    %3001 = vmatprep.subr.mxu0 0.0
    %3002 = vmatpush2.msra.mxu0 0.0
    %3003 = vmatprep.subr.mxu0 0.0
    %3004 = vmatpush2.msra.mxu0 0.0
    %3005 = vmatprep.subr.mxu0 0.0
    %3006 = vmatpush2.msra.mxu0 0.0
    %3007 = vmatprep.subr.mxu0 0.0
    %3008 = vmatpush2.msra.mxu0 0.0
    %3009 = vmatprep.subr.mxu0 0.0
    %3010 = vmatpush2.msra.mxu0 0.0
    %3011 = vmatprep.subr.mxu0 0.0
    %3012 = vmatpush2.msra.mxu0 0.0
    %3013 = vmatprep.subr.mxu0 0.0
    %3014 = vmatpush2.msra.mxu0 0.0
    %3015 = vmatprep.mubr.f32.mxu0 0.0
    %3016 = vmatmul.mubr.f32.gmra.mxu0 %v2949
    %v3017 = vpop.f32.mrf.mxu0
    %v3018 = vadd.f32 0.0, %v3017
    %v3019 = vpop.f32.mrf.mxu0
    %3020 = vdwg.mxu0
    %3022 = vrot.lane.b32.xlu0 %v3018, 16
    %v3023 = vpop.permute.xlu0 %3022
    %3025 = vst.msk [vmem:[#allocation2 + $0x8] sm:$0xff] %vm675, %v3023
    %3026 = vrot.lane.b32.xlu0 %v1753, 104
    %v3027 = vpop.permute.xlu0 %3026
    %3028 = vrot.lane.b32.xlu0 %v1845, 104
    %v3029 = vpop.permute.xlu0 %3028
    %v3030 = vsel %vm172, %v3027, 0
    %v3032 = vsel %vm172, %v3029, 0
    %3034 = vmatprep.subr.mxu0 0.0
    %3035 = vmatpush1.xpose.msra.mxu0 0.0
    %3036 = vmatprep.subr.mxu0 0.0
    %3037 = vmatpush1.xpose.msra.mxu0 0.0
    %3038 = vmatprep.subr.mxu0 0.0
    %3039 = vmatpush1.xpose.msra.mxu0 0.0
    %3040 = vmatprep.subr.mxu0 0.0
    %3041 = vmatpush1.xpose.msra.mxu0 0.0
    %3042 = vmatprep.subr.mxu0 0.0
    %3043 = vmatpush1.xpose.msra.mxu0 0.0
    %3044 = vmatprep.subr.mxu0 0.0
    %3045 = vmatpush1.xpose.msra.mxu0 0.0
    %3046 = vmatprep.subr.mxu0 0.0
    %3047 = vmatpush1.xpose.msra.mxu0 0.0
    %3048 = vmatprep.subr.mxu0 0.0
    %3049 = vmatpush1.xpose.msra.mxu0 0.0
    %3050 = vmatprep.subr.mxu0 0.0
    %3051 = vmatpush1.xpose.msra.mxu0 0.0
    %3052 = vmatprep.subr.mxu0 0.0
    %3053 = vmatpush1.xpose.msra.mxu0 0.0
    %3054 = vmatprep.subr.mxu0 0.0
    %3055 = vmatpush1.xpose.msra.mxu0 0.0
    %3056 = vmatprep.subr.mxu0 0.0
    %3057 = vmatpush1.xpose.msra.mxu0 0.0
    %3058 = vmatprep.subr.mxu0 0.0
    %3059 = vmatpush1.xpose.msra.mxu0 0.0
    %3060 = vmatprep.subr.mxu0 0.0
    %3061 = vmatpush1.xpose.msra.mxu0 0.0
    %3062 = vmatprep.subr.mxu0 0.0
    %3063 = vmatpush1.xpose.msra.mxu0 0.0
    %3064 = vmatprep.subr.mxu0 0.0
    %3065 = vmatpush1.xpose.msra.mxu0 %v3032
    %3066 = vmatprep.subr.mxu0 0.0
    %3067 = vmatpush2.xpose.msra.mxu0 0.0
    %3068 = vmatprep.subr.mxu0 0.0
    %3069 = vmatpush2.xpose.msra.mxu0 0.0
    %3070 = vmatprep.subr.mxu0 0.0
    %3071 = vmatpush2.xpose.msra.mxu0 0.0
    %3072 = vmatprep.subr.mxu0 0.0
    %3073 = vmatpush2.xpose.msra.mxu0 0.0
    %3074 = vmatprep.subr.mxu0 0.0
    %3075 = vmatpush2.xpose.msra.mxu0 0.0
    %3076 = vmatprep.subr.mxu0 0.0
    %3077 = vmatpush2.xpose.msra.mxu0 0.0
    %3078 = vmatprep.subr.mxu0 0.0
    %3079 = vmatpush2.xpose.msra.mxu0 0.0
    %3080 = vmatprep.subr.mxu0 0.0
    %3081 = vmatpush2.xpose.msra.mxu0 0.0
    %3082 = vmatprep.subr.mxu0 0.0
    %3083 = vmatpush2.xpose.msra.mxu0 0.0
    %3084 = vmatprep.subr.mxu0 0.0
    %3085 = vmatpush2.xpose.msra.mxu0 0.0
    %3086 = vmatprep.subr.mxu0 0.0
    %3087 = vmatpush2.xpose.msra.mxu0 0.0
    %3088 = vmatprep.subr.mxu0 0.0
    %3089 = vmatpush2.xpose.msra.mxu0 0.0
    %3090 = vmatprep.subr.mxu0 0.0
    %3091 = vmatpush2.xpose.msra.mxu0 0.0
    %3092 = vmatprep.subr.mxu0 0.0
    %3093 = vmatpush2.xpose.msra.mxu0 0.0
    %3094 = vmatprep.subr.mxu0 0.0
    %3095 = vmatpush2.xpose.msra.mxu0 0.0
    %3096 = vmatprep.subr.mxu0 0.0
    %3097 = vmatpush2.xpose.msra.mxu0 0.0
    %3098 = vmatprep.mubr.f32.mxu0 0.0
    %3099 = vmatmul.mubr.f32.gmra.mxu0 %v3030
    %v3100 = vpop.f32.mrf.mxu0
    %v3101 = vadd.f32 0.0, %v3100
    %v3102 = vpop.f32.mrf.mxu0
    %3103 = vdwg.mxu0
    %v3104 = vsel %vm172, %v3101, -inf
    %3105 = vmax.xlane.f32.xlu0 %v3104
    %v3106 = vpop.xlane.xlu0 %3105
    %v3107 = vsub.f32 %v3101, %v3106
    %v3108 = vmul.f32 %v3107, 1.442695
    %v3109 = vpow.pop %v3108
    %v3110 = vsel %vm172, %v3109, 0.0
    %3111 = vadd.xlane.f32.xlu0 %v3110
    %v3112 = vpop.xlane.xlu0 %3111
    %v3113 = vrcp.pop %v3112
    %v3114 = vmul.f32 %v3109, %v3113
    %3115 = vrot.lane.b32.xlu0 %v1845, 72
    %v3116 = vpop.permute.xlu0 %3115
    %v3119 = vsel %vm172, %v3114, 0
    %3121 = vmatprep.subr.mxu0 0.0
    %3122 = vmatpush1.msra.mxu0 0.0
    %3123 = vmatprep.subr.mxu0 0.0
    %3124 = vmatpush1.msra.mxu0 0.0
    %3125 = vmatprep.subr.mxu0 0.0
    %3126 = vmatpush1.msra.mxu0 0.0
    %3127 = vmatprep.subr.mxu0 0.0
    %3128 = vmatpush1.msra.mxu0 0.0
    %3129 = vmatprep.subr.mxu0 0.0
    %3130 = vmatpush1.msra.mxu0 0.0
    %3131 = vmatprep.subr.mxu0 0.0
    %3132 = vmatpush1.msra.mxu0 0.0
    %3133 = vmatprep.subr.mxu0 0.0
    %3134 = vmatpush1.msra.mxu0 0.0
    %3135 = vmatprep.subr.mxu0 0.0
    %3136 = vmatpush1.msra.mxu0 0.0
    %3137 = vmatprep.subr.mxu0 0.0
    %3138 = vmatpush1.msra.mxu0 0.0
    %3139 = vmatprep.subr.mxu0 0.0
    %3140 = vmatpush1.msra.mxu0 0.0
    %3141 = vmatprep.subr.mxu0 0.0
    %3142 = vmatpush1.msra.mxu0 0.0
    %3143 = vmatprep.subr.mxu0 0.0
    %3144 = vmatpush1.msra.mxu0 0.0
    %3145 = vmatprep.subr.mxu0 0.0
    %3146 = vmatpush1.msra.mxu0 0.0
    %3147 = vmatprep.subr.mxu0 0.0
    %3148 = vmatpush1.msra.mxu0 0.0
    %3149 = vmatprep.subr.mxu0 0.0
    %3150 = vmatpush1.msra.mxu0 0.0
    %3151 = vmatprep.subr.mxu0 0.0
    %3152 = vmatpush1.msra.mxu0 %v3116
    %3153 = vmatprep.subr.mxu0 0.0
    %3154 = vmatpush2.msra.mxu0 0.0
    %3155 = vmatprep.subr.mxu0 0.0
    %3156 = vmatpush2.msra.mxu0 0.0
    %3157 = vmatprep.subr.mxu0 0.0
    %3158 = vmatpush2.msra.mxu0 0.0
    %3159 = vmatprep.subr.mxu0 0.0
    %3160 = vmatpush2.msra.mxu0 0.0
    %3161 = vmatprep.subr.mxu0 0.0
    %3162 = vmatpush2.msra.mxu0 0.0
    %3163 = vmatprep.subr.mxu0 0.0
    %3164 = vmatpush2.msra.mxu0 0.0
    %3165 = vmatprep.subr.mxu0 0.0
    %3166 = vmatpush2.msra.mxu0 0.0
    %3167 = vmatprep.subr.mxu0 0.0
    %3168 = vmatpush2.msra.mxu0 0.0
    %3169 = vmatprep.subr.mxu0 0.0
    %3170 = vmatpush2.msra.mxu0 0.0
    %3171 = vmatprep.subr.mxu0 0.0
    %3172 = vmatpush2.msra.mxu0 0.0
    %3173 = vmatprep.subr.mxu0 0.0
    %3174 = vmatpush2.msra.mxu0 0.0
    %3175 = vmatprep.subr.mxu0 0.0
    %3176 = vmatpush2.msra.mxu0 0.0
    %3177 = vmatprep.subr.mxu0 0.0
    %3178 = vmatpush2.msra.mxu0 0.0
    %3179 = vmatprep.subr.mxu0 0.0
    %3180 = vmatpush2.msra.mxu0 0.0
    %3181 = vmatprep.subr.mxu0 0.0
    %3182 = vmatpush2.msra.mxu0 0.0
    %3183 = vmatprep.subr.mxu0 0.0
    %3184 = vmatpush2.msra.mxu0 0.0
    %3185 = vmatprep.mubr.f32.mxu0 0.0
    %3186 = vmatmul.mubr.f32.gmra.mxu0 %v3119
    %v3187 = vpop.f32.mrf.mxu0
    %v3188 = vadd.f32 0.0, %v3187
    %v3189 = vpop.f32.mrf.mxu0
    %3190 = vdwg.mxu0
    %3192 = vrot.lane.b32.xlu0 %v3188, 24
    %v3193 = vpop.permute.xlu0 %3192
    %3195 = vst.msk [vmem:[#allocation2 + $0x8] sm:$0xff] %vm846, %v3193
    %v3196 = vld [vmem:[#allocation2] sm:$0xff]
    %v3197 = vld [vmem:[#allocation2 + $0x8] sm:$0xff]
    %v3198 = vld [vmem:[%s12] sm:$0xff]
    %v3199 = vld [vmem:[%s12 + $0x8] sm:$0xff]
    %v3200 = vld [vmem:[%s12 + $0x10] sm:$0xff]
    %v3201 = vld [vmem:[%s12 + $0x18] sm:$0xff]
    %v3202 = vld [vmem:[%s13] sm:$0x1]
    %v3204 = vlaneseq
    %v3205 = vshrl.u32 %v3204, 7
    %v3206 = vsub.s32 0, %v3205
    %v3207 = vrot.slane %v3202, %v3206
    %v3210 = vsel %vm87, %v3196, 0
    %v3213 = vsel %vm87, %v3197, 0
    %3215 = vmatprep.subr.mxu0 0.0
    %3216 = vmatpush1.msra.mxu0 0.0
    %3217 = vmatprep.subr.mxu0 0.0
    %3218 = vmatpush1.msra.mxu0 0.0
    %3219 = vmatprep.subr.mxu0 0.0
    %3220 = vmatpush1.msra.mxu0 0.0
    %3221 = vmatprep.subr.mxu0 0.0
    %3222 = vmatpush1.msra.mxu0 0.0
    %3223 = vmatprep.subr.mxu0 0.0
    %3224 = vmatpush1.msra.mxu0 0.0
    %3225 = vmatprep.subr.mxu0 0.0
    %3226 = vmatpush1.msra.mxu0 0.0
    %3227 = vmatprep.subr.mxu0 0.0
    %3228 = vmatpush1.msra.mxu0 0.0
    %3229 = vmatprep.subr.mxu0 0.0
    %3230 = vmatpush1.msra.mxu0 0.0
    %3231 = vmatprep.subr.mxu0 0.0
    %3232 = vmatpush1.msra.mxu0 0.0
    %3233 = vmatprep.subr.mxu0 0.0
    %3234 = vmatpush1.msra.mxu0 0.0
    %3235 = vmatprep.subr.mxu0 0.0
    %3236 = vmatpush1.msra.mxu0 0.0
    %3237 = vmatprep.subr.mxu0 0.0
    %3238 = vmatpush1.msra.mxu0 0.0
    %3239 = vmatprep.subr.mxu0 0.0
    %3240 = vmatpush1.msra.mxu0 %v3201
    %3241 = vmatprep.subr.mxu0 0.0
    %3242 = vmatpush1.msra.mxu0 %v3200
    %3243 = vmatprep.subr.mxu0 0.0
    %3244 = vmatpush1.msra.mxu0 %v3199
    %3245 = vmatprep.subr.mxu0 0.0
    %3246 = vmatpush1.msra.mxu0 %v3198
    %3247 = vmatprep.subr.mxu0 0.0
    %3248 = vmatpush2.msra.mxu0 0.0
    %3249 = vmatprep.subr.mxu0 0.0
    %3250 = vmatpush2.msra.mxu0 0.0
    %3251 = vmatprep.subr.mxu0 0.0
    %3252 = vmatpush2.msra.mxu0 0.0
    %3253 = vmatprep.subr.mxu0 0.0
    %3254 = vmatpush2.msra.mxu0 0.0
    %3255 = vmatprep.subr.mxu0 0.0
    %3256 = vmatpush2.msra.mxu0 0.0
    %3257 = vmatprep.subr.mxu0 0.0
    %3258 = vmatpush2.msra.mxu0 0.0
    %3259 = vmatprep.subr.mxu0 0.0
    %3260 = vmatpush2.msra.mxu0 0.0
    %3261 = vmatprep.subr.mxu0 0.0
    %3262 = vmatpush2.msra.mxu0 0.0
    %3263 = vmatprep.subr.mxu0 0.0
    %3264 = vmatpush2.msra.mxu0 0.0
    %3265 = vmatprep.subr.mxu0 0.0
    %3266 = vmatpush2.msra.mxu0 0.0
    %3267 = vmatprep.subr.mxu0 0.0
    %3268 = vmatpush2.msra.mxu0 0.0
    %3269 = vmatprep.subr.mxu0 0.0
    %3270 = vmatpush2.msra.mxu0 0.0
    %3271 = vmatprep.subr.mxu0 0.0
    %3272 = vmatpush2.msra.mxu0 0.0
    %3273 = vmatprep.subr.mxu0 0.0
    %3274 = vmatpush2.msra.mxu0 0.0
    %3275 = vmatprep.subr.mxu0 0.0
    %3276 = vmatpush2.msra.mxu0 0.0
    %3277 = vmatprep.subr.mxu0 0.0
    %3278 = vmatpush2.msra.mxu0 0.0
    %3279 = vmatprep.mubr.f32.mxu0 0.0
    %3280 = vmatmul.mubr.f32.gmra.mxu0 %v3210
    %v3281 = vpop.f32.mrf.mxu0
    %v3282 = vadd.f32 %v3207, %v3281
    %v3283 = vpop.f32.mrf.mxu0
    %3284 = vmatprep.mubr.f32.mxu0 0.0
    %3285 = vmatmul.mubr.f32.gmra.mxu0 %v3213
    %v3286 = vpop.f32.mrf.mxu0
    %v3287 = vadd.f32 %v3207, %v3286
    %v3288 = vpop.f32.mrf.mxu0
    %3289 = vdwg.mxu0
    %v3290 = vadd.f32 %v1662, %v3282
    %v3291 = vadd.f32 %v1663, %v3287
    %v3292 = vld [vmem:[%s14] sm:$0x1]
    %v3293 = vld [vmem:[%s15] sm:$0x1]
    %v3294 = vsel %vm87, %v3290, 0.0
    %3295 = vadd.xlane.f32.xlu0 %v3294
    %v3296 = vpop.xlane.xlu0 %3295
    %v3297 = vsel %vm87, %v3291, 0.0
    %3298 = vadd.xlane.f32.xlu0 %v3297
    %v3299 = vpop.xlane.xlu0 %3298
    %v3300 = vmul.f32 %v3296, %v1627
    %v3301 = vmul.f32 %v3299, %v1627
    %v3302 = vsub.f32 %v3290, %v3300
    %v3303 = vsub.f32 %v3291, %v3301
    %v3304 = vmul.f32 %v3302, %v3302
    %v3305 = vmul.f32 %v3303, %v3303
    %v3306 = vsel %vm87, %v3304, 0.0
    %3307 = vadd.xlane.f32.xlu0 %v3306
    %v3308 = vpop.xlane.xlu0 %3307
    %v3309 = vsel %vm87, %v3305, 0.0
    %3310 = vadd.xlane.f32.xlu0 %v3309
    %v3311 = vpop.xlane.xlu0 %3310
    %v3312 = vmul.f32 %v3308, %v1627
    %v3313 = vmul.f32 %v3311, %v1627
    %v3314 = vadd.f32 %v3312, 1e-05
    %v3315 = vadd.f32 %v3313, 1e-05
    %v3316 = vrsqrt.pop %v3314
    %v3317 = vrsqrt.pop %v3315
    %v3318 = vmul.f32 %v3302, %v3316
    %v3319 = vmul.f32 %v3303, %v3317
    %v3321 = vlaneseq
    %v3322 = vshrl.u32 %v3321, 7
    %v3323 = vsub.s32 0, %v3322
    %v3324 = vrot.slane %v3292, %v3323
    %v3326 = vmul.f32 %v3318, %v3324
    %v3327 = vmul.f32 %v3319, %v3324
    %v3329 = vlaneseq
    %v3330 = vshrl.u32 %v3329, 7
    %v3331 = vsub.s32 0, %v3330
    %v3332 = vrot.slane %v3293, %v3331
    %v3334 = vadd.f32 %v3326, %v3332
    %v3335 = vadd.f32 %v3327, %v3332
    %v3336 = vld [vmem:[%s16] sm:$0xff]
    %v3337 = vld [vmem:[%s16 + $0x8] sm:$0xff]
    %v3338 = vld [vmem:[%s16 + $0x10] sm:$0xff]
    %v3339 = vld [vmem:[%s16 + $0x18] sm:$0xff]
    %v3340 = vld [vmem:[%s17] sm:$0x1]
    %v3342 = vlaneseq
    %v3343 = vshrl.u32 %v3342, 7
    %v3344 = vsub.s32 0, %v3343
    %v3345 = vrot.slane %v3340, %v3344
    %v3348 = vsel %vm87, %v3334, 0
    %v3351 = vsel %vm87, %v3335, 0
    %3353 = vmatprep.subr.mxu0 0.0
    %3354 = vmatpush1.msra.mxu0 0.0
    %3355 = vmatprep.subr.mxu0 0.0
    %3356 = vmatpush1.msra.mxu0 0.0
    %3357 = vmatprep.subr.mxu0 0.0
    %3358 = vmatpush1.msra.mxu0 0.0
    %3359 = vmatprep.subr.mxu0 0.0
    %3360 = vmatpush1.msra.mxu0 0.0
    %3361 = vmatprep.subr.mxu0 0.0
    %3362 = vmatpush1.msra.mxu0 0.0
    %3363 = vmatprep.subr.mxu0 0.0
    %3364 = vmatpush1.msra.mxu0 0.0
    %3365 = vmatprep.subr.mxu0 0.0
    %3366 = vmatpush1.msra.mxu0 0.0
    %3367 = vmatprep.subr.mxu0 0.0
    %3368 = vmatpush1.msra.mxu0 0.0
    %3369 = vmatprep.subr.mxu0 0.0
    %3370 = vmatpush1.msra.mxu0 0.0
    %3371 = vmatprep.subr.mxu0 0.0
    %3372 = vmatpush1.msra.mxu0 0.0
    %3373 = vmatprep.subr.mxu0 0.0
    %3374 = vmatpush1.msra.mxu0 0.0
    %3375 = vmatprep.subr.mxu0 0.0
    %3376 = vmatpush1.msra.mxu0 0.0
    %3377 = vmatprep.subr.mxu0 0.0
    %3378 = vmatpush1.msra.mxu0 %v3339
    %3379 = vmatprep.subr.mxu0 0.0
    %3380 = vmatpush1.msra.mxu0 %v3338
    %3381 = vmatprep.subr.mxu0 0.0
    %3382 = vmatpush1.msra.mxu0 %v3337
    %3383 = vmatprep.subr.mxu0 0.0
    %3384 = vmatpush1.msra.mxu0 %v3336
    %3385 = vmatprep.subr.mxu0 0.0
    %3386 = vmatpush2.msra.mxu0 0.0
    %3387 = vmatprep.subr.mxu0 0.0
    %3388 = vmatpush2.msra.mxu0 0.0
    %3389 = vmatprep.subr.mxu0 0.0
    %3390 = vmatpush2.msra.mxu0 0.0
    %3391 = vmatprep.subr.mxu0 0.0
    %3392 = vmatpush2.msra.mxu0 0.0
    %3393 = vmatprep.subr.mxu0 0.0
    %3394 = vmatpush2.msra.mxu0 0.0
    %3395 = vmatprep.subr.mxu0 0.0
    %3396 = vmatpush2.msra.mxu0 0.0
    %3397 = vmatprep.subr.mxu0 0.0
    %3398 = vmatpush2.msra.mxu0 0.0
    %3399 = vmatprep.subr.mxu0 0.0
    %3400 = vmatpush2.msra.mxu0 0.0
    %3401 = vmatprep.subr.mxu0 0.0
    %3402 = vmatpush2.msra.mxu0 0.0
    %3403 = vmatprep.subr.mxu0 0.0
    %3404 = vmatpush2.msra.mxu0 0.0
    %3405 = vmatprep.subr.mxu0 0.0
    %3406 = vmatpush2.msra.mxu0 0.0
    %3407 = vmatprep.subr.mxu0 0.0
    %3408 = vmatpush2.msra.mxu0 0.0
    %3409 = vmatprep.subr.mxu0 0.0
    %3410 = vmatpush2.msra.mxu0 0.0
    %3411 = vmatprep.subr.mxu0 0.0
    %3412 = vmatpush2.msra.mxu0 0.0
    %3413 = vmatprep.subr.mxu0 0.0
    %3414 = vmatpush2.msra.mxu0 0.0
    %3415 = vmatprep.subr.mxu0 0.0
    %3416 = vmatpush2.msra.mxu0 0.0
    %3417 = vmatprep.mubr.f32.mxu0 0.0
    %3418 = vmatmul.mubr.f32.gmra.mxu0 %v3348
    %v3419 = vpop.f32.mrf.mxu0
    %v3420 = vadd.f32 %v3345, %v3419
    %v3421 = vpop.f32.mrf.mxu0
    %3422 = vmatprep.mubr.f32.mxu0 0.0
    %3423 = vmatmul.mubr.f32.gmra.mxu0 %v3351
    %v3424 = vpop.f32.mrf.mxu0
    %v3425 = vadd.f32 %v3345, %v3424
    %v3426 = vpop.f32.mrf.mxu0
    %3427 = vdwg.mxu0
    %v3428 = vmax.f32 %v3420, 0.0
    %v3429 = vmax.f32 %v3425, 0.0
    %v3430 = vld [vmem:[%s18] sm:$0xff]
    %v3431 = vld [vmem:[%s18 + $0x8] sm:$0xff]
    %v3432 = vld [vmem:[%s18 + $0x10] sm:$0xff]
    %v3433 = vld [vmem:[%s18 + $0x18] sm:$0xff]
    %v3434 = vld [vmem:[%s18 + $0x20] sm:$0xff]
    %v3435 = vld [vmem:[%s18 + $0x28] sm:$0xff]
    %v3436 = vld [vmem:[%s18 + $0x30] sm:$0xff]
    %v3437 = vld [vmem:[%s18 + $0x38] sm:$0xff]
    %v3438 = vld [vmem:[%s19] sm:$0x1]
    %v3440 = vlaneseq
    %v3441 = vshrl.u32 %v3440, 7
    %v3442 = vsub.s32 0, %v3441
    %v3443 = vrot.slane %v3438, %v3442
    %vm3445 = vcmask 523264
    %v3447 = vsel %vm3445, %v3428, 0
    %v3450 = vsel %vm3445, %v3429, 0
    %3452 = vmatprep.subr.mxu0 0.0
    %3453 = vmatpush1.msra.mxu0 0.0
    %3454 = vmatprep.subr.mxu0 0.0
    %3455 = vmatpush1.msra.mxu0 0.0
    %3456 = vmatprep.subr.mxu0 0.0
    %3457 = vmatpush1.msra.mxu0 0.0
    %3458 = vmatprep.subr.mxu0 0.0
    %3459 = vmatpush1.msra.mxu0 0.0
    %3460 = vmatprep.subr.mxu0 0.0
    %3461 = vmatpush1.msra.mxu0 0.0
    %3462 = vmatprep.subr.mxu0 0.0
    %3463 = vmatpush1.msra.mxu0 0.0
    %3464 = vmatprep.subr.mxu0 0.0
    %3465 = vmatpush1.msra.mxu0 0.0
    %3466 = vmatprep.subr.mxu0 0.0
    %3467 = vmatpush1.msra.mxu0 0.0
    %3468 = vmatprep.subr.mxu0 0.0
    %3469 = vmatpush1.msra.mxu0 %v3437
    %3470 = vmatprep.subr.mxu0 0.0
    %3471 = vmatpush1.msra.mxu0 %v3436
    %3472 = vmatprep.subr.mxu0 0.0
    %3473 = vmatpush1.msra.mxu0 %v3435
    %3474 = vmatprep.subr.mxu0 0.0
    %3475 = vmatpush1.msra.mxu0 %v3434
    %3476 = vmatprep.subr.mxu0 0.0
    %3477 = vmatpush1.msra.mxu0 %v3433
    %3478 = vmatprep.subr.mxu0 0.0
    %3479 = vmatpush1.msra.mxu0 %v3432
    %3480 = vmatprep.subr.mxu0 0.0
    %3481 = vmatpush1.msra.mxu0 %v3431
    %3482 = vmatprep.subr.mxu0 0.0
    %3483 = vmatpush1.msra.mxu0 %v3430
    %3484 = vmatprep.subr.mxu0 0.0
    %3485 = vmatpush2.msra.mxu0 0.0
    %3486 = vmatprep.subr.mxu0 0.0
    %3487 = vmatpush2.msra.mxu0 0.0
    %3488 = vmatprep.subr.mxu0 0.0
    %3489 = vmatpush2.msra.mxu0 0.0
    %3490 = vmatprep.subr.mxu0 0.0
    %3491 = vmatpush2.msra.mxu0 0.0
    %3492 = vmatprep.subr.mxu0 0.0
    %3493 = vmatpush2.msra.mxu0 0.0
    %3494 = vmatprep.subr.mxu0 0.0
    %3495 = vmatpush2.msra.mxu0 0.0
    %3496 = vmatprep.subr.mxu0 0.0
    %3497 = vmatpush2.msra.mxu0 0.0
    %3498 = vmatprep.subr.mxu0 0.0
    %3499 = vmatpush2.msra.mxu0 0.0
    %3500 = vmatprep.subr.mxu0 0.0
    %3501 = vmatpush2.msra.mxu0 0.0
    %3502 = vmatprep.subr.mxu0 0.0
    %3503 = vmatpush2.msra.mxu0 0.0
    %3504 = vmatprep.subr.mxu0 0.0
    %3505 = vmatpush2.msra.mxu0 0.0
    %3506 = vmatprep.subr.mxu0 0.0
    %3507 = vmatpush2.msra.mxu0 0.0
    %3508 = vmatprep.subr.mxu0 0.0
    %3509 = vmatpush2.msra.mxu0 0.0
    %3510 = vmatprep.subr.mxu0 0.0
    %3511 = vmatpush2.msra.mxu0 0.0
    %3512 = vmatprep.subr.mxu0 0.0
    %3513 = vmatpush2.msra.mxu0 0.0
    %3514 = vmatprep.subr.mxu0 0.0
    %3515 = vmatpush2.msra.mxu0 0.0
    %3516 = vmatprep.mubr.f32.mxu0 0.0
    %3517 = vmatmul.mubr.f32.gmra.mxu0 %v3447
    %v3518 = vpop.f32.mrf.mxu0
    %v3519 = vadd.f32 %v3443, %v3518
    %v3520 = vpop.f32.mrf.mxu0
    %3521 = vmatprep.mubr.f32.mxu0 0.0
    %3522 = vmatmul.mubr.f32.gmra.mxu0 %v3450
    %v3523 = vpop.f32.mrf.mxu0
    %v3524 = vadd.f32 %v3443, %v3523
    %v3525 = vpop.f32.mrf.mxu0
    %3526 = vdwg.mxu0
    %v3527 = vadd.f32 %v3334, %v3519
    %v3528 = vadd.f32 %v3335, %v3524
    %v3529 = vld [vmem:[%s20] sm:$0x1]
    %v3530 = vld [vmem:[%s21] sm:$0x1]
    %v3531 = vsel %vm87, %v3527, 0.0
    %3532 = vadd.xlane.f32.xlu0 %v3531
    %v3533 = vpop.xlane.xlu0 %3532
    %v3534 = vsel %vm87, %v3528, 0.0
    %3535 = vadd.xlane.f32.xlu0 %v3534
    %v3536 = vpop.xlane.xlu0 %3535
    %v3537 = vmul.f32 %v3533, %v1627
    %v3538 = vmul.f32 %v3536, %v1627
    %v3539 = vsub.f32 %v3527, %v3537
    %v3540 = vsub.f32 %v3528, %v3538
    %v3541 = vmul.f32 %v3539, %v3539
    %v3542 = vmul.f32 %v3540, %v3540
    %v3543 = vsel %vm87, %v3541, 0.0
    %3544 = vadd.xlane.f32.xlu0 %v3543
    %v3545 = vpop.xlane.xlu0 %3544
    %v3546 = vsel %vm87, %v3542, 0.0
    %3547 = vadd.xlane.f32.xlu0 %v3546
    %v3548 = vpop.xlane.xlu0 %3547
    %v3549 = vmul.f32 %v3545, %v1627
    %v3550 = vmul.f32 %v3548, %v1627
    %v3551 = vadd.f32 %v3549, 1e-05
    %v3552 = vadd.f32 %v3550, 1e-05
    %v3553 = vrsqrt.pop %v3551
    %v3554 = vrsqrt.pop %v3552
    %v3555 = vmul.f32 %v3539, %v3553
    %v3556 = vmul.f32 %v3540, %v3554
    %v3558 = vlaneseq
    %v3559 = vshrl.u32 %v3558, 7
    %v3560 = vsub.s32 0, %v3559
    %v3561 = vrot.slane %v3529, %v3560
    %v3563 = vmul.f32 %v3555, %v3561
    %v3564 = vmul.f32 %v3556, %v3561
    %v3566 = vlaneseq
    %v3567 = vshrl.u32 %v3566, 7
    %v3568 = vsub.s32 0, %v3567
    %v3569 = vrot.slane %v3530, %v3568
    %v3571 = vadd.f32 %v3563, %v3569
    %v3572 = vadd.f32 %v3564, %v3569
    %3573 = vst.msk [vmem:[#allocation3] sm:$0xff] %vm87, %v3571
    %3574 = vst.msk [vmem:[#allocation3 + $0x8] sm:$0xff] %vm87, %v3572
    // Predicated region
    $region90: #{transformer_forward.3} parent=1 // pred_check
      _
    $region91: #{transformer_forward.3} parent=1 // pred_check_branch
      %3576 = sbr.rel (0) target = $region93
    $region92: #{transformer_forward.3} parent=1 // pred_region
      %s3578 = ssub.s32 256, 256
      %3579 = vsyncadd [#allocation4], %s3578
      %s3580 = sshll.u32 [#allocation3], 4
      %s3581 = int_to_ptr.vmem [resolvable:$true] %s3580
      %3586 = dma.vmem_to_hbm [thread:$0]  %s3581, 256, %s22, [#allocation4], 128, 128, 8
    $region93: #{transformer_forward.3} parent=1 // pred_fallthru
      _
    // Predicated region
    $region94: #{transformer_forward.3} parent=1 // pred_check
      _
    $region95: #{transformer_forward.3} parent=1 // pred_check_branch
      %3588 = sbr.rel (0) target = $region97
    $region96: #{transformer_forward.3} parent=1 // pred_region
      %3589 = dma.done [#allocation4], 256
    $region97: #{transformer_forward.3} parent=1 // pred_fallthru
      _
    %3590 = vsyncpa [#allocation4], 1

</llo_original>
